<compile_context>
chip_gen: v5e
topology: v5e:2x2
jax: 0.10.0
libtpu: 0.0.40
codegen_flags: <defaults>
</compile_context>

<pallas_src>
import numpy as np

import jax
import jax.numpy as jnp
from jax.experimental import pallas as pl
from jax.experimental.pallas import tpu as pltpu


# ---------------------------------------------------------------------------
# Pallas kernels
# ---------------------------------------------------------------------------

def conv_stack_kernel(p1_ref, w1_ref, b1_ref, w2_ref, b2_ref, pool_ref,
                      o_ref, y1_ref):
    """Per-image conv1+tanh -> conv2+tanh -> 2x2 avg-pool, all resident in VMEM.

    p1_ref  : [1, 26, 26, 9]  f32  conv1 3x3 patches (tap = kh*3+kw)
    w1_ref  : [9, 32]         f32  conv1 weight (tap, cout)
    b1_ref  : [1, 32]         f32
    w2_ref  : [9, 32, 64]     bf16 conv2 weight (tap, cin, cout)
    b2_ref  : [1, 64]         f32
    pool_ref: [144, 576]      bf16 constant 2x2 average-pool matrix
    o_ref   : [1, 144, 64]    bf16 pooled NHWC features (row = ph*12 + pw)
    y1_ref  : [26, 26, 32]    f32  VMEM scratch holding the conv1 activation
    """
    w1 = w1_ref[...]
    b1 = b1_ref[...]

    # conv1 + tanh, one output row at a time (C_in == 1 -> contract over 9 taps).
    for h in range(26):
        row = jnp.dot(p1_ref[0, h], w1,
                      preferred_element_type=jnp.float32)          # [26, 32]
        y1_ref[h] = jnp.tanh(row + b1)

    # conv2 + tanh: 9 shifted-window matmuls contracting the 32 input channels.
    acc2 = jnp.zeros((576, 64), jnp.float32)                        # row = i*24 + j
    for kh in range(3):
        for kw in range(3):
            win = y1_ref[kh:kh + 24, kw:kw + 24, :]                 # [24, 24, 32]
            lhs = win.reshape(576, 32).astype(jnp.bfloat16)
            acc2 = acc2 + jnp.dot(lhs, w2_ref[kh * 3 + kw],
                                  preferred_element_type=jnp.float32)
    y2 = jnp.tanh(acc2 + b2_ref[...])                               # [576, 64] f32

    # avg_pool2d(2): pooled = P @ y2 with the constant 0 / 0.25 pooling matrix.
    pooled = jnp.dot(pool_ref[...], y2.astype(jnp.bfloat16),
                     preferred_element_type=jnp.float32)            # [144, 64]
    o_ref[0] = pooled.astype(o_ref.dtype)


def head_kernel(x_ref, w1_ref, b1_ref, w2_ref, b2_ref, o_ref):
    """fc1 + tanh + fc2 + log_softmax fused; h=[tm,128] never leaves VMEM."""
    h = jnp.dot(x_ref[...], w1_ref[...],
                preferred_element_type=jnp.float32) + b1_ref[...]   # [tm, 128] f32
    h = jnp.tanh(h)
    z = jnp.dot(h, w2_ref[...],
                preferred_element_type=jnp.float32) + b2_ref[...]   # [tm, 10] f32
    m = jnp.max(z, axis=-1, keepdims=True)
    s = jnp.sum(jnp.exp(z - m), axis=-1, keepdims=True)
    o_ref[...] = (z - m - jnp.log(s)).astype(o_ref.dtype)


# ---------------------------------------------------------------------------
# Pallas wrappers
# ---------------------------------------------------------------------------

def conv_stack(p1, prep):
    """[B,26,26,9] conv1 patches -> [B,144,64] bf16 pooled NHWC features."""
    B = p1.shape[0]
    return pl.pallas_call(
        conv_stack_kernel,
        out_shape=jax.ShapeDtypeStruct((B, 144, 64), jnp.bfloat16),
        grid_spec=pltpu.PrefetchScalarGridSpec(
            num_scalar_prefetch=0,
            grid=(B,),
            in_specs=[
                pl.BlockSpec((1, 26, 26, 9), lambda b: (b, 0, 0, 0)),
                pl.BlockSpec((9, 32), lambda b: (0, 0)),
                pl.BlockSpec((1, 32), lambda b: (0, 0)),
                pl.BlockSpec((9, 32, 64), lambda b: (0, 0, 0)),
                pl.BlockSpec((1, 64), lambda b: (0, 0)),
                pl.BlockSpec((144, 576), lambda b: (0, 0)),
            ],
            out_specs=pl.BlockSpec((1, 144, 64), lambda b: (b, 0, 0)),
            scratch_shapes=[pltpu.VMEM((26, 26, 32), jnp.float32)],
        ),
        compiler_params=pltpu.CompilerParams(
            dimension_semantics=("parallel",)),
    )(p1, prep["w1"], prep["b1"], prep["w2"], prep["b2"], prep["pool"])


def head(flat, prep):
    """[B,9216] bf16 features -> [B,10] f32 log-probs (fc1+tanh+fc2+log_softmax)."""
    B, K = flat.shape
    N1 = prep["fc1_w"].shape[1]
    N2 = prep["fc2_w"].shape[1]
    tm = B if B <= 128 else 128          # M-tiling for large batch; fc1_w stays resident
    nm = pl.cdiv(B, tm)
    return pl.pallas_call(
        head_kernel,
        out_shape=jax.ShapeDtypeStruct((B, N2), jnp.float32),
        grid_spec=pltpu.PrefetchScalarGridSpec(
            num_scalar_prefetch=0,
            grid=(nm,),
            in_specs=[
                pl.BlockSpec((tm, K), lambda i: (i, 0)),
                pl.BlockSpec((K, N1), lambda i: (0, 0)),
                pl.BlockSpec((1, N1), lambda i: (0, 0)),
                pl.BlockSpec((N1, N2), lambda i: (0, 0)),
                pl.BlockSpec((1, N2), lambda i: (0, 0)),
            ],
            out_specs=pl.BlockSpec((tm, N2), lambda i: (i, 0)),
        ),
        compiler_params=pltpu.CompilerParams(
            dimension_semantics=("parallel",)),
    )(flat, prep["fc1_w"], prep["fc1_b"], prep["fc2_w"], prep["fc2_b"])


# ---------------------------------------------------------------------------
# One-time parameter preparation (weight re-layout / casts; no per-step kernels)
# ---------------------------------------------------------------------------

def prepare_params(p):
    # conv weights: PyTorch [Cout, Cin, KH, KW] -> (tap=kh*3+kw, cin, cout)
    w1 = jnp.transpose(p["conv1_w"], (2, 3, 1, 0)).reshape(9, 32)
    w2 = jnp.transpose(p["conv2_w"], (2, 3, 1, 0)).reshape(9, 32, 64)
    # fc1 weight rows permuted from PyTorch NCHW flatten (c,h,w) to NHWC (h,w,c)
    fc1_w = jnp.transpose(p["fc1_w"].reshape(128, 64, 12, 12),
                          (2, 3, 1, 0)).reshape(9216, 128)
    # 2x2 average pool as a constant matrix: out row ph*12+pw <- conv2 rows i*24+j
    pool = np.zeros((144, 576), np.float32)
    for ph in range(12):
        for pw in range(12):
            for di in range(2):
                for dj in range(2):
                    pool[ph * 12 + pw, (2 * ph + di) * 24 + (2 * pw + dj)] = 0.25
    return {
        "w1": w1.astype(jnp.float32),
        "b1": p["conv1_b"].reshape(1, 32).astype(jnp.float32),
        "w2": w2.astype(jnp.bfloat16),
        "b2": p["conv2_b"].reshape(1, 64).astype(jnp.float32),
        "pool": jnp.asarray(pool, jnp.bfloat16),
        "fc1_w": fc1_w.astype(jnp.bfloat16),
        "fc1_b": p["fc1_b"].reshape(1, 128).astype(jnp.float32),
        "fc2_w": p["fc2_w"].T.astype(jnp.float32),
        "fc2_b": p["fc2_b"].reshape(1, 10).astype(jnp.float32),
    }


# ---------------------------------------------------------------------------
# Forward pass
# ---------------------------------------------------------------------------

def net_forward(x_nchw, prep):
    B = x_nchw.shape[0]
    x = x_nchw.reshape(B, 28, 28)                        # single input channel
    # TODO(synk): 3x3 patch extraction for the 1-channel conv1 input stays as tiny
    # plain-JAX glue (B*26*26*9 floats) feeding the fused conv kernel.
    cols = [x[:, kh:kh + 26, kw:kw + 26] for kh in range(3) for kw in range(3)]
    p1 = jnp.stack(cols, axis=-1)                        # [B, 26, 26, 9]
    pooled = conv_stack(p1, prep)                        # [B, 144, 64] bf16
    flat = pooled.reshape(B, 144 * 64)                   # free row-major reshape
    return head(flat, prep)                              # [B, 10] f32


# ---------------------------------------------------------------------------
# Pure-JAX reference (sanity check only)
# ---------------------------------------------------------------------------

def reference_forward(x_nchw, p):
    x = jnp.transpose(x_nchw, (0, 2, 3, 1))
    y = jax.lax.conv_general_dilated(
        x, jnp.transpose(p["conv1_w"], (2, 3, 1, 0)), (1, 1), "VALID",
        dimension_numbers=("NHWC", "HWIO", "NHWC")) + p["conv1_b"]
    y = jnp.tanh(y)
    y = jax.lax.conv_general_dilated(
        y, jnp.transpose(p["conv2_w"], (2, 3, 1, 0)), (1, 1), "VALID",
        dimension_numbers=("NHWC", "HWIO", "NHWC")) + p["conv2_b"]
    y = jnp.tanh(y)
    B, H, W, C = y.shape
    y = y.reshape(B, H // 2, 2, W // 2, 2, C).mean(axis=(2, 4))
    y = jnp.transpose(y, (0, 3, 1, 2)).reshape(B, -1)
    y = jnp.tanh(y @ p["fc1_w"].T + p["fc1_b"])
    z = y @ p["fc2_w"].T + p["fc2_b"]
    return jax.nn.log_softmax(z, axis=1)


# ---------------------------------------------------------------------------
# Main
# ---------------------------------------------------------------------------

if __name__ == "__main__":
    key = jax.random.PRNGKey(0)
    ks = jax.random.split(key, 9)

    def init_w(k, shape, fan_in):
        return jax.random.normal(k, shape, jnp.float32) / jnp.sqrt(fan_in)

    params = {
        "conv1_w": init_w(ks[0], (32, 1, 3, 3), 9.0),
        "conv1_b": 0.01 * jax.random.normal(ks[1], (32,), jnp.float32),
        "conv2_w": init_w(ks[2], (64, 32, 3, 3), 288.0),
        "conv2_b": 0.01 * jax.random.normal(ks[3], (64,), jnp.float32),
        "fc1_w": init_w(ks[4], (128, 9216), 9216.0),
        "fc1_b": 0.01 * jax.random.normal(ks[5], (128,), jnp.float32),
        "fc2_w": init_w(ks[6], (10, 128), 128.0),
        "fc2_b": 0.01 * jax.random.normal(ks[7], (10,), jnp.float32),
    }

    # MNIST-like normalized input, batch=2, NCHW (28x28 is required by fc1=9216).
    x = jax.random.normal(ks[8], (2, 1, 28, 28), jnp.float32)

    prep = prepare_params(params)

    out = jax.block_until_ready(jax.jit(net_forward)(x, prep))
    ref = jax.block_until_ready(jax.jit(reference_forward)(x, params))

    assert out.shape == (2, 10) and out.dtype == jnp.float32
    assert bool(jnp.all(jnp.isfinite(out)))
    assert float(jnp.max(jnp.abs(out - ref))) < 5e-2

    print("KERNEL_OK")
</pallas_src>

<mosaic_0001>
module attributes {stable_mosaic.version = 11 : i64} {
  func.func @conv_stack_kernel(%arg0: i32, %arg1: memref<1x26x26x9xf32, #tpu.memory_space<vmem>>, %arg2: memref<9x32xf32, #tpu.memory_space<vmem>>, %arg3: memref<1x32xf32, #tpu.memory_space<vmem>>, %arg4: memref<9x32x64xbf16, #tpu.memory_space<vmem>>, %arg5: memref<1x64xf32, #tpu.memory_space<vmem>>, %arg6: memref<144x576xbf16, #tpu.memory_space<vmem>>, %arg7: memref<1x144x64xbf16, #tpu.memory_space<vmem>>, %arg8: memref<26x26x32xf32, #tpu.memory_space<vmem>>) attributes {dimension_semantics = [#tpu.dimension_semantics<parallel>], iteration_bounds = array<i64: 2>, scalar_prefetch = 0 : i64, scratch_operands = 1 : i64, tpu.core_type = #tpu.core_type<tc>, window_params = [{transform_indices = @transform_0, window_bounds = array<i64: 1, 26, 26, 9>}, {pipeline_mode = #tpu.pipeline_mode<synchronous>, transform_indices = @transform_1, window_bounds = array<i64: 9, 32>}, {pipeline_mode = #tpu.pipeline_mode<synchronous>, transform_indices = @transform_2, window_bounds = array<i64: 1, 32>}, {pipeline_mode = #tpu.pipeline_mode<synchronous>, transform_indices = @transform_3, window_bounds = array<i64: 9, 32, 64>}, {pipeline_mode = #tpu.pipeline_mode<synchronous>, transform_indices = @transform_4, window_bounds = array<i64: 1, 64>}, {pipeline_mode = #tpu.pipeline_mode<synchronous>, transform_indices = @transform_5, window_bounds = array<i64: 144, 576>}, {transform_indices = @transform_6, window_bounds = array<i64: 1, 144, 64>}]} {
    %c0 = arith.constant 0 : index
    %c0_0 = arith.constant 0 : index
    %0 = vector.load %arg2[%c0, %c0_0] : memref<9x32xf32, #tpu.memory_space<vmem>>, vector<9x32xf32>
    %c0_1 = arith.constant 0 : index
    %c0_2 = arith.constant 0 : index
    %1 = vector.load %arg3[%c0_1, %c0_2] : memref<1x32xf32, #tpu.memory_space<vmem>>, vector<1x32xf32>
    %c0_3 = arith.constant 0 : index
    %c0_4 = arith.constant 0 : index
    %c0_5 = arith.constant 0 : index
    %c0_6 = arith.constant 0 : index
    %2 = vector.load %arg1[%c0_3, %c0_4, %c0_5, %c0_6] : memref<1x26x26x9xf32, #tpu.memory_space<vmem>>, vector<1x1x26x9xf32>
    %3 = vector.shape_cast %2 : vector<1x1x26x9xf32> to vector<26x9xf32>
    %cst = arith.constant dense<0.000000e+00> : vector<26x32xf32>
    %4 = tpu.matmul %3, %0, %cst {dimension_numbers = #tpu.dot_dimension_numbers<[1], [0], [0], [1], [0, 0, 1, 1], [], []>} : vector<26x9xf32>, vector<9x32xf32>, vector<26x32xf32> -> vector<26x32xf32>
    %5 = vector.broadcast %1 : vector<1x32xf32> to vector<26x32xf32>
    %6 = arith.addf %4, %5 : vector<26x32xf32>
    %7 = math.tanh %6 : vector<26x32xf32>
    %c0_7 = arith.constant 0 : index
    %c0_8 = arith.constant 0 : index
    %c0_9 = arith.constant 0 : index
    %8 = vector.load %arg8[%c0_7, %c0_8, %c0_9] : memref<26x26x32xf32, #tpu.memory_space<vmem>>, vector<1x26x32xf32>
    %9 = vector.shape_cast %8 : vector<1x26x32xf32> to vector<26x32xf32>
    %10 = vector.shape_cast %7 : vector<26x32xf32> to vector<1x26x32xf32>
    tpu.vector_store %arg8[%c0_7, %c0_8, %c0_9], %10 {strides = array<i32>} : memref<26x26x32xf32, #tpu.memory_space<vmem>>, vector<1x26x32xf32>,
    %c0_10 = arith.constant 0 : index
    %c1 = arith.constant 1 : index
    %c0_11 = arith.constant 0 : index
    %c0_12 = arith.constant 0 : index
    %11 = vector.load %arg1[%c0_10, %c1, %c0_11, %c0_12] : memref<1x26x26x9xf32, #tpu.memory_space<vmem>>, vector<1x1x26x9xf32>
    %12 = vector.shape_cast %11 : vector<1x1x26x9xf32> to vector<26x9xf32>
    %cst_13 = arith.constant dense<0.000000e+00> : vector<26x32xf32>
    %13 = tpu.matmul %12, %0, %cst_13 {dimension_numbers = #tpu.dot_dimension_numbers<[1], [0], [0], [1], [0, 0, 1, 1], [], []>} : vector<26x9xf32>, vector<9x32xf32>, vector<26x32xf32> -> vector<26x32xf32>
    %14 = vector.broadcast %1 : vector<1x32xf32> to vector<26x32xf32>
    %15 = arith.addf %13, %14 : vector<26x32xf32>
    %16 = math.tanh %15 : vector<26x32xf32>
    %c1_14 = arith.constant 1 : index
    %c0_15 = arith.constant 0 : index
    %c0_16 = arith.constant 0 : index
    %17 = vector.load %arg8[%c1_14, %c0_15, %c0_16] : memref<26x26x32xf32, #tpu.memory_space<vmem>>, vector<1x26x32xf32>
    %18 = vector.shape_cast %17 : vector<1x26x32xf32> to vector<26x32xf32>
    %19 = vector.shape_cast %16 : vector<26x32xf32> to vector<1x26x32xf32>
    tpu.vector_store %arg8[%c1_14, %c0_15, %c0_16], %19 {strides = array<i32>} : memref<26x26x32xf32, #tpu.memory_space<vmem>>, vector<1x26x32xf32>,
    %c0_17 = arith.constant 0 : index
    %c2 = arith.constant 2 : index
    %c0_18 = arith.constant 0 : index
    %c0_19 = arith.constant 0 : index
    %20 = vector.load %arg1[%c0_17, %c2, %c0_18, %c0_19] : memref<1x26x26x9xf32, #tpu.memory_space<vmem>>, vector<1x1x26x9xf32>
    %21 = vector.shape_cast %20 : vector<1x1x26x9xf32> to vector<26x9xf32>
    %cst_20 = arith.constant dense<0.000000e+00> : vector<26x32xf32>
    %22 = tpu.matmul %21, %0, %cst_20 {dimension_numbers = #tpu.dot_dimension_numbers<[1], [0], [0], [1], [0, 0, 1, 1], [], []>} : vector<26x9xf32>, vector<9x32xf32>, vector<26x32xf32> -> vector<26x32xf32>
    %23 = vector.broadcast %1 : vector<1x32xf32> to vector<26x32xf32>
    %24 = arith.addf %22, %23 : vector<26x32xf32>
    %25 = math.tanh %24 : vector<26x32xf32>
    %c2_21 = arith.constant 2 : index
    %c0_22 = arith.constant 0 : index
    %c0_23 = arith.constant 0 : index
    %26 = vector.load %arg8[%c2_21, %c0_22, %c0_23] : memref<26x26x32xf32, #tpu.memory_space<vmem>>, vector<1x26x32xf32>
    %27 = vector.shape_cast %26 : vector<1x26x32xf32> to vector<26x32xf32>
    %28 = vector.shape_cast %25 : vector<26x32xf32> to vector<1x26x32xf32>
    tpu.vector_store %arg8[%c2_21, %c0_22, %c0_23], %28 {strides = array<i32>} : memref<26x26x32xf32, #tpu.memory_space<vmem>>, vector<1x26x32xf32>,
    %c0_24 = arith.constant 0 : index
    %c3 = arith.constant 3 : index
    %c0_25 = arith.constant 0 : index
    %c0_26 = arith.constant 0 : index
    %29 = vector.load %arg1[%c0_24, %c3, %c0_25, %c0_26] : memref<1x26x26x9xf32, #tpu.memory_space<vmem>>, vector<1x1x26x9xf32>
    %30 = vector.shape_cast %29 : vector<1x1x26x9xf32> to vector<26x9xf32>
    %cst_27 = arith.constant dense<0.000000e+00> : vector<26x32xf32>
    %31 = tpu.matmul %30, %0, %cst_27 {dimension_numbers = #tpu.dot_dimension_numbers<[1], [0], [0], [1], [0, 0, 1, 1], [], []>} : vector<26x9xf32>, vector<9x32xf32>, vector<26x32xf32> -> vector<26x32xf32>
    %32 = vector.broadcast %1 : vector<1x32xf32> to vector<26x32xf32>
    %33 = arith.addf %31, %32 : vector<26x32xf32>
    %34 = math.tanh %33 : vector<26x32xf32>
    %c3_28 = arith.constant 3 : index
    %c0_29 = arith.constant 0 : index
    %c0_30 = arith.constant 0 : index
    %35 = vector.load %arg8[%c3_28, %c0_29, %c0_30] : memref<26x26x32xf32, #tpu.memory_space<vmem>>, vector<1x26x32xf32>
    %36 = vector.shape_cast %35 : vector<1x26x32xf32> to vector<26x32xf32>
    %37 = vector.shape_cast %34 : vector<26x32xf32> to vector<1x26x32xf32>
    tpu.vector_store %arg8[%c3_28, %c0_29, %c0_30], %37 {strides = array<i32>} : memref<26x26x32xf32, #tpu.memory_space<vmem>>, vector<1x26x32xf32>,
    %c0_31 = arith.constant 0 : index
    %c4 = arith.constant 4 : index
    %c0_32 = arith.constant 0 : index
    %c0_33 = arith.constant 0 : index
    %38 = vector.load %arg1[%c0_31, %c4, %c0_32, %c0_33] : memref<1x26x26x9xf32, #tpu.memory_space<vmem>>, vector<1x1x26x9xf32>
    %39 = vector.shape_cast %38 : vector<1x1x26x9xf32> to vector<26x9xf32>
    %cst_34 = arith.constant dense<0.000000e+00> : vector<26x32xf32>
    %40 = tpu.matmul %39, %0, %cst_34 {dimension_numbers = #tpu.dot_dimension_numbers<[1], [0], [0], [1], [0, 0, 1, 1], [], []>} : vector<26x9xf32>, vector<9x32xf32>, vector<26x32xf32> -> vector<26x32xf32>
    %41 = vector.broadcast %1 : vector<1x32xf32> to vector<26x32xf32>
    %42 = arith.addf %40, %41 : vector<26x32xf32>
    %43 = math.tanh %42 : vector<26x32xf32>
    %c4_35 = arith.constant 4 : index
    %c0_36 = arith.constant 0 : index
    %c0_37 = arith.constant 0 : index
    %44 = vector.load %arg8[%c4_35, %c0_36, %c0_37] : memref<26x26x32xf32, #tpu.memory_space<vmem>>, vector<1x26x32xf32>
    %45 = vector.shape_cast %44 : vector<1x26x32xf32> to vector<26x32xf32>
    %46 = vector.shape_cast %43 : vector<26x32xf32> to vector<1x26x32xf32>
    tpu.vector_store %arg8[%c4_35, %c0_36, %c0_37], %46 {strides = array<i32>} : memref<26x26x32xf32, #tpu.memory_space<vmem>>, vector<1x26x32xf32>,
    %c0_38 = arith.constant 0 : index
    %c5 = arith.constant 5 : index
    %c0_39 = arith.constant 0 : index
    %c0_40 = arith.constant 0 : index
    %47 = vector.load %arg1[%c0_38, %c5, %c0_39, %c0_40] : memref<1x26x26x9xf32, #tpu.memory_space<vmem>>, vector<1x1x26x9xf32>
    %48 = vector.shape_cast %47 : vector<1x1x26x9xf32> to vector<26x9xf32>
    %cst_41 = arith.constant dense<0.000000e+00> : vector<26x32xf32>
    %49 = tpu.matmul %48, %0, %cst_41 {dimension_numbers = #tpu.dot_dimension_numbers<[1], [0], [0], [1], [0, 0, 1, 1], [], []>} : vector<26x9xf32>, vector<9x32xf32>, vector<26x32xf32> -> vector<26x32xf32>
    %50 = vector.broadcast %1 : vector<1x32xf32> to vector<26x32xf32>
    %51 = arith.addf %49, %50 : vector<26x32xf32>
    %52 = math.tanh %51 : vector<26x32xf32>
    %c5_42 = arith.constant 5 : index
    %c0_43 = arith.constant 0 : index
    %c0_44 = arith.constant 0 : index
    %53 = vector.load %arg8[%c5_42, %c0_43, %c0_44] : memref<26x26x32xf32, #tpu.memory_space<vmem>>, vector<1x26x32xf32>
    %54 = vector.shape_cast %53 : vector<1x26x32xf32> to vector<26x32xf32>
    %55 = vector.shape_cast %52 : vector<26x32xf32> to vector<1x26x32xf32>
    tpu.vector_store %arg8[%c5_42, %c0_43, %c0_44], %55 {strides = array<i32>} : memref<26x26x32xf32, #tpu.memory_space<vmem>>, vector<1x26x32xf32>,
    %c0_45 = arith.constant 0 : index
    %c6 = arith.constant 6 : index
    %c0_46 = arith.constant 0 : index
    %c0_47 = arith.constant 0 : index
    %56 = vector.load %arg1[%c0_45, %c6, %c0_46, %c0_47] : memref<1x26x26x9xf32, #tpu.memory_space<vmem>>, vector<1x1x26x9xf32>
    %57 = vector.shape_cast %56 : vector<1x1x26x9xf32> to vector<26x9xf32>
    %cst_48 = arith.constant dense<0.000000e+00> : vector<26x32xf32>
    %58 = tpu.matmul %57, %0, %cst_48 {dimension_numbers = #tpu.dot_dimension_numbers<[1], [0], [0], [1], [0, 0, 1, 1], [], []>} : vector<26x9xf32>, vector<9x32xf32>, vector<26x32xf32> -> vector<26x32xf32>
    %59 = vector.broadcast %1 : vector<1x32xf32> to vector<26x32xf32>
    %60 = arith.addf %58, %59 : vector<26x32xf32>
    %61 = math.tanh %60 : vector<26x32xf32>
    %c6_49 = arith.constant 6 : index
    %c0_50 = arith.constant 0 : index
    %c0_51 = arith.constant 0 : index
    %62 = vector.load %arg8[%c6_49, %c0_50, %c0_51] : memref<26x26x32xf32, #tpu.memory_space<vmem>>, vector<1x26x32xf32>
    %63 = vector.shape_cast %62 : vector<1x26x32xf32> to vector<26x32xf32>
    %64 = vector.shape_cast %61 : vector<26x32xf32> to vector<1x26x32xf32>
    tpu.vector_store %arg8[%c6_49, %c0_50, %c0_51], %64 {strides = array<i32>} : memref<26x26x32xf32, #tpu.memory_space<vmem>>, vector<1x26x32xf32>,
    %c0_52 = arith.constant 0 : index
    %c7 = arith.constant 7 : index
    %c0_53 = arith.constant 0 : index
    %c0_54 = arith.constant 0 : index
    %65 = vector.load %arg1[%c0_52, %c7, %c0_53, %c0_54] : memref<1x26x26x9xf32, #tpu.memory_space<vmem>>, vector<1x1x26x9xf32>
    %66 = vector.shape_cast %65 : vector<1x1x26x9xf32> to vector<26x9xf32>
    %cst_55 = arith.constant dense<0.000000e+00> : vector<26x32xf32>
    %67 = tpu.matmul %66, %0, %cst_55 {dimension_numbers = #tpu.dot_dimension_numbers<[1], [0], [0], [1], [0, 0, 1, 1], [], []>} : vector<26x9xf32>, vector<9x32xf32>, vector<26x32xf32> -> vector<26x32xf32>
    %68 = vector.broadcast %1 : vector<1x32xf32> to vector<26x32xf32>
    %69 = arith.addf %67, %68 : vector<26x32xf32>
    %70 = math.tanh %69 : vector<26x32xf32>
    %c7_56 = arith.constant 7 : index
    %c0_57 = arith.constant 0 : index
    %c0_58 = arith.constant 0 : index
    %71 = vector.load %arg8[%c7_56, %c0_57, %c0_58] : memref<26x26x32xf32, #tpu.memory_space<vmem>>, vector<1x26x32xf32>
    %72 = vector.shape_cast %71 : vector<1x26x32xf32> to vector<26x32xf32>
    %73 = vector.shape_cast %70 : vector<26x32xf32> to vector<1x26x32xf32>
    tpu.vector_store %arg8[%c7_56, %c0_57, %c0_58], %73 {strides = array<i32>} : memref<26x26x32xf32, #tpu.memory_space<vmem>>, vector<1x26x32xf32>,
    %c0_59 = arith.constant 0 : index
    %c8 = arith.constant 8 : index
    %c0_60 = arith.constant 0 : index
    %c0_61 = arith.constant 0 : index
    %74 = vector.load %arg1[%c0_59, %c8, %c0_60, %c0_61] : memref<1x26x26x9xf32, #tpu.memory_space<vmem>>, vector<1x1x26x9xf32>
    %75 = vector.shape_cast %74 : vector<1x1x26x9xf32> to vector<26x9xf32>
    %cst_62 = arith.constant dense<0.000000e+00> : vector<26x32xf32>
    %76 = tpu.matmul %75, %0, %cst_62 {dimension_numbers = #tpu.dot_dimension_numbers<[1], [0], [0], [1], [0, 0, 1, 1], [], []>} : vector<26x9xf32>, vector<9x32xf32>, vector<26x32xf32> -> vector<26x32xf32>
    %77 = vector.broadcast %1 : vector<1x32xf32> to vector<26x32xf32>
    %78 = arith.addf %76, %77 : vector<26x32xf32>
    %79 = math.tanh %78 : vector<26x32xf32>
    %c8_63 = arith.constant 8 : index
    %c0_64 = arith.constant 0 : index
    %c0_65 = arith.constant 0 : index
    %80 = vector.load %arg8[%c8_63, %c0_64, %c0_65] : memref<26x26x32xf32, #tpu.memory_space<vmem>>, vector<1x26x32xf32>
    %81 = vector.shape_cast %80 : vector<1x26x32xf32> to vector<26x32xf32>
    %82 = vector.shape_cast %79 : vector<26x32xf32> to vector<1x26x32xf32>
    tpu.vector_store %arg8[%c8_63, %c0_64, %c0_65], %82 {strides = array<i32>} : memref<26x26x32xf32, #tpu.memory_space<vmem>>, vector<1x26x32xf32>,
    %c0_66 = arith.constant 0 : index
    %c9 = arith.constant 9 : index
    %c0_67 = arith.constant 0 : index
    %c0_68 = arith.constant 0 : index
    %83 = vector.load %arg1[%c0_66, %c9, %c0_67, %c0_68] : memref<1x26x26x9xf32, #tpu.memory_space<vmem>>, vector<1x1x26x9xf32>
    %84 = vector.shape_cast %83 : vector<1x1x26x9xf32> to vector<26x9xf32>
    %cst_69 = arith.constant dense<0.000000e+00> : vector<26x32xf32>
    %85 = tpu.matmul %84, %0, %cst_69 {dimension_numbers = #tpu.dot_dimension_numbers<[1], [0], [0], [1], [0, 0, 1, 1], [], []>} : vector<26x9xf32>, vector<9x32xf32>, vector<26x32xf32> -> vector<26x32xf32>
    %86 = vector.broadcast %1 : vector<1x32xf32> to vector<26x32xf32>
    %87 = arith.addf %85, %86 : vector<26x32xf32>
    %88 = math.tanh %87 : vector<26x32xf32>
    %c9_70 = arith.constant 9 : index
    %c0_71 = arith.constant 0 : index
    %c0_72 = arith.constant 0 : index
    %89 = vector.load %arg8[%c9_70, %c0_71, %c0_72] : memref<26x26x32xf32, #tpu.memory_space<vmem>>, vector<1x26x32xf32>
    %90 = vector.shape_cast %89 : vector<1x26x32xf32> to vector<26x32xf32>
    %91 = vector.shape_cast %88 : vector<26x32xf32> to vector<1x26x32xf32>
    tpu.vector_store %arg8[%c9_70, %c0_71, %c0_72], %91 {strides = array<i32>} : memref<26x26x32xf32, #tpu.memory_space<vmem>>, vector<1x26x32xf32>,
    %c0_73 = arith.constant 0 : index
    %c10 = arith.constant 10 : index
    %c0_74 = arith.constant 0 : index
    %c0_75 = arith.constant 0 : index
    %92 = vector.load %arg1[%c0_73, %c10, %c0_74, %c0_75] : memref<1x26x26x9xf32, #tpu.memory_space<vmem>>, vector<1x1x26x9xf32>
    %93 = vector.shape_cast %92 : vector<1x1x26x9xf32> to vector<26x9xf32>
    %cst_76 = arith.constant dense<0.000000e+00> : vector<26x32xf32>
    %94 = tpu.matmul %93, %0, %cst_76 {dimension_numbers = #tpu.dot_dimension_numbers<[1], [0], [0], [1], [0, 0, 1, 1], [], []>} : vector<26x9xf32>, vector<9x32xf32>, vector<26x32xf32> -> vector<26x32xf32>
    %95 = vector.broadcast %1 : vector<1x32xf32> to vector<26x32xf32>
    %96 = arith.addf %94, %95 : vector<26x32xf32>
    %97 = math.tanh %96 : vector<26x32xf32>
    %c10_77 = arith.constant 10 : index
    %c0_78 = arith.constant 0 : index
    %c0_79 = arith.constant 0 : index
    %98 = vector.load %arg8[%c10_77, %c0_78, %c0_79] : memref<26x26x32xf32, #tpu.memory_space<vmem>>, vector<1x26x32xf32>
    %99 = vector.shape_cast %98 : vector<1x26x32xf32> to vector<26x32xf32>
    %100 = vector.shape_cast %97 : vector<26x32xf32> to vector<1x26x32xf32>
    tpu.vector_store %arg8[%c10_77, %c0_78, %c0_79], %100 {strides = array<i32>} : memref<26x26x32xf32, #tpu.memory_space<vmem>>, vector<1x26x32xf32>,
    %c0_80 = arith.constant 0 : index
    %c11 = arith.constant 11 : index
    %c0_81 = arith.constant 0 : index
    %c0_82 = arith.constant 0 : index
    %101 = vector.load %arg1[%c0_80, %c11, %c0_81, %c0_82] : memref<1x26x26x9xf32, #tpu.memory_space<vmem>>, vector<1x1x26x9xf32>
    %102 = vector.shape_cast %101 : vector<1x1x26x9xf32> to vector<26x9xf32>
    %cst_83 = arith.constant dense<0.000000e+00> : vector<26x32xf32>
    %103 = tpu.matmul %102, %0, %cst_83 {dimension_numbers = #tpu.dot_dimension_numbers<[1], [0], [0], [1], [0, 0, 1, 1], [], []>} : vector<26x9xf32>, vector<9x32xf32>, vector<26x32xf32> -> vector<26x32xf32>
    %104 = vector.broadcast %1 : vector<1x32xf32> to vector<26x32xf32>
    %105 = arith.addf %103, %104 : vector<26x32xf32>
    %106 = math.tanh %105 : vector<26x32xf32>
    %c11_84 = arith.constant 11 : index
    %c0_85 = arith.constant 0 : index
    %c0_86 = arith.constant 0 : index
    %107 = vector.load %arg8[%c11_84, %c0_85, %c0_86] : memref<26x26x32xf32, #tpu.memory_space<vmem>>, vector<1x26x32xf32>
    %108 = vector.shape_cast %107 : vector<1x26x32xf32> to vector<26x32xf32>
    %109 = vector.shape_cast %106 : vector<26x32xf32> to vector<1x26x32xf32>
    tpu.vector_store %arg8[%c11_84, %c0_85, %c0_86], %109 {strides = array<i32>} : memref<26x26x32xf32, #tpu.memory_space<vmem>>, vector<1x26x32xf32>,
    %c0_87 = arith.constant 0 : index
    %c12 = arith.constant 12 : index
    %c0_88 = arith.constant 0 : index
    %c0_89 = arith.constant 0 : index
    %110 = vector.load %arg1[%c0_87, %c12, %c0_88, %c0_89] : memref<1x26x26x9xf32, #tpu.memory_space<vmem>>, vector<1x1x26x9xf32>
    %111 = vector.shape_cast %110 : vector<1x1x26x9xf32> to vector<26x9xf32>
    %cst_90 = arith.constant dense<0.000000e+00> : vector<26x32xf32>
    %112 = tpu.matmul %111, %0, %cst_90 {dimension_numbers = #tpu.dot_dimension_numbers<[1], [0], [0], [1], [0, 0, 1, 1], [], []>} : vector<26x9xf32>, vector<9x32xf32>, vector<26x32xf32> -> vector<26x32xf32>
    %113 = vector.broadcast %1 : vector<1x32xf32> to vector<26x32xf32>
    %114 = arith.addf %112, %113 : vector<26x32xf32>
    %115 = math.tanh %114 : vector<26x32xf32>
    %c12_91 = arith.constant 12 : index
    %c0_92 = arith.constant 0 : index
    %c0_93 = arith.constant 0 : index
    %116 = vector.load %arg8[%c12_91, %c0_92, %c0_93] : memref<26x26x32xf32, #tpu.memory_space<vmem>>, vector<1x26x32xf32>
    %117 = vector.shape_cast %116 : vector<1x26x32xf32> to vector<26x32xf32>
    %118 = vector.shape_cast %115 : vector<26x32xf32> to vector<1x26x32xf32>
    tpu.vector_store %arg8[%c12_91, %c0_92, %c0_93], %118 {strides = array<i32>} : memref<26x26x32xf32, #tpu.memory_space<vmem>>, vector<1x26x32xf32>,
    %c0_94 = arith.constant 0 : index
    %c13 = arith.constant 13 : index
    %c0_95 = arith.constant 0 : index
    %c0_96 = arith.constant 0 : index
    %119 = vector.load %arg1[%c0_94, %c13, %c0_95, %c0_96] : memref<1x26x26x9xf32, #tpu.memory_space<vmem>>, vector<1x1x26x9xf32>
    %120 = vector.shape_cast %119 : vector<1x1x26x9xf32> to vector<26x9xf32>
    %cst_97 = arith.constant dense<0.000000e+00> : vector<26x32xf32>
    %121 = tpu.matmul %120, %0, %cst_97 {dimension_numbers = #tpu.dot_dimension_numbers<[1], [0], [0], [1], [0, 0, 1, 1], [], []>} : vector<26x9xf32>, vector<9x32xf32>, vector<26x32xf32> -> vector<26x32xf32>
    %122 = vector.broadcast %1 : vector<1x32xf32> to vector<26x32xf32>
    %123 = arith.addf %121, %122 : vector<26x32xf32>
    %124 = math.tanh %123 : vector<26x32xf32>
    %c13_98 = arith.constant 13 : index
    %c0_99 = arith.constant 0 : index
    %c0_100 = arith.constant 0 : index
    %125 = vector.load %arg8[%c13_98, %c0_99, %c0_100] : memref<26x26x32xf32, #tpu.memory_space<vmem>>, vector<1x26x32xf32>
    %126 = vector.shape_cast %125 : vector<1x26x32xf32> to vector<26x32xf32>
    %127 = vector.shape_cast %124 : vector<26x32xf32> to vector<1x26x32xf32>
    tpu.vector_store %arg8[%c13_98, %c0_99, %c0_100], %127 {strides = array<i32>} : memref<26x26x32xf32, #tpu.memory_space<vmem>>, vector<1x26x32xf32>,
    %c0_101 = arith.constant 0 : index
    %c14 = arith.constant 14 : index
    %c0_102 = arith.constant 0 : index
    %c0_103 = arith.constant 0 : index
    %128 = vector.load %arg1[%c0_101, %c14, %c0_102, %c0_103] : memref<1x26x26x9xf32, #tpu.memory_space<vmem>>, vector<1x1x26x9xf32>
    %129 = vector.shape_cast %128 : vector<1x1x26x9xf32> to vector<26x9xf32>
    %cst_104 = arith.constant dense<0.000000e+00> : vector<26x32xf32>
    %130 = tpu.matmul %129, %0, %cst_104 {dimension_numbers = #tpu.dot_dimension_numbers<[1], [0], [0], [1], [0, 0, 1, 1], [], []>} : vector<26x9xf32>, vector<9x32xf32>, vector<26x32xf32> -> vector<26x32xf32>
    %131 = vector.broadcast %1 : vector<1x32xf32> to vector<26x32xf32>
    %132 = arith.addf %130, %131 : vector<26x32xf32>
    %133 = math.tanh %132 : vector<26x32xf32>
    %c14_105 = arith.constant 14 : index
    %c0_106 = arith.constant 0 : index
    %c0_107 = arith.constant 0 : index
    %134 = vector.load %arg8[%c14_105, %c0_106, %c0_107] : memref<26x26x32xf32, #tpu.memory_space<vmem>>, vector<1x26x32xf32>
    %135 = vector.shape_cast %134 : vector<1x26x32xf32> to vector<26x32xf32>
    %136 = vector.shape_cast %133 : vector<26x32xf32> to vector<1x26x32xf32>
    tpu.vector_store %arg8[%c14_105, %c0_106, %c0_107], %136 {strides = array<i32>} : memref<26x26x32xf32, #tpu.memory_space<vmem>>, vector<1x26x32xf32>,
    %c0_108 = arith.constant 0 : index
    %c15 = arith.constant 15 : index
    %c0_109 = arith.constant 0 : index
    %c0_110 = arith.constant 0 : index
    %137 = vector.load %arg1[%c0_108, %c15, %c0_109, %c0_110] : memref<1x26x26x9xf32, #tpu.memory_space<vmem>>, vector<1x1x26x9xf32>
    %138 = vector.shape_cast %137 : vector<1x1x26x9xf32> to vector<26x9xf32>
    %cst_111 = arith.constant dense<0.000000e+00> : vector<26x32xf32>
    %139 = tpu.matmul %138, %0, %cst_111 {dimension_numbers = #tpu.dot_dimension_numbers<[1], [0], [0], [1], [0, 0, 1, 1], [], []>} : vector<26x9xf32>, vector<9x32xf32>, vector<26x32xf32> -> vector<26x32xf32>
    %140 = vector.broadcast %1 : vector<1x32xf32> to vector<26x32xf32>
    %141 = arith.addf %139, %140 : vector<26x32xf32>
    %142 = math.tanh %141 : vector<26x32xf32>
    %c15_112 = arith.constant 15 : index
    %c0_113 = arith.constant 0 : index
    %c0_114 = arith.constant 0 : index
    %143 = vector.load %arg8[%c15_112, %c0_113, %c0_114] : memref<26x26x32xf32, #tpu.memory_space<vmem>>, vector<1x26x32xf32>
    %144 = vector.shape_cast %143 : vector<1x26x32xf32> to vector<26x32xf32>
    %145 = vector.shape_cast %142 : vector<26x32xf32> to vector<1x26x32xf32>
    tpu.vector_store %arg8[%c15_112, %c0_113, %c0_114], %145 {strides = array<i32>} : memref<26x26x32xf32, #tpu.memory_space<vmem>>, vector<1x26x32xf32>,
    %c0_115 = arith.constant 0 : index
    %c16 = arith.constant 16 : index
    %c0_116 = arith.constant 0 : index
    %c0_117 = arith.constant 0 : index
    %146 = vector.load %arg1[%c0_115, %c16, %c0_116, %c0_117] : memref<1x26x26x9xf32, #tpu.memory_space<vmem>>, vector<1x1x26x9xf32>
    %147 = vector.shape_cast %146 : vector<1x1x26x9xf32> to vector<26x9xf32>
    %cst_118 = arith.constant dense<0.000000e+00> : vector<26x32xf32>
    %148 = tpu.matmul %147, %0, %cst_118 {dimension_numbers = #tpu.dot_dimension_numbers<[1], [0], [0], [1], [0, 0, 1, 1], [], []>} : vector<26x9xf32>, vector<9x32xf32>, vector<26x32xf32> -> vector<26x32xf32>
    %149 = vector.broadcast %1 : vector<1x32xf32> to vector<26x32xf32>
    %150 = arith.addf %148, %149 : vector<26x32xf32>
    %151 = math.tanh %150 : vector<26x32xf32>
    %c16_119 = arith.constant 16 : index
    %c0_120 = arith.constant 0 : index
    %c0_121 = arith.constant 0 : index
    %152 = vector.load %arg8[%c16_119, %c0_120, %c0_121] : memref<26x26x32xf32, #tpu.memory_space<vmem>>, vector<1x26x32xf32>
    %153 = vector.shape_cast %152 : vector<1x26x32xf32> to vector<26x32xf32>
    %154 = vector.shape_cast %151 : vector<26x32xf32> to vector<1x26x32xf32>
    tpu.vector_store %arg8[%c16_119, %c0_120, %c0_121], %154 {strides = array<i32>} : memref<26x26x32xf32, #tpu.memory_space<vmem>>, vector<1x26x32xf32>,
    %c0_122 = arith.constant 0 : index
    %c17 = arith.constant 17 : index
    %c0_123 = arith.constant 0 : index
    %c0_124 = arith.constant 0 : index
    %155 = vector.load %arg1[%c0_122, %c17, %c0_123, %c0_124] : memref<1x26x26x9xf32, #tpu.memory_space<vmem>>, vector<1x1x26x9xf32>
    %156 = vector.shape_cast %155 : vector<1x1x26x9xf32> to vector<26x9xf32>
    %cst_125 = arith.constant dense<0.000000e+00> : vector<26x32xf32>
    %157 = tpu.matmul %156, %0, %cst_125 {dimension_numbers = #tpu.dot_dimension_numbers<[1], [0], [0], [1], [0, 0, 1, 1], [], []>} : vector<26x9xf32>, vector<9x32xf32>, vector<26x32xf32> -> vector<26x32xf32>
    %158 = vector.broadcast %1 : vector<1x32xf32> to vector<26x32xf32>
    %159 = arith.addf %157, %158 : vector<26x32xf32>
    %160 = math.tanh %159 : vector<26x32xf32>
    %c17_126 = arith.constant 17 : index
    %c0_127 = arith.constant 0 : index
    %c0_128 = arith.constant 0 : index
    %161 = vector.load %arg8[%c17_126, %c0_127, %c0_128] : memref<26x26x32xf32, #tpu.memory_space<vmem>>, vector<1x26x32xf32>
    %162 = vector.shape_cast %161 : vector<1x26x32xf32> to vector<26x32xf32>
    %163 = vector.shape_cast %160 : vector<26x32xf32> to vector<1x26x32xf32>
    tpu.vector_store %arg8[%c17_126, %c0_127, %c0_128], %163 {strides = array<i32>} : memref<26x26x32xf32, #tpu.memory_space<vmem>>, vector<1x26x32xf32>,
    %c0_129 = arith.constant 0 : index
    %c18 = arith.constant 18 : index
    %c0_130 = arith.constant 0 : index
    %c0_131 = arith.constant 0 : index
    %164 = vector.load %arg1[%c0_129, %c18, %c0_130, %c0_131] : memref<1x26x26x9xf32, #tpu.memory_space<vmem>>, vector<1x1x26x9xf32>
    %165 = vector.shape_cast %164 : vector<1x1x26x9xf32> to vector<26x9xf32>
    %cst_132 = arith.constant dense<0.000000e+00> : vector<26x32xf32>
    %166 = tpu.matmul %165, %0, %cst_132 {dimension_numbers = #tpu.dot_dimension_numbers<[1], [0], [0], [1], [0, 0, 1, 1], [], []>} : vector<26x9xf32>, vector<9x32xf32>, vector<26x32xf32> -> vector<26x32xf32>
    %167 = vector.broadcast %1 : vector<1x32xf32> to vector<26x32xf32>
    %168 = arith.addf %166, %167 : vector<26x32xf32>
    %169 = math.tanh %168 : vector<26x32xf32>
    %c18_133 = arith.constant 18 : index
    %c0_134 = arith.constant 0 : index
    %c0_135 = arith.constant 0 : index
    %170 = vector.load %arg8[%c18_133, %c0_134, %c0_135] : memref<26x26x32xf32, #tpu.memory_space<vmem>>, vector<1x26x32xf32>
    %171 = vector.shape_cast %170 : vector<1x26x32xf32> to vector<26x32xf32>
    %172 = vector.shape_cast %169 : vector<26x32xf32> to vector<1x26x32xf32>
    tpu.vector_store %arg8[%c18_133, %c0_134, %c0_135], %172 {strides = array<i32>} : memref<26x26x32xf32, #tpu.memory_space<vmem>>, vector<1x26x32xf32>,
    %c0_136 = arith.constant 0 : index
    %c19 = arith.constant 19 : index
    %c0_137 = arith.constant 0 : index
    %c0_138 = arith.constant 0 : index
    %173 = vector.load %arg1[%c0_136, %c19, %c0_137, %c0_138] : memref<1x26x26x9xf32, #tpu.memory_space<vmem>>, vector<1x1x26x9xf32>
    %174 = vector.shape_cast %173 : vector<1x1x26x9xf32> to vector<26x9xf32>
    %cst_139 = arith.constant dense<0.000000e+00> : vector<26x32xf32>
    %175 = tpu.matmul %174, %0, %cst_139 {dimension_numbers = #tpu.dot_dimension_numbers<[1], [0], [0], [1], [0, 0, 1, 1], [], []>} : vector<26x9xf32>, vector<9x32xf32>, vector<26x32xf32> -> vector<26x32xf32>
    %176 = vector.broadcast %1 : vector<1x32xf32> to vector<26x32xf32>
    %177 = arith.addf %175, %176 : vector<26x32xf32>
    %178 = math.tanh %177 : vector<26x32xf32>
    %c19_140 = arith.constant 19 : index
    %c0_141 = arith.constant 0 : index
    %c0_142 = arith.constant 0 : index
    %179 = vector.load %arg8[%c19_140, %c0_141, %c0_142] : memref<26x26x32xf32, #tpu.memory_space<vmem>>, vector<1x26x32xf32>
    %180 = vector.shape_cast %179 : vector<1x26x32xf32> to vector<26x32xf32>
    %181 = vector.shape_cast %178 : vector<26x32xf32> to vector<1x26x32xf32>
    tpu.vector_store %arg8[%c19_140, %c0_141, %c0_142], %181 {strides = array<i32>} : memref<26x26x32xf32, #tpu.memory_space<vmem>>, vector<1x26x32xf32>,
    %c0_143 = arith.constant 0 : index
    %c20 = arith.constant 20 : index
    %c0_144 = arith.constant 0 : index
    %c0_145 = arith.constant 0 : index
    %182 = vector.load %arg1[%c0_143, %c20, %c0_144, %c0_145] : memref<1x26x26x9xf32, #tpu.memory_space<vmem>>, vector<1x1x26x9xf32>
    %183 = vector.shape_cast %182 : vector<1x1x26x9xf32> to vector<26x9xf32>
    %cst_146 = arith.constant dense<0.000000e+00> : vector<26x32xf32>
    %184 = tpu.matmul %183, %0, %cst_146 {dimension_numbers = #tpu.dot_dimension_numbers<[1], [0], [0], [1], [0, 0, 1, 1], [], []>} : vector<26x9xf32>, vector<9x32xf32>, vector<26x32xf32> -> vector<26x32xf32>
    %185 = vector.broadcast %1 : vector<1x32xf32> to vector<26x32xf32>
    %186 = arith.addf %184, %185 : vector<26x32xf32>
    %187 = math.tanh %186 : vector<26x32xf32>
    %c20_147 = arith.constant 20 : index
    %c0_148 = arith.constant 0 : index
    %c0_149 = arith.constant 0 : index
    %188 = vector.load %arg8[%c20_147, %c0_148, %c0_149] : memref<26x26x32xf32, #tpu.memory_space<vmem>>, vector<1x26x32xf32>
    %189 = vector.shape_cast %188 : vector<1x26x32xf32> to vector<26x32xf32>
    %190 = vector.shape_cast %187 : vector<26x32xf32> to vector<1x26x32xf32>
    tpu.vector_store %arg8[%c20_147, %c0_148, %c0_149], %190 {strides = array<i32>} : memref<26x26x32xf32, #tpu.memory_space<vmem>>, vector<1x26x32xf32>,
    %c0_150 = arith.constant 0 : index
    %c21 = arith.constant 21 : index
    %c0_151 = arith.constant 0 : index
    %c0_152 = arith.constant 0 : index
    %191 = vector.load %arg1[%c0_150, %c21, %c0_151, %c0_152] : memref<1x26x26x9xf32, #tpu.memory_space<vmem>>, vector<1x1x26x9xf32>
    %192 = vector.shape_cast %191 : vector<1x1x26x9xf32> to vector<26x9xf32>
    %cst_153 = arith.constant dense<0.000000e+00> : vector<26x32xf32>
    %193 = tpu.matmul %192, %0, %cst_153 {dimension_numbers = #tpu.dot_dimension_numbers<[1], [0], [0], [1], [0, 0, 1, 1], [], []>} : vector<26x9xf32>, vector<9x32xf32>, vector<26x32xf32> -> vector<26x32xf32>
    %194 = vector.broadcast %1 : vector<1x32xf32> to vector<26x32xf32>
    %195 = arith.addf %193, %194 : vector<26x32xf32>
    %196 = math.tanh %195 : vector<26x32xf32>
    %c21_154 = arith.constant 21 : index
    %c0_155 = arith.constant 0 : index
    %c0_156 = arith.constant 0 : index
    %197 = vector.load %arg8[%c21_154, %c0_155, %c0_156] : memref<26x26x32xf32, #tpu.memory_space<vmem>>, vector<1x26x32xf32>
    %198 = vector.shape_cast %197 : vector<1x26x32xf32> to vector<26x32xf32>
    %199 = vector.shape_cast %196 : vector<26x32xf32> to vector<1x26x32xf32>
    tpu.vector_store %arg8[%c21_154, %c0_155, %c0_156], %199 {strides = array<i32>} : memref<26x26x32xf32, #tpu.memory_space<vmem>>, vector<1x26x32xf32>,
    %c0_157 = arith.constant 0 : index
    %c22 = arith.constant 22 : index
    %c0_158 = arith.constant 0 : index
    %c0_159 = arith.constant 0 : index
    %200 = vector.load %arg1[%c0_157, %c22, %c0_158, %c0_159] : memref<1x26x26x9xf32, #tpu.memory_space<vmem>>, vector<1x1x26x9xf32>
    %201 = vector.shape_cast %200 : vector<1x1x26x9xf32> to vector<26x9xf32>
    %cst_160 = arith.constant dense<0.000000e+00> : vector<26x32xf32>
    %202 = tpu.matmul %201, %0, %cst_160 {dimension_numbers = #tpu.dot_dimension_numbers<[1], [0], [0], [1], [0, 0, 1, 1], [], []>} : vector<26x9xf32>, vector<9x32xf32>, vector<26x32xf32> -> vector<26x32xf32>
    %203 = vector.broadcast %1 : vector<1x32xf32> to vector<26x32xf32>
    %204 = arith.addf %202, %203 : vector<26x32xf32>
    %205 = math.tanh %204 : vector<26x32xf32>
    %c22_161 = arith.constant 22 : index
    %c0_162 = arith.constant 0 : index
    %c0_163 = arith.constant 0 : index
    %206 = vector.load %arg8[%c22_161, %c0_162, %c0_163] : memref<26x26x32xf32, #tpu.memory_space<vmem>>, vector<1x26x32xf32>
    %207 = vector.shape_cast %206 : vector<1x26x32xf32> to vector<26x32xf32>
    %208 = vector.shape_cast %205 : vector<26x32xf32> to vector<1x26x32xf32>
    tpu.vector_store %arg8[%c22_161, %c0_162, %c0_163], %208 {strides = array<i32>} : memref<26x26x32xf32, #tpu.memory_space<vmem>>, vector<1x26x32xf32>,
    %c0_164 = arith.constant 0 : index
    %c23 = arith.constant 23 : index
    %c0_165 = arith.constant 0 : index
    %c0_166 = arith.constant 0 : index
    %209 = vector.load %arg1[%c0_164, %c23, %c0_165, %c0_166] : memref<1x26x26x9xf32, #tpu.memory_space<vmem>>, vector<1x1x26x9xf32>
    %210 = vector.shape_cast %209 : vector<1x1x26x9xf32> to vector<26x9xf32>
    %cst_167 = arith.constant dense<0.000000e+00> : vector<26x32xf32>
    %211 = tpu.matmul %210, %0, %cst_167 {dimension_numbers = #tpu.dot_dimension_numbers<[1], [0], [0], [1], [0, 0, 1, 1], [], []>} : vector<26x9xf32>, vector<9x32xf32>, vector<26x32xf32> -> vector<26x32xf32>
    %212 = vector.broadcast %1 : vector<1x32xf32> to vector<26x32xf32>
    %213 = arith.addf %211, %212 : vector<26x32xf32>
    %214 = math.tanh %213 : vector<26x32xf32>
    %c23_168 = arith.constant 23 : index
    %c0_169 = arith.constant 0 : index
    %c0_170 = arith.constant 0 : index
    %215 = vector.load %arg8[%c23_168, %c0_169, %c0_170] : memref<26x26x32xf32, #tpu.memory_space<vmem>>, vector<1x26x32xf32>
    %216 = vector.shape_cast %215 : vector<1x26x32xf32> to vector<26x32xf32>
    %217 = vector.shape_cast %214 : vector<26x32xf32> to vector<1x26x32xf32>
    tpu.vector_store %arg8[%c23_168, %c0_169, %c0_170], %217 {strides = array<i32>} : memref<26x26x32xf32, #tpu.memory_space<vmem>>, vector<1x26x32xf32>,
    %c0_171 = arith.constant 0 : index
    %c24 = arith.constant 24 : index
    %c0_172 = arith.constant 0 : index
    %c0_173 = arith.constant 0 : index
    %218 = vector.load %arg1[%c0_171, %c24, %c0_172, %c0_173] : memref<1x26x26x9xf32, #tpu.memory_space<vmem>>, vector<1x1x26x9xf32>
    %219 = vector.shape_cast %218 : vector<1x1x26x9xf32> to vector<26x9xf32>
    %cst_174 = arith.constant dense<0.000000e+00> : vector<26x32xf32>
    %220 = tpu.matmul %219, %0, %cst_174 {dimension_numbers = #tpu.dot_dimension_numbers<[1], [0], [0], [1], [0, 0, 1, 1], [], []>} : vector<26x9xf32>, vector<9x32xf32>, vector<26x32xf32> -> vector<26x32xf32>
    %221 = vector.broadcast %1 : vector<1x32xf32> to vector<26x32xf32>
    %222 = arith.addf %220, %221 : vector<26x32xf32>
    %223 = math.tanh %222 : vector<26x32xf32>
    %c24_175 = arith.constant 24 : index
    %c0_176 = arith.constant 0 : index
    %c0_177 = arith.constant 0 : index
    %224 = vector.load %arg8[%c24_175, %c0_176, %c0_177] : memref<26x26x32xf32, #tpu.memory_space<vmem>>, vector<1x26x32xf32>
    %225 = vector.shape_cast %224 : vector<1x26x32xf32> to vector<26x32xf32>
    %226 = vector.shape_cast %223 : vector<26x32xf32> to vector<1x26x32xf32>
    tpu.vector_store %arg8[%c24_175, %c0_176, %c0_177], %226 {strides = array<i32>} : memref<26x26x32xf32, #tpu.memory_space<vmem>>, vector<1x26x32xf32>,
    %c0_178 = arith.constant 0 : index
    %c25 = arith.constant 25 : index
    %c0_179 = arith.constant 0 : index
    %c0_180 = arith.constant 0 : index
    %227 = vector.load %arg1[%c0_178, %c25, %c0_179, %c0_180] : memref<1x26x26x9xf32, #tpu.memory_space<vmem>>, vector<1x1x26x9xf32>
    %228 = vector.shape_cast %227 : vector<1x1x26x9xf32> to vector<26x9xf32>
    %cst_181 = arith.constant dense<0.000000e+00> : vector<26x32xf32>
    %229 = tpu.matmul %228, %0, %cst_181 {dimension_numbers = #tpu.dot_dimension_numbers<[1], [0], [0], [1], [0, 0, 1, 1], [], []>} : vector<26x9xf32>, vector<9x32xf32>, vector<26x32xf32> -> vector<26x32xf32>
    %230 = vector.broadcast %1 : vector<1x32xf32> to vector<26x32xf32>
    %231 = arith.addf %229, %230 : vector<26x32xf32>
    %232 = math.tanh %231 : vector<26x32xf32>
    %c25_182 = arith.constant 25 : index
    %c0_183 = arith.constant 0 : index
    %c0_184 = arith.constant 0 : index
    %233 = vector.load %arg8[%c25_182, %c0_183, %c0_184] : memref<26x26x32xf32, #tpu.memory_space<vmem>>, vector<1x26x32xf32>
    %234 = vector.shape_cast %233 : vector<1x26x32xf32> to vector<26x32xf32>
    %235 = vector.shape_cast %232 : vector<26x32xf32> to vector<1x26x32xf32>
    tpu.vector_store %arg8[%c25_182, %c0_183, %c0_184], %235 {strides = array<i32>} : memref<26x26x32xf32, #tpu.memory_space<vmem>>, vector<1x26x32xf32>,
    %cst_185 = arith.constant 0.000000e+00 : f32
    %236 = vector.broadcast %cst_185 : f32 to vector<576x64xf32>
    %c0_186 = arith.constant 0 : index
    %c0_187 = arith.constant 0 : index
    %c0_188 = arith.constant 0 : index
    %237 = vector.load %arg8[%c0_186, %c0_187, %c0_188] : memref<26x26x32xf32, #tpu.memory_space<vmem>>, vector<24x24x32xf32>
    %238 = vector.shape_cast %237 : vector<24x24x32xf32> to vector<576x32xf32>
    %239 = arith.truncf %238 : vector<576x32xf32> to vector<576x32xbf16>
    %c0_189 = arith.constant 0 : index
    %c0_190 = arith.constant 0 : index
    %c0_191 = arith.constant 0 : index
    %240 = vector.load %arg4[%c0_189, %c0_190, %c0_191] : memref<9x32x64xbf16, #tpu.memory_space<vmem>>, vector<1x32x64xbf16>
    %241 = vector.shape_cast %240 : vector<1x32x64xbf16> to vector<32x64xbf16>
    %cst_192 = arith.constant dense<0.000000e+00> : vector<576x64xf32>
    %242 = tpu.matmul %239, %241, %cst_192 {dimension_numbers = #tpu.dot_dimension_numbers<[1], [0], [0], [1], [0, 0, 1, 1], [], []>} : vector<576x32xbf16>, vector<32x64xbf16>, vector<576x64xf32> -> vector<576x64xf32>
    %243 = arith.addf %236, %242 : vector<576x64xf32>
    %c0_193 = arith.constant 0 : index
    %c1_194 = arith.constant 1 : index
    %c0_195 = arith.constant 0 : index
    %244 = vector.load %arg8[%c0_193, %c1_194, %c0_195] : memref<26x26x32xf32, #tpu.memory_space<vmem>>, vector<24x24x32xf32>
    %245 = vector.shape_cast %244 : vector<24x24x32xf32> to vector<576x32xf32>
    %246 = arith.truncf %245 : vector<576x32xf32> to vector<576x32xbf16>
    %c1_196 = arith.constant 1 : index
    %c0_197 = arith.constant 0 : index
    %c0_198 = arith.constant 0 : index
    %247 = vector.load %arg4[%c1_196, %c0_197, %c0_198] : memref<9x32x64xbf16, #tpu.memory_space<vmem>>, vector<1x32x64xbf16>
    %248 = vector.shape_cast %247 : vector<1x32x64xbf16> to vector<32x64xbf16>
    %cst_199 = arith.constant dense<0.000000e+00> : vector<576x64xf32>
    %249 = tpu.matmul %246, %248, %cst_199 {dimension_numbers = #tpu.dot_dimension_numbers<[1], [0], [0], [1], [0, 0, 1, 1], [], []>} : vector<576x32xbf16>, vector<32x64xbf16>, vector<576x64xf32> -> vector<576x64xf32>
    %250 = arith.addf %243, %249 : vector<576x64xf32>
    %c0_200 = arith.constant 0 : index
    %c2_201 = arith.constant 2 : index
    %c0_202 = arith.constant 0 : index
    %251 = vector.load %arg8[%c0_200, %c2_201, %c0_202] : memref<26x26x32xf32, #tpu.memory_space<vmem>>, vector<24x24x32xf32>
    %252 = vector.shape_cast %251 : vector<24x24x32xf32> to vector<576x32xf32>
    %253 = arith.truncf %252 : vector<576x32xf32> to vector<576x32xbf16>
    %c2_203 = arith.constant 2 : index
    %c0_204 = arith.constant 0 : index
    %c0_205 = arith.constant 0 : index
    %254 = vector.load %arg4[%c2_203, %c0_204, %c0_205] : memref<9x32x64xbf16, #tpu.memory_space<vmem>>, vector<1x32x64xbf16>
    %255 = vector.shape_cast %254 : vector<1x32x64xbf16> to vector<32x64xbf16>
    %cst_206 = arith.constant dense<0.000000e+00> : vector<576x64xf32>
    %256 = tpu.matmul %253, %255, %cst_206 {dimension_numbers = #tpu.dot_dimension_numbers<[1], [0], [0], [1], [0, 0, 1, 1], [], []>} : vector<576x32xbf16>, vector<32x64xbf16>, vector<576x64xf32> -> vector<576x64xf32>
    %257 = arith.addf %250, %256 : vector<576x64xf32>
    %c1_207 = arith.constant 1 : index
    %c0_208 = arith.constant 0 : index
    %c0_209 = arith.constant 0 : index
    %258 = vector.load %arg8[%c1_207, %c0_208, %c0_209] : memref<26x26x32xf32, #tpu.memory_space<vmem>>, vector<24x24x32xf32>
    %259 = vector.shape_cast %258 : vector<24x24x32xf32> to vector<576x32xf32>
    %260 = arith.truncf %259 : vector<576x32xf32> to vector<576x32xbf16>
    %c3_210 = arith.constant 3 : index
    %c0_211 = arith.constant 0 : index
    %c0_212 = arith.constant 0 : index
    %261 = vector.load %arg4[%c3_210, %c0_211, %c0_212] : memref<9x32x64xbf16, #tpu.memory_space<vmem>>, vector<1x32x64xbf16>
    %262 = vector.shape_cast %261 : vector<1x32x64xbf16> to vector<32x64xbf16>
    %cst_213 = arith.constant dense<0.000000e+00> : vector<576x64xf32>
    %263 = tpu.matmul %260, %262, %cst_213 {dimension_numbers = #tpu.dot_dimension_numbers<[1], [0], [0], [1], [0, 0, 1, 1], [], []>} : vector<576x32xbf16>, vector<32x64xbf16>, vector<576x64xf32> -> vector<576x64xf32>
    %264 = arith.addf %257, %263 : vector<576x64xf32>
    %c1_214 = arith.constant 1 : index
    %c1_215 = arith.constant 1 : index
    %c0_216 = arith.constant 0 : index
    %265 = vector.load %arg8[%c1_214, %c1_215, %c0_216] : memref<26x26x32xf32, #tpu.memory_space<vmem>>, vector<24x24x32xf32>
    %266 = vector.shape_cast %265 : vector<24x24x32xf32> to vector<576x32xf32>
    %267 = arith.truncf %266 : vector<576x32xf32> to vector<576x32xbf16>
    %c4_217 = arith.constant 4 : index
    %c0_218 = arith.constant 0 : index
    %c0_219 = arith.constant 0 : index
    %268 = vector.load %arg4[%c4_217, %c0_218, %c0_219] : memref<9x32x64xbf16, #tpu.memory_space<vmem>>, vector<1x32x64xbf16>
    %269 = vector.shape_cast %268 : vector<1x32x64xbf16> to vector<32x64xbf16>
    %cst_220 = arith.constant dense<0.000000e+00> : vector<576x64xf32>
    %270 = tpu.matmul %267, %269, %cst_220 {dimension_numbers = #tpu.dot_dimension_numbers<[1], [0], [0], [1], [0, 0, 1, 1], [], []>} : vector<576x32xbf16>, vector<32x64xbf16>, vector<576x64xf32> -> vector<576x64xf32>
    %271 = arith.addf %264, %270 : vector<576x64xf32>
    %c1_221 = arith.constant 1 : index
    %c2_222 = arith.constant 2 : index
    %c0_223 = arith.constant 0 : index
    %272 = vector.load %arg8[%c1_221, %c2_222, %c0_223] : memref<26x26x32xf32, #tpu.memory_space<vmem>>, vector<24x24x32xf32>
    %273 = vector.shape_cast %272 : vector<24x24x32xf32> to vector<576x32xf32>
    %274 = arith.truncf %273 : vector<576x32xf32> to vector<576x32xbf16>
    %c5_224 = arith.constant 5 : index
    %c0_225 = arith.constant 0 : index
    %c0_226 = arith.constant 0 : index
    %275 = vector.load %arg4[%c5_224, %c0_225, %c0_226] : memref<9x32x64xbf16, #tpu.memory_space<vmem>>, vector<1x32x64xbf16>
    %276 = vector.shape_cast %275 : vector<1x32x64xbf16> to vector<32x64xbf16>
    %cst_227 = arith.constant dense<0.000000e+00> : vector<576x64xf32>
    %277 = tpu.matmul %274, %276, %cst_227 {dimension_numbers = #tpu.dot_dimension_numbers<[1], [0], [0], [1], [0, 0, 1, 1], [], []>} : vector<576x32xbf16>, vector<32x64xbf16>, vector<576x64xf32> -> vector<576x64xf32>
    %278 = arith.addf %271, %277 : vector<576x64xf32>
    %c2_228 = arith.constant 2 : index
    %c0_229 = arith.constant 0 : index
    %c0_230 = arith.constant 0 : index
    %279 = vector.load %arg8[%c2_228, %c0_229, %c0_230] : memref<26x26x32xf32, #tpu.memory_space<vmem>>, vector<24x24x32xf32>
    %280 = vector.shape_cast %279 : vector<24x24x32xf32> to vector<576x32xf32>
    %281 = arith.truncf %280 : vector<576x32xf32> to vector<576x32xbf16>
    %c6_231 = arith.constant 6 : index
    %c0_232 = arith.constant 0 : index
    %c0_233 = arith.constant 0 : index
    %282 = vector.load %arg4[%c6_231, %c0_232, %c0_233] : memref<9x32x64xbf16, #tpu.memory_space<vmem>>, vector<1x32x64xbf16>
    %283 = vector.shape_cast %282 : vector<1x32x64xbf16> to vector<32x64xbf16>
    %cst_234 = arith.constant dense<0.000000e+00> : vector<576x64xf32>
    %284 = tpu.matmul %281, %283, %cst_234 {dimension_numbers = #tpu.dot_dimension_numbers<[1], [0], [0], [1], [0, 0, 1, 1], [], []>} : vector<576x32xbf16>, vector<32x64xbf16>, vector<576x64xf32> -> vector<576x64xf32>
    %285 = arith.addf %278, %284 : vector<576x64xf32>
    %c2_235 = arith.constant 2 : index
    %c1_236 = arith.constant 1 : index
    %c0_237 = arith.constant 0 : index
    %286 = vector.load %arg8[%c2_235, %c1_236, %c0_237] : memref<26x26x32xf32, #tpu.memory_space<vmem>>, vector<24x24x32xf32>
    %287 = vector.shape_cast %286 : vector<24x24x32xf32> to vector<576x32xf32>
    %288 = arith.truncf %287 : vector<576x32xf32> to vector<576x32xbf16>
    %c7_238 = arith.constant 7 : index
    %c0_239 = arith.constant 0 : index
    %c0_240 = arith.constant 0 : index
    %289 = vector.load %arg4[%c7_238, %c0_239, %c0_240] : memref<9x32x64xbf16, #tpu.memory_space<vmem>>, vector<1x32x64xbf16>
    %290 = vector.shape_cast %289 : vector<1x32x64xbf16> to vector<32x64xbf16>
    %cst_241 = arith.constant dense<0.000000e+00> : vector<576x64xf32>
    %291 = tpu.matmul %288, %290, %cst_241 {dimension_numbers = #tpu.dot_dimension_numbers<[1], [0], [0], [1], [0, 0, 1, 1], [], []>} : vector<576x32xbf16>, vector<32x64xbf16>, vector<576x64xf32> -> vector<576x64xf32>
    %292 = arith.addf %285, %291 : vector<576x64xf32>
    %c2_242 = arith.constant 2 : index
    %c2_243 = arith.constant 2 : index
    %c0_244 = arith.constant 0 : index
    %293 = vector.load %arg8[%c2_242, %c2_243, %c0_244] : memref<26x26x32xf32, #tpu.memory_space<vmem>>, vector<24x24x32xf32>
    %294 = vector.shape_cast %293 : vector<24x24x32xf32> to vector<576x32xf32>
    %295 = arith.truncf %294 : vector<576x32xf32> to vector<576x32xbf16>
    %c8_245 = arith.constant 8 : index
    %c0_246 = arith.constant 0 : index
    %c0_247 = arith.constant 0 : index
    %296 = vector.load %arg4[%c8_245, %c0_246, %c0_247] : memref<9x32x64xbf16, #tpu.memory_space<vmem>>, vector<1x32x64xbf16>
    %297 = vector.shape_cast %296 : vector<1x32x64xbf16> to vector<32x64xbf16>
    %cst_248 = arith.constant dense<0.000000e+00> : vector<576x64xf32>
    %298 = tpu.matmul %295, %297, %cst_248 {dimension_numbers = #tpu.dot_dimension_numbers<[1], [0], [0], [1], [0, 0, 1, 1], [], []>} : vector<576x32xbf16>, vector<32x64xbf16>, vector<576x64xf32> -> vector<576x64xf32>
    %299 = arith.addf %292, %298 : vector<576x64xf32>
    %c0_249 = arith.constant 0 : index
    %c0_250 = arith.constant 0 : index
    %300 = vector.load %arg5[%c0_249, %c0_250] : memref<1x64xf32, #tpu.memory_space<vmem>>, vector<1x64xf32>
    %301 = vector.broadcast %300 : vector<1x64xf32> to vector<576x64xf32>
    %302 = arith.addf %299, %301 : vector<576x64xf32>
    %303 = math.tanh %302 : vector<576x64xf32>
    %c0_251 = arith.constant 0 : index
    %c0_252 = arith.constant 0 : index
    %304 = vector.load %arg6[%c0_251, %c0_252] : memref<144x576xbf16, #tpu.memory_space<vmem>>, vector<144x576xbf16>
    %305 = arith.truncf %303 : vector<576x64xf32> to vector<576x64xbf16>
    %cst_253 = arith.constant dense<0.000000e+00> : vector<144x64xf32>
    %306 = tpu.matmul %304, %305, %cst_253 {dimension_numbers = #tpu.dot_dimension_numbers<[1], [0], [0], [1], [0, 0, 1, 1], [], []>} : vector<144x576xbf16>, vector<576x64xbf16>, vector<144x64xf32> -> vector<144x64xf32>
    %307 = arith.truncf %306 : vector<144x64xf32> to vector<144x64xbf16>
    %c0_254 = arith.constant 0 : index
    %c0_255 = arith.constant 0 : index
    %c0_256 = arith.constant 0 : index
    %308 = vector.load %arg7[%c0_254, %c0_255, %c0_256] : memref<1x144x64xbf16, #tpu.memory_space<vmem>>, vector<1x144x64xbf16>
    %309 = vector.shape_cast %308 : vector<1x144x64xbf16> to vector<144x64xbf16>
    %310 = vector.shape_cast %307 : vector<144x64xbf16> to vector<1x144x64xbf16>
    tpu.vector_store %arg7[%c0_254, %c0_255, %c0_256], %310 {strides = array<i32>} : memref<1x144x64xbf16, #tpu.memory_space<vmem>>, vector<1x144x64xbf16>,
    return
  }
  func.func @transform_0(%arg0: i32) -> (i32, i32, i32, i32) {
    %c0_i32 = arith.constant 0 : i32
    %c0_i32_0 = arith.constant 0 : i32
    %c0_i32_1 = arith.constant 0 : i32
    %c0_i32_2 = arith.constant 0 : i32
    return %arg0, %c0_i32, %c0_i32_0, %c0_i32_1 : i32, i32, i32, i32
  }
  func.func @transform_1(%arg0: i32) -> (i32, i32) {
    %c0_i32 = arith.constant 0 : i32
    %c0_i32_0 = arith.constant 0 : i32
    %c0_i32_1 = arith.constant 0 : i32
    return %c0_i32, %c0_i32_0 : i32, i32
  }
  func.func @transform_2(%arg0: i32) -> (i32, i32) {
    %c0_i32 = arith.constant 0 : i32
    %c0_i32_0 = arith.constant 0 : i32
    %c0_i32_1 = arith.constant 0 : i32
    return %c0_i32, %c0_i32_0 : i32, i32
  }
  func.func @transform_3(%arg0: i32) -> (i32, i32, i32) {
    %c0_i32 = arith.constant 0 : i32
    %c0_i32_0 = arith.constant 0 : i32
    %c0_i32_1 = arith.constant 0 : i32
    %c0_i32_2 = arith.constant 0 : i32
    return %c0_i32, %c0_i32_0, %c0_i32_1 : i32, i32, i32
  }
  func.func @transform_4(%arg0: i32) -> (i32, i32) {
    %c0_i32 = arith.constant 0 : i32
    %c0_i32_0 = arith.constant 0 : i32
    %c0_i32_1 = arith.constant 0 : i32
    return %c0_i32, %c0_i32_0 : i32, i32
  }
  func.func @transform_5(%arg0: i32) -> (i32, i32) {
    %c0_i32 = arith.constant 0 : i32
    %c0_i32_0 = arith.constant 0 : i32
    %c0_i32_1 = arith.constant 0 : i32
    return %c0_i32, %c0_i32_0 : i32, i32
  }
  func.func @transform_6(%arg0: i32) -> (i32, i32, i32) {
    %c0_i32 = arith.constant 0 : i32
    %c0_i32_0 = arith.constant 0 : i32
    %c0_i32_1 = arith.constant 0 : i32
    return %arg0, %c0_i32, %c0_i32_0 : i32, i32, i32
  }
}

module attributes {stable_mosaic.version = 11 : i64} {
  func.func @head_kernel(%arg0: i32, %arg1: memref<2x9216xbf16, #tpu.memory_space<vmem>>, %arg2: memref<9216x128xbf16, #tpu.memory_space<vmem>>, %arg3: memref<1x128xf32, #tpu.memory_space<vmem>>, %arg4: memref<128x10xf32, #tpu.memory_space<vmem>>, %arg5: memref<1x10xf32, #tpu.memory_space<vmem>>, %arg6: memref<2x10xf32, #tpu.memory_space<vmem>>) attributes {dimension_semantics = [#tpu.dimension_semantics<parallel>], iteration_bounds = array<i64: 1>, scalar_prefetch = 0 : i64, scratch_operands = 0 : i64, tpu.core_type = #tpu.core_type<tc>, window_params = [{transform_indices = @transform_0, window_bounds = array<i64: 2, 9216>}, {pipeline_mode = #tpu.pipeline_mode<synchronous>, transform_indices = @transform_1, window_bounds = array<i64: 9216, 128>}, {pipeline_mode = #tpu.pipeline_mode<synchronous>, transform_indices = @transform_2, window_bounds = array<i64: 1, 128>}, {pipeline_mode = #tpu.pipeline_mode<synchronous>, transform_indices = @transform_3, window_bounds = array<i64: 128, 10>}, {pipeline_mode = #tpu.pipeline_mode<synchronous>, transform_indices = @transform_4, window_bounds = array<i64: 1, 10>}, {transform_indices = @transform_5, window_bounds = array<i64: 2, 10>}]} {
    %c0 = arith.constant 0 : index
    %c0_0 = arith.constant 0 : index
    %0 = vector.load %arg1[%c0, %c0_0] : memref<2x9216xbf16, #tpu.memory_space<vmem>>, vector<2x9216xbf16>
    %c0_1 = arith.constant 0 : index
    %c0_2 = arith.constant 0 : index
    %1 = vector.load %arg2[%c0_1, %c0_2] : memref<9216x128xbf16, #tpu.memory_space<vmem>>, vector<9216x128xbf16>
    %cst = arith.constant dense<0.000000e+00> : vector<2x128xf32>
    %2 = tpu.matmul %0, %1, %cst {dimension_numbers = #tpu.dot_dimension_numbers<[1], [0], [0], [1], [0, 0, 1, 1], [], []>} : vector<2x9216xbf16>, vector<9216x128xbf16>, vector<2x128xf32> -> vector<2x128xf32>
    %c0_3 = arith.constant 0 : index
    %c0_4 = arith.constant 0 : index
    %3 = vector.load %arg3[%c0_3, %c0_4] : memref<1x128xf32, #tpu.memory_space<vmem>>, vector<1x128xf32>
    %4 = vector.broadcast %3 : vector<1x128xf32> to vector<2x128xf32>
    %5 = arith.addf %2, %4 : vector<2x128xf32>
    %6 = math.tanh %5 : vector<2x128xf32>
    %c0_5 = arith.constant 0 : index
    %c0_6 = arith.constant 0 : index
    %7 = vector.load %arg4[%c0_5, %c0_6] : memref<128x10xf32, #tpu.memory_space<vmem>>, vector<128x10xf32>
    %cst_7 = arith.constant dense<0.000000e+00> : vector<2x10xf32>
    %8 = tpu.matmul %6, %7, %cst_7 {dimension_numbers = #tpu.dot_dimension_numbers<[1], [0], [0], [1], [0, 0, 1, 1], [], []>} : vector<2x128xf32>, vector<128x10xf32>, vector<2x10xf32> -> vector<2x10xf32>
    %c0_8 = arith.constant 0 : index
    %c0_9 = arith.constant 0 : index
    %9 = vector.load %arg5[%c0_8, %c0_9] : memref<1x10xf32, #tpu.memory_space<vmem>>, vector<1x10xf32>
    %10 = vector.broadcast %9 : vector<1x10xf32> to vector<2x10xf32>
    %11 = arith.addf %8, %10 : vector<2x10xf32>
    %cst_10 = arith.constant dense<0xFF800000> : vector<2xf32>
    %12 = vector.multi_reduction <maximumf>, %11, %cst_10 [1] : vector<2x10xf32> to vector<2xf32>
    %13 = vector.shape_cast %12 : vector<2xf32> to vector<2x1xf32>
    %14 = vector.broadcast %13 : vector<2x1xf32> to vector<2x10xf32>
    %15 = arith.subf %11, %14 : vector<2x10xf32>
    %16 = math.exp %15 : vector<2x10xf32>
    %cst_11 = arith.constant dense<0.000000e+00> : vector<2xf32>
    %17 = vector.multi_reduction <add>, %16, %cst_11 [1] : vector<2x10xf32> to vector<2xf32>
    %18 = vector.shape_cast %17 : vector<2xf32> to vector<2x1xf32>
    %19 = vector.broadcast %13 : vector<2x1xf32> to vector<2x10xf32>
    %20 = arith.subf %11, %19 : vector<2x10xf32>
    %21 = math.log %18 : vector<2x1xf32>
    %22 = vector.broadcast %21 : vector<2x1xf32> to vector<2x10xf32>
    %23 = arith.subf %20, %22 : vector<2x10xf32>
    %c0_12 = arith.constant 0 : index
    %c0_13 = arith.constant 0 : index
    %24 = vector.load %arg6[%c0_12, %c0_13] : memref<2x10xf32, #tpu.memory_space<vmem>>, vector<2x10xf32>
    tpu.vector_store %arg6[%c0_12, %c0_13], %23 {strides = array<i32>} : memref<2x10xf32, #tpu.memory_space<vmem>>, vector<2x10xf32>,
    return
  }
  func.func @transform_0(%arg0: i32) -> (i32, i32) {
    %c0_i32 = arith.constant 0 : i32
    %c0_i32_0 = arith.constant 0 : i32
    return %arg0, %c0_i32 : i32, i32
  }
  func.func @transform_1(%arg0: i32) -> (i32, i32) {
    %c0_i32 = arith.constant 0 : i32
    %c0_i32_0 = arith.constant 0 : i32
    %c0_i32_1 = arith.constant 0 : i32
    return %c0_i32, %c0_i32_0 : i32, i32
  }
  func.func @transform_2(%arg0: i32) -> (i32, i32) {
    %c0_i32 = arith.constant 0 : i32
    %c0_i32_0 = arith.constant 0 : i32
    %c0_i32_1 = arith.constant 0 : i32
    return %c0_i32, %c0_i32_0 : i32, i32
  }
  func.func @transform_3(%arg0: i32) -> (i32, i32) {
    %c0_i32 = arith.constant 0 : i32
    %c0_i32_0 = arith.constant 0 : i32
    %c0_i32_1 = arith.constant 0 : i32
    return %c0_i32, %c0_i32_0 : i32, i32
  }
  func.func @transform_4(%arg0: i32) -> (i32, i32) {
    %c0_i32 = arith.constant 0 : i32
    %c0_i32_0 = arith.constant 0 : i32
    %c0_i32_1 = arith.constant 0 : i32
    return %c0_i32, %c0_i32_0 : i32, i32
  }
  func.func @transform_5(%arg0: i32) -> (i32, i32) {
    %c0_i32 = arith.constant 0 : i32
    %c0_i32_0 = arith.constant 0 : i32
    return %arg0, %c0_i32 : i32, i32
  }
}

</mosaic_0001>

<llo_original>
// kernel: net_forward.2
$region0: #{net_forward.2}
  #allocation0 [shape = 'u32[]', space=smem, size = 0x4, offset = 0x4, fixed_abs, tag = 'smem constant byte address 0x4 - core index']
  #allocation1 [shape = 'u32[72,128]{1,0:T(1,128)}', space=vmem, size = 0x9000, scoped, tag = 'internal scratch']
  #allocation2 [shape = 'f32[26,26,32]{2,1,0:T(8,128)}', space=vmem, size = 0x68000, scoped, tag = 'scratch operand']
  %s0 = inlined_call_operand.vmem [shape: f32[2,26,26,9], index: 0, kind: input, shape index: {}]
  %s1 = inlined_call_operand.vmem [shape: f32[9,32], index: 1, kind: input, shape index: {}]
  %s2 = inlined_call_operand.vmem [shape: f32[1,32], index: 2, kind: input, shape index: {}]
  %s3 = inlined_call_operand.vmem [shape: bf16[9,32,64], index: 3, kind: input, shape index: {}]
  %s4 = inlined_call_operand.vmem [shape: f32[1,64], index: 4, kind: input, shape index: {}]
  %s5 = inlined_call_operand.vmem [shape: bf16[144,576], index: 5, kind: input, shape index: {}]
  %s6 = inlined_call_operand.vmem [shape: bf16[2,144,64], index: 6, kind: output, shape index: {}]
  %s7 = sld [smem:[#allocation0]]
  $region57: #{net_forward.2} parent=0
    _
  %s9 = ssub.s32 1, %s7
  %s10 = scalar_select 0, %s9, %s7
  loop: start=0, step=1, limit=4
  $region2: #{net_forward.2} parent=0 // loop_pre_header
    _
  $region3: #{net_forward.2} parent=0 // loop_header
    %s12 = sphi 0, %s16
    %p13 = scmp.ge.s32.totalorder %s12, 4
    %s22 = sphi 0, %s24
    %s25 = sphi 0, %s22
    %s26 = sphi 0, %s25
    %s42 = sphi 0, %s26
    %s46 = sphi 0, %s46
    %s48 = sphi 0, %s46
    %s49 = sphi 0, %s48
    %s63 = sphi 0, %s49
    %s67 = sphi 0, %s67
    %s69 = sphi 0, %s67
    %s70 = sphi 0, %s69
    %s84 = sphi 0, %s70
    %s88 = sphi 0, %s88
    %s90 = sphi 0, %s88
    %s91 = sphi 0, %s90
    %s105 = sphi 0, %s91
    %s109 = sphi 0, %s109
    %s111 = sphi 0, %s109
    %s112 = sphi 0, %s111
    %s126 = sphi 0, %s112
    %s130 = sphi 0, %s130
    %s132 = sphi 0, %s130
    %s133 = sphi 0, %s132
    %s147 = sphi 0, %s133
    %s153 = sphi 0, %s155
    %s156 = sphi 0, %s153
    %s157 = sphi 0, %s156
    %s173 = sphi 0, %s157
  $region4: #{net_forward.2} parent=0 // loop_header_branch
    %15 = sbr.rel (%p13) target = $region8
  $region5: #{net_forward.2} parent=0 // loop_body
    %s17 = ssub.s32 %s12, 1
    %s18 = ssub.s32 %s12, 2
    %s19 = sadd.s32 %s12, 1
    %s20 = ssub.s32 %s12, %s19
    %p21 = scmp.eq.s32.totalorder %s20, 0
    %s23 = sadd.s32 %s22, 1
    %s24 = scalar_select %p21, %s22, %s23
    %p27 = pneg %p21
    %p28 = scmp.eq.s32.totalorder %s12, 1
    %p29 = por %p27, %p28
    %p30 = scmp.ne.s32.totalorder %s22, %s25
    %p31 = scmp.eq.s32.totalorder %s12, 0
    %p32 = por %p30, %p31
    %p33 = scmp.ne.s32.totalorder %s22, %s25
    %p34 = scmp.eq.s32.totalorder %s17, 1
    %p35 = por %p33, %p34
    %p36 = scmp.ne.s32.totalorder %s25, %s26
    %p37 = scmp.eq.s32.totalorder %s17, 0
    %p38 = por %p36, %p37
    %p39 = scmp.ne.s32.totalorder %s25, %s26
    %p40 = scmp.eq.s32.totalorder %s18, 1
    %p41 = por %p39, %p40
    %p43 = scmp.ne.s32.totalorder %s26, %s42
    %p44 = scmp.eq.s32.totalorder %s18, 0
    %p45 = por %p43, %p44
    %s47 = sadd.s32 %s46, 1
    %p50 = scmp.eq.s32.totalorder %s12, 1
    %p51 = scmp.ne.s32.totalorder %s46, %s48
    %p52 = scmp.eq.s32.totalorder %s12, 0
    %p53 = por %p51, %p52
    %p54 = scmp.ne.s32.totalorder %s46, %s48
    %p55 = scmp.eq.s32.totalorder %s17, 1
    %p56 = por %p54, %p55
    %p57 = scmp.ne.s32.totalorder %s48, %s49
    %p58 = scmp.eq.s32.totalorder %s17, 0
    %p59 = por %p57, %p58
    %p60 = scmp.ne.s32.totalorder %s48, %s49
    %p61 = scmp.eq.s32.totalorder %s18, 1
    %p62 = por %p60, %p61
    %p64 = scmp.ne.s32.totalorder %s49, %s63
    %p65 = scmp.eq.s32.totalorder %s18, 0
    %p66 = por %p64, %p65
    %s68 = sadd.s32 %s67, 1
    %p71 = scmp.eq.s32.totalorder %s12, 1
    %p72 = scmp.ne.s32.totalorder %s67, %s69
    %p73 = scmp.eq.s32.totalorder %s12, 0
    %p74 = por %p72, %p73
    %p75 = scmp.ne.s32.totalorder %s67, %s69
    %p76 = scmp.eq.s32.totalorder %s17, 1
    %p77 = por %p75, %p76
    %p78 = scmp.ne.s32.totalorder %s69, %s70
    %p79 = scmp.eq.s32.totalorder %s17, 0
    %p80 = por %p78, %p79
    %p81 = scmp.ne.s32.totalorder %s69, %s70
    %p82 = scmp.eq.s32.totalorder %s18, 1
    %p83 = por %p81, %p82
    %p85 = scmp.ne.s32.totalorder %s70, %s84
    %p86 = scmp.eq.s32.totalorder %s18, 0
    %p87 = por %p85, %p86
    %s89 = sadd.s32 %s88, 1
    %p92 = scmp.eq.s32.totalorder %s12, 1
    %p93 = scmp.ne.s32.totalorder %s88, %s90
    %p94 = scmp.eq.s32.totalorder %s12, 0
    %p95 = por %p93, %p94
    %p96 = scmp.ne.s32.totalorder %s88, %s90
    %p97 = scmp.eq.s32.totalorder %s17, 1
    %p98 = por %p96, %p97
    %p99 = scmp.ne.s32.totalorder %s90, %s91
    %p100 = scmp.eq.s32.totalorder %s17, 0
    %p101 = por %p99, %p100
    %p102 = scmp.ne.s32.totalorder %s90, %s91
    %p103 = scmp.eq.s32.totalorder %s18, 1
    %p104 = por %p102, %p103
    %p106 = scmp.ne.s32.totalorder %s91, %s105
    %p107 = scmp.eq.s32.totalorder %s18, 0
    %p108 = por %p106, %p107
    %s110 = sadd.s32 %s109, 1
    %p113 = scmp.eq.s32.totalorder %s12, 1
    %p114 = scmp.ne.s32.totalorder %s109, %s111
    %p115 = scmp.eq.s32.totalorder %s12, 0
    %p116 = por %p114, %p115
    %p117 = scmp.ne.s32.totalorder %s109, %s111
    %p118 = scmp.eq.s32.totalorder %s17, 1
    %p119 = por %p117, %p118
    %p120 = scmp.ne.s32.totalorder %s111, %s112
    %p121 = scmp.eq.s32.totalorder %s17, 0
    %p122 = por %p120, %p121
    %p123 = scmp.ne.s32.totalorder %s111, %s112
    %p124 = scmp.eq.s32.totalorder %s18, 1
    %p125 = por %p123, %p124
    %p127 = scmp.ne.s32.totalorder %s112, %s126
    %p128 = scmp.eq.s32.totalorder %s18, 0
    %p129 = por %p127, %p128
    %s131 = sadd.s32 %s130, 1
    %p134 = scmp.eq.s32.totalorder %s12, 1
    %p135 = scmp.ne.s32.totalorder %s130, %s132
    %p136 = scmp.eq.s32.totalorder %s12, 0
    %p137 = por %p135, %p136
    %p138 = scmp.ne.s32.totalorder %s130, %s132
    %p139 = scmp.eq.s32.totalorder %s17, 1
    %p140 = por %p138, %p139
    %p141 = scmp.ne.s32.totalorder %s132, %s133
    %p142 = scmp.eq.s32.totalorder %s17, 0
    %p143 = por %p141, %p142
    %p144 = scmp.ne.s32.totalorder %s132, %s133
    %p145 = scmp.eq.s32.totalorder %s18, 1
    %p146 = por %p144, %p145
    %p148 = scmp.ne.s32.totalorder %s133, %s147
    %p149 = scmp.eq.s32.totalorder %s18, 0
    %p150 = por %p148, %p149
    %s151 = ssub.s32 %s12, %s19
    %p152 = scmp.eq.s32.totalorder %s151, 0
    %s154 = sadd.s32 %s153, 1
    %s155 = scalar_select %p152, %s153, %s154
    %p158 = pneg %p152
    %p159 = scmp.eq.s32.totalorder %s12, 1
    %p160 = por %p158, %p159
    %p161 = scmp.ne.s32.totalorder %s153, %s156
    %p162 = scmp.eq.s32.totalorder %s12, 0
    %p163 = por %p161, %p162
    %p164 = scmp.ne.s32.totalorder %s153, %s156
    %p165 = scmp.eq.s32.totalorder %s17, 1
    %p166 = por %p164, %p165
    %p167 = scmp.ne.s32.totalorder %s156, %s157
    %p168 = scmp.eq.s32.totalorder %s17, 0
    %p169 = por %p167, %p168
    %p170 = scmp.ne.s32.totalorder %s156, %s157
    %p171 = scmp.eq.s32.totalorder %s18, 1
    %p172 = por %p170, %p171
    %p174 = scmp.ne.s32.totalorder %s157, %s173
    %p175 = scmp.eq.s32.totalorder %s18, 0
    %p176 = por %p174, %p175
    %p177 = scmp.le.s32.totalorder 1, %s12
    %p178 = scmp.lt.s32.totalorder %s12, 3
    %p179 = pnand %p177, %p178
    %p180 = pneg %p179
    // Predicated region
    $region9: #{net_forward.2} parent=5 // pred_check
      _
    $region10: #{net_forward.2} parent=5 // pred_check_branch
      %182 = sbr.rel (%p179) target = $region12
    $region11: #{net_forward.2} parent=5 // pred_region
      %s183 = ssub.s32 %s12, 1
      // Predicated region
      $region13: #{net_forward.2} parent=11 // pred_check
        %p184 = pneg %p59
      $region14: #{net_forward.2} parent=11 // pred_check_branch
        %186 = sbr.rel (%p184) target = $region16
      $region15: #{net_forward.2} parent=11 // pred_region
        _
      $region16: #{net_forward.2} parent=11 // pred_fallthru
        _
      // Predicated region
      $region17: #{net_forward.2} parent=11 // pred_check
        %p187 = pneg %p80
      $region18: #{net_forward.2} parent=11 // pred_check_branch
        %189 = sbr.rel (%p187) target = $region20
      $region19: #{net_forward.2} parent=11 // pred_region
        _
      $region20: #{net_forward.2} parent=11 // pred_fallthru
        _
      // Predicated region
      $region21: #{net_forward.2} parent=11 // pred_check
        %p190 = pneg %p101
      $region22: #{net_forward.2} parent=11 // pred_check_branch
        %192 = sbr.rel (%p190) target = $region24
      $region23: #{net_forward.2} parent=11 // pred_region
        _
      $region24: #{net_forward.2} parent=11 // pred_fallthru
        _
      // Predicated region
      $region25: #{net_forward.2} parent=11 // pred_check
        %p193 = pneg %p122
      $region26: #{net_forward.2} parent=11 // pred_check_branch
        %195 = sbr.rel (%p193) target = $region28
      $region27: #{net_forward.2} parent=11 // pred_region
        _
      $region28: #{net_forward.2} parent=11 // pred_fallthru
        _
      // Predicated region
      $region29: #{net_forward.2} parent=11 // pred_check
        %p196 = pneg %p143
      $region30: #{net_forward.2} parent=11 // pred_check_branch
        %198 = sbr.rel (%p196) target = $region32
      $region31: #{net_forward.2} parent=11 // pred_region
        _
      $region32: #{net_forward.2} parent=11 // pred_fallthru
        _
    $region12: #{net_forward.2} parent=5 // pred_fallthru
      _
    %p199 = scmp.lt.s32.totalorder %s12, 2
    // Predicated region
    $region33: #{net_forward.2} parent=5 // pred_check
      %p200 = pneg %p199
    $region34: #{net_forward.2} parent=5 // pred_check_branch
      %202 = sbr.rel (%p200) target = $region36
    $region35: #{net_forward.2} parent=5 // pred_region
      // Predicated region
      $region37: #{net_forward.2} parent=35 // pred_check
        %p203 = pneg %p32
      $region38: #{net_forward.2} parent=35 // pred_check_branch
        %205 = sbr.rel (%p203) target = $region40
      $region39: #{net_forward.2} parent=35 // pred_region
        %p206 = scmp.lt.s32.totalorder %s12, 1
        %s207 = scalar_select %p206, %s12, 1
        %s208 = smul.addr %s207, 104
        %s209 = smul.addr %s208, 8
        %s210 = scalar_lea.vmem %s0, %s209
      $region40: #{net_forward.2} parent=35 // pred_fallthru
        _
    $region36: #{net_forward.2} parent=5 // pred_fallthru
      _
    %p211 = scmp.le.s32.totalorder 1, %s12
    %p212 = scmp.lt.s32.totalorder %s12, 3
    %p213 = pnand %p211, %p212
    %p214 = pneg %p213
    // Predicated region
    $region41: #{net_forward.2} parent=5 // pred_check
      _
    $region42: #{net_forward.2} parent=5 // pred_check_branch
      %216 = sbr.rel (%p213) target = $region44
    $region43: #{net_forward.2} parent=5 // pred_region
      %s217 = ssub.s32 %s12, 1
      %p218 = scmp.lt.s32.totalorder %s17, 1
      %s219 = scalar_select %p218, %s17, 1
      %s220 = smul.addr %s219, 104
      %s221 = smul.addr %s220, 8
      %s222 = scalar_lea.vmem %s0, %s221
      %p223 = pneg %p38
      %p224 = pneg %p35
      %p225 = pneg %p59
      %p226 = pneg %p56
      %p227 = pneg %p80
      %p228 = pneg %p77
      %p229 = pneg %p101
      %p230 = pneg %p98
      %p231 = pneg %p122
      %p232 = pneg %p119
      %p233 = pneg %p143
      %p234 = pneg %p140
      %p235 = pneg %p169
      %p236 = pneg %p166
      %p237 = scmp.lt.s32.totalorder %s17, 1
      %s238 = scalar_select %p237, %s17, 1
      %s239 = smul.addr %s238, 18
      %s240 = smul.addr %s239, 4
      %s241 = scalar_lea.vmem %s6, %s240
      %p242 = scmp.lt.s32.totalorder %s17, 1
      %s243 = scalar_select %p242, %s17, 1
      %s244 = smul.addr %s243, 104
      %s245 = smul.addr %s244, 8
      %s246 = scalar_lea.vmem %s0, %s245
      %p247 = scmp.lt.s32.totalorder %s17, 1
      %s248 = scalar_select %p247, %s17, 1
      %s249 = smul.addr %s248, 18
      %s250 = smul.addr %s249, 4
      %s251 = scalar_lea.vmem %s6, %s250
      %v253 = vld [vmem:[%s1] sm:$0xff]
      %v254 = vld [vmem:[%s1 + $0x8] sm:$0x1]
      %v255 = vld [vmem:[%s2] sm:$0x1]
      %v256 = vld [vmem:[%s246] sm:$0xff]
      %v257 = vld [vmem:[%s246 + $0x8] sm:$0xff]
      %v258 = vld [vmem:[%s246 + $0x10] sm:$0xff]
      %v259 = vld [vmem:[%s246 + $0x18] sm:$0x3]
      %v261 = vperm.slane %v255, 0
      %vm263 = vcmask 72704
      %v265 = vsel %vm263, %v256, 0
      %v268 = vsel %vm263, %v257, 0
      %v271 = vsel %vm263, %v258, 0
      %v274 = vsel %vm263, %v259, 0
      %vm276 = vcmask 1040384
      %v278 = vsel %vm276, %v254, 0
      %280 = vmatpush.msra.mxu0 0.0
      %281 = vmatpush.msra.mxu0 0.0
      %282 = vmatpush.msra.mxu0 0.0
      %283 = vmatpush.msra.mxu0 0.0
      %284 = vmatpush.msra.mxu0 0.0
      %285 = vmatpush.msra.mxu0 0.0
      %286 = vmatpush.msra.mxu0 0.0
      %287 = vmatpush.msra.mxu0 0.0
      %288 = vmatpush.msra.mxu0 0.0
      %289 = vmatpush.msra.mxu0 0.0
      %290 = vmatpush.msra.mxu0 0.0
      %291 = vmatpush.msra.mxu0 0.0
      %292 = vmatpush.msra.mxu0 0.0
      %293 = vmatpush.msra.mxu0 0.0
      %294 = vmatpush.msra.mxu0 %v278
      %295 = vmatpush.msra.mxu0 %v253
      %296 = vmatmul.f32.gmra.mxu0 %v265
      %v297 = vpop.f32.mrf.mxu0
      %v298 = vadd.f32 %v261, %v297
      %299 = vmatmul.f32.gmra.mxu0 %v268
      %v300 = vpop.f32.mrf.mxu0
      %v301 = vadd.f32 %v261, %v300
      %302 = vmatmul.f32.gmra.mxu0 %v271
      %v303 = vpop.f32.mrf.mxu0
      %v304 = vadd.f32 %v261, %v303
      %305 = vmatmul.f32.gmra.mxu0 %v274
      %v306 = vpop.f32.mrf.mxu0
      %v307 = vadd.f32 %v261, %v306
      %308 = vdwg.mxu0
      %v309 = vtanh.pop %v298
      %v310 = vtanh.pop %v301
      %v311 = vtanh.pop %v304
      %v312 = vtanh.pop %v307
      %vm313 = vcmask 261120
      %314 = vst.msk [vmem:[#allocation2] sm:$0xff] %vm313, %v309
      %315 = vst.msk [vmem:[#allocation2 + $0x8] sm:$0xff] %vm313, %v310
      %316 = vst.msk [vmem:[#allocation2 + $0x10] sm:$0xff] %vm313, %v311
      %vm317 = vcmask 254976
      %318 = vst.msk [vmem:[#allocation2 + $0x18] sm:$0x3] %vm317, %v312
      %s319 = scalar_lea.vmem %s246, 32
      %v320 = vld [vmem:[%s319] sm:$0xff]
      %v321 = vld [vmem:[%s319 + $0x8] sm:$0xff]
      %v322 = vld [vmem:[%s319 + $0x10] sm:$0xff]
      %v323 = vld [vmem:[%s319 + $0x18] sm:$0x3]
      %v325 = vsel %vm263, %v320, 0
      %v328 = vsel %vm263, %v321, 0
      %v331 = vsel %vm263, %v322, 0
      %v334 = vsel %vm263, %v323, 0
      %336 = vmatpush.msra.mxu0 0.0
      %337 = vmatpush.msra.mxu0 0.0
      %338 = vmatpush.msra.mxu0 0.0
      %339 = vmatpush.msra.mxu0 0.0
      %340 = vmatpush.msra.mxu0 0.0
      %341 = vmatpush.msra.mxu0 0.0
      %342 = vmatpush.msra.mxu0 0.0
      %343 = vmatpush.msra.mxu0 0.0
      %344 = vmatpush.msra.mxu0 0.0
      %345 = vmatpush.msra.mxu0 0.0
      %346 = vmatpush.msra.mxu0 0.0
      %347 = vmatpush.msra.mxu0 0.0
      %348 = vmatpush.msra.mxu0 0.0
      %349 = vmatpush.msra.mxu0 0.0
      %350 = vmatpush.msra.mxu0 %v278
      %351 = vmatpush.msra.mxu0 %v253
      %352 = vmatmul.f32.gmra.mxu0 %v325
      %v353 = vpop.f32.mrf.mxu0
      %v354 = vadd.f32 %v261, %v353
      %355 = vmatmul.f32.gmra.mxu0 %v328
      %v356 = vpop.f32.mrf.mxu0
      %v357 = vadd.f32 %v261, %v356
      %358 = vmatmul.f32.gmra.mxu0 %v331
      %v359 = vpop.f32.mrf.mxu0
      %v360 = vadd.f32 %v261, %v359
      %361 = vmatmul.f32.gmra.mxu0 %v334
      %v362 = vpop.f32.mrf.mxu0
      %v363 = vadd.f32 %v261, %v362
      %364 = vdwg.mxu0
      %v365 = vtanh.pop %v354
      %v366 = vtanh.pop %v357
      %v367 = vtanh.pop %v360
      %v368 = vtanh.pop %v363
      %s369 = scalar_lea.vmem [#allocation2], 32
      %370 = vst.msk [vmem:[%s369] sm:$0xff] %vm313, %v365
      %371 = vst.msk [vmem:[%s369 + $0x8] sm:$0xff] %vm313, %v366
      %372 = vst.msk [vmem:[%s369 + $0x10] sm:$0xff] %vm313, %v367
      %373 = vst.msk [vmem:[%s369 + $0x18] sm:$0x3] %vm317, %v368
      %s374 = scalar_lea.vmem %s246, 64
      %v375 = vld [vmem:[%s374] sm:$0xff]
      %v376 = vld [vmem:[%s374 + $0x8] sm:$0xff]
      %v377 = vld [vmem:[%s374 + $0x10] sm:$0xff]
      %v378 = vld [vmem:[%s374 + $0x18] sm:$0x3]
      %v380 = vsel %vm263, %v375, 0
      %v383 = vsel %vm263, %v376, 0
      %v386 = vsel %vm263, %v377, 0
      %v389 = vsel %vm263, %v378, 0
      %391 = vmatpush.msra.mxu0 0.0
      %392 = vmatpush.msra.mxu0 0.0
      %393 = vmatpush.msra.mxu0 0.0
      %394 = vmatpush.msra.mxu0 0.0
      %395 = vmatpush.msra.mxu0 0.0
      %396 = vmatpush.msra.mxu0 0.0
      %397 = vmatpush.msra.mxu0 0.0
      %398 = vmatpush.msra.mxu0 0.0
      %399 = vmatpush.msra.mxu0 0.0
      %400 = vmatpush.msra.mxu0 0.0
      %401 = vmatpush.msra.mxu0 0.0
      %402 = vmatpush.msra.mxu0 0.0
      %403 = vmatpush.msra.mxu0 0.0
      %404 = vmatpush.msra.mxu0 0.0
      %405 = vmatpush.msra.mxu0 %v278
      %406 = vmatpush.msra.mxu0 %v253
      %407 = vmatmul.f32.gmra.mxu0 %v380
      %v408 = vpop.f32.mrf.mxu0
      %v409 = vadd.f32 %v261, %v408
      %410 = vmatmul.f32.gmra.mxu0 %v383
      %v411 = vpop.f32.mrf.mxu0
      %v412 = vadd.f32 %v261, %v411
      %413 = vmatmul.f32.gmra.mxu0 %v386
      %v414 = vpop.f32.mrf.mxu0
      %v415 = vadd.f32 %v261, %v414
      %416 = vmatmul.f32.gmra.mxu0 %v389
      %v417 = vpop.f32.mrf.mxu0
      %v418 = vadd.f32 %v261, %v417
      %419 = vdwg.mxu0
      %v420 = vtanh.pop %v409
      %v421 = vtanh.pop %v412
      %v422 = vtanh.pop %v415
      %v423 = vtanh.pop %v418
      %s424 = scalar_lea.vmem [#allocation2], 64
      %425 = vst.msk [vmem:[%s424] sm:$0xff] %vm313, %v420
      %426 = vst.msk [vmem:[%s424 + $0x8] sm:$0xff] %vm313, %v421
      %427 = vst.msk [vmem:[%s424 + $0x10] sm:$0xff] %vm313, %v422
      %428 = vst.msk [vmem:[%s424 + $0x18] sm:$0x3] %vm317, %v423
      %s429 = scalar_lea.vmem %s246, 96
      %v430 = vld [vmem:[%s429] sm:$0xff]
      %v431 = vld [vmem:[%s429 + $0x8] sm:$0xff]
      %v432 = vld [vmem:[%s429 + $0x10] sm:$0xff]
      %v433 = vld [vmem:[%s429 + $0x18] sm:$0x3]
      %v435 = vsel %vm263, %v430, 0
      %v438 = vsel %vm263, %v431, 0
      %v441 = vsel %vm263, %v432, 0
      %v444 = vsel %vm263, %v433, 0
      %446 = vmatpush.msra.mxu0 0.0
      %447 = vmatpush.msra.mxu0 0.0
      %448 = vmatpush.msra.mxu0 0.0
      %449 = vmatpush.msra.mxu0 0.0
      %450 = vmatpush.msra.mxu0 0.0
      %451 = vmatpush.msra.mxu0 0.0
      %452 = vmatpush.msra.mxu0 0.0
      %453 = vmatpush.msra.mxu0 0.0
      %454 = vmatpush.msra.mxu0 0.0
      %455 = vmatpush.msra.mxu0 0.0
      %456 = vmatpush.msra.mxu0 0.0
      %457 = vmatpush.msra.mxu0 0.0
      %458 = vmatpush.msra.mxu0 0.0
      %459 = vmatpush.msra.mxu0 0.0
      %460 = vmatpush.msra.mxu0 %v278
      %461 = vmatpush.msra.mxu0 %v253
      %462 = vmatmul.f32.gmra.mxu0 %v435
      %v463 = vpop.f32.mrf.mxu0
      %v464 = vadd.f32 %v261, %v463
      %465 = vmatmul.f32.gmra.mxu0 %v438
      %v466 = vpop.f32.mrf.mxu0
      %v467 = vadd.f32 %v261, %v466
      %468 = vmatmul.f32.gmra.mxu0 %v441
      %v469 = vpop.f32.mrf.mxu0
      %v470 = vadd.f32 %v261, %v469
      %471 = vmatmul.f32.gmra.mxu0 %v444
      %v472 = vpop.f32.mrf.mxu0
      %v473 = vadd.f32 %v261, %v472
      %474 = vdwg.mxu0
      %v475 = vtanh.pop %v464
      %v476 = vtanh.pop %v467
      %v477 = vtanh.pop %v470
      %v478 = vtanh.pop %v473
      %s479 = scalar_lea.vmem [#allocation2], 96
      %480 = vst.msk [vmem:[%s479] sm:$0xff] %vm313, %v475
      %481 = vst.msk [vmem:[%s479 + $0x8] sm:$0xff] %vm313, %v476
      %482 = vst.msk [vmem:[%s479 + $0x10] sm:$0xff] %vm313, %v477
      %483 = vst.msk [vmem:[%s479 + $0x18] sm:$0x3] %vm317, %v478
      %s484 = scalar_lea.vmem %s246, 128
      %v485 = vld [vmem:[%s484] sm:$0xff]
      %v486 = vld [vmem:[%s484 + $0x8] sm:$0xff]
      %v487 = vld [vmem:[%s484 + $0x10] sm:$0xff]
      %v488 = vld [vmem:[%s484 + $0x18] sm:$0x3]
      %v490 = vsel %vm263, %v485, 0
      %v493 = vsel %vm263, %v486, 0
      %v496 = vsel %vm263, %v487, 0
      %v499 = vsel %vm263, %v488, 0
      %501 = vmatpush.msra.mxu0 0.0
      %502 = vmatpush.msra.mxu0 0.0
      %503 = vmatpush.msra.mxu0 0.0
      %504 = vmatpush.msra.mxu0 0.0
      %505 = vmatpush.msra.mxu0 0.0
      %506 = vmatpush.msra.mxu0 0.0
      %507 = vmatpush.msra.mxu0 0.0
      %508 = vmatpush.msra.mxu0 0.0
      %509 = vmatpush.msra.mxu0 0.0
      %510 = vmatpush.msra.mxu0 0.0
      %511 = vmatpush.msra.mxu0 0.0
      %512 = vmatpush.msra.mxu0 0.0
      %513 = vmatpush.msra.mxu0 0.0
      %514 = vmatpush.msra.mxu0 0.0
      %515 = vmatpush.msra.mxu0 %v278
      %516 = vmatpush.msra.mxu0 %v253
      %517 = vmatmul.f32.gmra.mxu0 %v490
      %v518 = vpop.f32.mrf.mxu0
      %v519 = vadd.f32 %v261, %v518
      %520 = vmatmul.f32.gmra.mxu0 %v493
      %v521 = vpop.f32.mrf.mxu0
      %v522 = vadd.f32 %v261, %v521
      %523 = vmatmul.f32.gmra.mxu0 %v496
      %v524 = vpop.f32.mrf.mxu0
      %v525 = vadd.f32 %v261, %v524
      %526 = vmatmul.f32.gmra.mxu0 %v499
      %v527 = vpop.f32.mrf.mxu0
      %v528 = vadd.f32 %v261, %v527
      %529 = vdwg.mxu0
      %v530 = vtanh.pop %v519
      %v531 = vtanh.pop %v522
      %v532 = vtanh.pop %v525
      %v533 = vtanh.pop %v528
      %s534 = scalar_lea.vmem [#allocation2], 128
      %535 = vst.msk [vmem:[%s534] sm:$0xff] %vm313, %v530
      %536 = vst.msk [vmem:[%s534 + $0x8] sm:$0xff] %vm313, %v531
      %537 = vst.msk [vmem:[%s534 + $0x10] sm:$0xff] %vm313, %v532
      %538 = vst.msk [vmem:[%s534 + $0x18] sm:$0x3] %vm317, %v533
      %s539 = scalar_lea.vmem %s246, 160
      %v540 = vld [vmem:[%s539] sm:$0xff]
      %v541 = vld [vmem:[%s539 + $0x8] sm:$0xff]
      %v542 = vld [vmem:[%s539 + $0x10] sm:$0xff]
      %v543 = vld [vmem:[%s539 + $0x18] sm:$0x3]
      %v545 = vsel %vm263, %v540, 0
      %v548 = vsel %vm263, %v541, 0
      %v551 = vsel %vm263, %v542, 0
      %v554 = vsel %vm263, %v543, 0
      %556 = vmatpush.msra.mxu0 0.0
      %557 = vmatpush.msra.mxu0 0.0
      %558 = vmatpush.msra.mxu0 0.0
      %559 = vmatpush.msra.mxu0 0.0
      %560 = vmatpush.msra.mxu0 0.0
      %561 = vmatpush.msra.mxu0 0.0
      %562 = vmatpush.msra.mxu0 0.0
      %563 = vmatpush.msra.mxu0 0.0
      %564 = vmatpush.msra.mxu0 0.0
      %565 = vmatpush.msra.mxu0 0.0
      %566 = vmatpush.msra.mxu0 0.0
      %567 = vmatpush.msra.mxu0 0.0
      %568 = vmatpush.msra.mxu0 0.0
      %569 = vmatpush.msra.mxu0 0.0
      %570 = vmatpush.msra.mxu0 %v278
      %571 = vmatpush.msra.mxu0 %v253
      %572 = vmatmul.f32.gmra.mxu0 %v545
      %v573 = vpop.f32.mrf.mxu0
      %v574 = vadd.f32 %v261, %v573
      %575 = vmatmul.f32.gmra.mxu0 %v548
      %v576 = vpop.f32.mrf.mxu0
      %v577 = vadd.f32 %v261, %v576
      %578 = vmatmul.f32.gmra.mxu0 %v551
      %v579 = vpop.f32.mrf.mxu0
      %v580 = vadd.f32 %v261, %v579
      %581 = vmatmul.f32.gmra.mxu0 %v554
      %v582 = vpop.f32.mrf.mxu0
      %v583 = vadd.f32 %v261, %v582
      %584 = vdwg.mxu0
      %v585 = vtanh.pop %v574
      %v586 = vtanh.pop %v577
      %v587 = vtanh.pop %v580
      %v588 = vtanh.pop %v583
      %s589 = scalar_lea.vmem [#allocation2], 160
      %590 = vst.msk [vmem:[%s589] sm:$0xff] %vm313, %v585
      %591 = vst.msk [vmem:[%s589 + $0x8] sm:$0xff] %vm313, %v586
      %592 = vst.msk [vmem:[%s589 + $0x10] sm:$0xff] %vm313, %v587
      %593 = vst.msk [vmem:[%s589 + $0x18] sm:$0x3] %vm317, %v588
      %s594 = scalar_lea.vmem %s246, 192
      %v595 = vld [vmem:[%s594] sm:$0xff]
      %v596 = vld [vmem:[%s594 + $0x8] sm:$0xff]
      %v597 = vld [vmem:[%s594 + $0x10] sm:$0xff]
      %v598 = vld [vmem:[%s594 + $0x18] sm:$0x3]
      %v600 = vsel %vm263, %v595, 0
      %v603 = vsel %vm263, %v596, 0
      %v606 = vsel %vm263, %v597, 0
      %v609 = vsel %vm263, %v598, 0
      %611 = vmatpush.msra.mxu0 0.0
      %612 = vmatpush.msra.mxu0 0.0
      %613 = vmatpush.msra.mxu0 0.0
      %614 = vmatpush.msra.mxu0 0.0
      %615 = vmatpush.msra.mxu0 0.0
      %616 = vmatpush.msra.mxu0 0.0
      %617 = vmatpush.msra.mxu0 0.0
      %618 = vmatpush.msra.mxu0 0.0
      %619 = vmatpush.msra.mxu0 0.0
      %620 = vmatpush.msra.mxu0 0.0
      %621 = vmatpush.msra.mxu0 0.0
      %622 = vmatpush.msra.mxu0 0.0
      %623 = vmatpush.msra.mxu0 0.0
      %624 = vmatpush.msra.mxu0 0.0
      %625 = vmatpush.msra.mxu0 %v278
      %626 = vmatpush.msra.mxu0 %v253
      %627 = vmatmul.f32.gmra.mxu0 %v600
      %v628 = vpop.f32.mrf.mxu0
      %v629 = vadd.f32 %v261, %v628
      %630 = vmatmul.f32.gmra.mxu0 %v603
      %v631 = vpop.f32.mrf.mxu0
      %v632 = vadd.f32 %v261, %v631
      %633 = vmatmul.f32.gmra.mxu0 %v606
      %v634 = vpop.f32.mrf.mxu0
      %v635 = vadd.f32 %v261, %v634
      %636 = vmatmul.f32.gmra.mxu0 %v609
      %v637 = vpop.f32.mrf.mxu0
      %v638 = vadd.f32 %v261, %v637
      %639 = vdwg.mxu0
      %v640 = vtanh.pop %v629
      %v641 = vtanh.pop %v632
      %v642 = vtanh.pop %v635
      %v643 = vtanh.pop %v638
      %s644 = scalar_lea.vmem [#allocation2], 192
      %645 = vst.msk [vmem:[%s644] sm:$0xff] %vm313, %v640
      %646 = vst.msk [vmem:[%s644 + $0x8] sm:$0xff] %vm313, %v641
      %647 = vst.msk [vmem:[%s644 + $0x10] sm:$0xff] %vm313, %v642
      %648 = vst.msk [vmem:[%s644 + $0x18] sm:$0x3] %vm317, %v643
      %s649 = scalar_lea.vmem %s246, 224
      %v650 = vld [vmem:[%s649] sm:$0xff]
      %v651 = vld [vmem:[%s649 + $0x8] sm:$0xff]
      %v652 = vld [vmem:[%s649 + $0x10] sm:$0xff]
      %v653 = vld [vmem:[%s649 + $0x18] sm:$0x3]
      %v655 = vsel %vm263, %v650, 0
      %v658 = vsel %vm263, %v651, 0
      %v661 = vsel %vm263, %v652, 0
      %v664 = vsel %vm263, %v653, 0
      %666 = vmatpush.msra.mxu0 0.0
      %667 = vmatpush.msra.mxu0 0.0
      %668 = vmatpush.msra.mxu0 0.0
      %669 = vmatpush.msra.mxu0 0.0
      %670 = vmatpush.msra.mxu0 0.0
      %671 = vmatpush.msra.mxu0 0.0
      %672 = vmatpush.msra.mxu0 0.0
      %673 = vmatpush.msra.mxu0 0.0
      %674 = vmatpush.msra.mxu0 0.0
      %675 = vmatpush.msra.mxu0 0.0
      %676 = vmatpush.msra.mxu0 0.0
      %677 = vmatpush.msra.mxu0 0.0
      %678 = vmatpush.msra.mxu0 0.0
      %679 = vmatpush.msra.mxu0 0.0
      %680 = vmatpush.msra.mxu0 %v278
      %681 = vmatpush.msra.mxu0 %v253
      %682 = vmatmul.f32.gmra.mxu0 %v655
      %v683 = vpop.f32.mrf.mxu0
      %v684 = vadd.f32 %v261, %v683
      %685 = vmatmul.f32.gmra.mxu0 %v658
      %v686 = vpop.f32.mrf.mxu0
      %v687 = vadd.f32 %v261, %v686
      %688 = vmatmul.f32.gmra.mxu0 %v661
      %v689 = vpop.f32.mrf.mxu0
      %v690 = vadd.f32 %v261, %v689
      %691 = vmatmul.f32.gmra.mxu0 %v664
      %v692 = vpop.f32.mrf.mxu0
      %v693 = vadd.f32 %v261, %v692
      %694 = vdwg.mxu0
      %v695 = vtanh.pop %v684
      %v696 = vtanh.pop %v687
      %v697 = vtanh.pop %v690
      %v698 = vtanh.pop %v693
      %s699 = scalar_lea.vmem [#allocation2], 224
      %700 = vst.msk [vmem:[%s699] sm:$0xff] %vm313, %v695
      %701 = vst.msk [vmem:[%s699 + $0x8] sm:$0xff] %vm313, %v696
      %702 = vst.msk [vmem:[%s699 + $0x10] sm:$0xff] %vm313, %v697
      %703 = vst.msk [vmem:[%s699 + $0x18] sm:$0x3] %vm317, %v698
      %s704 = scalar_lea.vmem %s246, 256
      %v705 = vld [vmem:[%s704] sm:$0xff]
      %v706 = vld [vmem:[%s704 + $0x8] sm:$0xff]
      %v707 = vld [vmem:[%s704 + $0x10] sm:$0xff]
      %v708 = vld [vmem:[%s704 + $0x18] sm:$0x3]
      %v710 = vsel %vm263, %v705, 0
      %v713 = vsel %vm263, %v706, 0
      %v716 = vsel %vm263, %v707, 0
      %v719 = vsel %vm263, %v708, 0
      %721 = vmatpush.msra.mxu0 0.0
      %722 = vmatpush.msra.mxu0 0.0
      %723 = vmatpush.msra.mxu0 0.0
      %724 = vmatpush.msra.mxu0 0.0
      %725 = vmatpush.msra.mxu0 0.0
      %726 = vmatpush.msra.mxu0 0.0
      %727 = vmatpush.msra.mxu0 0.0
      %728 = vmatpush.msra.mxu0 0.0
      %729 = vmatpush.msra.mxu0 0.0
      %730 = vmatpush.msra.mxu0 0.0
      %731 = vmatpush.msra.mxu0 0.0
      %732 = vmatpush.msra.mxu0 0.0
      %733 = vmatpush.msra.mxu0 0.0
      %734 = vmatpush.msra.mxu0 0.0
      %735 = vmatpush.msra.mxu0 %v278
      %736 = vmatpush.msra.mxu0 %v253
      %737 = vmatmul.f32.gmra.mxu0 %v710
      %v738 = vpop.f32.mrf.mxu0
      %v739 = vadd.f32 %v261, %v738
      %740 = vmatmul.f32.gmra.mxu0 %v713
      %v741 = vpop.f32.mrf.mxu0
      %v742 = vadd.f32 %v261, %v741
      %743 = vmatmul.f32.gmra.mxu0 %v716
      %v744 = vpop.f32.mrf.mxu0
      %v745 = vadd.f32 %v261, %v744
      %746 = vmatmul.f32.gmra.mxu0 %v719
      %v747 = vpop.f32.mrf.mxu0
      %v748 = vadd.f32 %v261, %v747
      %749 = vdwg.mxu0
      %v750 = vtanh.pop %v739
      %v751 = vtanh.pop %v742
      %v752 = vtanh.pop %v745
      %v753 = vtanh.pop %v748
      %s754 = scalar_lea.vmem [#allocation2], 256
      %755 = vst.msk [vmem:[%s754] sm:$0xff] %vm313, %v750
      %756 = vst.msk [vmem:[%s754 + $0x8] sm:$0xff] %vm313, %v751
      %757 = vst.msk [vmem:[%s754 + $0x10] sm:$0xff] %vm313, %v752
      %758 = vst.msk [vmem:[%s754 + $0x18] sm:$0x3] %vm317, %v753
      %s759 = scalar_lea.vmem %s246, 288
      %v760 = vld [vmem:[%s759] sm:$0xff]
      %v761 = vld [vmem:[%s759 + $0x8] sm:$0xff]
      %v762 = vld [vmem:[%s759 + $0x10] sm:$0xff]
      %v763 = vld [vmem:[%s759 + $0x18] sm:$0x3]
      %v765 = vsel %vm263, %v760, 0
      %v768 = vsel %vm263, %v761, 0
      %v771 = vsel %vm263, %v762, 0
      %v774 = vsel %vm263, %v763, 0
      %776 = vmatpush.msra.mxu0 0.0
      %777 = vmatpush.msra.mxu0 0.0
      %778 = vmatpush.msra.mxu0 0.0
      %779 = vmatpush.msra.mxu0 0.0
      %780 = vmatpush.msra.mxu0 0.0
      %781 = vmatpush.msra.mxu0 0.0
      %782 = vmatpush.msra.mxu0 0.0
      %783 = vmatpush.msra.mxu0 0.0
      %784 = vmatpush.msra.mxu0 0.0
      %785 = vmatpush.msra.mxu0 0.0
      %786 = vmatpush.msra.mxu0 0.0
      %787 = vmatpush.msra.mxu0 0.0
      %788 = vmatpush.msra.mxu0 0.0
      %789 = vmatpush.msra.mxu0 0.0
      %790 = vmatpush.msra.mxu0 %v278
      %791 = vmatpush.msra.mxu0 %v253
      %792 = vmatmul.f32.gmra.mxu0 %v765
      %v793 = vpop.f32.mrf.mxu0
      %v794 = vadd.f32 %v261, %v793
      %795 = vmatmul.f32.gmra.mxu0 %v768
      %v796 = vpop.f32.mrf.mxu0
      %v797 = vadd.f32 %v261, %v796
      %798 = vmatmul.f32.gmra.mxu0 %v771
      %v799 = vpop.f32.mrf.mxu0
      %v800 = vadd.f32 %v261, %v799
      %801 = vmatmul.f32.gmra.mxu0 %v774
      %v802 = vpop.f32.mrf.mxu0
      %v803 = vadd.f32 %v261, %v802
      %804 = vdwg.mxu0
      %v805 = vtanh.pop %v794
      %v806 = vtanh.pop %v797
      %v807 = vtanh.pop %v800
      %v808 = vtanh.pop %v803
      %s809 = scalar_lea.vmem [#allocation2], 288
      %810 = vst.msk [vmem:[%s809] sm:$0xff] %vm313, %v805
      %811 = vst.msk [vmem:[%s809 + $0x8] sm:$0xff] %vm313, %v806
      %812 = vst.msk [vmem:[%s809 + $0x10] sm:$0xff] %vm313, %v807
      %813 = vst.msk [vmem:[%s809 + $0x18] sm:$0x3] %vm317, %v808
      %s814 = scalar_lea.vmem %s246, 320
      %v815 = vld [vmem:[%s814] sm:$0xff]
      %v816 = vld [vmem:[%s814 + $0x8] sm:$0xff]
      %v817 = vld [vmem:[%s814 + $0x10] sm:$0xff]
      %v818 = vld [vmem:[%s814 + $0x18] sm:$0x3]
      %v820 = vsel %vm263, %v815, 0
      %v823 = vsel %vm263, %v816, 0
      %v826 = vsel %vm263, %v817, 0
      %v829 = vsel %vm263, %v818, 0
      %831 = vmatpush.msra.mxu0 0.0
      %832 = vmatpush.msra.mxu0 0.0
      %833 = vmatpush.msra.mxu0 0.0
      %834 = vmatpush.msra.mxu0 0.0
      %835 = vmatpush.msra.mxu0 0.0
      %836 = vmatpush.msra.mxu0 0.0
      %837 = vmatpush.msra.mxu0 0.0
      %838 = vmatpush.msra.mxu0 0.0
      %839 = vmatpush.msra.mxu0 0.0
      %840 = vmatpush.msra.mxu0 0.0
      %841 = vmatpush.msra.mxu0 0.0
      %842 = vmatpush.msra.mxu0 0.0
      %843 = vmatpush.msra.mxu0 0.0
      %844 = vmatpush.msra.mxu0 0.0
      %845 = vmatpush.msra.mxu0 %v278
      %846 = vmatpush.msra.mxu0 %v253
      %847 = vmatmul.f32.gmra.mxu0 %v820
      %v848 = vpop.f32.mrf.mxu0
      %v849 = vadd.f32 %v261, %v848
      %850 = vmatmul.f32.gmra.mxu0 %v823
      %v851 = vpop.f32.mrf.mxu0
      %v852 = vadd.f32 %v261, %v851
      %853 = vmatmul.f32.gmra.mxu0 %v826
      %v854 = vpop.f32.mrf.mxu0
      %v855 = vadd.f32 %v261, %v854
      %856 = vmatmul.f32.gmra.mxu0 %v829
      %v857 = vpop.f32.mrf.mxu0
      %v858 = vadd.f32 %v261, %v857
      %859 = vdwg.mxu0
      %v860 = vtanh.pop %v849
      %v861 = vtanh.pop %v852
      %v862 = vtanh.pop %v855
      %v863 = vtanh.pop %v858
      %s864 = scalar_lea.vmem [#allocation2], 320
      %865 = vst.msk [vmem:[%s864] sm:$0xff] %vm313, %v860
      %866 = vst.msk [vmem:[%s864 + $0x8] sm:$0xff] %vm313, %v861
      %867 = vst.msk [vmem:[%s864 + $0x10] sm:$0xff] %vm313, %v862
      %868 = vst.msk [vmem:[%s864 + $0x18] sm:$0x3] %vm317, %v863
      %s869 = scalar_lea.vmem %s246, 352
      %v870 = vld [vmem:[%s869] sm:$0xff]
      %v871 = vld [vmem:[%s869 + $0x8] sm:$0xff]
      %v872 = vld [vmem:[%s869 + $0x10] sm:$0xff]
      %v873 = vld [vmem:[%s869 + $0x18] sm:$0x3]
      %v875 = vsel %vm263, %v870, 0
      %v878 = vsel %vm263, %v871, 0
      %v881 = vsel %vm263, %v872, 0
      %v884 = vsel %vm263, %v873, 0
      %886 = vmatpush.msra.mxu0 0.0
      %887 = vmatpush.msra.mxu0 0.0
      %888 = vmatpush.msra.mxu0 0.0
      %889 = vmatpush.msra.mxu0 0.0
      %890 = vmatpush.msra.mxu0 0.0
      %891 = vmatpush.msra.mxu0 0.0
      %892 = vmatpush.msra.mxu0 0.0
      %893 = vmatpush.msra.mxu0 0.0
      %894 = vmatpush.msra.mxu0 0.0
      %895 = vmatpush.msra.mxu0 0.0
      %896 = vmatpush.msra.mxu0 0.0
      %897 = vmatpush.msra.mxu0 0.0
      %898 = vmatpush.msra.mxu0 0.0
      %899 = vmatpush.msra.mxu0 0.0
      %900 = vmatpush.msra.mxu0 %v278
      %901 = vmatpush.msra.mxu0 %v253
      %902 = vmatmul.f32.gmra.mxu0 %v875
      %v903 = vpop.f32.mrf.mxu0
      %v904 = vadd.f32 %v261, %v903
      %905 = vmatmul.f32.gmra.mxu0 %v878
      %v906 = vpop.f32.mrf.mxu0
      %v907 = vadd.f32 %v261, %v906
      %908 = vmatmul.f32.gmra.mxu0 %v881
      %v909 = vpop.f32.mrf.mxu0
      %v910 = vadd.f32 %v261, %v909
      %911 = vmatmul.f32.gmra.mxu0 %v884
      %v912 = vpop.f32.mrf.mxu0
      %v913 = vadd.f32 %v261, %v912
      %914 = vdwg.mxu0
      %v915 = vtanh.pop %v904
      %v916 = vtanh.pop %v907
      %v917 = vtanh.pop %v910
      %v918 = vtanh.pop %v913
      %s919 = scalar_lea.vmem [#allocation2], 352
      %920 = vst.msk [vmem:[%s919] sm:$0xff] %vm313, %v915
      %921 = vst.msk [vmem:[%s919 + $0x8] sm:$0xff] %vm313, %v916
      %922 = vst.msk [vmem:[%s919 + $0x10] sm:$0xff] %vm313, %v917
      %923 = vst.msk [vmem:[%s919 + $0x18] sm:$0x3] %vm317, %v918
      %s924 = scalar_lea.vmem %s246, 384
      %v925 = vld [vmem:[%s924] sm:$0xff]
      %v926 = vld [vmem:[%s924 + $0x8] sm:$0xff]
      %v927 = vld [vmem:[%s924 + $0x10] sm:$0xff]
      %v928 = vld [vmem:[%s924 + $0x18] sm:$0x3]
      %v930 = vsel %vm263, %v925, 0
      %v933 = vsel %vm263, %v926, 0
      %v936 = vsel %vm263, %v927, 0
      %v939 = vsel %vm263, %v928, 0
      %941 = vmatpush.msra.mxu0 0.0
      %942 = vmatpush.msra.mxu0 0.0
      %943 = vmatpush.msra.mxu0 0.0
      %944 = vmatpush.msra.mxu0 0.0
      %945 = vmatpush.msra.mxu0 0.0
      %946 = vmatpush.msra.mxu0 0.0
      %947 = vmatpush.msra.mxu0 0.0
      %948 = vmatpush.msra.mxu0 0.0
      %949 = vmatpush.msra.mxu0 0.0
      %950 = vmatpush.msra.mxu0 0.0
      %951 = vmatpush.msra.mxu0 0.0
      %952 = vmatpush.msra.mxu0 0.0
      %953 = vmatpush.msra.mxu0 0.0
      %954 = vmatpush.msra.mxu0 0.0
      %955 = vmatpush.msra.mxu0 %v278
      %956 = vmatpush.msra.mxu0 %v253
      %957 = vmatmul.f32.gmra.mxu0 %v930
      %v958 = vpop.f32.mrf.mxu0
      %v959 = vadd.f32 %v261, %v958
      %960 = vmatmul.f32.gmra.mxu0 %v933
      %v961 = vpop.f32.mrf.mxu0
      %v962 = vadd.f32 %v261, %v961
      %963 = vmatmul.f32.gmra.mxu0 %v936
      %v964 = vpop.f32.mrf.mxu0
      %v965 = vadd.f32 %v261, %v964
      %966 = vmatmul.f32.gmra.mxu0 %v939
      %v967 = vpop.f32.mrf.mxu0
      %v968 = vadd.f32 %v261, %v967
      %969 = vdwg.mxu0
      %v970 = vtanh.pop %v959
      %v971 = vtanh.pop %v962
      %v972 = vtanh.pop %v965
      %v973 = vtanh.pop %v968
      %s974 = scalar_lea.vmem [#allocation2], 384
      %975 = vst.msk [vmem:[%s974] sm:$0xff] %vm313, %v970
      %976 = vst.msk [vmem:[%s974 + $0x8] sm:$0xff] %vm313, %v971
      %977 = vst.msk [vmem:[%s974 + $0x10] sm:$0xff] %vm313, %v972
      %978 = vst.msk [vmem:[%s974 + $0x18] sm:$0x3] %vm317, %v973
      %s979 = scalar_lea.vmem %s246, 416
      %v980 = vld [vmem:[%s979] sm:$0xff]
      %v981 = vld [vmem:[%s979 + $0x8] sm:$0xff]
      %v982 = vld [vmem:[%s979 + $0x10] sm:$0xff]
      %v983 = vld [vmem:[%s979 + $0x18] sm:$0x3]
      %v985 = vsel %vm263, %v980, 0
      %v988 = vsel %vm263, %v981, 0
      %v991 = vsel %vm263, %v982, 0
      %v994 = vsel %vm263, %v983, 0
      %996 = vmatpush.msra.mxu0 0.0
      %997 = vmatpush.msra.mxu0 0.0
      %998 = vmatpush.msra.mxu0 0.0
      %999 = vmatpush.msra.mxu0 0.0
      %1000 = vmatpush.msra.mxu0 0.0
      %1001 = vmatpush.msra.mxu0 0.0
      %1002 = vmatpush.msra.mxu0 0.0
      %1003 = vmatpush.msra.mxu0 0.0
      %1004 = vmatpush.msra.mxu0 0.0
      %1005 = vmatpush.msra.mxu0 0.0
      %1006 = vmatpush.msra.mxu0 0.0
      %1007 = vmatpush.msra.mxu0 0.0
      %1008 = vmatpush.msra.mxu0 0.0
      %1009 = vmatpush.msra.mxu0 0.0
      %1010 = vmatpush.msra.mxu0 %v278
      %1011 = vmatpush.msra.mxu0 %v253
      %1012 = vmatmul.f32.gmra.mxu0 %v985
      %v1013 = vpop.f32.mrf.mxu0
      %v1014 = vadd.f32 %v261, %v1013
      %1015 = vmatmul.f32.gmra.mxu0 %v988
      %v1016 = vpop.f32.mrf.mxu0
      %v1017 = vadd.f32 %v261, %v1016
      %1018 = vmatmul.f32.gmra.mxu0 %v991
      %v1019 = vpop.f32.mrf.mxu0
      %v1020 = vadd.f32 %v261, %v1019
      %1021 = vmatmul.f32.gmra.mxu0 %v994
      %v1022 = vpop.f32.mrf.mxu0
      %v1023 = vadd.f32 %v261, %v1022
      %1024 = vdwg.mxu0
      %v1025 = vtanh.pop %v1014
      %v1026 = vtanh.pop %v1017
      %v1027 = vtanh.pop %v1020
      %v1028 = vtanh.pop %v1023
      %s1029 = scalar_lea.vmem [#allocation2], 416
      %1030 = vst.msk [vmem:[%s1029] sm:$0xff] %vm313, %v1025
      %1031 = vst.msk [vmem:[%s1029 + $0x8] sm:$0xff] %vm313, %v1026
      %1032 = vst.msk [vmem:[%s1029 + $0x10] sm:$0xff] %vm313, %v1027
      %1033 = vst.msk [vmem:[%s1029 + $0x18] sm:$0x3] %vm317, %v1028
      %s1034 = scalar_lea.vmem %s246, 448
      %v1035 = vld [vmem:[%s1034] sm:$0xff]
      %v1036 = vld [vmem:[%s1034 + $0x8] sm:$0xff]
      %v1037 = vld [vmem:[%s1034 + $0x10] sm:$0xff]
      %v1038 = vld [vmem:[%s1034 + $0x18] sm:$0x3]
      %v1040 = vsel %vm263, %v1035, 0
      %v1043 = vsel %vm263, %v1036, 0
      %v1046 = vsel %vm263, %v1037, 0
      %v1049 = vsel %vm263, %v1038, 0
      %1051 = vmatpush.msra.mxu0 0.0
      %1052 = vmatpush.msra.mxu0 0.0
      %1053 = vmatpush.msra.mxu0 0.0
      %1054 = vmatpush.msra.mxu0 0.0
      %1055 = vmatpush.msra.mxu0 0.0
      %1056 = vmatpush.msra.mxu0 0.0
      %1057 = vmatpush.msra.mxu0 0.0
      %1058 = vmatpush.msra.mxu0 0.0
      %1059 = vmatpush.msra.mxu0 0.0
      %1060 = vmatpush.msra.mxu0 0.0
      %1061 = vmatpush.msra.mxu0 0.0
      %1062 = vmatpush.msra.mxu0 0.0
      %1063 = vmatpush.msra.mxu0 0.0
      %1064 = vmatpush.msra.mxu0 0.0
      %1065 = vmatpush.msra.mxu0 %v278
      %1066 = vmatpush.msra.mxu0 %v253
      %1067 = vmatmul.f32.gmra.mxu0 %v1040
      %v1068 = vpop.f32.mrf.mxu0
      %v1069 = vadd.f32 %v261, %v1068
      %1070 = vmatmul.f32.gmra.mxu0 %v1043
      %v1071 = vpop.f32.mrf.mxu0
      %v1072 = vadd.f32 %v261, %v1071
      %1073 = vmatmul.f32.gmra.mxu0 %v1046
      %v1074 = vpop.f32.mrf.mxu0
      %v1075 = vadd.f32 %v261, %v1074
      %1076 = vmatmul.f32.gmra.mxu0 %v1049
      %v1077 = vpop.f32.mrf.mxu0
      %v1078 = vadd.f32 %v261, %v1077
      %1079 = vdwg.mxu0
      %v1080 = vtanh.pop %v1069
      %v1081 = vtanh.pop %v1072
      %v1082 = vtanh.pop %v1075
      %v1083 = vtanh.pop %v1078
      %s1084 = scalar_lea.vmem [#allocation2], 448
      %1085 = vst.msk [vmem:[%s1084] sm:$0xff] %vm313, %v1080
      %1086 = vst.msk [vmem:[%s1084 + $0x8] sm:$0xff] %vm313, %v1081
      %1087 = vst.msk [vmem:[%s1084 + $0x10] sm:$0xff] %vm313, %v1082
      %1088 = vst.msk [vmem:[%s1084 + $0x18] sm:$0x3] %vm317, %v1083
      %s1089 = scalar_lea.vmem %s246, 480
      %v1090 = vld [vmem:[%s1089] sm:$0xff]
      %v1091 = vld [vmem:[%s1089 + $0x8] sm:$0xff]
      %v1092 = vld [vmem:[%s1089 + $0x10] sm:$0xff]
      %v1093 = vld [vmem:[%s1089 + $0x18] sm:$0x3]
      %v1095 = vsel %vm263, %v1090, 0
      %v1098 = vsel %vm263, %v1091, 0
      %v1101 = vsel %vm263, %v1092, 0
      %v1104 = vsel %vm263, %v1093, 0
      %1106 = vmatpush.msra.mxu0 0.0
      %1107 = vmatpush.msra.mxu0 0.0
      %1108 = vmatpush.msra.mxu0 0.0
      %1109 = vmatpush.msra.mxu0 0.0
      %1110 = vmatpush.msra.mxu0 0.0
      %1111 = vmatpush.msra.mxu0 0.0
      %1112 = vmatpush.msra.mxu0 0.0
      %1113 = vmatpush.msra.mxu0 0.0
      %1114 = vmatpush.msra.mxu0 0.0
      %1115 = vmatpush.msra.mxu0 0.0
      %1116 = vmatpush.msra.mxu0 0.0
      %1117 = vmatpush.msra.mxu0 0.0
      %1118 = vmatpush.msra.mxu0 0.0
      %1119 = vmatpush.msra.mxu0 0.0
      %1120 = vmatpush.msra.mxu0 %v278
      %1121 = vmatpush.msra.mxu0 %v253
      %1122 = vmatmul.f32.gmra.mxu0 %v1095
      %v1123 = vpop.f32.mrf.mxu0
      %v1124 = vadd.f32 %v261, %v1123
      %1125 = vmatmul.f32.gmra.mxu0 %v1098
      %v1126 = vpop.f32.mrf.mxu0
      %v1127 = vadd.f32 %v261, %v1126
      %1128 = vmatmul.f32.gmra.mxu0 %v1101
      %v1129 = vpop.f32.mrf.mxu0
      %v1130 = vadd.f32 %v261, %v1129
      %1131 = vmatmul.f32.gmra.mxu0 %v1104
      %v1132 = vpop.f32.mrf.mxu0
      %v1133 = vadd.f32 %v261, %v1132
      %1134 = vdwg.mxu0
      %v1135 = vtanh.pop %v1124
      %v1136 = vtanh.pop %v1127
      %v1137 = vtanh.pop %v1130
      %v1138 = vtanh.pop %v1133
      %s1139 = scalar_lea.vmem [#allocation2], 480
      %1140 = vst.msk [vmem:[%s1139] sm:$0xff] %vm313, %v1135
      %1141 = vst.msk [vmem:[%s1139 + $0x8] sm:$0xff] %vm313, %v1136
      %1142 = vst.msk [vmem:[%s1139 + $0x10] sm:$0xff] %vm313, %v1137
      %1143 = vst.msk [vmem:[%s1139 + $0x18] sm:$0x3] %vm317, %v1138
      %s1144 = scalar_lea.vmem %s246, 512
      %v1145 = vld [vmem:[%s1144] sm:$0xff]
      %v1146 = vld [vmem:[%s1144 + $0x8] sm:$0xff]
      %v1147 = vld [vmem:[%s1144 + $0x10] sm:$0xff]
      %v1148 = vld [vmem:[%s1144 + $0x18] sm:$0x3]
      %v1150 = vsel %vm263, %v1145, 0
      %v1153 = vsel %vm263, %v1146, 0
      %v1156 = vsel %vm263, %v1147, 0
      %v1159 = vsel %vm263, %v1148, 0
      %1161 = vmatpush.msra.mxu0 0.0
      %1162 = vmatpush.msra.mxu0 0.0
      %1163 = vmatpush.msra.mxu0 0.0
      %1164 = vmatpush.msra.mxu0 0.0
      %1165 = vmatpush.msra.mxu0 0.0
      %1166 = vmatpush.msra.mxu0 0.0
      %1167 = vmatpush.msra.mxu0 0.0
      %1168 = vmatpush.msra.mxu0 0.0
      %1169 = vmatpush.msra.mxu0 0.0
      %1170 = vmatpush.msra.mxu0 0.0
      %1171 = vmatpush.msra.mxu0 0.0
      %1172 = vmatpush.msra.mxu0 0.0
      %1173 = vmatpush.msra.mxu0 0.0
      %1174 = vmatpush.msra.mxu0 0.0
      %1175 = vmatpush.msra.mxu0 %v278
      %1176 = vmatpush.msra.mxu0 %v253
      %1177 = vmatmul.f32.gmra.mxu0 %v1150
      %v1178 = vpop.f32.mrf.mxu0
      %v1179 = vadd.f32 %v261, %v1178
      %1180 = vmatmul.f32.gmra.mxu0 %v1153
      %v1181 = vpop.f32.mrf.mxu0
      %v1182 = vadd.f32 %v261, %v1181
      %1183 = vmatmul.f32.gmra.mxu0 %v1156
      %v1184 = vpop.f32.mrf.mxu0
      %v1185 = vadd.f32 %v261, %v1184
      %1186 = vmatmul.f32.gmra.mxu0 %v1159
      %v1187 = vpop.f32.mrf.mxu0
      %v1188 = vadd.f32 %v261, %v1187
      %1189 = vdwg.mxu0
      %v1190 = vtanh.pop %v1179
      %v1191 = vtanh.pop %v1182
      %v1192 = vtanh.pop %v1185
      %v1193 = vtanh.pop %v1188
      %s1194 = scalar_lea.vmem [#allocation2], 512
      %1195 = vst.msk [vmem:[%s1194] sm:$0xff] %vm313, %v1190
      %1196 = vst.msk [vmem:[%s1194 + $0x8] sm:$0xff] %vm313, %v1191
      %1197 = vst.msk [vmem:[%s1194 + $0x10] sm:$0xff] %vm313, %v1192
      %1198 = vst.msk [vmem:[%s1194 + $0x18] sm:$0x3] %vm317, %v1193
      %s1199 = scalar_lea.vmem %s246, 544
      %v1200 = vld [vmem:[%s1199] sm:$0xff]
      %v1201 = vld [vmem:[%s1199 + $0x8] sm:$0xff]
      %v1202 = vld [vmem:[%s1199 + $0x10] sm:$0xff]
      %v1203 = vld [vmem:[%s1199 + $0x18] sm:$0x3]
      %v1205 = vsel %vm263, %v1200, 0
      %v1208 = vsel %vm263, %v1201, 0
      %v1211 = vsel %vm263, %v1202, 0
      %v1214 = vsel %vm263, %v1203, 0
      %1216 = vmatpush.msra.mxu0 0.0
      %1217 = vmatpush.msra.mxu0 0.0
      %1218 = vmatpush.msra.mxu0 0.0
      %1219 = vmatpush.msra.mxu0 0.0
      %1220 = vmatpush.msra.mxu0 0.0
      %1221 = vmatpush.msra.mxu0 0.0
      %1222 = vmatpush.msra.mxu0 0.0
      %1223 = vmatpush.msra.mxu0 0.0
      %1224 = vmatpush.msra.mxu0 0.0
      %1225 = vmatpush.msra.mxu0 0.0
      %1226 = vmatpush.msra.mxu0 0.0
      %1227 = vmatpush.msra.mxu0 0.0
      %1228 = vmatpush.msra.mxu0 0.0
      %1229 = vmatpush.msra.mxu0 0.0
      %1230 = vmatpush.msra.mxu0 %v278
      %1231 = vmatpush.msra.mxu0 %v253
      %1232 = vmatmul.f32.gmra.mxu0 %v1205
      %v1233 = vpop.f32.mrf.mxu0
      %v1234 = vadd.f32 %v261, %v1233
      %1235 = vmatmul.f32.gmra.mxu0 %v1208
      %v1236 = vpop.f32.mrf.mxu0
      %v1237 = vadd.f32 %v261, %v1236
      %1238 = vmatmul.f32.gmra.mxu0 %v1211
      %v1239 = vpop.f32.mrf.mxu0
      %v1240 = vadd.f32 %v261, %v1239
      %1241 = vmatmul.f32.gmra.mxu0 %v1214
      %v1242 = vpop.f32.mrf.mxu0
      %v1243 = vadd.f32 %v261, %v1242
      %1244 = vdwg.mxu0
      %v1245 = vtanh.pop %v1234
      %v1246 = vtanh.pop %v1237
      %v1247 = vtanh.pop %v1240
      %v1248 = vtanh.pop %v1243
      %s1249 = scalar_lea.vmem [#allocation2], 544
      %1250 = vst.msk [vmem:[%s1249] sm:$0xff] %vm313, %v1245
      %1251 = vst.msk [vmem:[%s1249 + $0x8] sm:$0xff] %vm313, %v1246
      %1252 = vst.msk [vmem:[%s1249 + $0x10] sm:$0xff] %vm313, %v1247
      %1253 = vst.msk [vmem:[%s1249 + $0x18] sm:$0x3] %vm317, %v1248
      %s1254 = scalar_lea.vmem %s246, 576
      %v1255 = vld [vmem:[%s1254] sm:$0xff]
      %v1256 = vld [vmem:[%s1254 + $0x8] sm:$0xff]
      %v1257 = vld [vmem:[%s1254 + $0x10] sm:$0xff]
      %v1258 = vld [vmem:[%s1254 + $0x18] sm:$0x3]
      %v1260 = vsel %vm263, %v1255, 0
      %v1263 = vsel %vm263, %v1256, 0
      %v1266 = vsel %vm263, %v1257, 0
      %v1269 = vsel %vm263, %v1258, 0
      %1271 = vmatpush.msra.mxu0 0.0
      %1272 = vmatpush.msra.mxu0 0.0
      %1273 = vmatpush.msra.mxu0 0.0
      %1274 = vmatpush.msra.mxu0 0.0
      %1275 = vmatpush.msra.mxu0 0.0
      %1276 = vmatpush.msra.mxu0 0.0
      %1277 = vmatpush.msra.mxu0 0.0
      %1278 = vmatpush.msra.mxu0 0.0
      %1279 = vmatpush.msra.mxu0 0.0
      %1280 = vmatpush.msra.mxu0 0.0
      %1281 = vmatpush.msra.mxu0 0.0
      %1282 = vmatpush.msra.mxu0 0.0
      %1283 = vmatpush.msra.mxu0 0.0
      %1284 = vmatpush.msra.mxu0 0.0
      %1285 = vmatpush.msra.mxu0 %v278
      %1286 = vmatpush.msra.mxu0 %v253
      %1287 = vmatmul.f32.gmra.mxu0 %v1260
      %v1288 = vpop.f32.mrf.mxu0
      %v1289 = vadd.f32 %v261, %v1288
      %1290 = vmatmul.f32.gmra.mxu0 %v1263
      %v1291 = vpop.f32.mrf.mxu0
      %v1292 = vadd.f32 %v261, %v1291
      %1293 = vmatmul.f32.gmra.mxu0 %v1266
      %v1294 = vpop.f32.mrf.mxu0
      %v1295 = vadd.f32 %v261, %v1294
      %1296 = vmatmul.f32.gmra.mxu0 %v1269
      %v1297 = vpop.f32.mrf.mxu0
      %v1298 = vadd.f32 %v261, %v1297
      %1299 = vdwg.mxu0
      %v1300 = vtanh.pop %v1289
      %v1301 = vtanh.pop %v1292
      %v1302 = vtanh.pop %v1295
      %v1303 = vtanh.pop %v1298
      %s1304 = scalar_lea.vmem [#allocation2], 576
      %1305 = vst.msk [vmem:[%s1304] sm:$0xff] %vm313, %v1300
      %1306 = vst.msk [vmem:[%s1304 + $0x8] sm:$0xff] %vm313, %v1301
      %1307 = vst.msk [vmem:[%s1304 + $0x10] sm:$0xff] %vm313, %v1302
      %1308 = vst.msk [vmem:[%s1304 + $0x18] sm:$0x3] %vm317, %v1303
      %s1309 = scalar_lea.vmem %s246, 608
      %v1310 = vld [vmem:[%s1309] sm:$0xff]
      %v1311 = vld [vmem:[%s1309 + $0x8] sm:$0xff]
      %v1312 = vld [vmem:[%s1309 + $0x10] sm:$0xff]
      %v1313 = vld [vmem:[%s1309 + $0x18] sm:$0x3]
      %v1315 = vsel %vm263, %v1310, 0
      %v1318 = vsel %vm263, %v1311, 0
      %v1321 = vsel %vm263, %v1312, 0
      %v1324 = vsel %vm263, %v1313, 0
      %1326 = vmatpush.msra.mxu0 0.0
      %1327 = vmatpush.msra.mxu0 0.0
      %1328 = vmatpush.msra.mxu0 0.0
      %1329 = vmatpush.msra.mxu0 0.0
      %1330 = vmatpush.msra.mxu0 0.0
      %1331 = vmatpush.msra.mxu0 0.0
      %1332 = vmatpush.msra.mxu0 0.0
      %1333 = vmatpush.msra.mxu0 0.0
      %1334 = vmatpush.msra.mxu0 0.0
      %1335 = vmatpush.msra.mxu0 0.0
      %1336 = vmatpush.msra.mxu0 0.0
      %1337 = vmatpush.msra.mxu0 0.0
      %1338 = vmatpush.msra.mxu0 0.0
      %1339 = vmatpush.msra.mxu0 0.0
      %1340 = vmatpush.msra.mxu0 %v278
      %1341 = vmatpush.msra.mxu0 %v253
      %1342 = vmatmul.f32.gmra.mxu0 %v1315
      %v1343 = vpop.f32.mrf.mxu0
      %v1344 = vadd.f32 %v261, %v1343
      %1345 = vmatmul.f32.gmra.mxu0 %v1318
      %v1346 = vpop.f32.mrf.mxu0
      %v1347 = vadd.f32 %v261, %v1346
      %1348 = vmatmul.f32.gmra.mxu0 %v1321
      %v1349 = vpop.f32.mrf.mxu0
      %v1350 = vadd.f32 %v261, %v1349
      %1351 = vmatmul.f32.gmra.mxu0 %v1324
      %v1352 = vpop.f32.mrf.mxu0
      %v1353 = vadd.f32 %v261, %v1352
      %1354 = vdwg.mxu0
      %v1355 = vtanh.pop %v1344
      %v1356 = vtanh.pop %v1347
      %v1357 = vtanh.pop %v1350
      %v1358 = vtanh.pop %v1353
      %s1359 = scalar_lea.vmem [#allocation2], 608
      %1360 = vst.msk [vmem:[%s1359] sm:$0xff] %vm313, %v1355
      %1361 = vst.msk [vmem:[%s1359 + $0x8] sm:$0xff] %vm313, %v1356
      %1362 = vst.msk [vmem:[%s1359 + $0x10] sm:$0xff] %vm313, %v1357
      %1363 = vst.msk [vmem:[%s1359 + $0x18] sm:$0x3] %vm317, %v1358
      %s1364 = scalar_lea.vmem %s246, 640
      %v1365 = vld [vmem:[%s1364] sm:$0xff]
      %v1366 = vld [vmem:[%s1364 + $0x8] sm:$0xff]
      %v1367 = vld [vmem:[%s1364 + $0x10] sm:$0xff]
      %v1368 = vld [vmem:[%s1364 + $0x18] sm:$0x3]
      %v1370 = vsel %vm263, %v1365, 0
      %v1373 = vsel %vm263, %v1366, 0
      %v1376 = vsel %vm263, %v1367, 0
      %v1379 = vsel %vm263, %v1368, 0
      %1381 = vmatpush.msra.mxu0 0.0
      %1382 = vmatpush.msra.mxu0 0.0
      %1383 = vmatpush.msra.mxu0 0.0
      %1384 = vmatpush.msra.mxu0 0.0
      %1385 = vmatpush.msra.mxu0 0.0
      %1386 = vmatpush.msra.mxu0 0.0
      %1387 = vmatpush.msra.mxu0 0.0
      %1388 = vmatpush.msra.mxu0 0.0
      %1389 = vmatpush.msra.mxu0 0.0
      %1390 = vmatpush.msra.mxu0 0.0
      %1391 = vmatpush.msra.mxu0 0.0
      %1392 = vmatpush.msra.mxu0 0.0
      %1393 = vmatpush.msra.mxu0 0.0
      %1394 = vmatpush.msra.mxu0 0.0
      %1395 = vmatpush.msra.mxu0 %v278
      %1396 = vmatpush.msra.mxu0 %v253
      %1397 = vmatmul.f32.gmra.mxu0 %v1370
      %v1398 = vpop.f32.mrf.mxu0
      %v1399 = vadd.f32 %v261, %v1398
      %1400 = vmatmul.f32.gmra.mxu0 %v1373
      %v1401 = vpop.f32.mrf.mxu0
      %v1402 = vadd.f32 %v261, %v1401
      %1403 = vmatmul.f32.gmra.mxu0 %v1376
      %v1404 = vpop.f32.mrf.mxu0
      %v1405 = vadd.f32 %v261, %v1404
      %1406 = vmatmul.f32.gmra.mxu0 %v1379
      %v1407 = vpop.f32.mrf.mxu0
      %v1408 = vadd.f32 %v261, %v1407
      %1409 = vdwg.mxu0
      %v1410 = vtanh.pop %v1399
      %v1411 = vtanh.pop %v1402
      %v1412 = vtanh.pop %v1405
      %v1413 = vtanh.pop %v1408
      %s1414 = scalar_lea.vmem [#allocation2], 640
      %1415 = vst.msk [vmem:[%s1414] sm:$0xff] %vm313, %v1410
      %1416 = vst.msk [vmem:[%s1414 + $0x8] sm:$0xff] %vm313, %v1411
      %1417 = vst.msk [vmem:[%s1414 + $0x10] sm:$0xff] %vm313, %v1412
      %1418 = vst.msk [vmem:[%s1414 + $0x18] sm:$0x3] %vm317, %v1413
      %s1419 = scalar_lea.vmem %s246, 672
      %v1420 = vld [vmem:[%s1419] sm:$0xff]
      %v1421 = vld [vmem:[%s1419 + $0x8] sm:$0xff]
      %v1422 = vld [vmem:[%s1419 + $0x10] sm:$0xff]
      %v1423 = vld [vmem:[%s1419 + $0x18] sm:$0x3]
      %v1425 = vsel %vm263, %v1420, 0
      %v1428 = vsel %vm263, %v1421, 0
      %v1431 = vsel %vm263, %v1422, 0
      %v1434 = vsel %vm263, %v1423, 0
      %1436 = vmatpush.msra.mxu0 0.0
      %1437 = vmatpush.msra.mxu0 0.0
      %1438 = vmatpush.msra.mxu0 0.0
      %1439 = vmatpush.msra.mxu0 0.0
      %1440 = vmatpush.msra.mxu0 0.0
      %1441 = vmatpush.msra.mxu0 0.0
      %1442 = vmatpush.msra.mxu0 0.0
      %1443 = vmatpush.msra.mxu0 0.0
      %1444 = vmatpush.msra.mxu0 0.0
      %1445 = vmatpush.msra.mxu0 0.0
      %1446 = vmatpush.msra.mxu0 0.0
      %1447 = vmatpush.msra.mxu0 0.0
      %1448 = vmatpush.msra.mxu0 0.0
      %1449 = vmatpush.msra.mxu0 0.0
      %1450 = vmatpush.msra.mxu0 %v278
      %1451 = vmatpush.msra.mxu0 %v253
      %1452 = vmatmul.f32.gmra.mxu0 %v1425
      %v1453 = vpop.f32.mrf.mxu0
      %v1454 = vadd.f32 %v261, %v1453
      %1455 = vmatmul.f32.gmra.mxu0 %v1428
      %v1456 = vpop.f32.mrf.mxu0
      %v1457 = vadd.f32 %v261, %v1456
      %1458 = vmatmul.f32.gmra.mxu0 %v1431
      %v1459 = vpop.f32.mrf.mxu0
      %v1460 = vadd.f32 %v261, %v1459
      %1461 = vmatmul.f32.gmra.mxu0 %v1434
      %v1462 = vpop.f32.mrf.mxu0
      %v1463 = vadd.f32 %v261, %v1462
      %1464 = vdwg.mxu0
      %v1465 = vtanh.pop %v1454
      %v1466 = vtanh.pop %v1457
      %v1467 = vtanh.pop %v1460
      %v1468 = vtanh.pop %v1463
      %s1469 = scalar_lea.vmem [#allocation2], 672
      %1470 = vst.msk [vmem:[%s1469] sm:$0xff] %vm313, %v1465
      %1471 = vst.msk [vmem:[%s1469 + $0x8] sm:$0xff] %vm313, %v1466
      %1472 = vst.msk [vmem:[%s1469 + $0x10] sm:$0xff] %vm313, %v1467
      %1473 = vst.msk [vmem:[%s1469 + $0x18] sm:$0x3] %vm317, %v1468
      %s1474 = scalar_lea.vmem %s246, 704
      %v1475 = vld [vmem:[%s1474] sm:$0xff]
      %v1476 = vld [vmem:[%s1474 + $0x8] sm:$0xff]
      %v1477 = vld [vmem:[%s1474 + $0x10] sm:$0xff]
      %v1478 = vld [vmem:[%s1474 + $0x18] sm:$0x3]
      %v1480 = vsel %vm263, %v1475, 0
      %v1483 = vsel %vm263, %v1476, 0
      %v1486 = vsel %vm263, %v1477, 0
      %v1489 = vsel %vm263, %v1478, 0
      %1491 = vmatpush.msra.mxu0 0.0
      %1492 = vmatpush.msra.mxu0 0.0
      %1493 = vmatpush.msra.mxu0 0.0
      %1494 = vmatpush.msra.mxu0 0.0
      %1495 = vmatpush.msra.mxu0 0.0
      %1496 = vmatpush.msra.mxu0 0.0
      %1497 = vmatpush.msra.mxu0 0.0
      %1498 = vmatpush.msra.mxu0 0.0
      %1499 = vmatpush.msra.mxu0 0.0
      %1500 = vmatpush.msra.mxu0 0.0
      %1501 = vmatpush.msra.mxu0 0.0
      %1502 = vmatpush.msra.mxu0 0.0
      %1503 = vmatpush.msra.mxu0 0.0
      %1504 = vmatpush.msra.mxu0 0.0
      %1505 = vmatpush.msra.mxu0 %v278
      %1506 = vmatpush.msra.mxu0 %v253
      %1507 = vmatmul.f32.gmra.mxu0 %v1480
      %v1508 = vpop.f32.mrf.mxu0
      %v1509 = vadd.f32 %v261, %v1508
      %1510 = vmatmul.f32.gmra.mxu0 %v1483
      %v1511 = vpop.f32.mrf.mxu0
      %v1512 = vadd.f32 %v261, %v1511
      %1513 = vmatmul.f32.gmra.mxu0 %v1486
      %v1514 = vpop.f32.mrf.mxu0
      %v1515 = vadd.f32 %v261, %v1514
      %1516 = vmatmul.f32.gmra.mxu0 %v1489
      %v1517 = vpop.f32.mrf.mxu0
      %v1518 = vadd.f32 %v261, %v1517
      %1519 = vdwg.mxu0
      %v1520 = vtanh.pop %v1509
      %v1521 = vtanh.pop %v1512
      %v1522 = vtanh.pop %v1515
      %v1523 = vtanh.pop %v1518
      %s1524 = scalar_lea.vmem [#allocation2], 704
      %1525 = vst.msk [vmem:[%s1524] sm:$0xff] %vm313, %v1520
      %1526 = vst.msk [vmem:[%s1524 + $0x8] sm:$0xff] %vm313, %v1521
      %1527 = vst.msk [vmem:[%s1524 + $0x10] sm:$0xff] %vm313, %v1522
      %1528 = vst.msk [vmem:[%s1524 + $0x18] sm:$0x3] %vm317, %v1523
      %s1529 = scalar_lea.vmem %s246, 736
      %v1530 = vld [vmem:[%s1529] sm:$0xff]
      %v1531 = vld [vmem:[%s1529 + $0x8] sm:$0xff]
      %v1532 = vld [vmem:[%s1529 + $0x10] sm:$0xff]
      %v1533 = vld [vmem:[%s1529 + $0x18] sm:$0x3]
      %v1535 = vsel %vm263, %v1530, 0
      %v1538 = vsel %vm263, %v1531, 0
      %v1541 = vsel %vm263, %v1532, 0
      %v1544 = vsel %vm263, %v1533, 0
      %1546 = vmatpush.msra.mxu0 0.0
      %1547 = vmatpush.msra.mxu0 0.0
      %1548 = vmatpush.msra.mxu0 0.0
      %1549 = vmatpush.msra.mxu0 0.0
      %1550 = vmatpush.msra.mxu0 0.0
      %1551 = vmatpush.msra.mxu0 0.0
      %1552 = vmatpush.msra.mxu0 0.0
      %1553 = vmatpush.msra.mxu0 0.0
      %1554 = vmatpush.msra.mxu0 0.0
      %1555 = vmatpush.msra.mxu0 0.0
      %1556 = vmatpush.msra.mxu0 0.0
      %1557 = vmatpush.msra.mxu0 0.0
      %1558 = vmatpush.msra.mxu0 0.0
      %1559 = vmatpush.msra.mxu0 0.0
      %1560 = vmatpush.msra.mxu0 %v278
      %1561 = vmatpush.msra.mxu0 %v253
      %1562 = vmatmul.f32.gmra.mxu0 %v1535
      %v1563 = vpop.f32.mrf.mxu0
      %v1564 = vadd.f32 %v261, %v1563
      %1565 = vmatmul.f32.gmra.mxu0 %v1538
      %v1566 = vpop.f32.mrf.mxu0
      %v1567 = vadd.f32 %v261, %v1566
      %1568 = vmatmul.f32.gmra.mxu0 %v1541
      %v1569 = vpop.f32.mrf.mxu0
      %v1570 = vadd.f32 %v261, %v1569
      %1571 = vmatmul.f32.gmra.mxu0 %v1544
      %v1572 = vpop.f32.mrf.mxu0
      %v1573 = vadd.f32 %v261, %v1572
      %1574 = vdwg.mxu0
      %v1575 = vtanh.pop %v1564
      %v1576 = vtanh.pop %v1567
      %v1577 = vtanh.pop %v1570
      %v1578 = vtanh.pop %v1573
      %s1579 = scalar_lea.vmem [#allocation2], 736
      %1580 = vst.msk [vmem:[%s1579] sm:$0xff] %vm313, %v1575
      %1581 = vst.msk [vmem:[%s1579 + $0x8] sm:$0xff] %vm313, %v1576
      %1582 = vst.msk [vmem:[%s1579 + $0x10] sm:$0xff] %vm313, %v1577
      %1583 = vst.msk [vmem:[%s1579 + $0x18] sm:$0x3] %vm317, %v1578
      %s1584 = scalar_lea.vmem %s246, 768
      %v1585 = vld [vmem:[%s1584] sm:$0xff]
      %v1586 = vld [vmem:[%s1584 + $0x8] sm:$0xff]
      %v1587 = vld [vmem:[%s1584 + $0x10] sm:$0xff]
      %v1588 = vld [vmem:[%s1584 + $0x18] sm:$0x3]
      %v1590 = vsel %vm263, %v1585, 0
      %v1593 = vsel %vm263, %v1586, 0
      %v1596 = vsel %vm263, %v1587, 0
      %v1599 = vsel %vm263, %v1588, 0
      %1601 = vmatpush.msra.mxu0 0.0
      %1602 = vmatpush.msra.mxu0 0.0
      %1603 = vmatpush.msra.mxu0 0.0
      %1604 = vmatpush.msra.mxu0 0.0
      %1605 = vmatpush.msra.mxu0 0.0
      %1606 = vmatpush.msra.mxu0 0.0
      %1607 = vmatpush.msra.mxu0 0.0
      %1608 = vmatpush.msra.mxu0 0.0
      %1609 = vmatpush.msra.mxu0 0.0
      %1610 = vmatpush.msra.mxu0 0.0
      %1611 = vmatpush.msra.mxu0 0.0
      %1612 = vmatpush.msra.mxu0 0.0
      %1613 = vmatpush.msra.mxu0 0.0
      %1614 = vmatpush.msra.mxu0 0.0
      %1615 = vmatpush.msra.mxu0 %v278
      %1616 = vmatpush.msra.mxu0 %v253
      %1617 = vmatmul.f32.gmra.mxu0 %v1590
      %v1618 = vpop.f32.mrf.mxu0
      %v1619 = vadd.f32 %v261, %v1618
      %1620 = vmatmul.f32.gmra.mxu0 %v1593
      %v1621 = vpop.f32.mrf.mxu0
      %v1622 = vadd.f32 %v261, %v1621
      %1623 = vmatmul.f32.gmra.mxu0 %v1596
      %v1624 = vpop.f32.mrf.mxu0
      %v1625 = vadd.f32 %v261, %v1624
      %1626 = vmatmul.f32.gmra.mxu0 %v1599
      %v1627 = vpop.f32.mrf.mxu0
      %v1628 = vadd.f32 %v261, %v1627
      %1629 = vdwg.mxu0
      %v1630 = vtanh.pop %v1619
      %v1631 = vtanh.pop %v1622
      %v1632 = vtanh.pop %v1625
      %v1633 = vtanh.pop %v1628
      %s1634 = scalar_lea.vmem [#allocation2], 768
      %1635 = vst.msk [vmem:[%s1634] sm:$0xff] %vm313, %v1630
      %1636 = vst.msk [vmem:[%s1634 + $0x8] sm:$0xff] %vm313, %v1631
      %1637 = vst.msk [vmem:[%s1634 + $0x10] sm:$0xff] %vm313, %v1632
      %1638 = vst.msk [vmem:[%s1634 + $0x18] sm:$0x3] %vm317, %v1633
      %s1639 = scalar_lea.vmem %s246, 800
      %v1640 = vld [vmem:[%s1639] sm:$0xff]
      %v1641 = vld [vmem:[%s1639 + $0x8] sm:$0xff]
      %v1642 = vld [vmem:[%s1639 + $0x10] sm:$0xff]
      %v1643 = vld [vmem:[%s1639 + $0x18] sm:$0x3]
      %v1645 = vsel %vm263, %v1640, 0
      %v1648 = vsel %vm263, %v1641, 0
      %v1651 = vsel %vm263, %v1642, 0
      %v1654 = vsel %vm263, %v1643, 0
      %1656 = vmatpush.msra.mxu0 0.0
      %1657 = vmatpush.msra.mxu0 0.0
      %1658 = vmatpush.msra.mxu0 0.0
      %1659 = vmatpush.msra.mxu0 0.0
      %1660 = vmatpush.msra.mxu0 0.0
      %1661 = vmatpush.msra.mxu0 0.0
      %1662 = vmatpush.msra.mxu0 0.0
      %1663 = vmatpush.msra.mxu0 0.0
      %1664 = vmatpush.msra.mxu0 0.0
      %1665 = vmatpush.msra.mxu0 0.0
      %1666 = vmatpush.msra.mxu0 0.0
      %1667 = vmatpush.msra.mxu0 0.0
      %1668 = vmatpush.msra.mxu0 0.0
      %1669 = vmatpush.msra.mxu0 0.0
      %1670 = vmatpush.msra.mxu0 %v278
      %1671 = vmatpush.msra.mxu0 %v253
      %1672 = vmatmul.f32.gmra.mxu0 %v1645
      %v1673 = vpop.f32.mrf.mxu0
      %v1674 = vadd.f32 %v261, %v1673
      %1675 = vmatmul.f32.gmra.mxu0 %v1648
      %v1676 = vpop.f32.mrf.mxu0
      %v1677 = vadd.f32 %v261, %v1676
      %1678 = vmatmul.f32.gmra.mxu0 %v1651
      %v1679 = vpop.f32.mrf.mxu0
      %v1680 = vadd.f32 %v261, %v1679
      %1681 = vmatmul.f32.gmra.mxu0 %v1654
      %v1682 = vpop.f32.mrf.mxu0
      %v1683 = vadd.f32 %v261, %v1682
      %1684 = vdwg.mxu0
      %v1685 = vtanh.pop %v1674
      %v1686 = vtanh.pop %v1677
      %v1687 = vtanh.pop %v1680
      %v1688 = vtanh.pop %v1683
      %s1689 = scalar_lea.vmem [#allocation2], 800
      %1690 = vst.msk [vmem:[%s1689] sm:$0xff] %vm313, %v1685
      %1691 = vst.msk [vmem:[%s1689 + $0x8] sm:$0xff] %vm313, %v1686
      %1692 = vst.msk [vmem:[%s1689 + $0x10] sm:$0xff] %vm313, %v1687
      %1693 = vst.msk [vmem:[%s1689 + $0x18] sm:$0x3] %vm317, %v1688
      %v1694 = vld [vmem:[#allocation2] sm:$0xff]
      %v1695 = vld [vmem:[#allocation2 + $0x8] sm:$0xff]
      %v1696 = vld [vmem:[#allocation2 + $0x10] sm:$0xff]
      %v1697 = vld [vmem:[#allocation2 + $0x20] sm:$0xff]
      %v1698 = vld [vmem:[#allocation2 + $0x28] sm:$0xff]
      %v1699 = vld [vmem:[#allocation2 + $0x30] sm:$0xff]
      %v1700 = vld [vmem:[#allocation2 + $0x40] sm:$0xff]
      %v1701 = vld [vmem:[#allocation2 + $0x48] sm:$0xff]
      %v1702 = vld [vmem:[#allocation2 + $0x50] sm:$0xff]
      %v1703 = vld [vmem:[#allocation2 + $0x60] sm:$0xff]
      %v1704 = vld [vmem:[#allocation2 + $0x68] sm:$0xff]
      %v1705 = vld [vmem:[#allocation2 + $0x70] sm:$0xff]
      %v1706 = vld [vmem:[#allocation2 + $0x80] sm:$0xff]
      %v1707 = vld [vmem:[#allocation2 + $0x88] sm:$0xff]
      %v1708 = vld [vmem:[#allocation2 + $0x90] sm:$0xff]
      %v1709 = vld [vmem:[#allocation2 + $0xa0] sm:$0xff]
      %v1710 = vld [vmem:[#allocation2 + $0xa8] sm:$0xff]
      %v1711 = vld [vmem:[#allocation2 + $0xb0] sm:$0xff]
      %v1712 = vld [vmem:[#allocation2 + $0xc0] sm:$0xff]
      %v1713 = vld [vmem:[#allocation2 + $0xc8] sm:$0xff]
      %v1714 = vld [vmem:[#allocation2 + $0xd0] sm:$0xff]
      %v1715 = vld [vmem:[#allocation2 + $0xe0] sm:$0xff]
      %v1716 = vld [vmem:[#allocation2 + $0xe8] sm:$0xff]
      %v1717 = vld [vmem:[#allocation2 + $0xf0] sm:$0xff]
      %v1718 = vld [vmem:[#allocation2 + $0x100] sm:$0xff]
      %v1719 = vld [vmem:[#allocation2 + $0x108] sm:$0xff]
      %v1720 = vld [vmem:[#allocation2 + $0x110] sm:$0xff]
      %v1721 = vld [vmem:[#allocation2 + $0x120] sm:$0xff]
      %v1722 = vld [vmem:[#allocation2 + $0x128] sm:$0xff]
      %v1723 = vld [vmem:[#allocation2 + $0x130] sm:$0xff]
      %v1724 = vld [vmem:[#allocation2 + $0x140] sm:$0xff]
      %v1725 = vld [vmem:[#allocation2 + $0x148] sm:$0xff]
      %v1726 = vld [vmem:[#allocation2 + $0x150] sm:$0xff]
      %v1727 = vld [vmem:[#allocation2 + $0x160] sm:$0xff]
      %v1728 = vld [vmem:[#allocation2 + $0x168] sm:$0xff]
      %v1729 = vld [vmem:[#allocation2 + $0x170] sm:$0xff]
      %v1730 = vld [vmem:[#allocation2 + $0x180] sm:$0xff]
      %v1731 = vld [vmem:[#allocation2 + $0x188] sm:$0xff]
      %v1732 = vld [vmem:[#allocation2 + $0x190] sm:$0xff]
      %v1733 = vld [vmem:[#allocation2 + $0x1a0] sm:$0xff]
      %v1734 = vld [vmem:[#allocation2 + $0x1a8] sm:$0xff]
      %v1735 = vld [vmem:[#allocation2 + $0x1b0] sm:$0xff]
      %v1736 = vld [vmem:[#allocation2 + $0x1c0] sm:$0xff]
      %v1737 = vld [vmem:[#allocation2 + $0x1c8] sm:$0xff]
      %v1738 = vld [vmem:[#allocation2 + $0x1d0] sm:$0xff]
      %v1739 = vld [vmem:[#allocation2 + $0x1e0] sm:$0xff]
      %v1740 = vld [vmem:[#allocation2 + $0x1e8] sm:$0xff]
      %v1741 = vld [vmem:[#allocation2 + $0x1f0] sm:$0xff]
      %v1742 = vld [vmem:[#allocation2 + $0x200] sm:$0xff]
      %v1743 = vld [vmem:[#allocation2 + $0x208] sm:$0xff]
      %v1744 = vld [vmem:[#allocation2 + $0x210] sm:$0xff]
      %v1745 = vld [vmem:[#allocation2 + $0x220] sm:$0xff]
      %v1746 = vld [vmem:[#allocation2 + $0x228] sm:$0xff]
      %v1747 = vld [vmem:[#allocation2 + $0x230] sm:$0xff]
      %v1748 = vld [vmem:[#allocation2 + $0x240] sm:$0xff]
      %v1749 = vld [vmem:[#allocation2 + $0x248] sm:$0xff]
      %v1750 = vld [vmem:[#allocation2 + $0x250] sm:$0xff]
      %v1751 = vld [vmem:[#allocation2 + $0x260] sm:$0xff]
      %v1752 = vld [vmem:[#allocation2 + $0x268] sm:$0xff]
      %v1753 = vld [vmem:[#allocation2 + $0x270] sm:$0xff]
      %v1754 = vld [vmem:[#allocation2 + $0x280] sm:$0xff]
      %v1755 = vld [vmem:[#allocation2 + $0x288] sm:$0xff]
      %v1756 = vld [vmem:[#allocation2 + $0x290] sm:$0xff]
      %v1757 = vld [vmem:[#allocation2 + $0x2a0] sm:$0xff]
      %v1758 = vld [vmem:[#allocation2 + $0x2a8] sm:$0xff]
      %v1759 = vld [vmem:[#allocation2 + $0x2b0] sm:$0xff]
      %v1760 = vld [vmem:[#allocation2 + $0x2c0] sm:$0xff]
      %v1761 = vld [vmem:[#allocation2 + $0x2c8] sm:$0xff]
      %v1762 = vld [vmem:[#allocation2 + $0x2d0] sm:$0xff]
      %v1763 = vld [vmem:[#allocation2 + $0x2e0] sm:$0xff]
      %v1764 = vld [vmem:[#allocation2 + $0x2e8] sm:$0xff]
      %v1765 = vld [vmem:[#allocation2 + $0x2f0] sm:$0xff]
      %v1766 = vpack.c.bf16 %v1695, %v1694
      %v1767 = vpack.c.bf16 %v1697, %v1696
      %v1768 = vpack.c.bf16 %v1699, %v1698
      %v1769 = vpack.c.bf16 %v1701, %v1700
      %v1770 = vpack.c.bf16 %v1703, %v1702
      %v1771 = vpack.c.bf16 %v1705, %v1704
      %v1772 = vpack.c.bf16 %v1707, %v1706
      %v1773 = vpack.c.bf16 %v1709, %v1708
      %v1774 = vpack.c.bf16 %v1711, %v1710
      %v1775 = vpack.c.bf16 %v1713, %v1712
      %v1776 = vpack.c.bf16 %v1715, %v1714
      %v1777 = vpack.c.bf16 %v1717, %v1716
      %v1778 = vpack.c.bf16 %v1719, %v1718
      %v1779 = vpack.c.bf16 %v1721, %v1720
      %v1780 = vpack.c.bf16 %v1723, %v1722
      %v1781 = vpack.c.bf16 %v1725, %v1724
      %v1782 = vpack.c.bf16 %v1727, %v1726
      %v1783 = vpack.c.bf16 %v1729, %v1728
      %v1784 = vpack.c.bf16 %v1731, %v1730
      %v1785 = vpack.c.bf16 %v1733, %v1732
      %v1786 = vpack.c.bf16 %v1735, %v1734
      %v1787 = vpack.c.bf16 %v1737, %v1736
      %v1788 = vpack.c.bf16 %v1739, %v1738
      %v1789 = vpack.c.bf16 %v1741, %v1740
      %v1790 = vpack.c.bf16 %v1743, %v1742
      %v1791 = vpack.c.bf16 %v1745, %v1744
      %v1792 = vpack.c.bf16 %v1747, %v1746
      %v1793 = vpack.c.bf16 %v1749, %v1748
      %v1794 = vpack.c.bf16 %v1751, %v1750
      %v1795 = vpack.c.bf16 %v1753, %v1752
      %v1796 = vpack.c.bf16 %v1755, %v1754
      %v1797 = vpack.c.bf16 %v1757, %v1756
      %v1798 = vpack.c.bf16 %v1759, %v1758
      %v1799 = vpack.c.bf16 %v1761, %v1760
      %v1800 = vpack.c.bf16 %v1763, %v1762
      %v1801 = vpack.c.bf16 %v1765, %v1764
      %v1802 = vld [vmem:[%s3] sm:$0xf]
      %v1803 = vld [vmem:[%s3 + $0x4] sm:$0xf]
      %v1804 = vld [vmem:[%s3 + $0x8] sm:$0xf]
      %v1805 = vld [vmem:[%s3 + $0xc] sm:$0xf]
      %v1806 = vld [vmem:[#allocation2 + $0x1] sm:$0xff]
      %v1807 = vld [vmem:[#allocation2 + $0x9] sm:$0xff]
      %v1808 = vld [vmem:[#allocation2 + $0x11] sm:$0xff]
      %v1809 = vld [vmem:[#allocation2 + $0x21] sm:$0xff]
      %v1810 = vld [vmem:[#allocation2 + $0x29] sm:$0xff]
      %v1811 = vld [vmem:[#allocation2 + $0x31] sm:$0xff]
      %v1812 = vld [vmem:[#allocation2 + $0x41] sm:$0xff]
      %v1813 = vld [vmem:[#allocation2 + $0x49] sm:$0xff]
      %v1814 = vld [vmem:[#allocation2 + $0x51] sm:$0xff]
      %v1815 = vld [vmem:[#allocation2 + $0x61] sm:$0xff]
      %v1816 = vld [vmem:[#allocation2 + $0x69] sm:$0xff]
      %v1817 = vld [vmem:[#allocation2 + $0x71] sm:$0xff]
      %v1818 = vld [vmem:[#allocation2 + $0x81] sm:$0xff]
      %v1819 = vld [vmem:[#allocation2 + $0x89] sm:$0xff]
      %v1820 = vld [vmem:[#allocation2 + $0x91] sm:$0xff]
      %v1821 = vld [vmem:[#allocation2 + $0xa1] sm:$0xff]
      %v1822 = vld [vmem:[#allocation2 + $0xa9] sm:$0xff]
      %v1823 = vld [vmem:[#allocation2 + $0xb1] sm:$0xff]
      %v1824 = vld [vmem:[#allocation2 + $0xc1] sm:$0xff]
      %v1825 = vld [vmem:[#allocation2 + $0xc9] sm:$0xff]
      %v1826 = vld [vmem:[#allocation2 + $0xd1] sm:$0xff]
      %v1827 = vld [vmem:[#allocation2 + $0xe1] sm:$0xff]
      %v1828 = vld [vmem:[#allocation2 + $0xe9] sm:$0xff]
      %v1829 = vld [vmem:[#allocation2 + $0xf1] sm:$0xff]
      %v1830 = vld [vmem:[#allocation2 + $0x101] sm:$0xff]
      %v1831 = vld [vmem:[#allocation2 + $0x109] sm:$0xff]
      %v1832 = vld [vmem:[#allocation2 + $0x111] sm:$0xff]
      %v1833 = vld [vmem:[#allocation2 + $0x121] sm:$0xff]
      %v1834 = vld [vmem:[#allocation2 + $0x129] sm:$0xff]
      %v1835 = vld [vmem:[#allocation2 + $0x131] sm:$0xff]
      %v1836 = vld [vmem:[#allocation2 + $0x141] sm:$0xff]
      %v1837 = vld [vmem:[#allocation2 + $0x149] sm:$0xff]
      %v1838 = vld [vmem:[#allocation2 + $0x151] sm:$0xff]
      %v1839 = vld [vmem:[#allocation2 + $0x161] sm:$0xff]
      %v1840 = vld [vmem:[#allocation2 + $0x169] sm:$0xff]
      %v1841 = vld [vmem:[#allocation2 + $0x171] sm:$0xff]
      %v1842 = vld [vmem:[#allocation2 + $0x181] sm:$0xff]
      %v1843 = vld [vmem:[#allocation2 + $0x189] sm:$0xff]
      %v1844 = vld [vmem:[#allocation2 + $0x191] sm:$0xff]
      %v1845 = vld [vmem:[#allocation2 + $0x1a1] sm:$0xff]
      %v1846 = vld [vmem:[#allocation2 + $0x1a9] sm:$0xff]
      %v1847 = vld [vmem:[#allocation2 + $0x1b1] sm:$0xff]
      %v1848 = vld [vmem:[#allocation2 + $0x1c1] sm:$0xff]
      %v1849 = vld [vmem:[#allocation2 + $0x1c9] sm:$0xff]
      %v1850 = vld [vmem:[#allocation2 + $0x1d1] sm:$0xff]
      %v1851 = vld [vmem:[#allocation2 + $0x1e1] sm:$0xff]
      %v1852 = vld [vmem:[#allocation2 + $0x1e9] sm:$0xff]
      %v1853 = vld [vmem:[#allocation2 + $0x1f1] sm:$0xff]
      %v1854 = vld [vmem:[#allocation2 + $0x201] sm:$0xff]
      %v1855 = vld [vmem:[#allocation2 + $0x209] sm:$0xff]
      %v1856 = vld [vmem:[#allocation2 + $0x211] sm:$0xff]
      %v1857 = vld [vmem:[#allocation2 + $0x221] sm:$0xff]
      %v1858 = vld [vmem:[#allocation2 + $0x229] sm:$0xff]
      %v1859 = vld [vmem:[#allocation2 + $0x231] sm:$0xff]
      %v1860 = vld [vmem:[#allocation2 + $0x241] sm:$0xff]
      %v1861 = vld [vmem:[#allocation2 + $0x249] sm:$0xff]
      %v1862 = vld [vmem:[#allocation2 + $0x251] sm:$0xff]
      %v1863 = vld [vmem:[#allocation2 + $0x261] sm:$0xff]
      %v1864 = vld [vmem:[#allocation2 + $0x269] sm:$0xff]
      %v1865 = vld [vmem:[#allocation2 + $0x271] sm:$0xff]
      %v1866 = vld [vmem:[#allocation2 + $0x281] sm:$0xff]
      %v1867 = vld [vmem:[#allocation2 + $0x289] sm:$0xff]
      %v1868 = vld [vmem:[#allocation2 + $0x291] sm:$0xff]
      %v1869 = vld [vmem:[#allocation2 + $0x2a1] sm:$0xff]
      %v1870 = vld [vmem:[#allocation2 + $0x2a9] sm:$0xff]
      %v1871 = vld [vmem:[#allocation2 + $0x2b1] sm:$0xff]
      %v1872 = vld [vmem:[#allocation2 + $0x2c1] sm:$0xff]
      %v1873 = vld [vmem:[#allocation2 + $0x2c9] sm:$0xff]
      %v1874 = vld [vmem:[#allocation2 + $0x2d1] sm:$0xff]
      %v1875 = vld [vmem:[#allocation2 + $0x2e1] sm:$0xff]
      %v1876 = vld [vmem:[#allocation2 + $0x2e9] sm:$0xff]
      %v1877 = vld [vmem:[#allocation2 + $0x2f1] sm:$0xff]
      %v1878 = vpack.c.bf16 %v1807, %v1806
      %v1879 = vpack.c.bf16 %v1809, %v1808
      %v1880 = vpack.c.bf16 %v1811, %v1810
      %v1881 = vpack.c.bf16 %v1813, %v1812
      %v1882 = vpack.c.bf16 %v1815, %v1814
      %v1883 = vpack.c.bf16 %v1817, %v1816
      %v1884 = vpack.c.bf16 %v1819, %v1818
      %v1885 = vpack.c.bf16 %v1821, %v1820
      %v1886 = vpack.c.bf16 %v1823, %v1822
      %v1887 = vpack.c.bf16 %v1825, %v1824
      %v1888 = vpack.c.bf16 %v1827, %v1826
      %v1889 = vpack.c.bf16 %v1829, %v1828
      %v1890 = vpack.c.bf16 %v1831, %v1830
      %v1891 = vpack.c.bf16 %v1833, %v1832
      %v1892 = vpack.c.bf16 %v1835, %v1834
      %v1893 = vpack.c.bf16 %v1837, %v1836
      %v1894 = vpack.c.bf16 %v1839, %v1838
      %v1895 = vpack.c.bf16 %v1841, %v1840
      %v1896 = vpack.c.bf16 %v1843, %v1842
      %v1897 = vpack.c.bf16 %v1845, %v1844
      %v1898 = vpack.c.bf16 %v1847, %v1846
      %v1899 = vpack.c.bf16 %v1849, %v1848
      %v1900 = vpack.c.bf16 %v1851, %v1850
      %v1901 = vpack.c.bf16 %v1853, %v1852
      %v1902 = vpack.c.bf16 %v1855, %v1854
      %v1903 = vpack.c.bf16 %v1857, %v1856
      %v1904 = vpack.c.bf16 %v1859, %v1858
      %v1905 = vpack.c.bf16 %v1861, %v1860
      %v1906 = vpack.c.bf16 %v1863, %v1862
      %v1907 = vpack.c.bf16 %v1865, %v1864
      %v1908 = vpack.c.bf16 %v1867, %v1866
      %v1909 = vpack.c.bf16 %v1869, %v1868
      %v1910 = vpack.c.bf16 %v1871, %v1870
      %v1911 = vpack.c.bf16 %v1873, %v1872
      %v1912 = vpack.c.bf16 %v1875, %v1874
      %v1913 = vpack.c.bf16 %v1877, %v1876
      %s1914 = scalar_lea.vmem %s3, 16
      %v1915 = vld [vmem:[%s1914] sm:$0xf]
      %v1916 = vld [vmem:[%s1914 + $0x4] sm:$0xf]
      %v1917 = vld [vmem:[%s1914 + $0x8] sm:$0xf]
      %v1918 = vld [vmem:[%s1914 + $0xc] sm:$0xf]
      %v1923 = vunpack.c.l.b16 %v1915
      %v1924 = vunpack.c.l.b16 %v1916
      %v1925 = vunpack.c.l.b16 %v1917
      %v1926 = vunpack.c.l.b16 %v1918
      %v1927 = vpack.c.b16 %v1924, %v1923
      %v1928 = vpack.c.b16 %v1926, %v1925
      %v1932 = vsel %vm313, %v1878, 0
      %v1935 = vsel %vm313, %v1879, 0
      %v1938 = vsel %vm313, %v1880, 0
      %v1941 = vsel %vm313, %v1881, 0
      %v1944 = vsel %vm313, %v1882, 0
      %v1947 = vsel %vm313, %v1883, 0
      %v1950 = vsel %vm313, %v1884, 0
      %v1953 = vsel %vm313, %v1885, 0
      %v1956 = vsel %vm313, %v1886, 0
      %v1959 = vsel %vm313, %v1887, 0
      %v1962 = vsel %vm313, %v1888, 0
      %v1965 = vsel %vm313, %v1889, 0
      %v1968 = vsel %vm313, %v1890, 0
      %v1971 = vsel %vm313, %v1891, 0
      %v1974 = vsel %vm313, %v1892, 0
      %v1977 = vsel %vm313, %v1893, 0
      %v1980 = vsel %vm313, %v1894, 0
      %v1983 = vsel %vm313, %v1895, 0
      %v1986 = vsel %vm313, %v1896, 0
      %v1989 = vsel %vm313, %v1897, 0
      %v1992 = vsel %vm313, %v1898, 0
      %v1995 = vsel %vm313, %v1899, 0
      %v1998 = vsel %vm313, %v1900, 0
      %v2001 = vsel %vm313, %v1901, 0
      %v2004 = vsel %vm313, %v1902, 0
      %v2007 = vsel %vm313, %v1903, 0
      %v2010 = vsel %vm313, %v1904, 0
      %v2013 = vsel %vm313, %v1905, 0
      %v2016 = vsel %vm313, %v1906, 0
      %v2019 = vsel %vm313, %v1907, 0
      %v2022 = vsel %vm313, %v1908, 0
      %v2025 = vsel %vm313, %v1909, 0
      %v2028 = vsel %vm313, %v1910, 0
      %v2031 = vsel %vm313, %v1911, 0
      %v2034 = vsel %vm313, %v1912, 0
      %v2037 = vsel %vm313, %v1913, 0
      %2039 = vmatpush.bf16.msra.mxu0 0
      %2040 = vmatpush.bf16.msra.mxu0 0
      %2041 = vmatpush.bf16.msra.mxu0 0
      %2042 = vmatpush.bf16.msra.mxu0 0
      %2043 = vmatpush.bf16.msra.mxu0 0
      %2044 = vmatpush.bf16.msra.mxu0 0
      %2045 = vmatpush.bf16.msra.mxu0 %v1928
      %2046 = vmatpush.bf16.msra.mxu0 %v1927
      %2047 = vmatmul.bf16.gmra.mxu0 %v1932
      %v2048 = vpop.f32.mrf.mxu0
      %v2049 = vadd.f32 0.0, %v2048
      %v2050 = vpop.f32.mrf.mxu0
      %v2051 = vadd.f32 0.0, %v2050
      %2052 = vmatmul.bf16.gmra.mxu0 %v1935
      %v2053 = vpop.f32.mrf.mxu0
      %v2054 = vadd.f32 0.0, %v2053
      %v2055 = vpop.f32.mrf.mxu0
      %v2056 = vadd.f32 0.0, %v2055
      %2057 = vmatmul.bf16.gmra.mxu0 %v1938
      %v2058 = vpop.f32.mrf.mxu0
      %v2059 = vadd.f32 0.0, %v2058
      %v2060 = vpop.f32.mrf.mxu0
      %v2061 = vadd.f32 0.0, %v2060
      %2062 = vmatmul.bf16.gmra.mxu0 %v1941
      %v2063 = vpop.f32.mrf.mxu0
      %v2064 = vadd.f32 0.0, %v2063
      %v2065 = vpop.f32.mrf.mxu0
      %v2066 = vadd.f32 0.0, %v2065
      %2067 = vmatmul.bf16.gmra.mxu0 %v1944
      %v2068 = vpop.f32.mrf.mxu0
      %v2069 = vadd.f32 0.0, %v2068
      %v2070 = vpop.f32.mrf.mxu0
      %v2071 = vadd.f32 0.0, %v2070
      %2072 = vmatmul.bf16.gmra.mxu0 %v1947
      %v2073 = vpop.f32.mrf.mxu0
      %v2074 = vadd.f32 0.0, %v2073
      %v2075 = vpop.f32.mrf.mxu0
      %v2076 = vadd.f32 0.0, %v2075
      %2077 = vmatmul.bf16.gmra.mxu0 %v1950
      %v2078 = vpop.f32.mrf.mxu0
      %v2079 = vadd.f32 0.0, %v2078
      %v2080 = vpop.f32.mrf.mxu0
      %v2081 = vadd.f32 0.0, %v2080
      %2082 = vmatmul.bf16.gmra.mxu0 %v1953
      %v2083 = vpop.f32.mrf.mxu0
      %v2084 = vadd.f32 0.0, %v2083
      %v2085 = vpop.f32.mrf.mxu0
      %v2086 = vadd.f32 0.0, %v2085
      %2087 = vmatmul.bf16.gmra.mxu0 %v1956
      %v2088 = vpop.f32.mrf.mxu0
      %v2089 = vadd.f32 0.0, %v2088
      %v2090 = vpop.f32.mrf.mxu0
      %v2091 = vadd.f32 0.0, %v2090
      %2092 = vmatmul.bf16.gmra.mxu0 %v1959
      %v2093 = vpop.f32.mrf.mxu0
      %v2094 = vadd.f32 0.0, %v2093
      %v2095 = vpop.f32.mrf.mxu0
      %v2096 = vadd.f32 0.0, %v2095
      %2097 = vmatmul.bf16.gmra.mxu0 %v1962
      %v2098 = vpop.f32.mrf.mxu0
      %v2099 = vadd.f32 0.0, %v2098
      %v2100 = vpop.f32.mrf.mxu0
      %v2101 = vadd.f32 0.0, %v2100
      %2102 = vmatmul.bf16.gmra.mxu0 %v1965
      %v2103 = vpop.f32.mrf.mxu0
      %v2104 = vadd.f32 0.0, %v2103
      %v2105 = vpop.f32.mrf.mxu0
      %v2106 = vadd.f32 0.0, %v2105
      %2107 = vmatmul.bf16.gmra.mxu0 %v1968
      %v2108 = vpop.f32.mrf.mxu0
      %v2109 = vadd.f32 0.0, %v2108
      %v2110 = vpop.f32.mrf.mxu0
      %v2111 = vadd.f32 0.0, %v2110
      %2112 = vmatmul.bf16.gmra.mxu0 %v1971
      %v2113 = vpop.f32.mrf.mxu0
      %v2114 = vadd.f32 0.0, %v2113
      %v2115 = vpop.f32.mrf.mxu0
      %v2116 = vadd.f32 0.0, %v2115
      %2117 = vmatmul.bf16.gmra.mxu0 %v1974
      %v2118 = vpop.f32.mrf.mxu0
      %v2119 = vadd.f32 0.0, %v2118
      %v2120 = vpop.f32.mrf.mxu0
      %v2121 = vadd.f32 0.0, %v2120
      %2122 = vmatmul.bf16.gmra.mxu0 %v1977
      %v2123 = vpop.f32.mrf.mxu0
      %v2124 = vadd.f32 0.0, %v2123
      %v2125 = vpop.f32.mrf.mxu0
      %v2126 = vadd.f32 0.0, %v2125
      %2127 = vmatmul.bf16.gmra.mxu0 %v1980
      %v2128 = vpop.f32.mrf.mxu0
      %v2129 = vadd.f32 0.0, %v2128
      %v2130 = vpop.f32.mrf.mxu0
      %v2131 = vadd.f32 0.0, %v2130
      %2132 = vmatmul.bf16.gmra.mxu0 %v1983
      %v2133 = vpop.f32.mrf.mxu0
      %v2134 = vadd.f32 0.0, %v2133
      %v2135 = vpop.f32.mrf.mxu0
      %v2136 = vadd.f32 0.0, %v2135
      %2137 = vmatmul.bf16.gmra.mxu0 %v1986
      %v2138 = vpop.f32.mrf.mxu0
      %v2139 = vadd.f32 0.0, %v2138
      %v2140 = vpop.f32.mrf.mxu0
      %v2141 = vadd.f32 0.0, %v2140
      %2142 = vmatmul.bf16.gmra.mxu0 %v1989
      %v2143 = vpop.f32.mrf.mxu0
      %v2144 = vadd.f32 0.0, %v2143
      %v2145 = vpop.f32.mrf.mxu0
      %v2146 = vadd.f32 0.0, %v2145
      %2147 = vmatmul.bf16.gmra.mxu0 %v1992
      %v2148 = vpop.f32.mrf.mxu0
      %v2149 = vadd.f32 0.0, %v2148
      %v2150 = vpop.f32.mrf.mxu0
      %v2151 = vadd.f32 0.0, %v2150
      %2152 = vmatmul.bf16.gmra.mxu0 %v1995
      %v2153 = vpop.f32.mrf.mxu0
      %v2154 = vadd.f32 0.0, %v2153
      %v2155 = vpop.f32.mrf.mxu0
      %v2156 = vadd.f32 0.0, %v2155
      %2157 = vmatmul.bf16.gmra.mxu0 %v1998
      %v2158 = vpop.f32.mrf.mxu0
      %v2159 = vadd.f32 0.0, %v2158
      %v2160 = vpop.f32.mrf.mxu0
      %v2161 = vadd.f32 0.0, %v2160
      %2162 = vmatmul.bf16.gmra.mxu0 %v2001
      %v2163 = vpop.f32.mrf.mxu0
      %v2164 = vadd.f32 0.0, %v2163
      %v2165 = vpop.f32.mrf.mxu0
      %v2166 = vadd.f32 0.0, %v2165
      %2167 = vmatmul.bf16.gmra.mxu0 %v2004
      %v2168 = vpop.f32.mrf.mxu0
      %v2169 = vadd.f32 0.0, %v2168
      %v2170 = vpop.f32.mrf.mxu0
      %v2171 = vadd.f32 0.0, %v2170
      %2172 = vmatmul.bf16.gmra.mxu0 %v2007
      %v2173 = vpop.f32.mrf.mxu0
      %v2174 = vadd.f32 0.0, %v2173
      %v2175 = vpop.f32.mrf.mxu0
      %v2176 = vadd.f32 0.0, %v2175
      %2177 = vmatmul.bf16.gmra.mxu0 %v2010
      %v2178 = vpop.f32.mrf.mxu0
      %v2179 = vadd.f32 0.0, %v2178
      %v2180 = vpop.f32.mrf.mxu0
      %v2181 = vadd.f32 0.0, %v2180
      %2182 = vmatmul.bf16.gmra.mxu0 %v2013
      %v2183 = vpop.f32.mrf.mxu0
      %v2184 = vadd.f32 0.0, %v2183
      %v2185 = vpop.f32.mrf.mxu0
      %v2186 = vadd.f32 0.0, %v2185
      %2187 = vmatmul.bf16.gmra.mxu0 %v2016
      %v2188 = vpop.f32.mrf.mxu0
      %v2189 = vadd.f32 0.0, %v2188
      %v2190 = vpop.f32.mrf.mxu0
      %v2191 = vadd.f32 0.0, %v2190
      %2192 = vmatmul.bf16.gmra.mxu0 %v2019
      %v2193 = vpop.f32.mrf.mxu0
      %v2194 = vadd.f32 0.0, %v2193
      %v2195 = vpop.f32.mrf.mxu0
      %v2196 = vadd.f32 0.0, %v2195
      %2197 = vmatmul.bf16.gmra.mxu0 %v2022
      %v2198 = vpop.f32.mrf.mxu0
      %v2199 = vadd.f32 0.0, %v2198
      %v2200 = vpop.f32.mrf.mxu0
      %v2201 = vadd.f32 0.0, %v2200
      %2202 = vmatmul.bf16.gmra.mxu0 %v2025
      %v2203 = vpop.f32.mrf.mxu0
      %v2204 = vadd.f32 0.0, %v2203
      %v2205 = vpop.f32.mrf.mxu0
      %v2206 = vadd.f32 0.0, %v2205
      %2207 = vmatmul.bf16.gmra.mxu0 %v2028
      %v2208 = vpop.f32.mrf.mxu0
      %v2209 = vadd.f32 0.0, %v2208
      %v2210 = vpop.f32.mrf.mxu0
      %v2211 = vadd.f32 0.0, %v2210
      %2212 = vmatmul.bf16.gmra.mxu0 %v2031
      %v2213 = vpop.f32.mrf.mxu0
      %v2214 = vadd.f32 0.0, %v2213
      %v2215 = vpop.f32.mrf.mxu0
      %v2216 = vadd.f32 0.0, %v2215
      %2217 = vmatmul.bf16.gmra.mxu0 %v2034
      %v2218 = vpop.f32.mrf.mxu0
      %v2219 = vadd.f32 0.0, %v2218
      %v2220 = vpop.f32.mrf.mxu0
      %v2221 = vadd.f32 0.0, %v2220
      %2222 = vmatmul.bf16.gmra.mxu0 %v2037
      %v2223 = vpop.f32.mrf.mxu0
      %v2224 = vadd.f32 0.0, %v2223
      %v2225 = vpop.f32.mrf.mxu0
      %v2226 = vadd.f32 0.0, %v2225
      %2227 = vdwg.mxu0
      %v2232 = vunpack.c.l.b16 %v1802
      %v2233 = vunpack.c.l.b16 %v1803
      %v2234 = vunpack.c.l.b16 %v1804
      %v2235 = vunpack.c.l.b16 %v1805
      %v2236 = vpack.c.b16 %v2233, %v2232
      %v2237 = vpack.c.b16 %v2235, %v2234
      %v2241 = vsel %vm313, %v1766, 0
      %v2244 = vsel %vm313, %v1767, 0
      %v2247 = vsel %vm313, %v1768, 0
      %v2250 = vsel %vm313, %v1769, 0
      %v2253 = vsel %vm313, %v1770, 0
      %v2256 = vsel %vm313, %v1771, 0
      %v2259 = vsel %vm313, %v1772, 0
      %v2262 = vsel %vm313, %v1773, 0
      %v2265 = vsel %vm313, %v1774, 0
      %v2268 = vsel %vm313, %v1775, 0
      %v2271 = vsel %vm313, %v1776, 0
      %v2274 = vsel %vm313, %v1777, 0
      %v2277 = vsel %vm313, %v1778, 0
      %v2280 = vsel %vm313, %v1779, 0
      %v2283 = vsel %vm313, %v1780, 0
      %v2286 = vsel %vm313, %v1781, 0
      %v2289 = vsel %vm313, %v1782, 0
      %v2292 = vsel %vm313, %v1783, 0
      %v2295 = vsel %vm313, %v1784, 0
      %v2298 = vsel %vm313, %v1785, 0
      %v2301 = vsel %vm313, %v1786, 0
      %v2304 = vsel %vm313, %v1787, 0
      %v2307 = vsel %vm313, %v1788, 0
      %v2310 = vsel %vm313, %v1789, 0
      %v2313 = vsel %vm313, %v1790, 0
      %v2316 = vsel %vm313, %v1791, 0
      %v2319 = vsel %vm313, %v1792, 0
      %v2322 = vsel %vm313, %v1793, 0
      %v2325 = vsel %vm313, %v1794, 0
      %v2328 = vsel %vm313, %v1795, 0
      %v2331 = vsel %vm313, %v1796, 0
      %v2334 = vsel %vm313, %v1797, 0
      %v2337 = vsel %vm313, %v1798, 0
      %v2340 = vsel %vm313, %v1799, 0
      %v2343 = vsel %vm313, %v1800, 0
      %v2346 = vsel %vm313, %v1801, 0
      %2348 = vmatpush.bf16.msra.mxu0 0
      %2349 = vmatpush.bf16.msra.mxu0 0
      %2350 = vmatpush.bf16.msra.mxu0 0
      %2351 = vmatpush.bf16.msra.mxu0 0
      %2352 = vmatpush.bf16.msra.mxu0 0
      %2353 = vmatpush.bf16.msra.mxu0 0
      %2354 = vmatpush.bf16.msra.mxu0 %v2237
      %2355 = vmatpush.bf16.msra.mxu0 %v2236
      %2356 = vmatmul.bf16.gmra.mxu0 %v2241
      %v2357 = vpop.f32.mrf.mxu0
      %v2358 = vadd.f32 %v2049, %v2357
      %v2359 = vpop.f32.mrf.mxu0
      %v2360 = vadd.f32 %v2051, %v2359
      %2361 = vmatmul.bf16.gmra.mxu0 %v2244
      %v2362 = vpop.f32.mrf.mxu0
      %v2363 = vadd.f32 %v2054, %v2362
      %v2364 = vpop.f32.mrf.mxu0
      %v2365 = vadd.f32 %v2056, %v2364
      %2366 = vmatmul.bf16.gmra.mxu0 %v2247
      %v2367 = vpop.f32.mrf.mxu0
      %v2368 = vadd.f32 %v2059, %v2367
      %v2369 = vpop.f32.mrf.mxu0
      %v2370 = vadd.f32 %v2061, %v2369
      %2371 = vmatmul.bf16.gmra.mxu0 %v2250
      %v2372 = vpop.f32.mrf.mxu0
      %v2373 = vadd.f32 %v2064, %v2372
      %v2374 = vpop.f32.mrf.mxu0
      %v2375 = vadd.f32 %v2066, %v2374
      %2376 = vmatmul.bf16.gmra.mxu0 %v2253
      %v2377 = vpop.f32.mrf.mxu0
      %v2378 = vadd.f32 %v2069, %v2377
      %v2379 = vpop.f32.mrf.mxu0
      %v2380 = vadd.f32 %v2071, %v2379
      %2381 = vmatmul.bf16.gmra.mxu0 %v2256
      %v2382 = vpop.f32.mrf.mxu0
      %v2383 = vadd.f32 %v2074, %v2382
      %v2384 = vpop.f32.mrf.mxu0
      %v2385 = vadd.f32 %v2076, %v2384
      %2386 = vmatmul.bf16.gmra.mxu0 %v2259
      %v2387 = vpop.f32.mrf.mxu0
      %v2388 = vadd.f32 %v2079, %v2387
      %v2389 = vpop.f32.mrf.mxu0
      %v2390 = vadd.f32 %v2081, %v2389
      %2391 = vmatmul.bf16.gmra.mxu0 %v2262
      %v2392 = vpop.f32.mrf.mxu0
      %v2393 = vadd.f32 %v2084, %v2392
      %v2394 = vpop.f32.mrf.mxu0
      %v2395 = vadd.f32 %v2086, %v2394
      %2396 = vmatmul.bf16.gmra.mxu0 %v2265
      %v2397 = vpop.f32.mrf.mxu0
      %v2398 = vadd.f32 %v2089, %v2397
      %v2399 = vpop.f32.mrf.mxu0
      %v2400 = vadd.f32 %v2091, %v2399
      %2401 = vmatmul.bf16.gmra.mxu0 %v2268
      %v2402 = vpop.f32.mrf.mxu0
      %v2403 = vadd.f32 %v2094, %v2402
      %v2404 = vpop.f32.mrf.mxu0
      %v2405 = vadd.f32 %v2096, %v2404
      %2406 = vmatmul.bf16.gmra.mxu0 %v2271
      %v2407 = vpop.f32.mrf.mxu0
      %v2408 = vadd.f32 %v2099, %v2407
      %v2409 = vpop.f32.mrf.mxu0
      %v2410 = vadd.f32 %v2101, %v2409
      %2411 = vmatmul.bf16.gmra.mxu0 %v2274
      %v2412 = vpop.f32.mrf.mxu0
      %v2413 = vadd.f32 %v2104, %v2412
      %v2414 = vpop.f32.mrf.mxu0
      %v2415 = vadd.f32 %v2106, %v2414
      %2416 = vmatmul.bf16.gmra.mxu0 %v2277
      %v2417 = vpop.f32.mrf.mxu0
      %v2418 = vadd.f32 %v2109, %v2417
      %v2419 = vpop.f32.mrf.mxu0
      %v2420 = vadd.f32 %v2111, %v2419
      %2421 = vmatmul.bf16.gmra.mxu0 %v2280
      %v2422 = vpop.f32.mrf.mxu0
      %v2423 = vadd.f32 %v2114, %v2422
      %v2424 = vpop.f32.mrf.mxu0
      %v2425 = vadd.f32 %v2116, %v2424
      %2426 = vmatmul.bf16.gmra.mxu0 %v2283
      %v2427 = vpop.f32.mrf.mxu0
      %v2428 = vadd.f32 %v2119, %v2427
      %v2429 = vpop.f32.mrf.mxu0
      %v2430 = vadd.f32 %v2121, %v2429
      %2431 = vmatmul.bf16.gmra.mxu0 %v2286
      %v2432 = vpop.f32.mrf.mxu0
      %v2433 = vadd.f32 %v2124, %v2432
      %v2434 = vpop.f32.mrf.mxu0
      %v2435 = vadd.f32 %v2126, %v2434
      %2436 = vmatmul.bf16.gmra.mxu0 %v2289
      %v2437 = vpop.f32.mrf.mxu0
      %v2438 = vadd.f32 %v2129, %v2437
      %v2439 = vpop.f32.mrf.mxu0
      %v2440 = vadd.f32 %v2131, %v2439
      %2441 = vmatmul.bf16.gmra.mxu0 %v2292
      %v2442 = vpop.f32.mrf.mxu0
      %v2443 = vadd.f32 %v2134, %v2442
      %v2444 = vpop.f32.mrf.mxu0
      %v2445 = vadd.f32 %v2136, %v2444
      %2446 = vmatmul.bf16.gmra.mxu0 %v2295
      %v2447 = vpop.f32.mrf.mxu0
      %v2448 = vadd.f32 %v2139, %v2447
      %v2449 = vpop.f32.mrf.mxu0
      %v2450 = vadd.f32 %v2141, %v2449
      %2451 = vmatmul.bf16.gmra.mxu0 %v2298
      %v2452 = vpop.f32.mrf.mxu0
      %v2453 = vadd.f32 %v2144, %v2452
      %v2454 = vpop.f32.mrf.mxu0
      %v2455 = vadd.f32 %v2146, %v2454
      %2456 = vmatmul.bf16.gmra.mxu0 %v2301
      %v2457 = vpop.f32.mrf.mxu0
      %v2458 = vadd.f32 %v2149, %v2457
      %v2459 = vpop.f32.mrf.mxu0
      %v2460 = vadd.f32 %v2151, %v2459
      %2461 = vmatmul.bf16.gmra.mxu0 %v2304
      %v2462 = vpop.f32.mrf.mxu0
      %v2463 = vadd.f32 %v2154, %v2462
      %v2464 = vpop.f32.mrf.mxu0
      %v2465 = vadd.f32 %v2156, %v2464
      %2466 = vmatmul.bf16.gmra.mxu0 %v2307
      %v2467 = vpop.f32.mrf.mxu0
      %v2468 = vadd.f32 %v2159, %v2467
      %v2469 = vpop.f32.mrf.mxu0
      %v2470 = vadd.f32 %v2161, %v2469
      %2471 = vmatmul.bf16.gmra.mxu0 %v2310
      %v2472 = vpop.f32.mrf.mxu0
      %v2473 = vadd.f32 %v2164, %v2472
      %v2474 = vpop.f32.mrf.mxu0
      %v2475 = vadd.f32 %v2166, %v2474
      %2476 = vmatmul.bf16.gmra.mxu0 %v2313
      %v2477 = vpop.f32.mrf.mxu0
      %v2478 = vadd.f32 %v2169, %v2477
      %v2479 = vpop.f32.mrf.mxu0
      %v2480 = vadd.f32 %v2171, %v2479
      %2481 = vmatmul.bf16.gmra.mxu0 %v2316
      %v2482 = vpop.f32.mrf.mxu0
      %v2483 = vadd.f32 %v2174, %v2482
      %v2484 = vpop.f32.mrf.mxu0
      %v2485 = vadd.f32 %v2176, %v2484
      %2486 = vmatmul.bf16.gmra.mxu0 %v2319
      %v2487 = vpop.f32.mrf.mxu0
      %v2488 = vadd.f32 %v2179, %v2487
      %v2489 = vpop.f32.mrf.mxu0
      %v2490 = vadd.f32 %v2181, %v2489
      %2491 = vmatmul.bf16.gmra.mxu0 %v2322
      %v2492 = vpop.f32.mrf.mxu0
      %v2493 = vadd.f32 %v2184, %v2492
      %v2494 = vpop.f32.mrf.mxu0
      %v2495 = vadd.f32 %v2186, %v2494
      %2496 = vmatmul.bf16.gmra.mxu0 %v2325
      %v2497 = vpop.f32.mrf.mxu0
      %v2498 = vadd.f32 %v2189, %v2497
      %v2499 = vpop.f32.mrf.mxu0
      %v2500 = vadd.f32 %v2191, %v2499
      %2501 = vmatmul.bf16.gmra.mxu0 %v2328
      %v2502 = vpop.f32.mrf.mxu0
      %v2503 = vadd.f32 %v2194, %v2502
      %v2504 = vpop.f32.mrf.mxu0
      %v2505 = vadd.f32 %v2196, %v2504
      %2506 = vmatmul.bf16.gmra.mxu0 %v2331
      %v2507 = vpop.f32.mrf.mxu0
      %v2508 = vadd.f32 %v2199, %v2507
      %v2509 = vpop.f32.mrf.mxu0
      %v2510 = vadd.f32 %v2201, %v2509
      %2511 = vmatmul.bf16.gmra.mxu0 %v2334
      %v2512 = vpop.f32.mrf.mxu0
      %v2513 = vadd.f32 %v2204, %v2512
      %v2514 = vpop.f32.mrf.mxu0
      %v2515 = vadd.f32 %v2206, %v2514
      %2516 = vmatmul.bf16.gmra.mxu0 %v2337
      %v2517 = vpop.f32.mrf.mxu0
      %v2518 = vadd.f32 %v2209, %v2517
      %v2519 = vpop.f32.mrf.mxu0
      %v2520 = vadd.f32 %v2211, %v2519
      %2521 = vmatmul.bf16.gmra.mxu0 %v2340
      %v2522 = vpop.f32.mrf.mxu0
      %v2523 = vadd.f32 %v2214, %v2522
      %v2524 = vpop.f32.mrf.mxu0
      %v2525 = vadd.f32 %v2216, %v2524
      %2526 = vmatmul.bf16.gmra.mxu0 %v2343
      %v2527 = vpop.f32.mrf.mxu0
      %v2528 = vadd.f32 %v2219, %v2527
      %v2529 = vpop.f32.mrf.mxu0
      %v2530 = vadd.f32 %v2221, %v2529
      %2531 = vmatmul.bf16.gmra.mxu0 %v2346
      %v2532 = vpop.f32.mrf.mxu0
      %v2533 = vadd.f32 %v2224, %v2532
      %v2534 = vpop.f32.mrf.mxu0
      %v2535 = vadd.f32 %v2226, %v2534
      %2536 = vdwg.mxu0
      %v2537 = vld [vmem:[#allocation2 + $0x2] sm:$0xff]
      %v2538 = vld [vmem:[#allocation2 + $0xa] sm:$0xff]
      %v2539 = vld [vmem:[#allocation2 + $0x12] sm:$0xff]
      %v2540 = vld [vmem:[#allocation2 + $0x22] sm:$0xff]
      %v2541 = vld [vmem:[#allocation2 + $0x2a] sm:$0xff]
      %v2542 = vld [vmem:[#allocation2 + $0x32] sm:$0xff]
      %v2543 = vld [vmem:[#allocation2 + $0x42] sm:$0xff]
      %v2544 = vld [vmem:[#allocation2 + $0x4a] sm:$0xff]
      %v2545 = vld [vmem:[#allocation2 + $0x52] sm:$0xff]
      %v2546 = vld [vmem:[#allocation2 + $0x62] sm:$0xff]
      %v2547 = vld [vmem:[#allocation2 + $0x6a] sm:$0xff]
      %v2548 = vld [vmem:[#allocation2 + $0x72] sm:$0xff]
      %v2549 = vld [vmem:[#allocation2 + $0x82] sm:$0xff]
      %v2550 = vld [vmem:[#allocation2 + $0x8a] sm:$0xff]
      %v2551 = vld [vmem:[#allocation2 + $0x92] sm:$0xff]
      %v2552 = vld [vmem:[#allocation2 + $0xa2] sm:$0xff]
      %v2553 = vld [vmem:[#allocation2 + $0xaa] sm:$0xff]
      %v2554 = vld [vmem:[#allocation2 + $0xb2] sm:$0xff]
      %v2555 = vld [vmem:[#allocation2 + $0xc2] sm:$0xff]
      %v2556 = vld [vmem:[#allocation2 + $0xca] sm:$0xff]
      %v2557 = vld [vmem:[#allocation2 + $0xd2] sm:$0xff]
      %v2558 = vld [vmem:[#allocation2 + $0xe2] sm:$0xff]
      %v2559 = vld [vmem:[#allocation2 + $0xea] sm:$0xff]
      %v2560 = vld [vmem:[#allocation2 + $0xf2] sm:$0xff]
      %v2561 = vld [vmem:[#allocation2 + $0x102] sm:$0xff]
      %v2562 = vld [vmem:[#allocation2 + $0x10a] sm:$0xff]
      %v2563 = vld [vmem:[#allocation2 + $0x112] sm:$0xff]
      %v2564 = vld [vmem:[#allocation2 + $0x122] sm:$0xff]
      %v2565 = vld [vmem:[#allocation2 + $0x12a] sm:$0xff]
      %v2566 = vld [vmem:[#allocation2 + $0x132] sm:$0xff]
      %v2567 = vld [vmem:[#allocation2 + $0x142] sm:$0xff]
      %v2568 = vld [vmem:[#allocation2 + $0x14a] sm:$0xff]
      %v2569 = vld [vmem:[#allocation2 + $0x152] sm:$0xff]
      %v2570 = vld [vmem:[#allocation2 + $0x162] sm:$0xff]
      %v2571 = vld [vmem:[#allocation2 + $0x16a] sm:$0xff]
      %v2572 = vld [vmem:[#allocation2 + $0x172] sm:$0xff]
      %v2573 = vld [vmem:[#allocation2 + $0x182] sm:$0xff]
      %v2574 = vld [vmem:[#allocation2 + $0x18a] sm:$0xff]
      %v2575 = vld [vmem:[#allocation2 + $0x192] sm:$0xff]
      %v2576 = vld [vmem:[#allocation2 + $0x1a2] sm:$0xff]
      %v2577 = vld [vmem:[#allocation2 + $0x1aa] sm:$0xff]
      %v2578 = vld [vmem:[#allocation2 + $0x1b2] sm:$0xff]
      %v2579 = vld [vmem:[#allocation2 + $0x1c2] sm:$0xff]
      %v2580 = vld [vmem:[#allocation2 + $0x1ca] sm:$0xff]
      %v2581 = vld [vmem:[#allocation2 + $0x1d2] sm:$0xff]
      %v2582 = vld [vmem:[#allocation2 + $0x1e2] sm:$0xff]
      %v2583 = vld [vmem:[#allocation2 + $0x1ea] sm:$0xff]
      %v2584 = vld [vmem:[#allocation2 + $0x1f2] sm:$0xff]
      %v2585 = vld [vmem:[#allocation2 + $0x202] sm:$0xff]
      %v2586 = vld [vmem:[#allocation2 + $0x20a] sm:$0xff]
      %v2587 = vld [vmem:[#allocation2 + $0x212] sm:$0xff]
      %v2588 = vld [vmem:[#allocation2 + $0x222] sm:$0xff]
      %v2589 = vld [vmem:[#allocation2 + $0x22a] sm:$0xff]
      %v2590 = vld [vmem:[#allocation2 + $0x232] sm:$0xff]
      %v2591 = vld [vmem:[#allocation2 + $0x242] sm:$0xff]
      %v2592 = vld [vmem:[#allocation2 + $0x24a] sm:$0xff]
      %v2593 = vld [vmem:[#allocation2 + $0x252] sm:$0xff]
      %v2594 = vld [vmem:[#allocation2 + $0x262] sm:$0xff]
      %v2595 = vld [vmem:[#allocation2 + $0x26a] sm:$0xff]
      %v2596 = vld [vmem:[#allocation2 + $0x272] sm:$0xff]
      %v2597 = vld [vmem:[#allocation2 + $0x282] sm:$0xff]
      %v2598 = vld [vmem:[#allocation2 + $0x28a] sm:$0xff]
      %v2599 = vld [vmem:[#allocation2 + $0x292] sm:$0xff]
      %v2600 = vld [vmem:[#allocation2 + $0x2a2] sm:$0xff]
      %v2601 = vld [vmem:[#allocation2 + $0x2aa] sm:$0xff]
      %v2602 = vld [vmem:[#allocation2 + $0x2b2] sm:$0xff]
      %v2603 = vld [vmem:[#allocation2 + $0x2c2] sm:$0xff]
      %v2604 = vld [vmem:[#allocation2 + $0x2ca] sm:$0xff]
      %v2605 = vld [vmem:[#allocation2 + $0x2d2] sm:$0xff]
      %v2606 = vld [vmem:[#allocation2 + $0x2e2] sm:$0xff]
      %v2607 = vld [vmem:[#allocation2 + $0x2ea] sm:$0xff]
      %v2608 = vld [vmem:[#allocation2 + $0x2f2] sm:$0xff]
      %v2609 = vpack.c.bf16 %v2538, %v2537
      %v2610 = vpack.c.bf16 %v2540, %v2539
      %v2611 = vpack.c.bf16 %v2542, %v2541
      %v2612 = vpack.c.bf16 %v2544, %v2543
      %v2613 = vpack.c.bf16 %v2546, %v2545
      %v2614 = vpack.c.bf16 %v2548, %v2547
      %v2615 = vpack.c.bf16 %v2550, %v2549
      %v2616 = vpack.c.bf16 %v2552, %v2551
      %v2617 = vpack.c.bf16 %v2554, %v2553
      %v2618 = vpack.c.bf16 %v2556, %v2555
      %v2619 = vpack.c.bf16 %v2558, %v2557
      %v2620 = vpack.c.bf16 %v2560, %v2559
      %v2621 = vpack.c.bf16 %v2562, %v2561
      %v2622 = vpack.c.bf16 %v2564, %v2563
      %v2623 = vpack.c.bf16 %v2566, %v2565
      %v2624 = vpack.c.bf16 %v2568, %v2567
      %v2625 = vpack.c.bf16 %v2570, %v2569
      %v2626 = vpack.c.bf16 %v2572, %v2571
      %v2627 = vpack.c.bf16 %v2574, %v2573
      %v2628 = vpack.c.bf16 %v2576, %v2575
      %v2629 = vpack.c.bf16 %v2578, %v2577
      %v2630 = vpack.c.bf16 %v2580, %v2579
      %v2631 = vpack.c.bf16 %v2582, %v2581
      %v2632 = vpack.c.bf16 %v2584, %v2583
      %v2633 = vpack.c.bf16 %v2586, %v2585
      %v2634 = vpack.c.bf16 %v2588, %v2587
      %v2635 = vpack.c.bf16 %v2590, %v2589
      %v2636 = vpack.c.bf16 %v2592, %v2591
      %v2637 = vpack.c.bf16 %v2594, %v2593
      %v2638 = vpack.c.bf16 %v2596, %v2595
      %v2639 = vpack.c.bf16 %v2598, %v2597
      %v2640 = vpack.c.bf16 %v2600, %v2599
      %v2641 = vpack.c.bf16 %v2602, %v2601
      %v2642 = vpack.c.bf16 %v2604, %v2603
      %v2643 = vpack.c.bf16 %v2606, %v2605
      %v2644 = vpack.c.bf16 %v2608, %v2607
      %s2645 = scalar_lea.vmem %s3, 32
      %v2646 = vld [vmem:[%s2645] sm:$0xf]
      %v2647 = vld [vmem:[%s2645 + $0x4] sm:$0xf]
      %v2648 = vld [vmem:[%s2645 + $0x8] sm:$0xf]
      %v2649 = vld [vmem:[%s2645 + $0xc] sm:$0xf]
      %v2654 = vunpack.c.l.b16 %v2646
      %v2655 = vunpack.c.l.b16 %v2647
      %v2656 = vunpack.c.l.b16 %v2648
      %v2657 = vunpack.c.l.b16 %v2649
      %v2658 = vpack.c.b16 %v2655, %v2654
      %v2659 = vpack.c.b16 %v2657, %v2656
      %v2663 = vsel %vm313, %v2609, 0
      %v2666 = vsel %vm313, %v2610, 0
      %v2669 = vsel %vm313, %v2611, 0
      %v2672 = vsel %vm313, %v2612, 0
      %v2675 = vsel %vm313, %v2613, 0
      %v2678 = vsel %vm313, %v2614, 0
      %v2681 = vsel %vm313, %v2615, 0
      %v2684 = vsel %vm313, %v2616, 0
      %v2687 = vsel %vm313, %v2617, 0
      %v2690 = vsel %vm313, %v2618, 0
      %v2693 = vsel %vm313, %v2619, 0
      %v2696 = vsel %vm313, %v2620, 0
      %v2699 = vsel %vm313, %v2621, 0
      %v2702 = vsel %vm313, %v2622, 0
      %v2705 = vsel %vm313, %v2623, 0
      %v2708 = vsel %vm313, %v2624, 0
      %v2711 = vsel %vm313, %v2625, 0
      %v2714 = vsel %vm313, %v2626, 0
      %v2717 = vsel %vm313, %v2627, 0
      %v2720 = vsel %vm313, %v2628, 0
      %v2723 = vsel %vm313, %v2629, 0
      %v2726 = vsel %vm313, %v2630, 0
      %v2729 = vsel %vm313, %v2631, 0
      %v2732 = vsel %vm313, %v2632, 0
      %v2735 = vsel %vm313, %v2633, 0
      %v2738 = vsel %vm313, %v2634, 0
      %v2741 = vsel %vm313, %v2635, 0
      %v2744 = vsel %vm313, %v2636, 0
      %v2747 = vsel %vm313, %v2637, 0
      %v2750 = vsel %vm313, %v2638, 0
      %v2753 = vsel %vm313, %v2639, 0
      %v2756 = vsel %vm313, %v2640, 0
      %v2759 = vsel %vm313, %v2641, 0
      %v2762 = vsel %vm313, %v2642, 0
      %v2765 = vsel %vm313, %v2643, 0
      %v2768 = vsel %vm313, %v2644, 0
      %2770 = vmatpush.bf16.msra.mxu0 0
      %2771 = vmatpush.bf16.msra.mxu0 0
      %2772 = vmatpush.bf16.msra.mxu0 0
      %2773 = vmatpush.bf16.msra.mxu0 0
      %2774 = vmatpush.bf16.msra.mxu0 0
      %2775 = vmatpush.bf16.msra.mxu0 0
      %2776 = vmatpush.bf16.msra.mxu0 %v2659
      %2777 = vmatpush.bf16.msra.mxu0 %v2658
      %2778 = vmatmul.bf16.gmra.mxu0 %v2663
      %v2779 = vpop.f32.mrf.mxu0
      %v2780 = vadd.f32 0.0, %v2779
      %v2781 = vpop.f32.mrf.mxu0
      %v2782 = vadd.f32 0.0, %v2781
      %2783 = vmatmul.bf16.gmra.mxu0 %v2666
      %v2784 = vpop.f32.mrf.mxu0
      %v2785 = vadd.f32 0.0, %v2784
      %v2786 = vpop.f32.mrf.mxu0
      %v2787 = vadd.f32 0.0, %v2786
      %2788 = vmatmul.bf16.gmra.mxu0 %v2669
      %v2789 = vpop.f32.mrf.mxu0
      %v2790 = vadd.f32 0.0, %v2789
      %v2791 = vpop.f32.mrf.mxu0
      %v2792 = vadd.f32 0.0, %v2791
      %2793 = vmatmul.bf16.gmra.mxu0 %v2672
      %v2794 = vpop.f32.mrf.mxu0
      %v2795 = vadd.f32 0.0, %v2794
      %v2796 = vpop.f32.mrf.mxu0
      %v2797 = vadd.f32 0.0, %v2796
      %2798 = vmatmul.bf16.gmra.mxu0 %v2675
      %v2799 = vpop.f32.mrf.mxu0
      %v2800 = vadd.f32 0.0, %v2799
      %v2801 = vpop.f32.mrf.mxu0
      %v2802 = vadd.f32 0.0, %v2801
      %2803 = vmatmul.bf16.gmra.mxu0 %v2678
      %v2804 = vpop.f32.mrf.mxu0
      %v2805 = vadd.f32 0.0, %v2804
      %v2806 = vpop.f32.mrf.mxu0
      %v2807 = vadd.f32 0.0, %v2806
      %2808 = vmatmul.bf16.gmra.mxu0 %v2681
      %v2809 = vpop.f32.mrf.mxu0
      %v2810 = vadd.f32 0.0, %v2809
      %v2811 = vpop.f32.mrf.mxu0
      %v2812 = vadd.f32 0.0, %v2811
      %2813 = vmatmul.bf16.gmra.mxu0 %v2684
      %v2814 = vpop.f32.mrf.mxu0
      %v2815 = vadd.f32 0.0, %v2814
      %v2816 = vpop.f32.mrf.mxu0
      %v2817 = vadd.f32 0.0, %v2816
      %2818 = vmatmul.bf16.gmra.mxu0 %v2687
      %v2819 = vpop.f32.mrf.mxu0
      %v2820 = vadd.f32 0.0, %v2819
      %v2821 = vpop.f32.mrf.mxu0
      %v2822 = vadd.f32 0.0, %v2821
      %2823 = vmatmul.bf16.gmra.mxu0 %v2690
      %v2824 = vpop.f32.mrf.mxu0
      %v2825 = vadd.f32 0.0, %v2824
      %v2826 = vpop.f32.mrf.mxu0
      %v2827 = vadd.f32 0.0, %v2826
      %2828 = vmatmul.bf16.gmra.mxu0 %v2693
      %v2829 = vpop.f32.mrf.mxu0
      %v2830 = vadd.f32 0.0, %v2829
      %v2831 = vpop.f32.mrf.mxu0
      %v2832 = vadd.f32 0.0, %v2831
      %2833 = vmatmul.bf16.gmra.mxu0 %v2696
      %v2834 = vpop.f32.mrf.mxu0
      %v2835 = vadd.f32 0.0, %v2834
      %v2836 = vpop.f32.mrf.mxu0
      %v2837 = vadd.f32 0.0, %v2836
      %2838 = vmatmul.bf16.gmra.mxu0 %v2699
      %v2839 = vpop.f32.mrf.mxu0
      %v2840 = vadd.f32 0.0, %v2839
      %v2841 = vpop.f32.mrf.mxu0
      %v2842 = vadd.f32 0.0, %v2841
      %2843 = vmatmul.bf16.gmra.mxu0 %v2702
      %v2844 = vpop.f32.mrf.mxu0
      %v2845 = vadd.f32 0.0, %v2844
      %v2846 = vpop.f32.mrf.mxu0
      %v2847 = vadd.f32 0.0, %v2846
      %2848 = vmatmul.bf16.gmra.mxu0 %v2705
      %v2849 = vpop.f32.mrf.mxu0
      %v2850 = vadd.f32 0.0, %v2849
      %v2851 = vpop.f32.mrf.mxu0
      %v2852 = vadd.f32 0.0, %v2851
      %2853 = vmatmul.bf16.gmra.mxu0 %v2708
      %v2854 = vpop.f32.mrf.mxu0
      %v2855 = vadd.f32 0.0, %v2854
      %v2856 = vpop.f32.mrf.mxu0
      %v2857 = vadd.f32 0.0, %v2856
      %2858 = vmatmul.bf16.gmra.mxu0 %v2711
      %v2859 = vpop.f32.mrf.mxu0
      %v2860 = vadd.f32 0.0, %v2859
      %v2861 = vpop.f32.mrf.mxu0
      %v2862 = vadd.f32 0.0, %v2861
      %2863 = vmatmul.bf16.gmra.mxu0 %v2714
      %v2864 = vpop.f32.mrf.mxu0
      %v2865 = vadd.f32 0.0, %v2864
      %v2866 = vpop.f32.mrf.mxu0
      %v2867 = vadd.f32 0.0, %v2866
      %2868 = vmatmul.bf16.gmra.mxu0 %v2717
      %v2869 = vpop.f32.mrf.mxu0
      %v2870 = vadd.f32 0.0, %v2869
      %v2871 = vpop.f32.mrf.mxu0
      %v2872 = vadd.f32 0.0, %v2871
      %2873 = vmatmul.bf16.gmra.mxu0 %v2720
      %v2874 = vpop.f32.mrf.mxu0
      %v2875 = vadd.f32 0.0, %v2874
      %v2876 = vpop.f32.mrf.mxu0
      %v2877 = vadd.f32 0.0, %v2876
      %2878 = vmatmul.bf16.gmra.mxu0 %v2723
      %v2879 = vpop.f32.mrf.mxu0
      %v2880 = vadd.f32 0.0, %v2879
      %v2881 = vpop.f32.mrf.mxu0
      %v2882 = vadd.f32 0.0, %v2881
      %2883 = vmatmul.bf16.gmra.mxu0 %v2726
      %v2884 = vpop.f32.mrf.mxu0
      %v2885 = vadd.f32 0.0, %v2884
      %v2886 = vpop.f32.mrf.mxu0
      %v2887 = vadd.f32 0.0, %v2886
      %2888 = vmatmul.bf16.gmra.mxu0 %v2729
      %v2889 = vpop.f32.mrf.mxu0
      %v2890 = vadd.f32 0.0, %v2889
      %v2891 = vpop.f32.mrf.mxu0
      %v2892 = vadd.f32 0.0, %v2891
      %2893 = vmatmul.bf16.gmra.mxu0 %v2732
      %v2894 = vpop.f32.mrf.mxu0
      %v2895 = vadd.f32 0.0, %v2894
      %v2896 = vpop.f32.mrf.mxu0
      %v2897 = vadd.f32 0.0, %v2896
      %2898 = vmatmul.bf16.gmra.mxu0 %v2735
      %v2899 = vpop.f32.mrf.mxu0
      %v2900 = vadd.f32 0.0, %v2899
      %v2901 = vpop.f32.mrf.mxu0
      %v2902 = vadd.f32 0.0, %v2901
      %2903 = vmatmul.bf16.gmra.mxu0 %v2738
      %v2904 = vpop.f32.mrf.mxu0
      %v2905 = vadd.f32 0.0, %v2904
      %v2906 = vpop.f32.mrf.mxu0
      %v2907 = vadd.f32 0.0, %v2906
      %2908 = vmatmul.bf16.gmra.mxu0 %v2741
      %v2909 = vpop.f32.mrf.mxu0
      %v2910 = vadd.f32 0.0, %v2909
      %v2911 = vpop.f32.mrf.mxu0
      %v2912 = vadd.f32 0.0, %v2911
      %2913 = vmatmul.bf16.gmra.mxu0 %v2744
      %v2914 = vpop.f32.mrf.mxu0
      %v2915 = vadd.f32 0.0, %v2914
      %v2916 = vpop.f32.mrf.mxu0
      %v2917 = vadd.f32 0.0, %v2916
      %2918 = vmatmul.bf16.gmra.mxu0 %v2747
      %v2919 = vpop.f32.mrf.mxu0
      %v2920 = vadd.f32 0.0, %v2919
      %v2921 = vpop.f32.mrf.mxu0
      %v2922 = vadd.f32 0.0, %v2921
      %2923 = vmatmul.bf16.gmra.mxu0 %v2750
      %v2924 = vpop.f32.mrf.mxu0
      %v2925 = vadd.f32 0.0, %v2924
      %v2926 = vpop.f32.mrf.mxu0
      %v2927 = vadd.f32 0.0, %v2926
      %2928 = vmatmul.bf16.gmra.mxu0 %v2753
      %v2929 = vpop.f32.mrf.mxu0
      %v2930 = vadd.f32 0.0, %v2929
      %v2931 = vpop.f32.mrf.mxu0
      %v2932 = vadd.f32 0.0, %v2931
      %2933 = vmatmul.bf16.gmra.mxu0 %v2756
      %v2934 = vpop.f32.mrf.mxu0
      %v2935 = vadd.f32 0.0, %v2934
      %v2936 = vpop.f32.mrf.mxu0
      %v2937 = vadd.f32 0.0, %v2936
      %2938 = vmatmul.bf16.gmra.mxu0 %v2759
      %v2939 = vpop.f32.mrf.mxu0
      %v2940 = vadd.f32 0.0, %v2939
      %v2941 = vpop.f32.mrf.mxu0
      %v2942 = vadd.f32 0.0, %v2941
      %2943 = vmatmul.bf16.gmra.mxu0 %v2762
      %v2944 = vpop.f32.mrf.mxu0
      %v2945 = vadd.f32 0.0, %v2944
      %v2946 = vpop.f32.mrf.mxu0
      %v2947 = vadd.f32 0.0, %v2946
      %2948 = vmatmul.bf16.gmra.mxu0 %v2765
      %v2949 = vpop.f32.mrf.mxu0
      %v2950 = vadd.f32 0.0, %v2949
      %v2951 = vpop.f32.mrf.mxu0
      %v2952 = vadd.f32 0.0, %v2951
      %2953 = vmatmul.bf16.gmra.mxu0 %v2768
      %v2954 = vpop.f32.mrf.mxu0
      %v2955 = vadd.f32 0.0, %v2954
      %v2956 = vpop.f32.mrf.mxu0
      %v2957 = vadd.f32 0.0, %v2956
      %2958 = vdwg.mxu0
      %v2959 = vadd.f32 %v2358, %v2780
      %v2960 = vadd.f32 %v2360, %v2782
      %v2961 = vadd.f32 %v2363, %v2785
      %v2962 = vadd.f32 %v2365, %v2787
      %v2963 = vadd.f32 %v2368, %v2790
      %v2964 = vadd.f32 %v2370, %v2792
      %v2965 = vadd.f32 %v2373, %v2795
      %v2966 = vadd.f32 %v2375, %v2797
      %v2967 = vadd.f32 %v2378, %v2800
      %v2968 = vadd.f32 %v2380, %v2802
      %v2969 = vadd.f32 %v2383, %v2805
      %v2970 = vadd.f32 %v2385, %v2807
      %v2971 = vadd.f32 %v2388, %v2810
      %v2972 = vadd.f32 %v2390, %v2812
      %v2973 = vadd.f32 %v2393, %v2815
      %v2974 = vadd.f32 %v2395, %v2817
      %v2975 = vadd.f32 %v2398, %v2820
      %v2976 = vadd.f32 %v2400, %v2822
      %v2977 = vadd.f32 %v2403, %v2825
      %v2978 = vadd.f32 %v2405, %v2827
      %v2979 = vadd.f32 %v2408, %v2830
      %v2980 = vadd.f32 %v2410, %v2832
      %v2981 = vadd.f32 %v2413, %v2835
      %v2982 = vadd.f32 %v2415, %v2837
      %v2983 = vadd.f32 %v2418, %v2840
      %v2984 = vadd.f32 %v2420, %v2842
      %v2985 = vadd.f32 %v2423, %v2845
      %v2986 = vadd.f32 %v2425, %v2847
      %v2987 = vadd.f32 %v2428, %v2850
      %v2988 = vadd.f32 %v2430, %v2852
      %v2989 = vadd.f32 %v2433, %v2855
      %v2990 = vadd.f32 %v2435, %v2857
      %v2991 = vadd.f32 %v2438, %v2860
      %v2992 = vadd.f32 %v2440, %v2862
      %v2993 = vadd.f32 %v2443, %v2865
      %v2994 = vadd.f32 %v2445, %v2867
      %v2995 = vadd.f32 %v2448, %v2870
      %v2996 = vadd.f32 %v2450, %v2872
      %v2997 = vadd.f32 %v2453, %v2875
      %v2998 = vadd.f32 %v2455, %v2877
      %v2999 = vadd.f32 %v2458, %v2880
      %v3000 = vadd.f32 %v2460, %v2882
      %v3001 = vadd.f32 %v2463, %v2885
      %v3002 = vadd.f32 %v2465, %v2887
      %v3003 = vadd.f32 %v2468, %v2890
      %v3004 = vadd.f32 %v2470, %v2892
      %v3005 = vadd.f32 %v2473, %v2895
      %v3006 = vadd.f32 %v2475, %v2897
      %v3007 = vadd.f32 %v2478, %v2900
      %v3008 = vadd.f32 %v2480, %v2902
      %v3009 = vadd.f32 %v2483, %v2905
      %v3010 = vadd.f32 %v2485, %v2907
      %v3011 = vadd.f32 %v2488, %v2910
      %v3012 = vadd.f32 %v2490, %v2912
      %v3013 = vadd.f32 %v2493, %v2915
      %v3014 = vadd.f32 %v2495, %v2917
      %v3015 = vadd.f32 %v2498, %v2920
      %v3016 = vadd.f32 %v2500, %v2922
      %v3017 = vadd.f32 %v2503, %v2925
      %v3018 = vadd.f32 %v2505, %v2927
      %v3019 = vadd.f32 %v2508, %v2930
      %v3020 = vadd.f32 %v2510, %v2932
      %v3021 = vadd.f32 %v2513, %v2935
      %v3022 = vadd.f32 %v2515, %v2937
      %v3023 = vadd.f32 %v2518, %v2940
      %v3024 = vadd.f32 %v2520, %v2942
      %v3025 = vadd.f32 %v2523, %v2945
      %v3026 = vadd.f32 %v2525, %v2947
      %v3027 = vadd.f32 %v2528, %v2950
      %v3028 = vadd.f32 %v2530, %v2952
      %v3029 = vadd.f32 %v2533, %v2955
      %v3030 = vadd.f32 %v2535, %v2957
      %v3031 = vld [vmem:[%s369] sm:$0xff]
      %v3032 = vld [vmem:[%s369 + $0x8] sm:$0xff]
      %v3033 = vld [vmem:[%s369 + $0x10] sm:$0xff]
      %v3034 = vld [vmem:[%s369 + $0x20] sm:$0xff]
      %v3035 = vld [vmem:[%s369 + $0x28] sm:$0xff]
      %v3036 = vld [vmem:[%s369 + $0x30] sm:$0xff]
      %v3037 = vld [vmem:[%s369 + $0x40] sm:$0xff]
      %v3038 = vld [vmem:[%s369 + $0x48] sm:$0xff]
      %v3039 = vld [vmem:[%s369 + $0x50] sm:$0xff]
      %v3040 = vld [vmem:[%s369 + $0x60] sm:$0xff]
      %v3041 = vld [vmem:[%s369 + $0x68] sm:$0xff]
      %v3042 = vld [vmem:[%s369 + $0x70] sm:$0xff]
      %v3043 = vld [vmem:[%s369 + $0x80] sm:$0xff]
      %v3044 = vld [vmem:[%s369 + $0x88] sm:$0xff]
      %v3045 = vld [vmem:[%s369 + $0x90] sm:$0xff]
      %v3046 = vld [vmem:[%s369 + $0xa0] sm:$0xff]
      %v3047 = vld [vmem:[%s369 + $0xa8] sm:$0xff]
      %v3048 = vld [vmem:[%s369 + $0xb0] sm:$0xff]
      %v3049 = vld [vmem:[%s369 + $0xc0] sm:$0xff]
      %v3050 = vld [vmem:[%s369 + $0xc8] sm:$0xff]
      %v3051 = vld [vmem:[%s369 + $0xd0] sm:$0xff]
      %v3052 = vld [vmem:[%s369 + $0xe0] sm:$0xff]
      %v3053 = vld [vmem:[%s369 + $0xe8] sm:$0xff]
      %v3054 = vld [vmem:[%s369 + $0xf0] sm:$0xff]
      %v3055 = vld [vmem:[%s369 + $0x100] sm:$0xff]
      %v3056 = vld [vmem:[%s369 + $0x108] sm:$0xff]
      %v3057 = vld [vmem:[%s369 + $0x110] sm:$0xff]
      %v3058 = vld [vmem:[%s369 + $0x120] sm:$0xff]
      %v3059 = vld [vmem:[%s369 + $0x128] sm:$0xff]
      %v3060 = vld [vmem:[%s369 + $0x130] sm:$0xff]
      %v3061 = vld [vmem:[%s369 + $0x140] sm:$0xff]
      %v3062 = vld [vmem:[%s369 + $0x148] sm:$0xff]
      %v3063 = vld [vmem:[%s369 + $0x150] sm:$0xff]
      %v3064 = vld [vmem:[%s369 + $0x160] sm:$0xff]
      %v3065 = vld [vmem:[%s369 + $0x168] sm:$0xff]
      %v3066 = vld [vmem:[%s369 + $0x170] sm:$0xff]
      %v3067 = vld [vmem:[%s369 + $0x180] sm:$0xff]
      %v3068 = vld [vmem:[%s369 + $0x188] sm:$0xff]
      %v3069 = vld [vmem:[%s369 + $0x190] sm:$0xff]
      %v3070 = vld [vmem:[%s369 + $0x1a0] sm:$0xff]
      %v3071 = vld [vmem:[%s369 + $0x1a8] sm:$0xff]
      %v3072 = vld [vmem:[%s369 + $0x1b0] sm:$0xff]
      %v3073 = vld [vmem:[%s369 + $0x1c0] sm:$0xff]
      %v3074 = vld [vmem:[%s369 + $0x1c8] sm:$0xff]
      %v3075 = vld [vmem:[%s369 + $0x1d0] sm:$0xff]
      %v3076 = vld [vmem:[%s369 + $0x1e0] sm:$0xff]
      %v3077 = vld [vmem:[%s369 + $0x1e8] sm:$0xff]
      %v3078 = vld [vmem:[%s369 + $0x1f0] sm:$0xff]
      %v3079 = vld [vmem:[%s369 + $0x200] sm:$0xff]
      %v3080 = vld [vmem:[%s369 + $0x208] sm:$0xff]
      %v3081 = vld [vmem:[%s369 + $0x210] sm:$0xff]
      %v3082 = vld [vmem:[%s369 + $0x220] sm:$0xff]
      %v3083 = vld [vmem:[%s369 + $0x228] sm:$0xff]
      %v3084 = vld [vmem:[%s369 + $0x230] sm:$0xff]
      %v3085 = vld [vmem:[%s369 + $0x240] sm:$0xff]
      %v3086 = vld [vmem:[%s369 + $0x248] sm:$0xff]
      %v3087 = vld [vmem:[%s369 + $0x250] sm:$0xff]
      %v3088 = vld [vmem:[%s369 + $0x260] sm:$0xff]
      %v3089 = vld [vmem:[%s369 + $0x268] sm:$0xff]
      %v3090 = vld [vmem:[%s369 + $0x270] sm:$0xff]
      %v3091 = vld [vmem:[%s369 + $0x280] sm:$0xff]
      %v3092 = vld [vmem:[%s369 + $0x288] sm:$0xff]
      %v3093 = vld [vmem:[%s369 + $0x290] sm:$0xff]
      %v3094 = vld [vmem:[%s369 + $0x2a0] sm:$0xff]
      %v3095 = vld [vmem:[%s369 + $0x2a8] sm:$0xff]
      %v3096 = vld [vmem:[%s369 + $0x2b0] sm:$0xff]
      %v3097 = vld [vmem:[%s369 + $0x2c0] sm:$0xff]
      %v3098 = vld [vmem:[%s369 + $0x2c8] sm:$0xff]
      %v3099 = vld [vmem:[%s369 + $0x2d0] sm:$0xff]
      %v3100 = vld [vmem:[%s369 + $0x2e0] sm:$0xff]
      %v3101 = vld [vmem:[%s369 + $0x2e8] sm:$0xff]
      %v3102 = vld [vmem:[%s369 + $0x2f0] sm:$0xff]
      %v3103 = vpack.c.bf16 %v3032, %v3031
      %v3104 = vpack.c.bf16 %v3034, %v3033
      %v3105 = vpack.c.bf16 %v3036, %v3035
      %v3106 = vpack.c.bf16 %v3038, %v3037
      %v3107 = vpack.c.bf16 %v3040, %v3039
      %v3108 = vpack.c.bf16 %v3042, %v3041
      %v3109 = vpack.c.bf16 %v3044, %v3043
      %v3110 = vpack.c.bf16 %v3046, %v3045
      %v3111 = vpack.c.bf16 %v3048, %v3047
      %v3112 = vpack.c.bf16 %v3050, %v3049
      %v3113 = vpack.c.bf16 %v3052, %v3051
      %v3114 = vpack.c.bf16 %v3054, %v3053
      %v3115 = vpack.c.bf16 %v3056, %v3055
      %v3116 = vpack.c.bf16 %v3058, %v3057
      %v3117 = vpack.c.bf16 %v3060, %v3059
      %v3118 = vpack.c.bf16 %v3062, %v3061
      %v3119 = vpack.c.bf16 %v3064, %v3063
      %v3120 = vpack.c.bf16 %v3066, %v3065
      %v3121 = vpack.c.bf16 %v3068, %v3067
      %v3122 = vpack.c.bf16 %v3070, %v3069
      %v3123 = vpack.c.bf16 %v3072, %v3071
      %v3124 = vpack.c.bf16 %v3074, %v3073
      %v3125 = vpack.c.bf16 %v3076, %v3075
      %v3126 = vpack.c.bf16 %v3078, %v3077
      %v3127 = vpack.c.bf16 %v3080, %v3079
      %v3128 = vpack.c.bf16 %v3082, %v3081
      %v3129 = vpack.c.bf16 %v3084, %v3083
      %v3130 = vpack.c.bf16 %v3086, %v3085
      %v3131 = vpack.c.bf16 %v3088, %v3087
      %v3132 = vpack.c.bf16 %v3090, %v3089
      %v3133 = vpack.c.bf16 %v3092, %v3091
      %v3134 = vpack.c.bf16 %v3094, %v3093
      %v3135 = vpack.c.bf16 %v3096, %v3095
      %v3136 = vpack.c.bf16 %v3098, %v3097
      %v3137 = vpack.c.bf16 %v3100, %v3099
      %v3138 = vpack.c.bf16 %v3102, %v3101
      %s3139 = scalar_lea.vmem %s3, 48
      %v3140 = vld [vmem:[%s3139] sm:$0xf]
      %v3141 = vld [vmem:[%s3139 + $0x4] sm:$0xf]
      %v3142 = vld [vmem:[%s3139 + $0x8] sm:$0xf]
      %v3143 = vld [vmem:[%s3139 + $0xc] sm:$0xf]
      %v3148 = vunpack.c.l.b16 %v3140
      %v3149 = vunpack.c.l.b16 %v3141
      %v3150 = vunpack.c.l.b16 %v3142
      %v3151 = vunpack.c.l.b16 %v3143
      %v3152 = vpack.c.b16 %v3149, %v3148
      %v3153 = vpack.c.b16 %v3151, %v3150
      %v3157 = vsel %vm313, %v3103, 0
      %v3160 = vsel %vm313, %v3104, 0
      %v3163 = vsel %vm313, %v3105, 0
      %v3166 = vsel %vm313, %v3106, 0
      %v3169 = vsel %vm313, %v3107, 0
      %v3172 = vsel %vm313, %v3108, 0
      %v3175 = vsel %vm313, %v3109, 0
      %v3178 = vsel %vm313, %v3110, 0
      %v3181 = vsel %vm313, %v3111, 0
      %v3184 = vsel %vm313, %v3112, 0
      %v3187 = vsel %vm313, %v3113, 0
      %v3190 = vsel %vm313, %v3114, 0
      %v3193 = vsel %vm313, %v3115, 0
      %v3196 = vsel %vm313, %v3116, 0
      %v3199 = vsel %vm313, %v3117, 0
      %v3202 = vsel %vm313, %v3118, 0
      %v3205 = vsel %vm313, %v3119, 0
      %v3208 = vsel %vm313, %v3120, 0
      %v3211 = vsel %vm313, %v3121, 0
      %v3214 = vsel %vm313, %v3122, 0
      %v3217 = vsel %vm313, %v3123, 0
      %v3220 = vsel %vm313, %v3124, 0
      %v3223 = vsel %vm313, %v3125, 0
      %v3226 = vsel %vm313, %v3126, 0
      %v3229 = vsel %vm313, %v3127, 0
      %v3232 = vsel %vm313, %v3128, 0
      %v3235 = vsel %vm313, %v3129, 0
      %v3238 = vsel %vm313, %v3130, 0
      %v3241 = vsel %vm313, %v3131, 0
      %v3244 = vsel %vm313, %v3132, 0
      %v3247 = vsel %vm313, %v3133, 0
      %v3250 = vsel %vm313, %v3134, 0
      %v3253 = vsel %vm313, %v3135, 0
      %v3256 = vsel %vm313, %v3136, 0
      %v3259 = vsel %vm313, %v3137, 0
      %v3262 = vsel %vm313, %v3138, 0
      %3264 = vmatpush.bf16.msra.mxu0 0
      %3265 = vmatpush.bf16.msra.mxu0 0
      %3266 = vmatpush.bf16.msra.mxu0 0
      %3267 = vmatpush.bf16.msra.mxu0 0
      %3268 = vmatpush.bf16.msra.mxu0 0
      %3269 = vmatpush.bf16.msra.mxu0 0
      %3270 = vmatpush.bf16.msra.mxu0 %v3153
      %3271 = vmatpush.bf16.msra.mxu0 %v3152
      %3272 = vmatmul.bf16.gmra.mxu0 %v3157
      %v3273 = vpop.f32.mrf.mxu0
      %v3274 = vadd.f32 0.0, %v3273
      %v3275 = vpop.f32.mrf.mxu0
      %v3276 = vadd.f32 0.0, %v3275
      %3277 = vmatmul.bf16.gmra.mxu0 %v3160
      %v3278 = vpop.f32.mrf.mxu0
      %v3279 = vadd.f32 0.0, %v3278
      %v3280 = vpop.f32.mrf.mxu0
      %v3281 = vadd.f32 0.0, %v3280
      %3282 = vmatmul.bf16.gmra.mxu0 %v3163
      %v3283 = vpop.f32.mrf.mxu0
      %v3284 = vadd.f32 0.0, %v3283
      %v3285 = vpop.f32.mrf.mxu0
      %v3286 = vadd.f32 0.0, %v3285
      %3287 = vmatmul.bf16.gmra.mxu0 %v3166
      %v3288 = vpop.f32.mrf.mxu0
      %v3289 = vadd.f32 0.0, %v3288
      %v3290 = vpop.f32.mrf.mxu0
      %v3291 = vadd.f32 0.0, %v3290
      %3292 = vmatmul.bf16.gmra.mxu0 %v3169
      %v3293 = vpop.f32.mrf.mxu0
      %v3294 = vadd.f32 0.0, %v3293
      %v3295 = vpop.f32.mrf.mxu0
      %v3296 = vadd.f32 0.0, %v3295
      %3297 = vmatmul.bf16.gmra.mxu0 %v3172
      %v3298 = vpop.f32.mrf.mxu0
      %v3299 = vadd.f32 0.0, %v3298
      %v3300 = vpop.f32.mrf.mxu0
      %v3301 = vadd.f32 0.0, %v3300
      %3302 = vmatmul.bf16.gmra.mxu0 %v3175
      %v3303 = vpop.f32.mrf.mxu0
      %v3304 = vadd.f32 0.0, %v3303
      %v3305 = vpop.f32.mrf.mxu0
      %v3306 = vadd.f32 0.0, %v3305
      %3307 = vmatmul.bf16.gmra.mxu0 %v3178
      %v3308 = vpop.f32.mrf.mxu0
      %v3309 = vadd.f32 0.0, %v3308
      %v3310 = vpop.f32.mrf.mxu0
      %v3311 = vadd.f32 0.0, %v3310
      %3312 = vmatmul.bf16.gmra.mxu0 %v3181
      %v3313 = vpop.f32.mrf.mxu0
      %v3314 = vadd.f32 0.0, %v3313
      %v3315 = vpop.f32.mrf.mxu0
      %v3316 = vadd.f32 0.0, %v3315
      %3317 = vmatmul.bf16.gmra.mxu0 %v3184
      %v3318 = vpop.f32.mrf.mxu0
      %v3319 = vadd.f32 0.0, %v3318
      %v3320 = vpop.f32.mrf.mxu0
      %v3321 = vadd.f32 0.0, %v3320
      %3322 = vmatmul.bf16.gmra.mxu0 %v3187
      %v3323 = vpop.f32.mrf.mxu0
      %v3324 = vadd.f32 0.0, %v3323
      %v3325 = vpop.f32.mrf.mxu0
      %v3326 = vadd.f32 0.0, %v3325
      %3327 = vmatmul.bf16.gmra.mxu0 %v3190
      %v3328 = vpop.f32.mrf.mxu0
      %v3329 = vadd.f32 0.0, %v3328
      %v3330 = vpop.f32.mrf.mxu0
      %v3331 = vadd.f32 0.0, %v3330
      %3332 = vmatmul.bf16.gmra.mxu0 %v3193
      %v3333 = vpop.f32.mrf.mxu0
      %v3334 = vadd.f32 0.0, %v3333
      %v3335 = vpop.f32.mrf.mxu0
      %v3336 = vadd.f32 0.0, %v3335
      %3337 = vmatmul.bf16.gmra.mxu0 %v3196
      %v3338 = vpop.f32.mrf.mxu0
      %v3339 = vadd.f32 0.0, %v3338
      %v3340 = vpop.f32.mrf.mxu0
      %v3341 = vadd.f32 0.0, %v3340
      %3342 = vmatmul.bf16.gmra.mxu0 %v3199
      %v3343 = vpop.f32.mrf.mxu0
      %v3344 = vadd.f32 0.0, %v3343
      %v3345 = vpop.f32.mrf.mxu0
      %v3346 = vadd.f32 0.0, %v3345
      %3347 = vmatmul.bf16.gmra.mxu0 %v3202
      %v3348 = vpop.f32.mrf.mxu0
      %v3349 = vadd.f32 0.0, %v3348
      %v3350 = vpop.f32.mrf.mxu0
      %v3351 = vadd.f32 0.0, %v3350
      %3352 = vmatmul.bf16.gmra.mxu0 %v3205
      %v3353 = vpop.f32.mrf.mxu0
      %v3354 = vadd.f32 0.0, %v3353
      %v3355 = vpop.f32.mrf.mxu0
      %v3356 = vadd.f32 0.0, %v3355
      %3357 = vmatmul.bf16.gmra.mxu0 %v3208
      %v3358 = vpop.f32.mrf.mxu0
      %v3359 = vadd.f32 0.0, %v3358
      %v3360 = vpop.f32.mrf.mxu0
      %v3361 = vadd.f32 0.0, %v3360
      %3362 = vmatmul.bf16.gmra.mxu0 %v3211
      %v3363 = vpop.f32.mrf.mxu0
      %v3364 = vadd.f32 0.0, %v3363
      %v3365 = vpop.f32.mrf.mxu0
      %v3366 = vadd.f32 0.0, %v3365
      %3367 = vmatmul.bf16.gmra.mxu0 %v3214
      %v3368 = vpop.f32.mrf.mxu0
      %v3369 = vadd.f32 0.0, %v3368
      %v3370 = vpop.f32.mrf.mxu0
      %v3371 = vadd.f32 0.0, %v3370
      %3372 = vmatmul.bf16.gmra.mxu0 %v3217
      %v3373 = vpop.f32.mrf.mxu0
      %v3374 = vadd.f32 0.0, %v3373
      %v3375 = vpop.f32.mrf.mxu0
      %v3376 = vadd.f32 0.0, %v3375
      %3377 = vmatmul.bf16.gmra.mxu0 %v3220
      %v3378 = vpop.f32.mrf.mxu0
      %v3379 = vadd.f32 0.0, %v3378
      %v3380 = vpop.f32.mrf.mxu0
      %v3381 = vadd.f32 0.0, %v3380
      %3382 = vmatmul.bf16.gmra.mxu0 %v3223
      %v3383 = vpop.f32.mrf.mxu0
      %v3384 = vadd.f32 0.0, %v3383
      %v3385 = vpop.f32.mrf.mxu0
      %v3386 = vadd.f32 0.0, %v3385
      %3387 = vmatmul.bf16.gmra.mxu0 %v3226
      %v3388 = vpop.f32.mrf.mxu0
      %v3389 = vadd.f32 0.0, %v3388
      %v3390 = vpop.f32.mrf.mxu0
      %v3391 = vadd.f32 0.0, %v3390
      %3392 = vmatmul.bf16.gmra.mxu0 %v3229
      %v3393 = vpop.f32.mrf.mxu0
      %v3394 = vadd.f32 0.0, %v3393
      %v3395 = vpop.f32.mrf.mxu0
      %v3396 = vadd.f32 0.0, %v3395
      %3397 = vmatmul.bf16.gmra.mxu0 %v3232
      %v3398 = vpop.f32.mrf.mxu0
      %v3399 = vadd.f32 0.0, %v3398
      %v3400 = vpop.f32.mrf.mxu0
      %v3401 = vadd.f32 0.0, %v3400
      %3402 = vmatmul.bf16.gmra.mxu0 %v3235
      %v3403 = vpop.f32.mrf.mxu0
      %v3404 = vadd.f32 0.0, %v3403
      %v3405 = vpop.f32.mrf.mxu0
      %v3406 = vadd.f32 0.0, %v3405
      %3407 = vmatmul.bf16.gmra.mxu0 %v3238
      %v3408 = vpop.f32.mrf.mxu0
      %v3409 = vadd.f32 0.0, %v3408
      %v3410 = vpop.f32.mrf.mxu0
      %v3411 = vadd.f32 0.0, %v3410
      %3412 = vmatmul.bf16.gmra.mxu0 %v3241
      %v3413 = vpop.f32.mrf.mxu0
      %v3414 = vadd.f32 0.0, %v3413
      %v3415 = vpop.f32.mrf.mxu0
      %v3416 = vadd.f32 0.0, %v3415
      %3417 = vmatmul.bf16.gmra.mxu0 %v3244
      %v3418 = vpop.f32.mrf.mxu0
      %v3419 = vadd.f32 0.0, %v3418
      %v3420 = vpop.f32.mrf.mxu0
      %v3421 = vadd.f32 0.0, %v3420
      %3422 = vmatmul.bf16.gmra.mxu0 %v3247
      %v3423 = vpop.f32.mrf.mxu0
      %v3424 = vadd.f32 0.0, %v3423
      %v3425 = vpop.f32.mrf.mxu0
      %v3426 = vadd.f32 0.0, %v3425
      %3427 = vmatmul.bf16.gmra.mxu0 %v3250
      %v3428 = vpop.f32.mrf.mxu0
      %v3429 = vadd.f32 0.0, %v3428
      %v3430 = vpop.f32.mrf.mxu0
      %v3431 = vadd.f32 0.0, %v3430
      %3432 = vmatmul.bf16.gmra.mxu0 %v3253
      %v3433 = vpop.f32.mrf.mxu0
      %v3434 = vadd.f32 0.0, %v3433
      %v3435 = vpop.f32.mrf.mxu0
      %v3436 = vadd.f32 0.0, %v3435
      %3437 = vmatmul.bf16.gmra.mxu0 %v3256
      %v3438 = vpop.f32.mrf.mxu0
      %v3439 = vadd.f32 0.0, %v3438
      %v3440 = vpop.f32.mrf.mxu0
      %v3441 = vadd.f32 0.0, %v3440
      %3442 = vmatmul.bf16.gmra.mxu0 %v3259
      %v3443 = vpop.f32.mrf.mxu0
      %v3444 = vadd.f32 0.0, %v3443
      %v3445 = vpop.f32.mrf.mxu0
      %v3446 = vadd.f32 0.0, %v3445
      %3447 = vmatmul.bf16.gmra.mxu0 %v3262
      %v3448 = vpop.f32.mrf.mxu0
      %v3449 = vadd.f32 0.0, %v3448
      %v3450 = vpop.f32.mrf.mxu0
      %v3451 = vadd.f32 0.0, %v3450
      %3452 = vdwg.mxu0
      %v3453 = vadd.f32 %v2959, %v3274
      %v3454 = vadd.f32 %v2960, %v3276
      %v3455 = vadd.f32 %v2961, %v3279
      %v3456 = vadd.f32 %v2962, %v3281
      %v3457 = vadd.f32 %v2963, %v3284
      %v3458 = vadd.f32 %v2964, %v3286
      %v3459 = vadd.f32 %v2965, %v3289
      %v3460 = vadd.f32 %v2966, %v3291
      %v3461 = vadd.f32 %v2967, %v3294
      %v3462 = vadd.f32 %v2968, %v3296
      %v3463 = vadd.f32 %v2969, %v3299
      %v3464 = vadd.f32 %v2970, %v3301
      %v3465 = vadd.f32 %v2971, %v3304
      %v3466 = vadd.f32 %v2972, %v3306
      %v3467 = vadd.f32 %v2973, %v3309
      %v3468 = vadd.f32 %v2974, %v3311
      %v3469 = vadd.f32 %v2975, %v3314
      %v3470 = vadd.f32 %v2976, %v3316
      %v3471 = vadd.f32 %v2977, %v3319
      %v3472 = vadd.f32 %v2978, %v3321
      %v3473 = vadd.f32 %v2979, %v3324
      %v3474 = vadd.f32 %v2980, %v3326
      %v3475 = vadd.f32 %v2981, %v3329
      %v3476 = vadd.f32 %v2982, %v3331
      %v3477 = vadd.f32 %v2983, %v3334
      %v3478 = vadd.f32 %v2984, %v3336
      %v3479 = vadd.f32 %v2985, %v3339
      %v3480 = vadd.f32 %v2986, %v3341
      %v3481 = vadd.f32 %v2987, %v3344
      %v3482 = vadd.f32 %v2988, %v3346
      %v3483 = vadd.f32 %v2989, %v3349
      %v3484 = vadd.f32 %v2990, %v3351
      %v3485 = vadd.f32 %v2991, %v3354
      %v3486 = vadd.f32 %v2992, %v3356
      %v3487 = vadd.f32 %v2993, %v3359
      %v3488 = vadd.f32 %v2994, %v3361
      %v3489 = vadd.f32 %v2995, %v3364
      %v3490 = vadd.f32 %v2996, %v3366
      %v3491 = vadd.f32 %v2997, %v3369
      %v3492 = vadd.f32 %v2998, %v3371
      %v3493 = vadd.f32 %v2999, %v3374
      %v3494 = vadd.f32 %v3000, %v3376
      %v3495 = vadd.f32 %v3001, %v3379
      %v3496 = vadd.f32 %v3002, %v3381
      %v3497 = vadd.f32 %v3003, %v3384
      %v3498 = vadd.f32 %v3004, %v3386
      %v3499 = vadd.f32 %v3005, %v3389
      %v3500 = vadd.f32 %v3006, %v3391
      %v3501 = vadd.f32 %v3007, %v3394
      %v3502 = vadd.f32 %v3008, %v3396
      %v3503 = vadd.f32 %v3009, %v3399
      %v3504 = vadd.f32 %v3010, %v3401
      %v3505 = vadd.f32 %v3011, %v3404
      %v3506 = vadd.f32 %v3012, %v3406
      %v3507 = vadd.f32 %v3013, %v3409
      %v3508 = vadd.f32 %v3014, %v3411
      %v3509 = vadd.f32 %v3015, %v3414
      %v3510 = vadd.f32 %v3016, %v3416
      %v3511 = vadd.f32 %v3017, %v3419
      %v3512 = vadd.f32 %v3018, %v3421
      %v3513 = vadd.f32 %v3019, %v3424
      %v3514 = vadd.f32 %v3020, %v3426
      %v3515 = vadd.f32 %v3021, %v3429
      %v3516 = vadd.f32 %v3022, %v3431
      %v3517 = vadd.f32 %v3023, %v3434
      %v3518 = vadd.f32 %v3024, %v3436
      %v3519 = vadd.f32 %v3025, %v3439
      %v3520 = vadd.f32 %v3026, %v3441
      %v3521 = vadd.f32 %v3027, %v3444
      %v3522 = vadd.f32 %v3028, %v3446
      %v3523 = vadd.f32 %v3029, %v3449
      %v3524 = vadd.f32 %v3030, %v3451
      %v3525 = vld [vmem:[%s369 + $0x1] sm:$0xff]
      %v3526 = vld [vmem:[%s369 + $0x9] sm:$0xff]
      %v3527 = vld [vmem:[%s369 + $0x11] sm:$0xff]
      %v3528 = vld [vmem:[%s369 + $0x21] sm:$0xff]
      %v3529 = vld [vmem:[%s369 + $0x29] sm:$0xff]
      %v3530 = vld [vmem:[%s369 + $0x31] sm:$0xff]
      %v3531 = vld [vmem:[%s369 + $0x41] sm:$0xff]
      %v3532 = vld [vmem:[%s369 + $0x49] sm:$0xff]
      %v3533 = vld [vmem:[%s369 + $0x51] sm:$0xff]
      %v3534 = vld [vmem:[%s369 + $0x61] sm:$0xff]
      %v3535 = vld [vmem:[%s369 + $0x69] sm:$0xff]
      %v3536 = vld [vmem:[%s369 + $0x71] sm:$0xff]
      %v3537 = vld [vmem:[%s369 + $0x81] sm:$0xff]
      %v3538 = vld [vmem:[%s369 + $0x89] sm:$0xff]
      %v3539 = vld [vmem:[%s369 + $0x91] sm:$0xff]
      %v3540 = vld [vmem:[%s369 + $0xa1] sm:$0xff]
      %v3541 = vld [vmem:[%s369 + $0xa9] sm:$0xff]
      %v3542 = vld [vmem:[%s369 + $0xb1] sm:$0xff]
      %v3543 = vld [vmem:[%s369 + $0xc1] sm:$0xff]
      %v3544 = vld [vmem:[%s369 + $0xc9] sm:$0xff]
      %v3545 = vld [vmem:[%s369 + $0xd1] sm:$0xff]
      %v3546 = vld [vmem:[%s369 + $0xe1] sm:$0xff]
      %v3547 = vld [vmem:[%s369 + $0xe9] sm:$0xff]
      %v3548 = vld [vmem:[%s369 + $0xf1] sm:$0xff]
      %v3549 = vld [vmem:[%s369 + $0x101] sm:$0xff]
      %v3550 = vld [vmem:[%s369 + $0x109] sm:$0xff]
      %v3551 = vld [vmem:[%s369 + $0x111] sm:$0xff]
      %v3552 = vld [vmem:[%s369 + $0x121] sm:$0xff]
      %v3553 = vld [vmem:[%s369 + $0x129] sm:$0xff]
      %v3554 = vld [vmem:[%s369 + $0x131] sm:$0xff]
      %v3555 = vld [vmem:[%s369 + $0x141] sm:$0xff]
      %v3556 = vld [vmem:[%s369 + $0x149] sm:$0xff]
      %v3557 = vld [vmem:[%s369 + $0x151] sm:$0xff]
      %v3558 = vld [vmem:[%s369 + $0x161] sm:$0xff]
      %v3559 = vld [vmem:[%s369 + $0x169] sm:$0xff]
      %v3560 = vld [vmem:[%s369 + $0x171] sm:$0xff]
      %v3561 = vld [vmem:[%s369 + $0x181] sm:$0xff]
      %v3562 = vld [vmem:[%s369 + $0x189] sm:$0xff]
      %v3563 = vld [vmem:[%s369 + $0x191] sm:$0xff]
      %v3564 = vld [vmem:[%s369 + $0x1a1] sm:$0xff]
      %v3565 = vld [vmem:[%s369 + $0x1a9] sm:$0xff]
      %v3566 = vld [vmem:[%s369 + $0x1b1] sm:$0xff]
      %v3567 = vld [vmem:[%s369 + $0x1c1] sm:$0xff]
      %v3568 = vld [vmem:[%s369 + $0x1c9] sm:$0xff]
      %v3569 = vld [vmem:[%s369 + $0x1d1] sm:$0xff]
      %v3570 = vld [vmem:[%s369 + $0x1e1] sm:$0xff]
      %v3571 = vld [vmem:[%s369 + $0x1e9] sm:$0xff]
      %v3572 = vld [vmem:[%s369 + $0x1f1] sm:$0xff]
      %v3573 = vld [vmem:[%s369 + $0x201] sm:$0xff]
      %v3574 = vld [vmem:[%s369 + $0x209] sm:$0xff]
      %v3575 = vld [vmem:[%s369 + $0x211] sm:$0xff]
      %v3576 = vld [vmem:[%s369 + $0x221] sm:$0xff]
      %v3577 = vld [vmem:[%s369 + $0x229] sm:$0xff]
      %v3578 = vld [vmem:[%s369 + $0x231] sm:$0xff]
      %v3579 = vld [vmem:[%s369 + $0x241] sm:$0xff]
      %v3580 = vld [vmem:[%s369 + $0x249] sm:$0xff]
      %v3581 = vld [vmem:[%s369 + $0x251] sm:$0xff]
      %v3582 = vld [vmem:[%s369 + $0x261] sm:$0xff]
      %v3583 = vld [vmem:[%s369 + $0x269] sm:$0xff]
      %v3584 = vld [vmem:[%s369 + $0x271] sm:$0xff]
      %v3585 = vld [vmem:[%s369 + $0x281] sm:$0xff]
      %v3586 = vld [vmem:[%s369 + $0x289] sm:$0xff]
      %v3587 = vld [vmem:[%s369 + $0x291] sm:$0xff]
      %v3588 = vld [vmem:[%s369 + $0x2a1] sm:$0xff]
      %v3589 = vld [vmem:[%s369 + $0x2a9] sm:$0xff]
      %v3590 = vld [vmem:[%s369 + $0x2b1] sm:$0xff]
      %v3591 = vld [vmem:[%s369 + $0x2c1] sm:$0xff]
      %v3592 = vld [vmem:[%s369 + $0x2c9] sm:$0xff]
      %v3593 = vld [vmem:[%s369 + $0x2d1] sm:$0xff]
      %v3594 = vld [vmem:[%s369 + $0x2e1] sm:$0xff]
      %v3595 = vld [vmem:[%s369 + $0x2e9] sm:$0xff]
      %v3596 = vld [vmem:[%s369 + $0x2f1] sm:$0xff]
      %v3597 = vpack.c.bf16 %v3526, %v3525
      %v3598 = vpack.c.bf16 %v3528, %v3527
      %v3599 = vpack.c.bf16 %v3530, %v3529
      %v3600 = vpack.c.bf16 %v3532, %v3531
      %v3601 = vpack.c.bf16 %v3534, %v3533
      %v3602 = vpack.c.bf16 %v3536, %v3535
      %v3603 = vpack.c.bf16 %v3538, %v3537
      %v3604 = vpack.c.bf16 %v3540, %v3539
      %v3605 = vpack.c.bf16 %v3542, %v3541
      %v3606 = vpack.c.bf16 %v3544, %v3543
      %v3607 = vpack.c.bf16 %v3546, %v3545
      %v3608 = vpack.c.bf16 %v3548, %v3547
      %v3609 = vpack.c.bf16 %v3550, %v3549
      %v3610 = vpack.c.bf16 %v3552, %v3551
      %v3611 = vpack.c.bf16 %v3554, %v3553
      %v3612 = vpack.c.bf16 %v3556, %v3555
      %v3613 = vpack.c.bf16 %v3558, %v3557
      %v3614 = vpack.c.bf16 %v3560, %v3559
      %v3615 = vpack.c.bf16 %v3562, %v3561
      %v3616 = vpack.c.bf16 %v3564, %v3563
      %v3617 = vpack.c.bf16 %v3566, %v3565
      %v3618 = vpack.c.bf16 %v3568, %v3567
      %v3619 = vpack.c.bf16 %v3570, %v3569
      %v3620 = vpack.c.bf16 %v3572, %v3571
      %v3621 = vpack.c.bf16 %v3574, %v3573
      %v3622 = vpack.c.bf16 %v3576, %v3575
      %v3623 = vpack.c.bf16 %v3578, %v3577
      %v3624 = vpack.c.bf16 %v3580, %v3579
      %v3625 = vpack.c.bf16 %v3582, %v3581
      %v3626 = vpack.c.bf16 %v3584, %v3583
      %v3627 = vpack.c.bf16 %v3586, %v3585
      %v3628 = vpack.c.bf16 %v3588, %v3587
      %v3629 = vpack.c.bf16 %v3590, %v3589
      %v3630 = vpack.c.bf16 %v3592, %v3591
      %v3631 = vpack.c.bf16 %v3594, %v3593
      %v3632 = vpack.c.bf16 %v3596, %v3595
      %s3633 = scalar_lea.vmem %s3, 64
      %v3634 = vld [vmem:[%s3633] sm:$0xf]
      %v3635 = vld [vmem:[%s3633 + $0x4] sm:$0xf]
      %v3636 = vld [vmem:[%s3633 + $0x8] sm:$0xf]
      %v3637 = vld [vmem:[%s3633 + $0xc] sm:$0xf]
      %v3642 = vunpack.c.l.b16 %v3634
      %v3643 = vunpack.c.l.b16 %v3635
      %v3644 = vunpack.c.l.b16 %v3636
      %v3645 = vunpack.c.l.b16 %v3637
      %v3646 = vpack.c.b16 %v3643, %v3642
      %v3647 = vpack.c.b16 %v3645, %v3644
      %v3651 = vsel %vm313, %v3597, 0
      %v3654 = vsel %vm313, %v3598, 0
      %v3657 = vsel %vm313, %v3599, 0
      %v3660 = vsel %vm313, %v3600, 0
      %v3663 = vsel %vm313, %v3601, 0
      %v3666 = vsel %vm313, %v3602, 0
      %v3669 = vsel %vm313, %v3603, 0
      %v3672 = vsel %vm313, %v3604, 0
      %v3675 = vsel %vm313, %v3605, 0
      %v3678 = vsel %vm313, %v3606, 0
      %v3681 = vsel %vm313, %v3607, 0
      %v3684 = vsel %vm313, %v3608, 0
      %v3687 = vsel %vm313, %v3609, 0
      %v3690 = vsel %vm313, %v3610, 0
      %v3693 = vsel %vm313, %v3611, 0
      %v3696 = vsel %vm313, %v3612, 0
      %v3699 = vsel %vm313, %v3613, 0
      %v3702 = vsel %vm313, %v3614, 0
      %v3705 = vsel %vm313, %v3615, 0
      %v3708 = vsel %vm313, %v3616, 0
      %v3711 = vsel %vm313, %v3617, 0
      %v3714 = vsel %vm313, %v3618, 0
      %v3717 = vsel %vm313, %v3619, 0
      %v3720 = vsel %vm313, %v3620, 0
      %v3723 = vsel %vm313, %v3621, 0
      %v3726 = vsel %vm313, %v3622, 0
      %v3729 = vsel %vm313, %v3623, 0
      %v3732 = vsel %vm313, %v3624, 0
      %v3735 = vsel %vm313, %v3625, 0
      %v3738 = vsel %vm313, %v3626, 0
      %v3741 = vsel %vm313, %v3627, 0
      %v3744 = vsel %vm313, %v3628, 0
      %v3747 = vsel %vm313, %v3629, 0
      %v3750 = vsel %vm313, %v3630, 0
      %v3753 = vsel %vm313, %v3631, 0
      %v3756 = vsel %vm313, %v3632, 0
      %3758 = vmatpush.bf16.msra.mxu0 0
      %3759 = vmatpush.bf16.msra.mxu0 0
      %3760 = vmatpush.bf16.msra.mxu0 0
      %3761 = vmatpush.bf16.msra.mxu0 0
      %3762 = vmatpush.bf16.msra.mxu0 0
      %3763 = vmatpush.bf16.msra.mxu0 0
      %3764 = vmatpush.bf16.msra.mxu0 %v3647
      %3765 = vmatpush.bf16.msra.mxu0 %v3646
      %3766 = vmatmul.bf16.gmra.mxu0 %v3651
      %v3767 = vpop.f32.mrf.mxu0
      %v3768 = vadd.f32 0.0, %v3767
      %v3769 = vpop.f32.mrf.mxu0
      %v3770 = vadd.f32 0.0, %v3769
      %3771 = vmatmul.bf16.gmra.mxu0 %v3654
      %v3772 = vpop.f32.mrf.mxu0
      %v3773 = vadd.f32 0.0, %v3772
      %v3774 = vpop.f32.mrf.mxu0
      %v3775 = vadd.f32 0.0, %v3774
      %3776 = vmatmul.bf16.gmra.mxu0 %v3657
      %v3777 = vpop.f32.mrf.mxu0
      %v3778 = vadd.f32 0.0, %v3777
      %v3779 = vpop.f32.mrf.mxu0
      %v3780 = vadd.f32 0.0, %v3779
      %3781 = vmatmul.bf16.gmra.mxu0 %v3660
      %v3782 = vpop.f32.mrf.mxu0
      %v3783 = vadd.f32 0.0, %v3782
      %v3784 = vpop.f32.mrf.mxu0
      %v3785 = vadd.f32 0.0, %v3784
      %3786 = vmatmul.bf16.gmra.mxu0 %v3663
      %v3787 = vpop.f32.mrf.mxu0
      %v3788 = vadd.f32 0.0, %v3787
      %v3789 = vpop.f32.mrf.mxu0
      %v3790 = vadd.f32 0.0, %v3789
      %3791 = vmatmul.bf16.gmra.mxu0 %v3666
      %v3792 = vpop.f32.mrf.mxu0
      %v3793 = vadd.f32 0.0, %v3792
      %v3794 = vpop.f32.mrf.mxu0
      %v3795 = vadd.f32 0.0, %v3794
      %3796 = vmatmul.bf16.gmra.mxu0 %v3669
      %v3797 = vpop.f32.mrf.mxu0
      %v3798 = vadd.f32 0.0, %v3797
      %v3799 = vpop.f32.mrf.mxu0
      %v3800 = vadd.f32 0.0, %v3799
      %3801 = vmatmul.bf16.gmra.mxu0 %v3672
      %v3802 = vpop.f32.mrf.mxu0
      %v3803 = vadd.f32 0.0, %v3802
      %v3804 = vpop.f32.mrf.mxu0
      %v3805 = vadd.f32 0.0, %v3804
      %3806 = vmatmul.bf16.gmra.mxu0 %v3675
      %v3807 = vpop.f32.mrf.mxu0
      %v3808 = vadd.f32 0.0, %v3807
      %v3809 = vpop.f32.mrf.mxu0
      %v3810 = vadd.f32 0.0, %v3809
      %3811 = vmatmul.bf16.gmra.mxu0 %v3678
      %v3812 = vpop.f32.mrf.mxu0
      %v3813 = vadd.f32 0.0, %v3812
      %v3814 = vpop.f32.mrf.mxu0
      %v3815 = vadd.f32 0.0, %v3814
      %3816 = vmatmul.bf16.gmra.mxu0 %v3681
      %v3817 = vpop.f32.mrf.mxu0
      %v3818 = vadd.f32 0.0, %v3817
      %v3819 = vpop.f32.mrf.mxu0
      %v3820 = vadd.f32 0.0, %v3819
      %3821 = vmatmul.bf16.gmra.mxu0 %v3684
      %v3822 = vpop.f32.mrf.mxu0
      %v3823 = vadd.f32 0.0, %v3822
      %v3824 = vpop.f32.mrf.mxu0
      %v3825 = vadd.f32 0.0, %v3824
      %3826 = vmatmul.bf16.gmra.mxu0 %v3687
      %v3827 = vpop.f32.mrf.mxu0
      %v3828 = vadd.f32 0.0, %v3827
      %v3829 = vpop.f32.mrf.mxu0
      %v3830 = vadd.f32 0.0, %v3829
      %3831 = vmatmul.bf16.gmra.mxu0 %v3690
      %v3832 = vpop.f32.mrf.mxu0
      %v3833 = vadd.f32 0.0, %v3832
      %v3834 = vpop.f32.mrf.mxu0
      %v3835 = vadd.f32 0.0, %v3834
      %3836 = vmatmul.bf16.gmra.mxu0 %v3693
      %v3837 = vpop.f32.mrf.mxu0
      %v3838 = vadd.f32 0.0, %v3837
      %v3839 = vpop.f32.mrf.mxu0
      %v3840 = vadd.f32 0.0, %v3839
      %3841 = vmatmul.bf16.gmra.mxu0 %v3696
      %v3842 = vpop.f32.mrf.mxu0
      %v3843 = vadd.f32 0.0, %v3842
      %v3844 = vpop.f32.mrf.mxu0
      %v3845 = vadd.f32 0.0, %v3844
      %3846 = vmatmul.bf16.gmra.mxu0 %v3699
      %v3847 = vpop.f32.mrf.mxu0
      %v3848 = vadd.f32 0.0, %v3847
      %v3849 = vpop.f32.mrf.mxu0
      %v3850 = vadd.f32 0.0, %v3849
      %3851 = vmatmul.bf16.gmra.mxu0 %v3702
      %v3852 = vpop.f32.mrf.mxu0
      %v3853 = vadd.f32 0.0, %v3852
      %v3854 = vpop.f32.mrf.mxu0
      %v3855 = vadd.f32 0.0, %v3854
      %3856 = vmatmul.bf16.gmra.mxu0 %v3705
      %v3857 = vpop.f32.mrf.mxu0
      %v3858 = vadd.f32 0.0, %v3857
      %v3859 = vpop.f32.mrf.mxu0
      %v3860 = vadd.f32 0.0, %v3859
      %3861 = vmatmul.bf16.gmra.mxu0 %v3708
      %v3862 = vpop.f32.mrf.mxu0
      %v3863 = vadd.f32 0.0, %v3862
      %v3864 = vpop.f32.mrf.mxu0
      %v3865 = vadd.f32 0.0, %v3864
      %3866 = vmatmul.bf16.gmra.mxu0 %v3711
      %v3867 = vpop.f32.mrf.mxu0
      %v3868 = vadd.f32 0.0, %v3867
      %v3869 = vpop.f32.mrf.mxu0
      %v3870 = vadd.f32 0.0, %v3869
      %3871 = vmatmul.bf16.gmra.mxu0 %v3714
      %v3872 = vpop.f32.mrf.mxu0
      %v3873 = vadd.f32 0.0, %v3872
      %v3874 = vpop.f32.mrf.mxu0
      %v3875 = vadd.f32 0.0, %v3874
      %3876 = vmatmul.bf16.gmra.mxu0 %v3717
      %v3877 = vpop.f32.mrf.mxu0
      %v3878 = vadd.f32 0.0, %v3877
      %v3879 = vpop.f32.mrf.mxu0
      %v3880 = vadd.f32 0.0, %v3879
      %3881 = vmatmul.bf16.gmra.mxu0 %v3720
      %v3882 = vpop.f32.mrf.mxu0
      %v3883 = vadd.f32 0.0, %v3882
      %v3884 = vpop.f32.mrf.mxu0
      %v3885 = vadd.f32 0.0, %v3884
      %3886 = vmatmul.bf16.gmra.mxu0 %v3723
      %v3887 = vpop.f32.mrf.mxu0
      %v3888 = vadd.f32 0.0, %v3887
      %v3889 = vpop.f32.mrf.mxu0
      %v3890 = vadd.f32 0.0, %v3889
      %3891 = vmatmul.bf16.gmra.mxu0 %v3726
      %v3892 = vpop.f32.mrf.mxu0
      %v3893 = vadd.f32 0.0, %v3892
      %v3894 = vpop.f32.mrf.mxu0
      %v3895 = vadd.f32 0.0, %v3894
      %3896 = vmatmul.bf16.gmra.mxu0 %v3729
      %v3897 = vpop.f32.mrf.mxu0
      %v3898 = vadd.f32 0.0, %v3897
      %v3899 = vpop.f32.mrf.mxu0
      %v3900 = vadd.f32 0.0, %v3899
      %3901 = vmatmul.bf16.gmra.mxu0 %v3732
      %v3902 = vpop.f32.mrf.mxu0
      %v3903 = vadd.f32 0.0, %v3902
      %v3904 = vpop.f32.mrf.mxu0
      %v3905 = vadd.f32 0.0, %v3904
      %3906 = vmatmul.bf16.gmra.mxu0 %v3735
      %v3907 = vpop.f32.mrf.mxu0
      %v3908 = vadd.f32 0.0, %v3907
      %v3909 = vpop.f32.mrf.mxu0
      %v3910 = vadd.f32 0.0, %v3909
      %3911 = vmatmul.bf16.gmra.mxu0 %v3738
      %v3912 = vpop.f32.mrf.mxu0
      %v3913 = vadd.f32 0.0, %v3912
      %v3914 = vpop.f32.mrf.mxu0
      %v3915 = vadd.f32 0.0, %v3914
      %3916 = vmatmul.bf16.gmra.mxu0 %v3741
      %v3917 = vpop.f32.mrf.mxu0
      %v3918 = vadd.f32 0.0, %v3917
      %v3919 = vpop.f32.mrf.mxu0
      %v3920 = vadd.f32 0.0, %v3919
      %3921 = vmatmul.bf16.gmra.mxu0 %v3744
      %v3922 = vpop.f32.mrf.mxu0
      %v3923 = vadd.f32 0.0, %v3922
      %v3924 = vpop.f32.mrf.mxu0
      %v3925 = vadd.f32 0.0, %v3924
      %3926 = vmatmul.bf16.gmra.mxu0 %v3747
      %v3927 = vpop.f32.mrf.mxu0
      %v3928 = vadd.f32 0.0, %v3927
      %v3929 = vpop.f32.mrf.mxu0
      %v3930 = vadd.f32 0.0, %v3929
      %3931 = vmatmul.bf16.gmra.mxu0 %v3750
      %v3932 = vpop.f32.mrf.mxu0
      %v3933 = vadd.f32 0.0, %v3932
      %v3934 = vpop.f32.mrf.mxu0
      %v3935 = vadd.f32 0.0, %v3934
      %3936 = vmatmul.bf16.gmra.mxu0 %v3753
      %v3937 = vpop.f32.mrf.mxu0
      %v3938 = vadd.f32 0.0, %v3937
      %v3939 = vpop.f32.mrf.mxu0
      %v3940 = vadd.f32 0.0, %v3939
      %3941 = vmatmul.bf16.gmra.mxu0 %v3756
      %v3942 = vpop.f32.mrf.mxu0
      %v3943 = vadd.f32 0.0, %v3942
      %v3944 = vpop.f32.mrf.mxu0
      %v3945 = vadd.f32 0.0, %v3944
      %3946 = vdwg.mxu0
      %v3947 = vadd.f32 %v3453, %v3768
      %v3948 = vadd.f32 %v3454, %v3770
      %v3949 = vadd.f32 %v3455, %v3773
      %v3950 = vadd.f32 %v3456, %v3775
      %v3951 = vadd.f32 %v3457, %v3778
      %v3952 = vadd.f32 %v3458, %v3780
      %v3953 = vadd.f32 %v3459, %v3783
      %v3954 = vadd.f32 %v3460, %v3785
      %v3955 = vadd.f32 %v3461, %v3788
      %v3956 = vadd.f32 %v3462, %v3790
      %v3957 = vadd.f32 %v3463, %v3793
      %v3958 = vadd.f32 %v3464, %v3795
      %v3959 = vadd.f32 %v3465, %v3798
      %v3960 = vadd.f32 %v3466, %v3800
      %v3961 = vadd.f32 %v3467, %v3803
      %v3962 = vadd.f32 %v3468, %v3805
      %v3963 = vadd.f32 %v3469, %v3808
      %v3964 = vadd.f32 %v3470, %v3810
      %v3965 = vadd.f32 %v3471, %v3813
      %v3966 = vadd.f32 %v3472, %v3815
      %v3967 = vadd.f32 %v3473, %v3818
      %v3968 = vadd.f32 %v3474, %v3820
      %v3969 = vadd.f32 %v3475, %v3823
      %v3970 = vadd.f32 %v3476, %v3825
      %v3971 = vadd.f32 %v3477, %v3828
      %v3972 = vadd.f32 %v3478, %v3830
      %v3973 = vadd.f32 %v3479, %v3833
      %v3974 = vadd.f32 %v3480, %v3835
      %v3975 = vadd.f32 %v3481, %v3838
      %v3976 = vadd.f32 %v3482, %v3840
      %v3977 = vadd.f32 %v3483, %v3843
      %v3978 = vadd.f32 %v3484, %v3845
      %v3979 = vadd.f32 %v3485, %v3848
      %v3980 = vadd.f32 %v3486, %v3850
      %v3981 = vadd.f32 %v3487, %v3853
      %v3982 = vadd.f32 %v3488, %v3855
      %v3983 = vadd.f32 %v3489, %v3858
      %v3984 = vadd.f32 %v3490, %v3860
      %v3985 = vadd.f32 %v3491, %v3863
      %v3986 = vadd.f32 %v3492, %v3865
      %v3987 = vadd.f32 %v3493, %v3868
      %v3988 = vadd.f32 %v3494, %v3870
      %v3989 = vadd.f32 %v3495, %v3873
      %v3990 = vadd.f32 %v3496, %v3875
      %v3991 = vadd.f32 %v3497, %v3878
      %v3992 = vadd.f32 %v3498, %v3880
      %v3993 = vadd.f32 %v3499, %v3883
      %v3994 = vadd.f32 %v3500, %v3885
      %v3995 = vadd.f32 %v3501, %v3888
      %v3996 = vadd.f32 %v3502, %v3890
      %v3997 = vadd.f32 %v3503, %v3893
      %v3998 = vadd.f32 %v3504, %v3895
      %v3999 = vadd.f32 %v3505, %v3898
      %v4000 = vadd.f32 %v3506, %v3900
      %v4001 = vadd.f32 %v3507, %v3903
      %v4002 = vadd.f32 %v3508, %v3905
      %v4003 = vadd.f32 %v3509, %v3908
      %v4004 = vadd.f32 %v3510, %v3910
      %v4005 = vadd.f32 %v3511, %v3913
      %v4006 = vadd.f32 %v3512, %v3915
      %v4007 = vadd.f32 %v3513, %v3918
      %v4008 = vadd.f32 %v3514, %v3920
      %v4009 = vadd.f32 %v3515, %v3923
      %v4010 = vadd.f32 %v3516, %v3925
      %v4011 = vadd.f32 %v3517, %v3928
      %v4012 = vadd.f32 %v3518, %v3930
      %v4013 = vadd.f32 %v3519, %v3933
      %v4014 = vadd.f32 %v3520, %v3935
      %v4015 = vadd.f32 %v3521, %v3938
      %v4016 = vadd.f32 %v3522, %v3940
      %v4017 = vadd.f32 %v3523, %v3943
      %v4018 = vadd.f32 %v3524, %v3945
      %v4019 = vld [vmem:[%s369 + $0x2] sm:$0xff]
      %v4020 = vld [vmem:[%s369 + $0xa] sm:$0xff]
      %v4021 = vld [vmem:[%s369 + $0x12] sm:$0xff]
      %v4022 = vld [vmem:[%s369 + $0x22] sm:$0xff]
      %v4023 = vld [vmem:[%s369 + $0x2a] sm:$0xff]
      %v4024 = vld [vmem:[%s369 + $0x32] sm:$0xff]
      %v4025 = vld [vmem:[%s369 + $0x42] sm:$0xff]
      %v4026 = vld [vmem:[%s369 + $0x4a] sm:$0xff]
      %v4027 = vld [vmem:[%s369 + $0x52] sm:$0xff]
      %v4028 = vld [vmem:[%s369 + $0x62] sm:$0xff]
      %v4029 = vld [vmem:[%s369 + $0x6a] sm:$0xff]
      %v4030 = vld [vmem:[%s369 + $0x72] sm:$0xff]
      %v4031 = vld [vmem:[%s369 + $0x82] sm:$0xff]
      %v4032 = vld [vmem:[%s369 + $0x8a] sm:$0xff]
      %v4033 = vld [vmem:[%s369 + $0x92] sm:$0xff]
      %v4034 = vld [vmem:[%s369 + $0xa2] sm:$0xff]
      %v4035 = vld [vmem:[%s369 + $0xaa] sm:$0xff]
      %v4036 = vld [vmem:[%s369 + $0xb2] sm:$0xff]
      %v4037 = vld [vmem:[%s369 + $0xc2] sm:$0xff]
      %v4038 = vld [vmem:[%s369 + $0xca] sm:$0xff]
      %v4039 = vld [vmem:[%s369 + $0xd2] sm:$0xff]
      %v4040 = vld [vmem:[%s369 + $0xe2] sm:$0xff]
      %v4041 = vld [vmem:[%s369 + $0xea] sm:$0xff]
      %v4042 = vld [vmem:[%s369 + $0xf2] sm:$0xff]
      %v4043 = vld [vmem:[%s369 + $0x102] sm:$0xff]
      %v4044 = vld [vmem:[%s369 + $0x10a] sm:$0xff]
      %v4045 = vld [vmem:[%s369 + $0x112] sm:$0xff]
      %v4046 = vld [vmem:[%s369 + $0x122] sm:$0xff]
      %v4047 = vld [vmem:[%s369 + $0x12a] sm:$0xff]
      %v4048 = vld [vmem:[%s369 + $0x132] sm:$0xff]
      %v4049 = vld [vmem:[%s369 + $0x142] sm:$0xff]
      %v4050 = vld [vmem:[%s369 + $0x14a] sm:$0xff]
      %v4051 = vld [vmem:[%s369 + $0x152] sm:$0xff]
      %v4052 = vld [vmem:[%s369 + $0x162] sm:$0xff]
      %v4053 = vld [vmem:[%s369 + $0x16a] sm:$0xff]
      %v4054 = vld [vmem:[%s369 + $0x172] sm:$0xff]
      %v4055 = vld [vmem:[%s369 + $0x182] sm:$0xff]
      %v4056 = vld [vmem:[%s369 + $0x18a] sm:$0xff]
      %v4057 = vld [vmem:[%s369 + $0x192] sm:$0xff]
      %v4058 = vld [vmem:[%s369 + $0x1a2] sm:$0xff]
      %v4059 = vld [vmem:[%s369 + $0x1aa] sm:$0xff]
      %v4060 = vld [vmem:[%s369 + $0x1b2] sm:$0xff]
      %v4061 = vld [vmem:[%s369 + $0x1c2] sm:$0xff]
      %v4062 = vld [vmem:[%s369 + $0x1ca] sm:$0xff]
      %v4063 = vld [vmem:[%s369 + $0x1d2] sm:$0xff]
      %v4064 = vld [vmem:[%s369 + $0x1e2] sm:$0xff]
      %v4065 = vld [vmem:[%s369 + $0x1ea] sm:$0xff]
      %v4066 = vld [vmem:[%s369 + $0x1f2] sm:$0xff]
      %v4067 = vld [vmem:[%s369 + $0x202] sm:$0xff]
      %v4068 = vld [vmem:[%s369 + $0x20a] sm:$0xff]
      %v4069 = vld [vmem:[%s369 + $0x212] sm:$0xff]
      %v4070 = vld [vmem:[%s369 + $0x222] sm:$0xff]
      %v4071 = vld [vmem:[%s369 + $0x22a] sm:$0xff]
      %v4072 = vld [vmem:[%s369 + $0x232] sm:$0xff]
      %v4073 = vld [vmem:[%s369 + $0x242] sm:$0xff]
      %v4074 = vld [vmem:[%s369 + $0x24a] sm:$0xff]
      %v4075 = vld [vmem:[%s369 + $0x252] sm:$0xff]
      %v4076 = vld [vmem:[%s369 + $0x262] sm:$0xff]
      %v4077 = vld [vmem:[%s369 + $0x26a] sm:$0xff]
      %v4078 = vld [vmem:[%s369 + $0x272] sm:$0xff]
      %v4079 = vld [vmem:[%s369 + $0x282] sm:$0xff]
      %v4080 = vld [vmem:[%s369 + $0x28a] sm:$0xff]
      %v4081 = vld [vmem:[%s369 + $0x292] sm:$0xff]
      %v4082 = vld [vmem:[%s369 + $0x2a2] sm:$0xff]
      %v4083 = vld [vmem:[%s369 + $0x2aa] sm:$0xff]
      %v4084 = vld [vmem:[%s369 + $0x2b2] sm:$0xff]
      %v4085 = vld [vmem:[%s369 + $0x2c2] sm:$0xff]
      %v4086 = vld [vmem:[%s369 + $0x2ca] sm:$0xff]
      %v4087 = vld [vmem:[%s369 + $0x2d2] sm:$0xff]
      %v4088 = vld [vmem:[%s369 + $0x2e2] sm:$0xff]
      %v4089 = vld [vmem:[%s369 + $0x2ea] sm:$0xff]
      %v4090 = vld [vmem:[%s369 + $0x2f2] sm:$0xff]
      %v4091 = vpack.c.bf16 %v4020, %v4019
      %v4092 = vpack.c.bf16 %v4022, %v4021
      %v4093 = vpack.c.bf16 %v4024, %v4023
      %v4094 = vpack.c.bf16 %v4026, %v4025
      %v4095 = vpack.c.bf16 %v4028, %v4027
      %v4096 = vpack.c.bf16 %v4030, %v4029
      %v4097 = vpack.c.bf16 %v4032, %v4031
      %v4098 = vpack.c.bf16 %v4034, %v4033
      %v4099 = vpack.c.bf16 %v4036, %v4035
      %v4100 = vpack.c.bf16 %v4038, %v4037
      %v4101 = vpack.c.bf16 %v4040, %v4039
      %v4102 = vpack.c.bf16 %v4042, %v4041
      %v4103 = vpack.c.bf16 %v4044, %v4043
      %v4104 = vpack.c.bf16 %v4046, %v4045
      %v4105 = vpack.c.bf16 %v4048, %v4047
      %v4106 = vpack.c.bf16 %v4050, %v4049
      %v4107 = vpack.c.bf16 %v4052, %v4051
      %v4108 = vpack.c.bf16 %v4054, %v4053
      %v4109 = vpack.c.bf16 %v4056, %v4055
      %v4110 = vpack.c.bf16 %v4058, %v4057
      %v4111 = vpack.c.bf16 %v4060, %v4059
      %v4112 = vpack.c.bf16 %v4062, %v4061
      %v4113 = vpack.c.bf16 %v4064, %v4063
      %v4114 = vpack.c.bf16 %v4066, %v4065
      %v4115 = vpack.c.bf16 %v4068, %v4067
      %v4116 = vpack.c.bf16 %v4070, %v4069
      %v4117 = vpack.c.bf16 %v4072, %v4071
      %v4118 = vpack.c.bf16 %v4074, %v4073
      %v4119 = vpack.c.bf16 %v4076, %v4075
      %v4120 = vpack.c.bf16 %v4078, %v4077
      %v4121 = vpack.c.bf16 %v4080, %v4079
      %v4122 = vpack.c.bf16 %v4082, %v4081
      %v4123 = vpack.c.bf16 %v4084, %v4083
      %v4124 = vpack.c.bf16 %v4086, %v4085
      %v4125 = vpack.c.bf16 %v4088, %v4087
      %v4126 = vpack.c.bf16 %v4090, %v4089
      %s4127 = scalar_lea.vmem %s3, 80
      %v4128 = vld [vmem:[%s4127] sm:$0xf]
      %v4129 = vld [vmem:[%s4127 + $0x4] sm:$0xf]
      %v4130 = vld [vmem:[%s4127 + $0x8] sm:$0xf]
      %v4131 = vld [vmem:[%s4127 + $0xc] sm:$0xf]
      %v4136 = vunpack.c.l.b16 %v4128
      %v4137 = vunpack.c.l.b16 %v4129
      %v4138 = vunpack.c.l.b16 %v4130
      %v4139 = vunpack.c.l.b16 %v4131
      %v4140 = vpack.c.b16 %v4137, %v4136
      %v4141 = vpack.c.b16 %v4139, %v4138
      %v4145 = vsel %vm313, %v4091, 0
      %v4148 = vsel %vm313, %v4092, 0
      %v4151 = vsel %vm313, %v4093, 0
      %v4154 = vsel %vm313, %v4094, 0
      %v4157 = vsel %vm313, %v4095, 0
      %v4160 = vsel %vm313, %v4096, 0
      %v4163 = vsel %vm313, %v4097, 0
      %v4166 = vsel %vm313, %v4098, 0
      %v4169 = vsel %vm313, %v4099, 0
      %v4172 = vsel %vm313, %v4100, 0
      %v4175 = vsel %vm313, %v4101, 0
      %v4178 = vsel %vm313, %v4102, 0
      %v4181 = vsel %vm313, %v4103, 0
      %v4184 = vsel %vm313, %v4104, 0
      %v4187 = vsel %vm313, %v4105, 0
      %v4190 = vsel %vm313, %v4106, 0
      %v4193 = vsel %vm313, %v4107, 0
      %v4196 = vsel %vm313, %v4108, 0
      %v4199 = vsel %vm313, %v4109, 0
      %v4202 = vsel %vm313, %v4110, 0
      %v4205 = vsel %vm313, %v4111, 0
      %v4208 = vsel %vm313, %v4112, 0
      %v4211 = vsel %vm313, %v4113, 0
      %v4214 = vsel %vm313, %v4114, 0
      %v4217 = vsel %vm313, %v4115, 0
      %v4220 = vsel %vm313, %v4116, 0
      %v4223 = vsel %vm313, %v4117, 0
      %v4226 = vsel %vm313, %v4118, 0
      %v4229 = vsel %vm313, %v4119, 0
      %v4232 = vsel %vm313, %v4120, 0
      %v4235 = vsel %vm313, %v4121, 0
      %v4238 = vsel %vm313, %v4122, 0
      %v4241 = vsel %vm313, %v4123, 0
      %v4244 = vsel %vm313, %v4124, 0
      %v4247 = vsel %vm313, %v4125, 0
      %v4250 = vsel %vm313, %v4126, 0
      %4252 = vmatpush.bf16.msra.mxu0 0
      %4253 = vmatpush.bf16.msra.mxu0 0
      %4254 = vmatpush.bf16.msra.mxu0 0
      %4255 = vmatpush.bf16.msra.mxu0 0
      %4256 = vmatpush.bf16.msra.mxu0 0
      %4257 = vmatpush.bf16.msra.mxu0 0
      %4258 = vmatpush.bf16.msra.mxu0 %v4141
      %4259 = vmatpush.bf16.msra.mxu0 %v4140
      %4260 = vmatmul.bf16.gmra.mxu0 %v4145
      %v4261 = vpop.f32.mrf.mxu0
      %v4262 = vadd.f32 0.0, %v4261
      %v4263 = vpop.f32.mrf.mxu0
      %v4264 = vadd.f32 0.0, %v4263
      %4265 = vmatmul.bf16.gmra.mxu0 %v4148
      %v4266 = vpop.f32.mrf.mxu0
      %v4267 = vadd.f32 0.0, %v4266
      %v4268 = vpop.f32.mrf.mxu0
      %v4269 = vadd.f32 0.0, %v4268
      %4270 = vmatmul.bf16.gmra.mxu0 %v4151
      %v4271 = vpop.f32.mrf.mxu0
      %v4272 = vadd.f32 0.0, %v4271
      %v4273 = vpop.f32.mrf.mxu0
      %v4274 = vadd.f32 0.0, %v4273
      %4275 = vmatmul.bf16.gmra.mxu0 %v4154
      %v4276 = vpop.f32.mrf.mxu0
      %v4277 = vadd.f32 0.0, %v4276
      %v4278 = vpop.f32.mrf.mxu0
      %v4279 = vadd.f32 0.0, %v4278
      %4280 = vmatmul.bf16.gmra.mxu0 %v4157
      %v4281 = vpop.f32.mrf.mxu0
      %v4282 = vadd.f32 0.0, %v4281
      %v4283 = vpop.f32.mrf.mxu0
      %v4284 = vadd.f32 0.0, %v4283
      %4285 = vmatmul.bf16.gmra.mxu0 %v4160
      %v4286 = vpop.f32.mrf.mxu0
      %v4287 = vadd.f32 0.0, %v4286
      %v4288 = vpop.f32.mrf.mxu0
      %v4289 = vadd.f32 0.0, %v4288
      %4290 = vmatmul.bf16.gmra.mxu0 %v4163
      %v4291 = vpop.f32.mrf.mxu0
      %v4292 = vadd.f32 0.0, %v4291
      %v4293 = vpop.f32.mrf.mxu0
      %v4294 = vadd.f32 0.0, %v4293
      %4295 = vmatmul.bf16.gmra.mxu0 %v4166
      %v4296 = vpop.f32.mrf.mxu0
      %v4297 = vadd.f32 0.0, %v4296
      %v4298 = vpop.f32.mrf.mxu0
      %v4299 = vadd.f32 0.0, %v4298
      %4300 = vmatmul.bf16.gmra.mxu0 %v4169
      %v4301 = vpop.f32.mrf.mxu0
      %v4302 = vadd.f32 0.0, %v4301
      %v4303 = vpop.f32.mrf.mxu0
      %v4304 = vadd.f32 0.0, %v4303
      %4305 = vmatmul.bf16.gmra.mxu0 %v4172
      %v4306 = vpop.f32.mrf.mxu0
      %v4307 = vadd.f32 0.0, %v4306
      %v4308 = vpop.f32.mrf.mxu0
      %v4309 = vadd.f32 0.0, %v4308
      %4310 = vmatmul.bf16.gmra.mxu0 %v4175
      %v4311 = vpop.f32.mrf.mxu0
      %v4312 = vadd.f32 0.0, %v4311
      %v4313 = vpop.f32.mrf.mxu0
      %v4314 = vadd.f32 0.0, %v4313
      %4315 = vmatmul.bf16.gmra.mxu0 %v4178
      %v4316 = vpop.f32.mrf.mxu0
      %v4317 = vadd.f32 0.0, %v4316
      %v4318 = vpop.f32.mrf.mxu0
      %v4319 = vadd.f32 0.0, %v4318
      %4320 = vmatmul.bf16.gmra.mxu0 %v4181
      %v4321 = vpop.f32.mrf.mxu0
      %v4322 = vadd.f32 0.0, %v4321
      %v4323 = vpop.f32.mrf.mxu0
      %v4324 = vadd.f32 0.0, %v4323
      %4325 = vmatmul.bf16.gmra.mxu0 %v4184
      %v4326 = vpop.f32.mrf.mxu0
      %v4327 = vadd.f32 0.0, %v4326
      %v4328 = vpop.f32.mrf.mxu0
      %v4329 = vadd.f32 0.0, %v4328
      %4330 = vmatmul.bf16.gmra.mxu0 %v4187
      %v4331 = vpop.f32.mrf.mxu0
      %v4332 = vadd.f32 0.0, %v4331
      %v4333 = vpop.f32.mrf.mxu0
      %v4334 = vadd.f32 0.0, %v4333
      %4335 = vmatmul.bf16.gmra.mxu0 %v4190
      %v4336 = vpop.f32.mrf.mxu0
      %v4337 = vadd.f32 0.0, %v4336
      %v4338 = vpop.f32.mrf.mxu0
      %v4339 = vadd.f32 0.0, %v4338
      %4340 = vmatmul.bf16.gmra.mxu0 %v4193
      %v4341 = vpop.f32.mrf.mxu0
      %v4342 = vadd.f32 0.0, %v4341
      %v4343 = vpop.f32.mrf.mxu0
      %v4344 = vadd.f32 0.0, %v4343
      %4345 = vmatmul.bf16.gmra.mxu0 %v4196
      %v4346 = vpop.f32.mrf.mxu0
      %v4347 = vadd.f32 0.0, %v4346
      %v4348 = vpop.f32.mrf.mxu0
      %v4349 = vadd.f32 0.0, %v4348
      %4350 = vmatmul.bf16.gmra.mxu0 %v4199
      %v4351 = vpop.f32.mrf.mxu0
      %v4352 = vadd.f32 0.0, %v4351
      %v4353 = vpop.f32.mrf.mxu0
      %v4354 = vadd.f32 0.0, %v4353
      %4355 = vmatmul.bf16.gmra.mxu0 %v4202
      %v4356 = vpop.f32.mrf.mxu0
      %v4357 = vadd.f32 0.0, %v4356
      %v4358 = vpop.f32.mrf.mxu0
      %v4359 = vadd.f32 0.0, %v4358
      %4360 = vmatmul.bf16.gmra.mxu0 %v4205
      %v4361 = vpop.f32.mrf.mxu0
      %v4362 = vadd.f32 0.0, %v4361
      %v4363 = vpop.f32.mrf.mxu0
      %v4364 = vadd.f32 0.0, %v4363
      %4365 = vmatmul.bf16.gmra.mxu0 %v4208
      %v4366 = vpop.f32.mrf.mxu0
      %v4367 = vadd.f32 0.0, %v4366
      %v4368 = vpop.f32.mrf.mxu0
      %v4369 = vadd.f32 0.0, %v4368
      %4370 = vmatmul.bf16.gmra.mxu0 %v4211
      %v4371 = vpop.f32.mrf.mxu0
      %v4372 = vadd.f32 0.0, %v4371
      %v4373 = vpop.f32.mrf.mxu0
      %v4374 = vadd.f32 0.0, %v4373
      %4375 = vmatmul.bf16.gmra.mxu0 %v4214
      %v4376 = vpop.f32.mrf.mxu0
      %v4377 = vadd.f32 0.0, %v4376
      %v4378 = vpop.f32.mrf.mxu0
      %v4379 = vadd.f32 0.0, %v4378
      %4380 = vmatmul.bf16.gmra.mxu0 %v4217
      %v4381 = vpop.f32.mrf.mxu0
      %v4382 = vadd.f32 0.0, %v4381
      %v4383 = vpop.f32.mrf.mxu0
      %v4384 = vadd.f32 0.0, %v4383
      %4385 = vmatmul.bf16.gmra.mxu0 %v4220
      %v4386 = vpop.f32.mrf.mxu0
      %v4387 = vadd.f32 0.0, %v4386
      %v4388 = vpop.f32.mrf.mxu0
      %v4389 = vadd.f32 0.0, %v4388
      %4390 = vmatmul.bf16.gmra.mxu0 %v4223
      %v4391 = vpop.f32.mrf.mxu0
      %v4392 = vadd.f32 0.0, %v4391
      %v4393 = vpop.f32.mrf.mxu0
      %v4394 = vadd.f32 0.0, %v4393
      %4395 = vmatmul.bf16.gmra.mxu0 %v4226
      %v4396 = vpop.f32.mrf.mxu0
      %v4397 = vadd.f32 0.0, %v4396
      %v4398 = vpop.f32.mrf.mxu0
      %v4399 = vadd.f32 0.0, %v4398
      %4400 = vmatmul.bf16.gmra.mxu0 %v4229
      %v4401 = vpop.f32.mrf.mxu0
      %v4402 = vadd.f32 0.0, %v4401
      %v4403 = vpop.f32.mrf.mxu0
      %v4404 = vadd.f32 0.0, %v4403
      %4405 = vmatmul.bf16.gmra.mxu0 %v4232
      %v4406 = vpop.f32.mrf.mxu0
      %v4407 = vadd.f32 0.0, %v4406
      %v4408 = vpop.f32.mrf.mxu0
      %v4409 = vadd.f32 0.0, %v4408
      %4410 = vmatmul.bf16.gmra.mxu0 %v4235
      %v4411 = vpop.f32.mrf.mxu0
      %v4412 = vadd.f32 0.0, %v4411
      %v4413 = vpop.f32.mrf.mxu0
      %v4414 = vadd.f32 0.0, %v4413
      %4415 = vmatmul.bf16.gmra.mxu0 %v4238
      %v4416 = vpop.f32.mrf.mxu0
      %v4417 = vadd.f32 0.0, %v4416
      %v4418 = vpop.f32.mrf.mxu0
      %v4419 = vadd.f32 0.0, %v4418
      %4420 = vmatmul.bf16.gmra.mxu0 %v4241
      %v4421 = vpop.f32.mrf.mxu0
      %v4422 = vadd.f32 0.0, %v4421
      %v4423 = vpop.f32.mrf.mxu0
      %v4424 = vadd.f32 0.0, %v4423
      %4425 = vmatmul.bf16.gmra.mxu0 %v4244
      %v4426 = vpop.f32.mrf.mxu0
      %v4427 = vadd.f32 0.0, %v4426
      %v4428 = vpop.f32.mrf.mxu0
      %v4429 = vadd.f32 0.0, %v4428
      %4430 = vmatmul.bf16.gmra.mxu0 %v4247
      %v4431 = vpop.f32.mrf.mxu0
      %v4432 = vadd.f32 0.0, %v4431
      %v4433 = vpop.f32.mrf.mxu0
      %v4434 = vadd.f32 0.0, %v4433
      %4435 = vmatmul.bf16.gmra.mxu0 %v4250
      %v4436 = vpop.f32.mrf.mxu0
      %v4437 = vadd.f32 0.0, %v4436
      %v4438 = vpop.f32.mrf.mxu0
      %v4439 = vadd.f32 0.0, %v4438
      %4440 = vdwg.mxu0
      %v4441 = vadd.f32 %v3947, %v4262
      %v4442 = vadd.f32 %v3948, %v4264
      %v4443 = vadd.f32 %v3949, %v4267
      %v4444 = vadd.f32 %v3950, %v4269
      %v4445 = vadd.f32 %v3951, %v4272
      %v4446 = vadd.f32 %v3952, %v4274
      %v4447 = vadd.f32 %v3953, %v4277
      %v4448 = vadd.f32 %v3954, %v4279
      %v4449 = vadd.f32 %v3955, %v4282
      %v4450 = vadd.f32 %v3956, %v4284
      %v4451 = vadd.f32 %v3957, %v4287
      %v4452 = vadd.f32 %v3958, %v4289
      %v4453 = vadd.f32 %v3959, %v4292
      %v4454 = vadd.f32 %v3960, %v4294
      %v4455 = vadd.f32 %v3961, %v4297
      %v4456 = vadd.f32 %v3962, %v4299
      %v4457 = vadd.f32 %v3963, %v4302
      %v4458 = vadd.f32 %v3964, %v4304
      %v4459 = vadd.f32 %v3965, %v4307
      %v4460 = vadd.f32 %v3966, %v4309
      %v4461 = vadd.f32 %v3967, %v4312
      %v4462 = vadd.f32 %v3968, %v4314
      %v4463 = vadd.f32 %v3969, %v4317
      %v4464 = vadd.f32 %v3970, %v4319
      %v4465 = vadd.f32 %v3971, %v4322
      %v4466 = vadd.f32 %v3972, %v4324
      %v4467 = vadd.f32 %v3973, %v4327
      %v4468 = vadd.f32 %v3974, %v4329
      %v4469 = vadd.f32 %v3975, %v4332
      %v4470 = vadd.f32 %v3976, %v4334
      %v4471 = vadd.f32 %v3977, %v4337
      %v4472 = vadd.f32 %v3978, %v4339
      %v4473 = vadd.f32 %v3979, %v4342
      %v4474 = vadd.f32 %v3980, %v4344
      %v4475 = vadd.f32 %v3981, %v4347
      %v4476 = vadd.f32 %v3982, %v4349
      %v4477 = vadd.f32 %v3983, %v4352
      %v4478 = vadd.f32 %v3984, %v4354
      %v4479 = vadd.f32 %v3985, %v4357
      %v4480 = vadd.f32 %v3986, %v4359
      %v4481 = vadd.f32 %v3987, %v4362
      %v4482 = vadd.f32 %v3988, %v4364
      %v4483 = vadd.f32 %v3989, %v4367
      %v4484 = vadd.f32 %v3990, %v4369
      %v4485 = vadd.f32 %v3991, %v4372
      %v4486 = vadd.f32 %v3992, %v4374
      %v4487 = vadd.f32 %v3993, %v4377
      %v4488 = vadd.f32 %v3994, %v4379
      %v4489 = vadd.f32 %v3995, %v4382
      %v4490 = vadd.f32 %v3996, %v4384
      %v4491 = vadd.f32 %v3997, %v4387
      %v4492 = vadd.f32 %v3998, %v4389
      %v4493 = vadd.f32 %v3999, %v4392
      %v4494 = vadd.f32 %v4000, %v4394
      %v4495 = vadd.f32 %v4001, %v4397
      %v4496 = vadd.f32 %v4002, %v4399
      %v4497 = vadd.f32 %v4003, %v4402
      %v4498 = vadd.f32 %v4004, %v4404
      %v4499 = vadd.f32 %v4005, %v4407
      %v4500 = vadd.f32 %v4006, %v4409
      %v4501 = vadd.f32 %v4007, %v4412
      %v4502 = vadd.f32 %v4008, %v4414
      %v4503 = vadd.f32 %v4009, %v4417
      %v4504 = vadd.f32 %v4010, %v4419
      %v4505 = vadd.f32 %v4011, %v4422
      %v4506 = vadd.f32 %v4012, %v4424
      %v4507 = vadd.f32 %v4013, %v4427
      %v4508 = vadd.f32 %v4014, %v4429
      %v4509 = vadd.f32 %v4015, %v4432
      %v4510 = vadd.f32 %v4016, %v4434
      %v4511 = vadd.f32 %v4017, %v4437
      %v4512 = vadd.f32 %v4018, %v4439
      %v4513 = vld [vmem:[%s424] sm:$0xff]
      %v4514 = vld [vmem:[%s424 + $0x8] sm:$0xff]
      %v4515 = vld [vmem:[%s424 + $0x10] sm:$0xff]
      %v4516 = vld [vmem:[%s424 + $0x20] sm:$0xff]
      %v4517 = vld [vmem:[%s424 + $0x28] sm:$0xff]
      %v4518 = vld [vmem:[%s424 + $0x30] sm:$0xff]
      %v4519 = vld [vmem:[%s424 + $0x40] sm:$0xff]
      %v4520 = vld [vmem:[%s424 + $0x48] sm:$0xff]
      %v4521 = vld [vmem:[%s424 + $0x50] sm:$0xff]
      %v4522 = vld [vmem:[%s424 + $0x60] sm:$0xff]
      %v4523 = vld [vmem:[%s424 + $0x68] sm:$0xff]
      %v4524 = vld [vmem:[%s424 + $0x70] sm:$0xff]
      %v4525 = vld [vmem:[%s424 + $0x80] sm:$0xff]
      %v4526 = vld [vmem:[%s424 + $0x88] sm:$0xff]
      %v4527 = vld [vmem:[%s424 + $0x90] sm:$0xff]
      %v4528 = vld [vmem:[%s424 + $0xa0] sm:$0xff]
      %v4529 = vld [vmem:[%s424 + $0xa8] sm:$0xff]
      %v4530 = vld [vmem:[%s424 + $0xb0] sm:$0xff]
      %v4531 = vld [vmem:[%s424 + $0xc0] sm:$0xff]
      %v4532 = vld [vmem:[%s424 + $0xc8] sm:$0xff]
      %v4533 = vld [vmem:[%s424 + $0xd0] sm:$0xff]
      %v4534 = vld [vmem:[%s424 + $0xe0] sm:$0xff]
      %v4535 = vld [vmem:[%s424 + $0xe8] sm:$0xff]
      %v4536 = vld [vmem:[%s424 + $0xf0] sm:$0xff]
      %v4537 = vld [vmem:[%s424 + $0x100] sm:$0xff]
      %v4538 = vld [vmem:[%s424 + $0x108] sm:$0xff]
      %v4539 = vld [vmem:[%s424 + $0x110] sm:$0xff]
      %v4540 = vld [vmem:[%s424 + $0x120] sm:$0xff]
      %v4541 = vld [vmem:[%s424 + $0x128] sm:$0xff]
      %v4542 = vld [vmem:[%s424 + $0x130] sm:$0xff]
      %v4543 = vld [vmem:[%s424 + $0x140] sm:$0xff]
      %v4544 = vld [vmem:[%s424 + $0x148] sm:$0xff]
      %v4545 = vld [vmem:[%s424 + $0x150] sm:$0xff]
      %v4546 = vld [vmem:[%s424 + $0x160] sm:$0xff]
      %v4547 = vld [vmem:[%s424 + $0x168] sm:$0xff]
      %v4548 = vld [vmem:[%s424 + $0x170] sm:$0xff]
      %v4549 = vld [vmem:[%s424 + $0x180] sm:$0xff]
      %v4550 = vld [vmem:[%s424 + $0x188] sm:$0xff]
      %v4551 = vld [vmem:[%s424 + $0x190] sm:$0xff]
      %v4552 = vld [vmem:[%s424 + $0x1a0] sm:$0xff]
      %v4553 = vld [vmem:[%s424 + $0x1a8] sm:$0xff]
      %v4554 = vld [vmem:[%s424 + $0x1b0] sm:$0xff]
      %v4555 = vld [vmem:[%s424 + $0x1c0] sm:$0xff]
      %v4556 = vld [vmem:[%s424 + $0x1c8] sm:$0xff]
      %v4557 = vld [vmem:[%s424 + $0x1d0] sm:$0xff]
      %v4558 = vld [vmem:[%s424 + $0x1e0] sm:$0xff]
      %v4559 = vld [vmem:[%s424 + $0x1e8] sm:$0xff]
      %v4560 = vld [vmem:[%s424 + $0x1f0] sm:$0xff]
      %v4561 = vld [vmem:[%s424 + $0x200] sm:$0xff]
      %v4562 = vld [vmem:[%s424 + $0x208] sm:$0xff]
      %v4563 = vld [vmem:[%s424 + $0x210] sm:$0xff]
      %v4564 = vld [vmem:[%s424 + $0x220] sm:$0xff]
      %v4565 = vld [vmem:[%s424 + $0x228] sm:$0xff]
      %v4566 = vld [vmem:[%s424 + $0x230] sm:$0xff]
      %v4567 = vld [vmem:[%s424 + $0x240] sm:$0xff]
      %v4568 = vld [vmem:[%s424 + $0x248] sm:$0xff]
      %v4569 = vld [vmem:[%s424 + $0x250] sm:$0xff]
      %v4570 = vld [vmem:[%s424 + $0x260] sm:$0xff]
      %v4571 = vld [vmem:[%s424 + $0x268] sm:$0xff]
      %v4572 = vld [vmem:[%s424 + $0x270] sm:$0xff]
      %v4573 = vld [vmem:[%s424 + $0x280] sm:$0xff]
      %v4574 = vld [vmem:[%s424 + $0x288] sm:$0xff]
      %v4575 = vld [vmem:[%s424 + $0x290] sm:$0xff]
      %v4576 = vld [vmem:[%s424 + $0x2a0] sm:$0xff]
      %v4577 = vld [vmem:[%s424 + $0x2a8] sm:$0xff]
      %v4578 = vld [vmem:[%s424 + $0x2b0] sm:$0xff]
      %v4579 = vld [vmem:[%s424 + $0x2c0] sm:$0xff]
      %v4580 = vld [vmem:[%s424 + $0x2c8] sm:$0xff]
      %v4581 = vld [vmem:[%s424 + $0x2d0] sm:$0xff]
      %v4582 = vld [vmem:[%s424 + $0x2e0] sm:$0xff]
      %v4583 = vld [vmem:[%s424 + $0x2e8] sm:$0xff]
      %v4584 = vld [vmem:[%s424 + $0x2f0] sm:$0xff]
      %v4585 = vpack.c.bf16 %v4514, %v4513
      %v4586 = vpack.c.bf16 %v4516, %v4515
      %v4587 = vpack.c.bf16 %v4518, %v4517
      %v4588 = vpack.c.bf16 %v4520, %v4519
      %v4589 = vpack.c.bf16 %v4522, %v4521
      %v4590 = vpack.c.bf16 %v4524, %v4523
      %v4591 = vpack.c.bf16 %v4526, %v4525
      %v4592 = vpack.c.bf16 %v4528, %v4527
      %v4593 = vpack.c.bf16 %v4530, %v4529
      %v4594 = vpack.c.bf16 %v4532, %v4531
      %v4595 = vpack.c.bf16 %v4534, %v4533
      %v4596 = vpack.c.bf16 %v4536, %v4535
      %v4597 = vpack.c.bf16 %v4538, %v4537
      %v4598 = vpack.c.bf16 %v4540, %v4539
      %v4599 = vpack.c.bf16 %v4542, %v4541
      %v4600 = vpack.c.bf16 %v4544, %v4543
      %v4601 = vpack.c.bf16 %v4546, %v4545
      %v4602 = vpack.c.bf16 %v4548, %v4547
      %v4603 = vpack.c.bf16 %v4550, %v4549
      %v4604 = vpack.c.bf16 %v4552, %v4551
      %v4605 = vpack.c.bf16 %v4554, %v4553
      %v4606 = vpack.c.bf16 %v4556, %v4555
      %v4607 = vpack.c.bf16 %v4558, %v4557
      %v4608 = vpack.c.bf16 %v4560, %v4559
      %v4609 = vpack.c.bf16 %v4562, %v4561
      %v4610 = vpack.c.bf16 %v4564, %v4563
      %v4611 = vpack.c.bf16 %v4566, %v4565
      %v4612 = vpack.c.bf16 %v4568, %v4567
      %v4613 = vpack.c.bf16 %v4570, %v4569
      %v4614 = vpack.c.bf16 %v4572, %v4571
      %v4615 = vpack.c.bf16 %v4574, %v4573
      %v4616 = vpack.c.bf16 %v4576, %v4575
      %v4617 = vpack.c.bf16 %v4578, %v4577
      %v4618 = vpack.c.bf16 %v4580, %v4579
      %v4619 = vpack.c.bf16 %v4582, %v4581
      %v4620 = vpack.c.bf16 %v4584, %v4583
      %s4621 = scalar_lea.vmem %s3, 96
      %v4622 = vld [vmem:[%s4621] sm:$0xf]
      %v4623 = vld [vmem:[%s4621 + $0x4] sm:$0xf]
      %v4624 = vld [vmem:[%s4621 + $0x8] sm:$0xf]
      %v4625 = vld [vmem:[%s4621 + $0xc] sm:$0xf]
      %v4630 = vunpack.c.l.b16 %v4622
      %v4631 = vunpack.c.l.b16 %v4623
      %v4632 = vunpack.c.l.b16 %v4624
      %v4633 = vunpack.c.l.b16 %v4625
      %v4634 = vpack.c.b16 %v4631, %v4630
      %v4635 = vpack.c.b16 %v4633, %v4632
      %v4639 = vsel %vm313, %v4585, 0
      %v4642 = vsel %vm313, %v4586, 0
      %v4645 = vsel %vm313, %v4587, 0
      %v4648 = vsel %vm313, %v4588, 0
      %v4651 = vsel %vm313, %v4589, 0
      %v4654 = vsel %vm313, %v4590, 0
      %v4657 = vsel %vm313, %v4591, 0
      %v4660 = vsel %vm313, %v4592, 0
      %v4663 = vsel %vm313, %v4593, 0
      %v4666 = vsel %vm313, %v4594, 0
      %v4669 = vsel %vm313, %v4595, 0
      %v4672 = vsel %vm313, %v4596, 0
      %v4675 = vsel %vm313, %v4597, 0
      %v4678 = vsel %vm313, %v4598, 0
      %v4681 = vsel %vm313, %v4599, 0
      %v4684 = vsel %vm313, %v4600, 0
      %v4687 = vsel %vm313, %v4601, 0
      %v4690 = vsel %vm313, %v4602, 0
      %v4693 = vsel %vm313, %v4603, 0
      %v4696 = vsel %vm313, %v4604, 0
      %v4699 = vsel %vm313, %v4605, 0
      %v4702 = vsel %vm313, %v4606, 0
      %v4705 = vsel %vm313, %v4607, 0
      %v4708 = vsel %vm313, %v4608, 0
      %v4711 = vsel %vm313, %v4609, 0
      %v4714 = vsel %vm313, %v4610, 0
      %v4717 = vsel %vm313, %v4611, 0
      %v4720 = vsel %vm313, %v4612, 0
      %v4723 = vsel %vm313, %v4613, 0
      %v4726 = vsel %vm313, %v4614, 0
      %v4729 = vsel %vm313, %v4615, 0
      %v4732 = vsel %vm313, %v4616, 0
      %v4735 = vsel %vm313, %v4617, 0
      %v4738 = vsel %vm313, %v4618, 0
      %v4741 = vsel %vm313, %v4619, 0
      %v4744 = vsel %vm313, %v4620, 0
      %4746 = vmatpush.bf16.msra.mxu0 0
      %4747 = vmatpush.bf16.msra.mxu0 0
      %4748 = vmatpush.bf16.msra.mxu0 0
      %4749 = vmatpush.bf16.msra.mxu0 0
      %4750 = vmatpush.bf16.msra.mxu0 0
      %4751 = vmatpush.bf16.msra.mxu0 0
      %4752 = vmatpush.bf16.msra.mxu0 %v4635
      %4753 = vmatpush.bf16.msra.mxu0 %v4634
      %4754 = vmatmul.bf16.gmra.mxu0 %v4639
      %v4755 = vpop.f32.mrf.mxu0
      %v4756 = vadd.f32 0.0, %v4755
      %v4757 = vpop.f32.mrf.mxu0
      %v4758 = vadd.f32 0.0, %v4757
      %4759 = vmatmul.bf16.gmra.mxu0 %v4642
      %v4760 = vpop.f32.mrf.mxu0
      %v4761 = vadd.f32 0.0, %v4760
      %v4762 = vpop.f32.mrf.mxu0
      %v4763 = vadd.f32 0.0, %v4762
      %4764 = vmatmul.bf16.gmra.mxu0 %v4645
      %v4765 = vpop.f32.mrf.mxu0
      %v4766 = vadd.f32 0.0, %v4765
      %v4767 = vpop.f32.mrf.mxu0
      %v4768 = vadd.f32 0.0, %v4767
      %4769 = vmatmul.bf16.gmra.mxu0 %v4648
      %v4770 = vpop.f32.mrf.mxu0
      %v4771 = vadd.f32 0.0, %v4770
      %v4772 = vpop.f32.mrf.mxu0
      %v4773 = vadd.f32 0.0, %v4772
      %4774 = vmatmul.bf16.gmra.mxu0 %v4651
      %v4775 = vpop.f32.mrf.mxu0
      %v4776 = vadd.f32 0.0, %v4775
      %v4777 = vpop.f32.mrf.mxu0
      %v4778 = vadd.f32 0.0, %v4777
      %4779 = vmatmul.bf16.gmra.mxu0 %v4654
      %v4780 = vpop.f32.mrf.mxu0
      %v4781 = vadd.f32 0.0, %v4780
      %v4782 = vpop.f32.mrf.mxu0
      %v4783 = vadd.f32 0.0, %v4782
      %4784 = vmatmul.bf16.gmra.mxu0 %v4657
      %v4785 = vpop.f32.mrf.mxu0
      %v4786 = vadd.f32 0.0, %v4785
      %v4787 = vpop.f32.mrf.mxu0
      %v4788 = vadd.f32 0.0, %v4787
      %4789 = vmatmul.bf16.gmra.mxu0 %v4660
      %v4790 = vpop.f32.mrf.mxu0
      %v4791 = vadd.f32 0.0, %v4790
      %v4792 = vpop.f32.mrf.mxu0
      %v4793 = vadd.f32 0.0, %v4792
      %4794 = vmatmul.bf16.gmra.mxu0 %v4663
      %v4795 = vpop.f32.mrf.mxu0
      %v4796 = vadd.f32 0.0, %v4795
      %v4797 = vpop.f32.mrf.mxu0
      %v4798 = vadd.f32 0.0, %v4797
      %4799 = vmatmul.bf16.gmra.mxu0 %v4666
      %v4800 = vpop.f32.mrf.mxu0
      %v4801 = vadd.f32 0.0, %v4800
      %v4802 = vpop.f32.mrf.mxu0
      %v4803 = vadd.f32 0.0, %v4802
      %4804 = vmatmul.bf16.gmra.mxu0 %v4669
      %v4805 = vpop.f32.mrf.mxu0
      %v4806 = vadd.f32 0.0, %v4805
      %v4807 = vpop.f32.mrf.mxu0
      %v4808 = vadd.f32 0.0, %v4807
      %4809 = vmatmul.bf16.gmra.mxu0 %v4672
      %v4810 = vpop.f32.mrf.mxu0
      %v4811 = vadd.f32 0.0, %v4810
      %v4812 = vpop.f32.mrf.mxu0
      %v4813 = vadd.f32 0.0, %v4812
      %4814 = vmatmul.bf16.gmra.mxu0 %v4675
      %v4815 = vpop.f32.mrf.mxu0
      %v4816 = vadd.f32 0.0, %v4815
      %v4817 = vpop.f32.mrf.mxu0
      %v4818 = vadd.f32 0.0, %v4817
      %4819 = vmatmul.bf16.gmra.mxu0 %v4678
      %v4820 = vpop.f32.mrf.mxu0
      %v4821 = vadd.f32 0.0, %v4820
      %v4822 = vpop.f32.mrf.mxu0
      %v4823 = vadd.f32 0.0, %v4822
      %4824 = vmatmul.bf16.gmra.mxu0 %v4681
      %v4825 = vpop.f32.mrf.mxu0
      %v4826 = vadd.f32 0.0, %v4825
      %v4827 = vpop.f32.mrf.mxu0
      %v4828 = vadd.f32 0.0, %v4827
      %4829 = vmatmul.bf16.gmra.mxu0 %v4684
      %v4830 = vpop.f32.mrf.mxu0
      %v4831 = vadd.f32 0.0, %v4830
      %v4832 = vpop.f32.mrf.mxu0
      %v4833 = vadd.f32 0.0, %v4832
      %4834 = vmatmul.bf16.gmra.mxu0 %v4687
      %v4835 = vpop.f32.mrf.mxu0
      %v4836 = vadd.f32 0.0, %v4835
      %v4837 = vpop.f32.mrf.mxu0
      %v4838 = vadd.f32 0.0, %v4837
      %4839 = vmatmul.bf16.gmra.mxu0 %v4690
      %v4840 = vpop.f32.mrf.mxu0
      %v4841 = vadd.f32 0.0, %v4840
      %v4842 = vpop.f32.mrf.mxu0
      %v4843 = vadd.f32 0.0, %v4842
      %4844 = vmatmul.bf16.gmra.mxu0 %v4693
      %v4845 = vpop.f32.mrf.mxu0
      %v4846 = vadd.f32 0.0, %v4845
      %v4847 = vpop.f32.mrf.mxu0
      %v4848 = vadd.f32 0.0, %v4847
      %4849 = vmatmul.bf16.gmra.mxu0 %v4696
      %v4850 = vpop.f32.mrf.mxu0
      %v4851 = vadd.f32 0.0, %v4850
      %v4852 = vpop.f32.mrf.mxu0
      %v4853 = vadd.f32 0.0, %v4852
      %4854 = vmatmul.bf16.gmra.mxu0 %v4699
      %v4855 = vpop.f32.mrf.mxu0
      %v4856 = vadd.f32 0.0, %v4855
      %v4857 = vpop.f32.mrf.mxu0
      %v4858 = vadd.f32 0.0, %v4857
      %4859 = vmatmul.bf16.gmra.mxu0 %v4702
      %v4860 = vpop.f32.mrf.mxu0
      %v4861 = vadd.f32 0.0, %v4860
      %v4862 = vpop.f32.mrf.mxu0
      %v4863 = vadd.f32 0.0, %v4862
      %4864 = vmatmul.bf16.gmra.mxu0 %v4705
      %v4865 = vpop.f32.mrf.mxu0
      %v4866 = vadd.f32 0.0, %v4865
      %v4867 = vpop.f32.mrf.mxu0
      %v4868 = vadd.f32 0.0, %v4867
      %4869 = vmatmul.bf16.gmra.mxu0 %v4708
      %v4870 = vpop.f32.mrf.mxu0
      %v4871 = vadd.f32 0.0, %v4870
      %v4872 = vpop.f32.mrf.mxu0
      %v4873 = vadd.f32 0.0, %v4872
      %4874 = vmatmul.bf16.gmra.mxu0 %v4711
      %v4875 = vpop.f32.mrf.mxu0
      %v4876 = vadd.f32 0.0, %v4875
      %v4877 = vpop.f32.mrf.mxu0
      %v4878 = vadd.f32 0.0, %v4877
      %4879 = vmatmul.bf16.gmra.mxu0 %v4714
      %v4880 = vpop.f32.mrf.mxu0
      %v4881 = vadd.f32 0.0, %v4880
      %v4882 = vpop.f32.mrf.mxu0
      %v4883 = vadd.f32 0.0, %v4882
      %4884 = vmatmul.bf16.gmra.mxu0 %v4717
      %v4885 = vpop.f32.mrf.mxu0
      %v4886 = vadd.f32 0.0, %v4885
      %v4887 = vpop.f32.mrf.mxu0
      %v4888 = vadd.f32 0.0, %v4887
      %4889 = vmatmul.bf16.gmra.mxu0 %v4720
      %v4890 = vpop.f32.mrf.mxu0
      %v4891 = vadd.f32 0.0, %v4890
      %v4892 = vpop.f32.mrf.mxu0
      %v4893 = vadd.f32 0.0, %v4892
      %4894 = vmatmul.bf16.gmra.mxu0 %v4723
      %v4895 = vpop.f32.mrf.mxu0
      %v4896 = vadd.f32 0.0, %v4895
      %v4897 = vpop.f32.mrf.mxu0
      %v4898 = vadd.f32 0.0, %v4897
      %4899 = vmatmul.bf16.gmra.mxu0 %v4726
      %v4900 = vpop.f32.mrf.mxu0
      %v4901 = vadd.f32 0.0, %v4900
      %v4902 = vpop.f32.mrf.mxu0
      %v4903 = vadd.f32 0.0, %v4902
      %4904 = vmatmul.bf16.gmra.mxu0 %v4729
      %v4905 = vpop.f32.mrf.mxu0
      %v4906 = vadd.f32 0.0, %v4905
      %v4907 = vpop.f32.mrf.mxu0
      %v4908 = vadd.f32 0.0, %v4907
      %4909 = vmatmul.bf16.gmra.mxu0 %v4732
      %v4910 = vpop.f32.mrf.mxu0
      %v4911 = vadd.f32 0.0, %v4910
      %v4912 = vpop.f32.mrf.mxu0
      %v4913 = vadd.f32 0.0, %v4912
      %4914 = vmatmul.bf16.gmra.mxu0 %v4735
      %v4915 = vpop.f32.mrf.mxu0
      %v4916 = vadd.f32 0.0, %v4915
      %v4917 = vpop.f32.mrf.mxu0
      %v4918 = vadd.f32 0.0, %v4917
      %4919 = vmatmul.bf16.gmra.mxu0 %v4738
      %v4920 = vpop.f32.mrf.mxu0
      %v4921 = vadd.f32 0.0, %v4920
      %v4922 = vpop.f32.mrf.mxu0
      %v4923 = vadd.f32 0.0, %v4922
      %4924 = vmatmul.bf16.gmra.mxu0 %v4741
      %v4925 = vpop.f32.mrf.mxu0
      %v4926 = vadd.f32 0.0, %v4925
      %v4927 = vpop.f32.mrf.mxu0
      %v4928 = vadd.f32 0.0, %v4927
      %4929 = vmatmul.bf16.gmra.mxu0 %v4744
      %v4930 = vpop.f32.mrf.mxu0
      %v4931 = vadd.f32 0.0, %v4930
      %v4932 = vpop.f32.mrf.mxu0
      %v4933 = vadd.f32 0.0, %v4932
      %4934 = vdwg.mxu0
      %v4935 = vadd.f32 %v4441, %v4756
      %v4936 = vadd.f32 %v4442, %v4758
      %v4937 = vadd.f32 %v4443, %v4761
      %v4938 = vadd.f32 %v4444, %v4763
      %v4939 = vadd.f32 %v4445, %v4766
      %v4940 = vadd.f32 %v4446, %v4768
      %v4941 = vadd.f32 %v4447, %v4771
      %v4942 = vadd.f32 %v4448, %v4773
      %v4943 = vadd.f32 %v4449, %v4776
      %v4944 = vadd.f32 %v4450, %v4778
      %v4945 = vadd.f32 %v4451, %v4781
      %v4946 = vadd.f32 %v4452, %v4783
      %v4947 = vadd.f32 %v4453, %v4786
      %v4948 = vadd.f32 %v4454, %v4788
      %v4949 = vadd.f32 %v4455, %v4791
      %v4950 = vadd.f32 %v4456, %v4793
      %v4951 = vadd.f32 %v4457, %v4796
      %v4952 = vadd.f32 %v4458, %v4798
      %v4953 = vadd.f32 %v4459, %v4801
      %v4954 = vadd.f32 %v4460, %v4803
      %v4955 = vadd.f32 %v4461, %v4806
      %v4956 = vadd.f32 %v4462, %v4808
      %v4957 = vadd.f32 %v4463, %v4811
      %v4958 = vadd.f32 %v4464, %v4813
      %v4959 = vadd.f32 %v4465, %v4816
      %v4960 = vadd.f32 %v4466, %v4818
      %v4961 = vadd.f32 %v4467, %v4821
      %v4962 = vadd.f32 %v4468, %v4823
      %v4963 = vadd.f32 %v4469, %v4826
      %v4964 = vadd.f32 %v4470, %v4828
      %v4965 = vadd.f32 %v4471, %v4831
      %v4966 = vadd.f32 %v4472, %v4833
      %v4967 = vadd.f32 %v4473, %v4836
      %v4968 = vadd.f32 %v4474, %v4838
      %v4969 = vadd.f32 %v4475, %v4841
      %v4970 = vadd.f32 %v4476, %v4843
      %v4971 = vadd.f32 %v4477, %v4846
      %v4972 = vadd.f32 %v4478, %v4848
      %v4973 = vadd.f32 %v4479, %v4851
      %v4974 = vadd.f32 %v4480, %v4853
      %v4975 = vadd.f32 %v4481, %v4856
      %v4976 = vadd.f32 %v4482, %v4858
      %v4977 = vadd.f32 %v4483, %v4861
      %v4978 = vadd.f32 %v4484, %v4863
      %v4979 = vadd.f32 %v4485, %v4866
      %v4980 = vadd.f32 %v4486, %v4868
      %v4981 = vadd.f32 %v4487, %v4871
      %v4982 = vadd.f32 %v4488, %v4873
      %v4983 = vadd.f32 %v4489, %v4876
      %v4984 = vadd.f32 %v4490, %v4878
      %v4985 = vadd.f32 %v4491, %v4881
      %v4986 = vadd.f32 %v4492, %v4883
      %v4987 = vadd.f32 %v4493, %v4886
      %v4988 = vadd.f32 %v4494, %v4888
      %v4989 = vadd.f32 %v4495, %v4891
      %v4990 = vadd.f32 %v4496, %v4893
      %v4991 = vadd.f32 %v4497, %v4896
      %v4992 = vadd.f32 %v4498, %v4898
      %v4993 = vadd.f32 %v4499, %v4901
      %v4994 = vadd.f32 %v4500, %v4903
      %v4995 = vadd.f32 %v4501, %v4906
      %v4996 = vadd.f32 %v4502, %v4908
      %v4997 = vadd.f32 %v4503, %v4911
      %v4998 = vadd.f32 %v4504, %v4913
      %v4999 = vadd.f32 %v4505, %v4916
      %v5000 = vadd.f32 %v4506, %v4918
      %v5001 = vadd.f32 %v4507, %v4921
      %v5002 = vadd.f32 %v4508, %v4923
      %v5003 = vadd.f32 %v4509, %v4926
      %v5004 = vadd.f32 %v4510, %v4928
      %v5005 = vadd.f32 %v4511, %v4931
      %v5006 = vadd.f32 %v4512, %v4933
      %v5007 = vld [vmem:[%s424 + $0x1] sm:$0xff]
      %v5008 = vld [vmem:[%s424 + $0x9] sm:$0xff]
      %v5009 = vld [vmem:[%s424 + $0x11] sm:$0xff]
      %v5010 = vld [vmem:[%s424 + $0x21] sm:$0xff]
      %v5011 = vld [vmem:[%s424 + $0x29] sm:$0xff]
      %v5012 = vld [vmem:[%s424 + $0x31] sm:$0xff]
      %v5013 = vld [vmem:[%s424 + $0x41] sm:$0xff]
      %v5014 = vld [vmem:[%s424 + $0x49] sm:$0xff]
      %v5015 = vld [vmem:[%s424 + $0x51] sm:$0xff]
      %v5016 = vld [vmem:[%s424 + $0x61] sm:$0xff]
      %v5017 = vld [vmem:[%s424 + $0x69] sm:$0xff]
      %v5018 = vld [vmem:[%s424 + $0x71] sm:$0xff]
      %v5019 = vld [vmem:[%s424 + $0x81] sm:$0xff]
      %v5020 = vld [vmem:[%s424 + $0x89] sm:$0xff]
      %v5021 = vld [vmem:[%s424 + $0x91] sm:$0xff]
      %v5022 = vld [vmem:[%s424 + $0xa1] sm:$0xff]
      %v5023 = vld [vmem:[%s424 + $0xa9] sm:$0xff]
      %v5024 = vld [vmem:[%s424 + $0xb1] sm:$0xff]
      %v5025 = vld [vmem:[%s424 + $0xc1] sm:$0xff]
      %v5026 = vld [vmem:[%s424 + $0xc9] sm:$0xff]
      %v5027 = vld [vmem:[%s424 + $0xd1] sm:$0xff]
      %v5028 = vld [vmem:[%s424 + $0xe1] sm:$0xff]
      %v5029 = vld [vmem:[%s424 + $0xe9] sm:$0xff]
      %v5030 = vld [vmem:[%s424 + $0xf1] sm:$0xff]
      %v5031 = vld [vmem:[%s424 + $0x101] sm:$0xff]
      %v5032 = vld [vmem:[%s424 + $0x109] sm:$0xff]
      %v5033 = vld [vmem:[%s424 + $0x111] sm:$0xff]
      %v5034 = vld [vmem:[%s424 + $0x121] sm:$0xff]
      %v5035 = vld [vmem:[%s424 + $0x129] sm:$0xff]
      %v5036 = vld [vmem:[%s424 + $0x131] sm:$0xff]
      %v5037 = vld [vmem:[%s424 + $0x141] sm:$0xff]
      %v5038 = vld [vmem:[%s424 + $0x149] sm:$0xff]
      %v5039 = vld [vmem:[%s424 + $0x151] sm:$0xff]
      %v5040 = vld [vmem:[%s424 + $0x161] sm:$0xff]
      %v5041 = vld [vmem:[%s424 + $0x169] sm:$0xff]
      %v5042 = vld [vmem:[%s424 + $0x171] sm:$0xff]
      %v5043 = vld [vmem:[%s424 + $0x181] sm:$0xff]
      %v5044 = vld [vmem:[%s424 + $0x189] sm:$0xff]
      %v5045 = vld [vmem:[%s424 + $0x191] sm:$0xff]
      %v5046 = vld [vmem:[%s424 + $0x1a1] sm:$0xff]
      %v5047 = vld [vmem:[%s424 + $0x1a9] sm:$0xff]
      %v5048 = vld [vmem:[%s424 + $0x1b1] sm:$0xff]
      %v5049 = vld [vmem:[%s424 + $0x1c1] sm:$0xff]
      %v5050 = vld [vmem:[%s424 + $0x1c9] sm:$0xff]
      %v5051 = vld [vmem:[%s424 + $0x1d1] sm:$0xff]
      %v5052 = vld [vmem:[%s424 + $0x1e1] sm:$0xff]
      %v5053 = vld [vmem:[%s424 + $0x1e9] sm:$0xff]
      %v5054 = vld [vmem:[%s424 + $0x1f1] sm:$0xff]
      %v5055 = vld [vmem:[%s424 + $0x201] sm:$0xff]
      %v5056 = vld [vmem:[%s424 + $0x209] sm:$0xff]
      %v5057 = vld [vmem:[%s424 + $0x211] sm:$0xff]
      %v5058 = vld [vmem:[%s424 + $0x221] sm:$0xff]
      %v5059 = vld [vmem:[%s424 + $0x229] sm:$0xff]
      %v5060 = vld [vmem:[%s424 + $0x231] sm:$0xff]
      %v5061 = vld [vmem:[%s424 + $0x241] sm:$0xff]
      %v5062 = vld [vmem:[%s424 + $0x249] sm:$0xff]
      %v5063 = vld [vmem:[%s424 + $0x251] sm:$0xff]
      %v5064 = vld [vmem:[%s424 + $0x261] sm:$0xff]
      %v5065 = vld [vmem:[%s424 + $0x269] sm:$0xff]
      %v5066 = vld [vmem:[%s424 + $0x271] sm:$0xff]
      %v5067 = vld [vmem:[%s424 + $0x281] sm:$0xff]
      %v5068 = vld [vmem:[%s424 + $0x289] sm:$0xff]
      %v5069 = vld [vmem:[%s424 + $0x291] sm:$0xff]
      %v5070 = vld [vmem:[%s424 + $0x2a1] sm:$0xff]
      %v5071 = vld [vmem:[%s424 + $0x2a9] sm:$0xff]
      %v5072 = vld [vmem:[%s424 + $0x2b1] sm:$0xff]
      %v5073 = vld [vmem:[%s424 + $0x2c1] sm:$0xff]
      %v5074 = vld [vmem:[%s424 + $0x2c9] sm:$0xff]
      %v5075 = vld [vmem:[%s424 + $0x2d1] sm:$0xff]
      %v5076 = vld [vmem:[%s424 + $0x2e1] sm:$0xff]
      %v5077 = vld [vmem:[%s424 + $0x2e9] sm:$0xff]
      %v5078 = vld [vmem:[%s424 + $0x2f1] sm:$0xff]
      %v5079 = vpack.c.bf16 %v5008, %v5007
      %v5080 = vpack.c.bf16 %v5010, %v5009
      %v5081 = vpack.c.bf16 %v5012, %v5011
      %v5082 = vpack.c.bf16 %v5014, %v5013
      %v5083 = vpack.c.bf16 %v5016, %v5015
      %v5084 = vpack.c.bf16 %v5018, %v5017
      %v5085 = vpack.c.bf16 %v5020, %v5019
      %v5086 = vpack.c.bf16 %v5022, %v5021
      %v5087 = vpack.c.bf16 %v5024, %v5023
      %v5088 = vpack.c.bf16 %v5026, %v5025
      %v5089 = vpack.c.bf16 %v5028, %v5027
      %v5090 = vpack.c.bf16 %v5030, %v5029
      %v5091 = vpack.c.bf16 %v5032, %v5031
      %v5092 = vpack.c.bf16 %v5034, %v5033
      %v5093 = vpack.c.bf16 %v5036, %v5035
      %v5094 = vpack.c.bf16 %v5038, %v5037
      %v5095 = vpack.c.bf16 %v5040, %v5039
      %v5096 = vpack.c.bf16 %v5042, %v5041
      %v5097 = vpack.c.bf16 %v5044, %v5043
      %v5098 = vpack.c.bf16 %v5046, %v5045
      %v5099 = vpack.c.bf16 %v5048, %v5047
      %v5100 = vpack.c.bf16 %v5050, %v5049
      %v5101 = vpack.c.bf16 %v5052, %v5051
      %v5102 = vpack.c.bf16 %v5054, %v5053
      %v5103 = vpack.c.bf16 %v5056, %v5055
      %v5104 = vpack.c.bf16 %v5058, %v5057
      %v5105 = vpack.c.bf16 %v5060, %v5059
      %v5106 = vpack.c.bf16 %v5062, %v5061
      %v5107 = vpack.c.bf16 %v5064, %v5063
      %v5108 = vpack.c.bf16 %v5066, %v5065
      %v5109 = vpack.c.bf16 %v5068, %v5067
      %v5110 = vpack.c.bf16 %v5070, %v5069
      %v5111 = vpack.c.bf16 %v5072, %v5071
      %v5112 = vpack.c.bf16 %v5074, %v5073
      %v5113 = vpack.c.bf16 %v5076, %v5075
      %v5114 = vpack.c.bf16 %v5078, %v5077
      %s5115 = scalar_lea.vmem %s3, 112
      %v5116 = vld [vmem:[%s5115] sm:$0xf]
      %v5117 = vld [vmem:[%s5115 + $0x4] sm:$0xf]
      %v5118 = vld [vmem:[%s5115 + $0x8] sm:$0xf]
      %v5119 = vld [vmem:[%s5115 + $0xc] sm:$0xf]
      %v5124 = vunpack.c.l.b16 %v5116
      %v5125 = vunpack.c.l.b16 %v5117
      %v5126 = vunpack.c.l.b16 %v5118
      %v5127 = vunpack.c.l.b16 %v5119
      %v5128 = vpack.c.b16 %v5125, %v5124
      %v5129 = vpack.c.b16 %v5127, %v5126
      %v5133 = vsel %vm313, %v5079, 0
      %v5136 = vsel %vm313, %v5080, 0
      %v5139 = vsel %vm313, %v5081, 0
      %v5142 = vsel %vm313, %v5082, 0
      %v5145 = vsel %vm313, %v5083, 0
      %v5148 = vsel %vm313, %v5084, 0
      %v5151 = vsel %vm313, %v5085, 0
      %v5154 = vsel %vm313, %v5086, 0
      %v5157 = vsel %vm313, %v5087, 0
      %v5160 = vsel %vm313, %v5088, 0
      %v5163 = vsel %vm313, %v5089, 0
      %v5166 = vsel %vm313, %v5090, 0
      %v5169 = vsel %vm313, %v5091, 0
      %v5172 = vsel %vm313, %v5092, 0
      %v5175 = vsel %vm313, %v5093, 0
      %v5178 = vsel %vm313, %v5094, 0
      %v5181 = vsel %vm313, %v5095, 0
      %v5184 = vsel %vm313, %v5096, 0
      %v5187 = vsel %vm313, %v5097, 0
      %v5190 = vsel %vm313, %v5098, 0
      %v5193 = vsel %vm313, %v5099, 0
      %v5196 = vsel %vm313, %v5100, 0
      %v5199 = vsel %vm313, %v5101, 0
      %v5202 = vsel %vm313, %v5102, 0
      %v5205 = vsel %vm313, %v5103, 0
      %v5208 = vsel %vm313, %v5104, 0
      %v5211 = vsel %vm313, %v5105, 0
      %v5214 = vsel %vm313, %v5106, 0
      %v5217 = vsel %vm313, %v5107, 0
      %v5220 = vsel %vm313, %v5108, 0
      %v5223 = vsel %vm313, %v5109, 0
      %v5226 = vsel %vm313, %v5110, 0
      %v5229 = vsel %vm313, %v5111, 0
      %v5232 = vsel %vm313, %v5112, 0
      %v5235 = vsel %vm313, %v5113, 0
      %v5238 = vsel %vm313, %v5114, 0
      %5240 = vmatpush.bf16.msra.mxu0 0
      %5241 = vmatpush.bf16.msra.mxu0 0
      %5242 = vmatpush.bf16.msra.mxu0 0
      %5243 = vmatpush.bf16.msra.mxu0 0
      %5244 = vmatpush.bf16.msra.mxu0 0
      %5245 = vmatpush.bf16.msra.mxu0 0
      %5246 = vmatpush.bf16.msra.mxu0 %v5129
      %5247 = vmatpush.bf16.msra.mxu0 %v5128
      %5248 = vmatmul.bf16.gmra.mxu0 %v5133
      %v5249 = vpop.f32.mrf.mxu0
      %v5250 = vadd.f32 0.0, %v5249
      %v5251 = vpop.f32.mrf.mxu0
      %v5252 = vadd.f32 0.0, %v5251
      %5253 = vmatmul.bf16.gmra.mxu0 %v5136
      %v5254 = vpop.f32.mrf.mxu0
      %v5255 = vadd.f32 0.0, %v5254
      %v5256 = vpop.f32.mrf.mxu0
      %v5257 = vadd.f32 0.0, %v5256
      %5258 = vmatmul.bf16.gmra.mxu0 %v5139
      %v5259 = vpop.f32.mrf.mxu0
      %v5260 = vadd.f32 0.0, %v5259
      %v5261 = vpop.f32.mrf.mxu0
      %v5262 = vadd.f32 0.0, %v5261
      %5263 = vmatmul.bf16.gmra.mxu0 %v5142
      %v5264 = vpop.f32.mrf.mxu0
      %v5265 = vadd.f32 0.0, %v5264
      %v5266 = vpop.f32.mrf.mxu0
      %v5267 = vadd.f32 0.0, %v5266
      %5268 = vmatmul.bf16.gmra.mxu0 %v5145
      %v5269 = vpop.f32.mrf.mxu0
      %v5270 = vadd.f32 0.0, %v5269
      %v5271 = vpop.f32.mrf.mxu0
      %v5272 = vadd.f32 0.0, %v5271
      %5273 = vmatmul.bf16.gmra.mxu0 %v5148
      %v5274 = vpop.f32.mrf.mxu0
      %v5275 = vadd.f32 0.0, %v5274
      %v5276 = vpop.f32.mrf.mxu0
      %v5277 = vadd.f32 0.0, %v5276
      %5278 = vmatmul.bf16.gmra.mxu0 %v5151
      %v5279 = vpop.f32.mrf.mxu0
      %v5280 = vadd.f32 0.0, %v5279
      %v5281 = vpop.f32.mrf.mxu0
      %v5282 = vadd.f32 0.0, %v5281
      %5283 = vmatmul.bf16.gmra.mxu0 %v5154
      %v5284 = vpop.f32.mrf.mxu0
      %v5285 = vadd.f32 0.0, %v5284
      %v5286 = vpop.f32.mrf.mxu0
      %v5287 = vadd.f32 0.0, %v5286
      %5288 = vmatmul.bf16.gmra.mxu0 %v5157
      %v5289 = vpop.f32.mrf.mxu0
      %v5290 = vadd.f32 0.0, %v5289
      %v5291 = vpop.f32.mrf.mxu0
      %v5292 = vadd.f32 0.0, %v5291
      %5293 = vmatmul.bf16.gmra.mxu0 %v5160
      %v5294 = vpop.f32.mrf.mxu0
      %v5295 = vadd.f32 0.0, %v5294
      %v5296 = vpop.f32.mrf.mxu0
      %v5297 = vadd.f32 0.0, %v5296
      %5298 = vmatmul.bf16.gmra.mxu0 %v5163
      %v5299 = vpop.f32.mrf.mxu0
      %v5300 = vadd.f32 0.0, %v5299
      %v5301 = vpop.f32.mrf.mxu0
      %v5302 = vadd.f32 0.0, %v5301
      %5303 = vmatmul.bf16.gmra.mxu0 %v5166
      %v5304 = vpop.f32.mrf.mxu0
      %v5305 = vadd.f32 0.0, %v5304
      %v5306 = vpop.f32.mrf.mxu0
      %v5307 = vadd.f32 0.0, %v5306
      %5308 = vmatmul.bf16.gmra.mxu0 %v5169
      %v5309 = vpop.f32.mrf.mxu0
      %v5310 = vadd.f32 0.0, %v5309
      %v5311 = vpop.f32.mrf.mxu0
      %v5312 = vadd.f32 0.0, %v5311
      %5313 = vmatmul.bf16.gmra.mxu0 %v5172
      %v5314 = vpop.f32.mrf.mxu0
      %v5315 = vadd.f32 0.0, %v5314
      %v5316 = vpop.f32.mrf.mxu0
      %v5317 = vadd.f32 0.0, %v5316
      %5318 = vmatmul.bf16.gmra.mxu0 %v5175
      %v5319 = vpop.f32.mrf.mxu0
      %v5320 = vadd.f32 0.0, %v5319
      %v5321 = vpop.f32.mrf.mxu0
      %v5322 = vadd.f32 0.0, %v5321
      %5323 = vmatmul.bf16.gmra.mxu0 %v5178
      %v5324 = vpop.f32.mrf.mxu0
      %v5325 = vadd.f32 0.0, %v5324
      %v5326 = vpop.f32.mrf.mxu0
      %v5327 = vadd.f32 0.0, %v5326
      %5328 = vmatmul.bf16.gmra.mxu0 %v5181
      %v5329 = vpop.f32.mrf.mxu0
      %v5330 = vadd.f32 0.0, %v5329
      %v5331 = vpop.f32.mrf.mxu0
      %v5332 = vadd.f32 0.0, %v5331
      %5333 = vmatmul.bf16.gmra.mxu0 %v5184
      %v5334 = vpop.f32.mrf.mxu0
      %v5335 = vadd.f32 0.0, %v5334
      %v5336 = vpop.f32.mrf.mxu0
      %v5337 = vadd.f32 0.0, %v5336
      %5338 = vmatmul.bf16.gmra.mxu0 %v5187
      %v5339 = vpop.f32.mrf.mxu0
      %v5340 = vadd.f32 0.0, %v5339
      %v5341 = vpop.f32.mrf.mxu0
      %v5342 = vadd.f32 0.0, %v5341
      %5343 = vmatmul.bf16.gmra.mxu0 %v5190
      %v5344 = vpop.f32.mrf.mxu0
      %v5345 = vadd.f32 0.0, %v5344
      %v5346 = vpop.f32.mrf.mxu0
      %v5347 = vadd.f32 0.0, %v5346
      %5348 = vmatmul.bf16.gmra.mxu0 %v5193
      %v5349 = vpop.f32.mrf.mxu0
      %v5350 = vadd.f32 0.0, %v5349
      %v5351 = vpop.f32.mrf.mxu0
      %v5352 = vadd.f32 0.0, %v5351
      %5353 = vmatmul.bf16.gmra.mxu0 %v5196
      %v5354 = vpop.f32.mrf.mxu0
      %v5355 = vadd.f32 0.0, %v5354
      %v5356 = vpop.f32.mrf.mxu0
      %v5357 = vadd.f32 0.0, %v5356
      %5358 = vmatmul.bf16.gmra.mxu0 %v5199
      %v5359 = vpop.f32.mrf.mxu0
      %v5360 = vadd.f32 0.0, %v5359
      %v5361 = vpop.f32.mrf.mxu0
      %v5362 = vadd.f32 0.0, %v5361
      %5363 = vmatmul.bf16.gmra.mxu0 %v5202
      %v5364 = vpop.f32.mrf.mxu0
      %v5365 = vadd.f32 0.0, %v5364
      %v5366 = vpop.f32.mrf.mxu0
      %v5367 = vadd.f32 0.0, %v5366
      %5368 = vmatmul.bf16.gmra.mxu0 %v5205
      %v5369 = vpop.f32.mrf.mxu0
      %v5370 = vadd.f32 0.0, %v5369
      %v5371 = vpop.f32.mrf.mxu0
      %v5372 = vadd.f32 0.0, %v5371
      %5373 = vmatmul.bf16.gmra.mxu0 %v5208
      %v5374 = vpop.f32.mrf.mxu0
      %v5375 = vadd.f32 0.0, %v5374
      %v5376 = vpop.f32.mrf.mxu0
      %v5377 = vadd.f32 0.0, %v5376
      %5378 = vmatmul.bf16.gmra.mxu0 %v5211
      %v5379 = vpop.f32.mrf.mxu0
      %v5380 = vadd.f32 0.0, %v5379
      %v5381 = vpop.f32.mrf.mxu0
      %v5382 = vadd.f32 0.0, %v5381
      %5383 = vmatmul.bf16.gmra.mxu0 %v5214
      %v5384 = vpop.f32.mrf.mxu0
      %v5385 = vadd.f32 0.0, %v5384
      %v5386 = vpop.f32.mrf.mxu0
      %v5387 = vadd.f32 0.0, %v5386
      %5388 = vmatmul.bf16.gmra.mxu0 %v5217
      %v5389 = vpop.f32.mrf.mxu0
      %v5390 = vadd.f32 0.0, %v5389
      %v5391 = vpop.f32.mrf.mxu0
      %v5392 = vadd.f32 0.0, %v5391
      %5393 = vmatmul.bf16.gmra.mxu0 %v5220
      %v5394 = vpop.f32.mrf.mxu0
      %v5395 = vadd.f32 0.0, %v5394
      %v5396 = vpop.f32.mrf.mxu0
      %v5397 = vadd.f32 0.0, %v5396
      %5398 = vmatmul.bf16.gmra.mxu0 %v5223
      %v5399 = vpop.f32.mrf.mxu0
      %v5400 = vadd.f32 0.0, %v5399
      %v5401 = vpop.f32.mrf.mxu0
      %v5402 = vadd.f32 0.0, %v5401
      %5403 = vmatmul.bf16.gmra.mxu0 %v5226
      %v5404 = vpop.f32.mrf.mxu0
      %v5405 = vadd.f32 0.0, %v5404
      %v5406 = vpop.f32.mrf.mxu0
      %v5407 = vadd.f32 0.0, %v5406
      %5408 = vmatmul.bf16.gmra.mxu0 %v5229
      %v5409 = vpop.f32.mrf.mxu0
      %v5410 = vadd.f32 0.0, %v5409
      %v5411 = vpop.f32.mrf.mxu0
      %v5412 = vadd.f32 0.0, %v5411
      %5413 = vmatmul.bf16.gmra.mxu0 %v5232
      %v5414 = vpop.f32.mrf.mxu0
      %v5415 = vadd.f32 0.0, %v5414
      %v5416 = vpop.f32.mrf.mxu0
      %v5417 = vadd.f32 0.0, %v5416
      %5418 = vmatmul.bf16.gmra.mxu0 %v5235
      %v5419 = vpop.f32.mrf.mxu0
      %v5420 = vadd.f32 0.0, %v5419
      %v5421 = vpop.f32.mrf.mxu0
      %v5422 = vadd.f32 0.0, %v5421
      %5423 = vmatmul.bf16.gmra.mxu0 %v5238
      %v5424 = vpop.f32.mrf.mxu0
      %v5425 = vadd.f32 0.0, %v5424
      %v5426 = vpop.f32.mrf.mxu0
      %v5427 = vadd.f32 0.0, %v5426
      %5428 = vdwg.mxu0
      %v5429 = vadd.f32 %v4935, %v5250
      %v5430 = vadd.f32 %v4936, %v5252
      %v5431 = vadd.f32 %v4937, %v5255
      %v5432 = vadd.f32 %v4938, %v5257
      %v5433 = vadd.f32 %v4939, %v5260
      %v5434 = vadd.f32 %v4940, %v5262
      %v5435 = vadd.f32 %v4941, %v5265
      %v5436 = vadd.f32 %v4942, %v5267
      %v5437 = vadd.f32 %v4943, %v5270
      %v5438 = vadd.f32 %v4944, %v5272
      %v5439 = vadd.f32 %v4945, %v5275
      %v5440 = vadd.f32 %v4946, %v5277
      %v5441 = vadd.f32 %v4947, %v5280
      %v5442 = vadd.f32 %v4948, %v5282
      %v5443 = vadd.f32 %v4949, %v5285
      %v5444 = vadd.f32 %v4950, %v5287
      %v5445 = vadd.f32 %v4951, %v5290
      %v5446 = vadd.f32 %v4952, %v5292
      %v5447 = vadd.f32 %v4953, %v5295
      %v5448 = vadd.f32 %v4954, %v5297
      %v5449 = vadd.f32 %v4955, %v5300
      %v5450 = vadd.f32 %v4956, %v5302
      %v5451 = vadd.f32 %v4957, %v5305
      %v5452 = vadd.f32 %v4958, %v5307
      %v5453 = vadd.f32 %v4959, %v5310
      %v5454 = vadd.f32 %v4960, %v5312
      %v5455 = vadd.f32 %v4961, %v5315
      %v5456 = vadd.f32 %v4962, %v5317
      %v5457 = vadd.f32 %v4963, %v5320
      %v5458 = vadd.f32 %v4964, %v5322
      %v5459 = vadd.f32 %v4965, %v5325
      %v5460 = vadd.f32 %v4966, %v5327
      %v5461 = vadd.f32 %v4967, %v5330
      %v5462 = vadd.f32 %v4968, %v5332
      %v5463 = vadd.f32 %v4969, %v5335
      %v5464 = vadd.f32 %v4970, %v5337
      %v5465 = vadd.f32 %v4971, %v5340
      %v5466 = vadd.f32 %v4972, %v5342
      %v5467 = vadd.f32 %v4973, %v5345
      %v5468 = vadd.f32 %v4974, %v5347
      %v5469 = vadd.f32 %v4975, %v5350
      %v5470 = vadd.f32 %v4976, %v5352
      %v5471 = vadd.f32 %v4977, %v5355
      %v5472 = vadd.f32 %v4978, %v5357
      %v5473 = vadd.f32 %v4979, %v5360
      %v5474 = vadd.f32 %v4980, %v5362
      %v5475 = vadd.f32 %v4981, %v5365
      %v5476 = vadd.f32 %v4982, %v5367
      %v5477 = vadd.f32 %v4983, %v5370
      %v5478 = vadd.f32 %v4984, %v5372
      %v5479 = vadd.f32 %v4985, %v5375
      %v5480 = vadd.f32 %v4986, %v5377
      %v5481 = vadd.f32 %v4987, %v5380
      %v5482 = vadd.f32 %v4988, %v5382
      %v5483 = vadd.f32 %v4989, %v5385
      %v5484 = vadd.f32 %v4990, %v5387
      %v5485 = vadd.f32 %v4991, %v5390
      %v5486 = vadd.f32 %v4992, %v5392
      %v5487 = vadd.f32 %v4993, %v5395
      %v5488 = vadd.f32 %v4994, %v5397
      %v5489 = vadd.f32 %v4995, %v5400
      %v5490 = vadd.f32 %v4996, %v5402
      %v5491 = vadd.f32 %v4997, %v5405
      %v5492 = vadd.f32 %v4998, %v5407
      %v5493 = vadd.f32 %v4999, %v5410
      %v5494 = vadd.f32 %v5000, %v5412
      %v5495 = vadd.f32 %v5001, %v5415
      %v5496 = vadd.f32 %v5002, %v5417
      %v5497 = vadd.f32 %v5003, %v5420
      %v5498 = vadd.f32 %v5004, %v5422
      %v5499 = vadd.f32 %v5005, %v5425
      %v5500 = vadd.f32 %v5006, %v5427
      %v5501 = vld [vmem:[%s424 + $0x2] sm:$0xff]
      %v5502 = vld [vmem:[%s424 + $0xa] sm:$0xff]
      %v5503 = vld [vmem:[%s424 + $0x12] sm:$0xff]
      %v5504 = vld [vmem:[%s424 + $0x22] sm:$0xff]
      %v5505 = vld [vmem:[%s424 + $0x2a] sm:$0xff]
      %v5506 = vld [vmem:[%s424 + $0x32] sm:$0xff]
      %v5507 = vld [vmem:[%s424 + $0x42] sm:$0xff]
      %v5508 = vld [vmem:[%s424 + $0x4a] sm:$0xff]
      %v5509 = vld [vmem:[%s424 + $0x52] sm:$0xff]
      %v5510 = vld [vmem:[%s424 + $0x62] sm:$0xff]
      %v5511 = vld [vmem:[%s424 + $0x6a] sm:$0xff]
      %v5512 = vld [vmem:[%s424 + $0x72] sm:$0xff]
      %v5513 = vld [vmem:[%s424 + $0x82] sm:$0xff]
      %v5514 = vld [vmem:[%s424 + $0x8a] sm:$0xff]
      %v5515 = vld [vmem:[%s424 + $0x92] sm:$0xff]
      %v5516 = vld [vmem:[%s424 + $0xa2] sm:$0xff]
      %v5517 = vld [vmem:[%s424 + $0xaa] sm:$0xff]
      %v5518 = vld [vmem:[%s424 + $0xb2] sm:$0xff]
      %v5519 = vld [vmem:[%s424 + $0xc2] sm:$0xff]
      %v5520 = vld [vmem:[%s424 + $0xca] sm:$0xff]
      %v5521 = vld [vmem:[%s424 + $0xd2] sm:$0xff]
      %v5522 = vld [vmem:[%s424 + $0xe2] sm:$0xff]
      %v5523 = vld [vmem:[%s424 + $0xea] sm:$0xff]
      %v5524 = vld [vmem:[%s424 + $0xf2] sm:$0xff]
      %v5525 = vld [vmem:[%s424 + $0x102] sm:$0xff]
      %v5526 = vld [vmem:[%s424 + $0x10a] sm:$0xff]
      %v5527 = vld [vmem:[%s424 + $0x112] sm:$0xff]
      %v5528 = vld [vmem:[%s424 + $0x122] sm:$0xff]
      %v5529 = vld [vmem:[%s424 + $0x12a] sm:$0xff]
      %v5530 = vld [vmem:[%s424 + $0x132] sm:$0xff]
      %v5531 = vld [vmem:[%s424 + $0x142] sm:$0xff]
      %v5532 = vld [vmem:[%s424 + $0x14a] sm:$0xff]
      %v5533 = vld [vmem:[%s424 + $0x152] sm:$0xff]
      %v5534 = vld [vmem:[%s424 + $0x162] sm:$0xff]
      %v5535 = vld [vmem:[%s424 + $0x16a] sm:$0xff]
      %v5536 = vld [vmem:[%s424 + $0x172] sm:$0xff]
      %v5537 = vld [vmem:[%s424 + $0x182] sm:$0xff]
      %v5538 = vld [vmem:[%s424 + $0x18a] sm:$0xff]
      %v5539 = vld [vmem:[%s424 + $0x192] sm:$0xff]
      %v5540 = vld [vmem:[%s424 + $0x1a2] sm:$0xff]
      %v5541 = vld [vmem:[%s424 + $0x1aa] sm:$0xff]
      %v5542 = vld [vmem:[%s424 + $0x1b2] sm:$0xff]
      %v5543 = vld [vmem:[%s424 + $0x1c2] sm:$0xff]
      %v5544 = vld [vmem:[%s424 + $0x1ca] sm:$0xff]
      %v5545 = vld [vmem:[%s424 + $0x1d2] sm:$0xff]
      %v5546 = vld [vmem:[%s424 + $0x1e2] sm:$0xff]
      %v5547 = vld [vmem:[%s424 + $0x1ea] sm:$0xff]
      %v5548 = vld [vmem:[%s424 + $0x1f2] sm:$0xff]
      %v5549 = vld [vmem:[%s424 + $0x202] sm:$0xff]
      %v5550 = vld [vmem:[%s424 + $0x20a] sm:$0xff]
      %v5551 = vld [vmem:[%s424 + $0x212] sm:$0xff]
      %v5552 = vld [vmem:[%s424 + $0x222] sm:$0xff]
      %v5553 = vld [vmem:[%s424 + $0x22a] sm:$0xff]
      %v5554 = vld [vmem:[%s424 + $0x232] sm:$0xff]
      %v5555 = vld [vmem:[%s424 + $0x242] sm:$0xff]
      %v5556 = vld [vmem:[%s424 + $0x24a] sm:$0xff]
      %v5557 = vld [vmem:[%s424 + $0x252] sm:$0xff]
      %v5558 = vld [vmem:[%s424 + $0x262] sm:$0xff]
      %v5559 = vld [vmem:[%s424 + $0x26a] sm:$0xff]
      %v5560 = vld [vmem:[%s424 + $0x272] sm:$0xff]
      %v5561 = vld [vmem:[%s424 + $0x282] sm:$0xff]
      %v5562 = vld [vmem:[%s424 + $0x28a] sm:$0xff]
      %v5563 = vld [vmem:[%s424 + $0x292] sm:$0xff]
      %v5564 = vld [vmem:[%s424 + $0x2a2] sm:$0xff]
      %v5565 = vld [vmem:[%s424 + $0x2aa] sm:$0xff]
      %v5566 = vld [vmem:[%s424 + $0x2b2] sm:$0xff]
      %v5567 = vld [vmem:[%s424 + $0x2c2] sm:$0xff]
      %v5568 = vld [vmem:[%s424 + $0x2ca] sm:$0xff]
      %v5569 = vld [vmem:[%s424 + $0x2d2] sm:$0xff]
      %v5570 = vld [vmem:[%s424 + $0x2e2] sm:$0xff]
      %v5571 = vld [vmem:[%s424 + $0x2ea] sm:$0xff]
      %v5572 = vld [vmem:[%s424 + $0x2f2] sm:$0xff]
      %v5573 = vpack.c.bf16 %v5502, %v5501
      %v5574 = vpack.c.bf16 %v5504, %v5503
      %v5575 = vpack.c.bf16 %v5506, %v5505
      %v5576 = vpack.c.bf16 %v5508, %v5507
      %v5577 = vpack.c.bf16 %v5510, %v5509
      %v5578 = vpack.c.bf16 %v5512, %v5511
      %v5579 = vpack.c.bf16 %v5514, %v5513
      %v5580 = vpack.c.bf16 %v5516, %v5515
      %v5581 = vpack.c.bf16 %v5518, %v5517
      %v5582 = vpack.c.bf16 %v5520, %v5519
      %v5583 = vpack.c.bf16 %v5522, %v5521
      %v5584 = vpack.c.bf16 %v5524, %v5523
      %v5585 = vpack.c.bf16 %v5526, %v5525
      %v5586 = vpack.c.bf16 %v5528, %v5527
      %v5587 = vpack.c.bf16 %v5530, %v5529
      %v5588 = vpack.c.bf16 %v5532, %v5531
      %v5589 = vpack.c.bf16 %v5534, %v5533
      %v5590 = vpack.c.bf16 %v5536, %v5535
      %v5591 = vpack.c.bf16 %v5538, %v5537
      %v5592 = vpack.c.bf16 %v5540, %v5539
      %v5593 = vpack.c.bf16 %v5542, %v5541
      %v5594 = vpack.c.bf16 %v5544, %v5543
      %v5595 = vpack.c.bf16 %v5546, %v5545
      %v5596 = vpack.c.bf16 %v5548, %v5547
      %v5597 = vpack.c.bf16 %v5550, %v5549
      %v5598 = vpack.c.bf16 %v5552, %v5551
      %v5599 = vpack.c.bf16 %v5554, %v5553
      %v5600 = vpack.c.bf16 %v5556, %v5555
      %v5601 = vpack.c.bf16 %v5558, %v5557
      %v5602 = vpack.c.bf16 %v5560, %v5559
      %v5603 = vpack.c.bf16 %v5562, %v5561
      %v5604 = vpack.c.bf16 %v5564, %v5563
      %v5605 = vpack.c.bf16 %v5566, %v5565
      %v5606 = vpack.c.bf16 %v5568, %v5567
      %v5607 = vpack.c.bf16 %v5570, %v5569
      %v5608 = vpack.c.bf16 %v5572, %v5571
      %s5609 = scalar_lea.vmem %s3, 128
      %v5610 = vld [vmem:[%s5609] sm:$0xf]
      %v5611 = vld [vmem:[%s5609 + $0x4] sm:$0xf]
      %v5612 = vld [vmem:[%s5609 + $0x8] sm:$0xf]
      %v5613 = vld [vmem:[%s5609 + $0xc] sm:$0xf]
      %v5618 = vunpack.c.l.b16 %v5610
      %v5619 = vunpack.c.l.b16 %v5611
      %v5620 = vunpack.c.l.b16 %v5612
      %v5621 = vunpack.c.l.b16 %v5613
      %v5622 = vpack.c.b16 %v5619, %v5618
      %v5623 = vpack.c.b16 %v5621, %v5620
      %v5627 = vsel %vm313, %v5573, 0
      %v5630 = vsel %vm313, %v5574, 0
      %v5633 = vsel %vm313, %v5575, 0
      %v5636 = vsel %vm313, %v5576, 0
      %v5639 = vsel %vm313, %v5577, 0
      %v5642 = vsel %vm313, %v5578, 0
      %v5645 = vsel %vm313, %v5579, 0
      %v5648 = vsel %vm313, %v5580, 0
      %v5651 = vsel %vm313, %v5581, 0
      %v5654 = vsel %vm313, %v5582, 0
      %v5657 = vsel %vm313, %v5583, 0
      %v5660 = vsel %vm313, %v5584, 0
      %v5663 = vsel %vm313, %v5585, 0
      %v5666 = vsel %vm313, %v5586, 0
      %v5669 = vsel %vm313, %v5587, 0
      %v5672 = vsel %vm313, %v5588, 0
      %v5675 = vsel %vm313, %v5589, 0
      %v5678 = vsel %vm313, %v5590, 0
      %v5681 = vsel %vm313, %v5591, 0
      %v5684 = vsel %vm313, %v5592, 0
      %v5687 = vsel %vm313, %v5593, 0
      %v5690 = vsel %vm313, %v5594, 0
      %v5693 = vsel %vm313, %v5595, 0
      %v5696 = vsel %vm313, %v5596, 0
      %v5699 = vsel %vm313, %v5597, 0
      %v5702 = vsel %vm313, %v5598, 0
      %v5705 = vsel %vm313, %v5599, 0
      %v5708 = vsel %vm313, %v5600, 0
      %v5711 = vsel %vm313, %v5601, 0
      %v5714 = vsel %vm313, %v5602, 0
      %v5717 = vsel %vm313, %v5603, 0
      %v5720 = vsel %vm313, %v5604, 0
      %v5723 = vsel %vm313, %v5605, 0
      %v5726 = vsel %vm313, %v5606, 0
      %v5729 = vsel %vm313, %v5607, 0
      %v5732 = vsel %vm313, %v5608, 0
      %5734 = vmatpush.bf16.msra.mxu0 0
      %5735 = vmatpush.bf16.msra.mxu0 0
      %5736 = vmatpush.bf16.msra.mxu0 0
      %5737 = vmatpush.bf16.msra.mxu0 0
      %5738 = vmatpush.bf16.msra.mxu0 0
      %5739 = vmatpush.bf16.msra.mxu0 0
      %5740 = vmatpush.bf16.msra.mxu0 %v5623
      %5741 = vmatpush.bf16.msra.mxu0 %v5622
      %5742 = vmatmul.bf16.gmra.mxu0 %v5627
      %v5743 = vpop.f32.mrf.mxu0
      %v5744 = vadd.f32 0.0, %v5743
      %v5745 = vpop.f32.mrf.mxu0
      %v5746 = vadd.f32 0.0, %v5745
      %5747 = vmatmul.bf16.gmra.mxu0 %v5630
      %v5748 = vpop.f32.mrf.mxu0
      %v5749 = vadd.f32 0.0, %v5748
      %v5750 = vpop.f32.mrf.mxu0
      %v5751 = vadd.f32 0.0, %v5750
      %5752 = vmatmul.bf16.gmra.mxu0 %v5633
      %v5753 = vpop.f32.mrf.mxu0
      %v5754 = vadd.f32 0.0, %v5753
      %v5755 = vpop.f32.mrf.mxu0
      %v5756 = vadd.f32 0.0, %v5755
      %5757 = vmatmul.bf16.gmra.mxu0 %v5636
      %v5758 = vpop.f32.mrf.mxu0
      %v5759 = vadd.f32 0.0, %v5758
      %v5760 = vpop.f32.mrf.mxu0
      %v5761 = vadd.f32 0.0, %v5760
      %5762 = vmatmul.bf16.gmra.mxu0 %v5639
      %v5763 = vpop.f32.mrf.mxu0
      %v5764 = vadd.f32 0.0, %v5763
      %v5765 = vpop.f32.mrf.mxu0
      %v5766 = vadd.f32 0.0, %v5765
      %5767 = vmatmul.bf16.gmra.mxu0 %v5642
      %v5768 = vpop.f32.mrf.mxu0
      %v5769 = vadd.f32 0.0, %v5768
      %v5770 = vpop.f32.mrf.mxu0
      %v5771 = vadd.f32 0.0, %v5770
      %5772 = vmatmul.bf16.gmra.mxu0 %v5645
      %v5773 = vpop.f32.mrf.mxu0
      %v5774 = vadd.f32 0.0, %v5773
      %v5775 = vpop.f32.mrf.mxu0
      %v5776 = vadd.f32 0.0, %v5775
      %5777 = vmatmul.bf16.gmra.mxu0 %v5648
      %v5778 = vpop.f32.mrf.mxu0
      %v5779 = vadd.f32 0.0, %v5778
      %v5780 = vpop.f32.mrf.mxu0
      %v5781 = vadd.f32 0.0, %v5780
      %5782 = vmatmul.bf16.gmra.mxu0 %v5651
      %v5783 = vpop.f32.mrf.mxu0
      %v5784 = vadd.f32 0.0, %v5783
      %v5785 = vpop.f32.mrf.mxu0
      %v5786 = vadd.f32 0.0, %v5785
      %5787 = vmatmul.bf16.gmra.mxu0 %v5654
      %v5788 = vpop.f32.mrf.mxu0
      %v5789 = vadd.f32 0.0, %v5788
      %v5790 = vpop.f32.mrf.mxu0
      %v5791 = vadd.f32 0.0, %v5790
      %5792 = vmatmul.bf16.gmra.mxu0 %v5657
      %v5793 = vpop.f32.mrf.mxu0
      %v5794 = vadd.f32 0.0, %v5793
      %v5795 = vpop.f32.mrf.mxu0
      %v5796 = vadd.f32 0.0, %v5795
      %5797 = vmatmul.bf16.gmra.mxu0 %v5660
      %v5798 = vpop.f32.mrf.mxu0
      %v5799 = vadd.f32 0.0, %v5798
      %v5800 = vpop.f32.mrf.mxu0
      %v5801 = vadd.f32 0.0, %v5800
      %5802 = vmatmul.bf16.gmra.mxu0 %v5663
      %v5803 = vpop.f32.mrf.mxu0
      %v5804 = vadd.f32 0.0, %v5803
      %v5805 = vpop.f32.mrf.mxu0
      %v5806 = vadd.f32 0.0, %v5805
      %5807 = vmatmul.bf16.gmra.mxu0 %v5666
      %v5808 = vpop.f32.mrf.mxu0
      %v5809 = vadd.f32 0.0, %v5808
      %v5810 = vpop.f32.mrf.mxu0
      %v5811 = vadd.f32 0.0, %v5810
      %5812 = vmatmul.bf16.gmra.mxu0 %v5669
      %v5813 = vpop.f32.mrf.mxu0
      %v5814 = vadd.f32 0.0, %v5813
      %v5815 = vpop.f32.mrf.mxu0
      %v5816 = vadd.f32 0.0, %v5815
      %5817 = vmatmul.bf16.gmra.mxu0 %v5672
      %v5818 = vpop.f32.mrf.mxu0
      %v5819 = vadd.f32 0.0, %v5818
      %v5820 = vpop.f32.mrf.mxu0
      %v5821 = vadd.f32 0.0, %v5820
      %5822 = vmatmul.bf16.gmra.mxu0 %v5675
      %v5823 = vpop.f32.mrf.mxu0
      %v5824 = vadd.f32 0.0, %v5823
      %v5825 = vpop.f32.mrf.mxu0
      %v5826 = vadd.f32 0.0, %v5825
      %5827 = vmatmul.bf16.gmra.mxu0 %v5678
      %v5828 = vpop.f32.mrf.mxu0
      %v5829 = vadd.f32 0.0, %v5828
      %v5830 = vpop.f32.mrf.mxu0
      %v5831 = vadd.f32 0.0, %v5830
      %5832 = vmatmul.bf16.gmra.mxu0 %v5681
      %v5833 = vpop.f32.mrf.mxu0
      %v5834 = vadd.f32 0.0, %v5833
      %v5835 = vpop.f32.mrf.mxu0
      %v5836 = vadd.f32 0.0, %v5835
      %5837 = vmatmul.bf16.gmra.mxu0 %v5684
      %v5838 = vpop.f32.mrf.mxu0
      %v5839 = vadd.f32 0.0, %v5838
      %v5840 = vpop.f32.mrf.mxu0
      %v5841 = vadd.f32 0.0, %v5840
      %5842 = vmatmul.bf16.gmra.mxu0 %v5687
      %v5843 = vpop.f32.mrf.mxu0
      %v5844 = vadd.f32 0.0, %v5843
      %v5845 = vpop.f32.mrf.mxu0
      %v5846 = vadd.f32 0.0, %v5845
      %5847 = vmatmul.bf16.gmra.mxu0 %v5690
      %v5848 = vpop.f32.mrf.mxu0
      %v5849 = vadd.f32 0.0, %v5848
      %v5850 = vpop.f32.mrf.mxu0
      %v5851 = vadd.f32 0.0, %v5850
      %5852 = vmatmul.bf16.gmra.mxu0 %v5693
      %v5853 = vpop.f32.mrf.mxu0
      %v5854 = vadd.f32 0.0, %v5853
      %v5855 = vpop.f32.mrf.mxu0
      %v5856 = vadd.f32 0.0, %v5855
      %5857 = vmatmul.bf16.gmra.mxu0 %v5696
      %v5858 = vpop.f32.mrf.mxu0
      %v5859 = vadd.f32 0.0, %v5858
      %v5860 = vpop.f32.mrf.mxu0
      %v5861 = vadd.f32 0.0, %v5860
      %5862 = vmatmul.bf16.gmra.mxu0 %v5699
      %v5863 = vpop.f32.mrf.mxu0
      %v5864 = vadd.f32 0.0, %v5863
      %v5865 = vpop.f32.mrf.mxu0
      %v5866 = vadd.f32 0.0, %v5865
      %5867 = vmatmul.bf16.gmra.mxu0 %v5702
      %v5868 = vpop.f32.mrf.mxu0
      %v5869 = vadd.f32 0.0, %v5868
      %v5870 = vpop.f32.mrf.mxu0
      %v5871 = vadd.f32 0.0, %v5870
      %5872 = vmatmul.bf16.gmra.mxu0 %v5705
      %v5873 = vpop.f32.mrf.mxu0
      %v5874 = vadd.f32 0.0, %v5873
      %v5875 = vpop.f32.mrf.mxu0
      %v5876 = vadd.f32 0.0, %v5875
      %5877 = vmatmul.bf16.gmra.mxu0 %v5708
      %v5878 = vpop.f32.mrf.mxu0
      %v5879 = vadd.f32 0.0, %v5878
      %v5880 = vpop.f32.mrf.mxu0
      %v5881 = vadd.f32 0.0, %v5880
      %5882 = vmatmul.bf16.gmra.mxu0 %v5711
      %v5883 = vpop.f32.mrf.mxu0
      %v5884 = vadd.f32 0.0, %v5883
      %v5885 = vpop.f32.mrf.mxu0
      %v5886 = vadd.f32 0.0, %v5885
      %5887 = vmatmul.bf16.gmra.mxu0 %v5714
      %v5888 = vpop.f32.mrf.mxu0
      %v5889 = vadd.f32 0.0, %v5888
      %v5890 = vpop.f32.mrf.mxu0
      %v5891 = vadd.f32 0.0, %v5890
      %5892 = vmatmul.bf16.gmra.mxu0 %v5717
      %v5893 = vpop.f32.mrf.mxu0
      %v5894 = vadd.f32 0.0, %v5893
      %v5895 = vpop.f32.mrf.mxu0
      %v5896 = vadd.f32 0.0, %v5895
      %5897 = vmatmul.bf16.gmra.mxu0 %v5720
      %v5898 = vpop.f32.mrf.mxu0
      %v5899 = vadd.f32 0.0, %v5898
      %v5900 = vpop.f32.mrf.mxu0
      %v5901 = vadd.f32 0.0, %v5900
      %5902 = vmatmul.bf16.gmra.mxu0 %v5723
      %v5903 = vpop.f32.mrf.mxu0
      %v5904 = vadd.f32 0.0, %v5903
      %v5905 = vpop.f32.mrf.mxu0
      %v5906 = vadd.f32 0.0, %v5905
      %5907 = vmatmul.bf16.gmra.mxu0 %v5726
      %v5908 = vpop.f32.mrf.mxu0
      %v5909 = vadd.f32 0.0, %v5908
      %v5910 = vpop.f32.mrf.mxu0
      %v5911 = vadd.f32 0.0, %v5910
      %5912 = vmatmul.bf16.gmra.mxu0 %v5729
      %v5913 = vpop.f32.mrf.mxu0
      %v5914 = vadd.f32 0.0, %v5913
      %v5915 = vpop.f32.mrf.mxu0
      %v5916 = vadd.f32 0.0, %v5915
      %5917 = vmatmul.bf16.gmra.mxu0 %v5732
      %v5918 = vpop.f32.mrf.mxu0
      %v5919 = vadd.f32 0.0, %v5918
      %v5920 = vpop.f32.mrf.mxu0
      %v5921 = vadd.f32 0.0, %v5920
      %5922 = vdwg.mxu0
      %v5923 = vadd.f32 %v5429, %v5744
      %v5924 = vadd.f32 %v5430, %v5746
      %v5925 = vadd.f32 %v5431, %v5749
      %v5926 = vadd.f32 %v5432, %v5751
      %v5927 = vadd.f32 %v5433, %v5754
      %v5928 = vadd.f32 %v5434, %v5756
      %v5929 = vadd.f32 %v5435, %v5759
      %v5930 = vadd.f32 %v5436, %v5761
      %v5931 = vadd.f32 %v5437, %v5764
      %v5932 = vadd.f32 %v5438, %v5766
      %v5933 = vadd.f32 %v5439, %v5769
      %v5934 = vadd.f32 %v5440, %v5771
      %v5935 = vadd.f32 %v5441, %v5774
      %v5936 = vadd.f32 %v5442, %v5776
      %v5937 = vadd.f32 %v5443, %v5779
      %v5938 = vadd.f32 %v5444, %v5781
      %v5939 = vadd.f32 %v5445, %v5784
      %v5940 = vadd.f32 %v5446, %v5786
      %v5941 = vadd.f32 %v5447, %v5789
      %v5942 = vadd.f32 %v5448, %v5791
      %v5943 = vadd.f32 %v5449, %v5794
      %v5944 = vadd.f32 %v5450, %v5796
      %v5945 = vadd.f32 %v5451, %v5799
      %v5946 = vadd.f32 %v5452, %v5801
      %v5947 = vadd.f32 %v5453, %v5804
      %v5948 = vadd.f32 %v5454, %v5806
      %v5949 = vadd.f32 %v5455, %v5809
      %v5950 = vadd.f32 %v5456, %v5811
      %v5951 = vadd.f32 %v5457, %v5814
      %v5952 = vadd.f32 %v5458, %v5816
      %v5953 = vadd.f32 %v5459, %v5819
      %v5954 = vadd.f32 %v5460, %v5821
      %v5955 = vadd.f32 %v5461, %v5824
      %v5956 = vadd.f32 %v5462, %v5826
      %v5957 = vadd.f32 %v5463, %v5829
      %v5958 = vadd.f32 %v5464, %v5831
      %v5959 = vadd.f32 %v5465, %v5834
      %v5960 = vadd.f32 %v5466, %v5836
      %v5961 = vadd.f32 %v5467, %v5839
      %v5962 = vadd.f32 %v5468, %v5841
      %v5963 = vadd.f32 %v5469, %v5844
      %v5964 = vadd.f32 %v5470, %v5846
      %v5965 = vadd.f32 %v5471, %v5849
      %v5966 = vadd.f32 %v5472, %v5851
      %v5967 = vadd.f32 %v5473, %v5854
      %v5968 = vadd.f32 %v5474, %v5856
      %v5969 = vadd.f32 %v5475, %v5859
      %v5970 = vadd.f32 %v5476, %v5861
      %v5971 = vadd.f32 %v5477, %v5864
      %v5972 = vadd.f32 %v5478, %v5866
      %v5973 = vadd.f32 %v5479, %v5869
      %v5974 = vadd.f32 %v5480, %v5871
      %v5975 = vadd.f32 %v5481, %v5874
      %v5976 = vadd.f32 %v5482, %v5876
      %v5977 = vadd.f32 %v5483, %v5879
      %v5978 = vadd.f32 %v5484, %v5881
      %v5979 = vadd.f32 %v5485, %v5884
      %v5980 = vadd.f32 %v5486, %v5886
      %v5981 = vadd.f32 %v5487, %v5889
      %v5982 = vadd.f32 %v5488, %v5891
      %v5983 = vadd.f32 %v5489, %v5894
      %v5984 = vadd.f32 %v5490, %v5896
      %v5985 = vadd.f32 %v5491, %v5899
      %v5986 = vadd.f32 %v5492, %v5901
      %v5987 = vadd.f32 %v5493, %v5904
      %v5988 = vadd.f32 %v5494, %v5906
      %v5989 = vadd.f32 %v5495, %v5909
      %v5990 = vadd.f32 %v5496, %v5911
      %v5991 = vadd.f32 %v5497, %v5914
      %v5992 = vadd.f32 %v5498, %v5916
      %v5993 = vadd.f32 %v5499, %v5919
      %v5994 = vadd.f32 %v5500, %v5921
      %v5995 = vld [vmem:[%s4] sm:$0x1]
      %v5997 = vperm.slane %v5995, 0
      %v5999 = vadd.f32 %v5923, %v5997
      %v6000 = vadd.f32 %v5924, %v5997
      %v6001 = vadd.f32 %v5925, %v5997
      %v6002 = vadd.f32 %v5926, %v5997
      %v6003 = vadd.f32 %v5927, %v5997
      %v6004 = vadd.f32 %v5928, %v5997
      %v6005 = vadd.f32 %v5929, %v5997
      %v6006 = vadd.f32 %v5930, %v5997
      %v6007 = vadd.f32 %v5931, %v5997
      %v6008 = vadd.f32 %v5932, %v5997
      %v6009 = vadd.f32 %v5933, %v5997
      %v6010 = vadd.f32 %v5934, %v5997
      %v6011 = vadd.f32 %v5935, %v5997
      %v6012 = vadd.f32 %v5936, %v5997
      %v6013 = vadd.f32 %v5937, %v5997
      %v6014 = vadd.f32 %v5938, %v5997
      %v6015 = vadd.f32 %v5939, %v5997
      %v6016 = vadd.f32 %v5940, %v5997
      %v6017 = vadd.f32 %v5941, %v5997
      %v6018 = vadd.f32 %v5942, %v5997
      %v6019 = vadd.f32 %v5943, %v5997
      %v6020 = vadd.f32 %v5944, %v5997
      %v6021 = vadd.f32 %v5945, %v5997
      %v6022 = vadd.f32 %v5946, %v5997
      %v6023 = vadd.f32 %v5947, %v5997
      %v6024 = vadd.f32 %v5948, %v5997
      %v6025 = vadd.f32 %v5949, %v5997
      %v6026 = vadd.f32 %v5950, %v5997
      %v6027 = vadd.f32 %v5951, %v5997
      %v6028 = vadd.f32 %v5952, %v5997
      %v6029 = vadd.f32 %v5953, %v5997
      %v6030 = vadd.f32 %v5954, %v5997
      %v6031 = vadd.f32 %v5955, %v5997
      %v6032 = vadd.f32 %v5956, %v5997
      %v6033 = vadd.f32 %v5957, %v5997
      %v6034 = vadd.f32 %v5958, %v5997
      %v6035 = vadd.f32 %v5959, %v5997
      %v6036 = vadd.f32 %v5960, %v5997
      %v6037 = vadd.f32 %v5961, %v5997
      %v6038 = vadd.f32 %v5962, %v5997
      %v6039 = vadd.f32 %v5963, %v5997
      %v6040 = vadd.f32 %v5964, %v5997
      %v6041 = vadd.f32 %v5965, %v5997
      %v6042 = vadd.f32 %v5966, %v5997
      %v6043 = vadd.f32 %v5967, %v5997
      %v6044 = vadd.f32 %v5968, %v5997
      %v6045 = vadd.f32 %v5969, %v5997
      %v6046 = vadd.f32 %v5970, %v5997
      %v6047 = vadd.f32 %v5971, %v5997
      %v6048 = vadd.f32 %v5972, %v5997
      %v6049 = vadd.f32 %v5973, %v5997
      %v6050 = vadd.f32 %v5974, %v5997
      %v6051 = vadd.f32 %v5975, %v5997
      %v6052 = vadd.f32 %v5976, %v5997
      %v6053 = vadd.f32 %v5977, %v5997
      %v6054 = vadd.f32 %v5978, %v5997
      %v6055 = vadd.f32 %v5979, %v5997
      %v6056 = vadd.f32 %v5980, %v5997
      %v6057 = vadd.f32 %v5981, %v5997
      %v6058 = vadd.f32 %v5982, %v5997
      %v6059 = vadd.f32 %v5983, %v5997
      %v6060 = vadd.f32 %v5984, %v5997
      %v6061 = vadd.f32 %v5985, %v5997
      %v6062 = vadd.f32 %v5986, %v5997
      %v6063 = vadd.f32 %v5987, %v5997
      %v6064 = vadd.f32 %v5988, %v5997
      %v6065 = vadd.f32 %v5989, %v5997
      %v6066 = vadd.f32 %v5990, %v5997
      %v6067 = vadd.f32 %v5991, %v5997
      %v6068 = vadd.f32 %v5992, %v5997
      %v6069 = vadd.f32 %v5993, %v5997
      %v6070 = vadd.f32 %v5994, %v5997
      %v6071 = vtanh.pop %v5999
      %v6072 = vtanh.pop %v6000
      %v6073 = vtanh.pop %v6001
      %v6074 = vtanh.pop %v6002
      %v6075 = vtanh.pop %v6003
      %v6076 = vtanh.pop %v6004
      %v6077 = vtanh.pop %v6005
      %v6078 = vtanh.pop %v6006
      %v6079 = vtanh.pop %v6007
      %v6080 = vtanh.pop %v6008
      %v6081 = vtanh.pop %v6009
      %v6082 = vtanh.pop %v6010
      %v6083 = vtanh.pop %v6011
      %v6084 = vtanh.pop %v6012
      %v6085 = vtanh.pop %v6013
      %v6086 = vtanh.pop %v6014
      %v6087 = vtanh.pop %v6015
      %v6088 = vtanh.pop %v6016
      %v6089 = vtanh.pop %v6017
      %v6090 = vtanh.pop %v6018
      %v6091 = vtanh.pop %v6019
      %v6092 = vtanh.pop %v6020
      %v6093 = vtanh.pop %v6021
      %v6094 = vtanh.pop %v6022
      %v6095 = vtanh.pop %v6023
      %v6096 = vtanh.pop %v6024
      %v6097 = vtanh.pop %v6025
      %v6098 = vtanh.pop %v6026
      %v6099 = vtanh.pop %v6027
      %v6100 = vtanh.pop %v6028
      %v6101 = vtanh.pop %v6029
      %v6102 = vtanh.pop %v6030
      %v6103 = vtanh.pop %v6031
      %v6104 = vtanh.pop %v6032
      %v6105 = vtanh.pop %v6033
      %v6106 = vtanh.pop %v6034
      %v6107 = vtanh.pop %v6035
      %v6108 = vtanh.pop %v6036
      %v6109 = vtanh.pop %v6037
      %v6110 = vtanh.pop %v6038
      %v6111 = vtanh.pop %v6039
      %v6112 = vtanh.pop %v6040
      %v6113 = vtanh.pop %v6041
      %v6114 = vtanh.pop %v6042
      %v6115 = vtanh.pop %v6043
      %v6116 = vtanh.pop %v6044
      %v6117 = vtanh.pop %v6045
      %v6118 = vtanh.pop %v6046
      %v6119 = vtanh.pop %v6047
      %v6120 = vtanh.pop %v6048
      %v6121 = vtanh.pop %v6049
      %v6122 = vtanh.pop %v6050
      %v6123 = vtanh.pop %v6051
      %v6124 = vtanh.pop %v6052
      %v6125 = vtanh.pop %v6053
      %v6126 = vtanh.pop %v6054
      %v6127 = vtanh.pop %v6055
      %v6128 = vtanh.pop %v6056
      %v6129 = vtanh.pop %v6057
      %v6130 = vtanh.pop %v6058
      %v6131 = vtanh.pop %v6059
      %v6132 = vtanh.pop %v6060
      %v6133 = vtanh.pop %v6061
      %v6134 = vtanh.pop %v6062
      %v6135 = vtanh.pop %v6063
      %v6136 = vtanh.pop %v6064
      %v6137 = vtanh.pop %v6065
      %v6138 = vtanh.pop %v6066
      %v6139 = vtanh.pop %v6067
      %v6140 = vtanh.pop %v6068
      %v6141 = vtanh.pop %v6069
      %v6142 = vtanh.pop %v6070
      %v6143 = vld [vmem:[%s5] sm:$0xff]
      %v6144 = vld [vmem:[%s5 + $0x8] sm:$0xff]
      %v6145 = vld [vmem:[%s5 + $0x10] sm:$0xf]
      %v6146 = vld [vmem:[%s5 + $0x14] sm:$0xff]
      %v6147 = vld [vmem:[%s5 + $0x1c] sm:$0xff]
      %v6148 = vld [vmem:[%s5 + $0x24] sm:$0xf]
      %v6149 = vld [vmem:[%s5 + $0x28] sm:$0xff]
      %v6150 = vld [vmem:[%s5 + $0x30] sm:$0xff]
      %v6151 = vld [vmem:[%s5 + $0x38] sm:$0xf]
      %v6152 = vld [vmem:[%s5 + $0x3c] sm:$0xff]
      %v6153 = vld [vmem:[%s5 + $0x44] sm:$0xff]
      %v6154 = vld [vmem:[%s5 + $0x4c] sm:$0xf]
      %v6155 = vld [vmem:[%s5 + $0x50] sm:$0xff]
      %v6156 = vld [vmem:[%s5 + $0x58] sm:$0xff]
      %v6157 = vld [vmem:[%s5 + $0x60] sm:$0xf]
      %v6158 = vld [vmem:[%s5 + $0x64] sm:$0xff]
      %v6159 = vld [vmem:[%s5 + $0x6c] sm:$0xff]
      %v6160 = vld [vmem:[%s5 + $0x74] sm:$0xf]
      %v6161 = vld [vmem:[%s5 + $0x78] sm:$0xff]
      %v6162 = vld [vmem:[%s5 + $0x80] sm:$0xff]
      %v6163 = vld [vmem:[%s5 + $0x88] sm:$0xf]
      %v6164 = vld [vmem:[%s5 + $0x8c] sm:$0xff]
      %v6165 = vld [vmem:[%s5 + $0x94] sm:$0xff]
      %v6166 = vld [vmem:[%s5 + $0x9c] sm:$0xf]
      %v6167 = vld [vmem:[%s5 + $0xa0] sm:$0xff]
      %v6168 = vld [vmem:[%s5 + $0xa8] sm:$0xff]
      %v6169 = vld [vmem:[%s5 + $0xb0] sm:$0xf]
      %v6170 = vld [vmem:[%s5 + $0xb4] sm:$0xff]
      %v6171 = vld [vmem:[%s5 + $0xbc] sm:$0xff]
      %v6172 = vld [vmem:[%s5 + $0xc4] sm:$0xf]
      %v6173 = vld [vmem:[%s5 + $0xc8] sm:$0xff]
      %v6174 = vld [vmem:[%s5 + $0xd0] sm:$0xff]
      %v6175 = vld [vmem:[%s5 + $0xd8] sm:$0xf]
      %v6176 = vld [vmem:[%s5 + $0xdc] sm:$0xff]
      %v6177 = vld [vmem:[%s5 + $0xe4] sm:$0xff]
      %v6178 = vld [vmem:[%s5 + $0xec] sm:$0xf]
      %v6179 = vld [vmem:[%s5 + $0xf0] sm:$0xff]
      %v6180 = vld [vmem:[%s5 + $0xf8] sm:$0xff]
      %v6181 = vld [vmem:[%s5 + $0x100] sm:$0xf]
      %v6182 = vld [vmem:[%s5 + $0x104] sm:$0xff]
      %v6183 = vld [vmem:[%s5 + $0x10c] sm:$0xff]
      %v6184 = vld [vmem:[%s5 + $0x114] sm:$0xf]
      %v6185 = vld [vmem:[%s5 + $0x118] sm:$0xff]
      %v6186 = vld [vmem:[%s5 + $0x120] sm:$0xff]
      %v6187 = vld [vmem:[%s5 + $0x128] sm:$0xf]
      %v6188 = vld [vmem:[%s5 + $0x12c] sm:$0xff]
      %v6189 = vld [vmem:[%s5 + $0x134] sm:$0xff]
      %v6190 = vld [vmem:[%s5 + $0x13c] sm:$0xf]
      %v6191 = vld [vmem:[%s5 + $0x140] sm:$0xff]
      %v6192 = vld [vmem:[%s5 + $0x148] sm:$0xff]
      %v6193 = vld [vmem:[%s5 + $0x150] sm:$0xf]
      %v6194 = vld [vmem:[%s5 + $0x154] sm:$0xff]
      %v6195 = vld [vmem:[%s5 + $0x15c] sm:$0xff]
      %v6196 = vld [vmem:[%s5 + $0x164] sm:$0xf]
      %v6197 = vpack.c.bf16 %v6072, %v6071
      %v6198 = vpack.c.bf16 %v6074, %v6073
      %v6199 = vpack.c.bf16 %v6076, %v6075
      %v6200 = vpack.c.bf16 %v6078, %v6077
      %v6201 = vpack.c.bf16 %v6080, %v6079
      %v6202 = vpack.c.bf16 %v6082, %v6081
      %v6203 = vpack.c.bf16 %v6084, %v6083
      %v6204 = vpack.c.bf16 %v6086, %v6085
      %v6205 = vpack.c.bf16 %v6088, %v6087
      %v6206 = vpack.c.bf16 %v6090, %v6089
      %v6207 = vpack.c.bf16 %v6092, %v6091
      %v6208 = vpack.c.bf16 %v6094, %v6093
      %v6209 = vpack.c.bf16 %v6096, %v6095
      %v6210 = vpack.c.bf16 %v6098, %v6097
      %v6211 = vpack.c.bf16 %v6100, %v6099
      %v6212 = vpack.c.bf16 %v6102, %v6101
      %v6213 = vpack.c.bf16 %v6104, %v6103
      %v6214 = vpack.c.bf16 %v6106, %v6105
      %v6215 = vpack.c.bf16 %v6108, %v6107
      %v6216 = vpack.c.bf16 %v6110, %v6109
      %v6217 = vpack.c.bf16 %v6112, %v6111
      %v6218 = vpack.c.bf16 %v6114, %v6113
      %v6219 = vpack.c.bf16 %v6116, %v6115
      %v6220 = vpack.c.bf16 %v6118, %v6117
      %v6221 = vpack.c.bf16 %v6120, %v6119
      %v6222 = vpack.c.bf16 %v6122, %v6121
      %v6223 = vpack.c.bf16 %v6124, %v6123
      %v6224 = vpack.c.bf16 %v6126, %v6125
      %v6225 = vpack.c.bf16 %v6128, %v6127
      %v6226 = vpack.c.bf16 %v6130, %v6129
      %v6227 = vpack.c.bf16 %v6132, %v6131
      %v6228 = vpack.c.bf16 %v6134, %v6133
      %v6229 = vpack.c.bf16 %v6136, %v6135
      %v6230 = vpack.c.bf16 %v6138, %v6137
      %v6231 = vpack.c.bf16 %v6140, %v6139
      %v6232 = vpack.c.bf16 %v6142, %v6141
      %v6287 = vunpack.c.l.b16 %v6143
      %v6288 = vunpack.c.h.b16 %v6143
      %v6289 = vunpack.c.l.b16 %v6144
      %v6290 = vunpack.c.h.b16 %v6144
      %v6291 = vunpack.c.l.b16 %v6145
      %v6292 = vunpack.c.l.b16 %v6146
      %v6293 = vunpack.c.h.b16 %v6146
      %v6294 = vunpack.c.l.b16 %v6147
      %v6295 = vunpack.c.h.b16 %v6147
      %v6296 = vunpack.c.l.b16 %v6148
      %v6297 = vunpack.c.l.b16 %v6149
      %v6298 = vunpack.c.h.b16 %v6149
      %v6299 = vunpack.c.l.b16 %v6150
      %v6300 = vunpack.c.h.b16 %v6150
      %v6301 = vunpack.c.l.b16 %v6151
      %v6302 = vunpack.c.l.b16 %v6152
      %v6303 = vunpack.c.h.b16 %v6152
      %v6304 = vunpack.c.l.b16 %v6153
      %v6305 = vunpack.c.h.b16 %v6153
      %v6306 = vunpack.c.l.b16 %v6154
      %v6307 = vunpack.c.l.b16 %v6155
      %v6308 = vunpack.c.h.b16 %v6155
      %v6309 = vunpack.c.l.b16 %v6156
      %v6310 = vunpack.c.h.b16 %v6156
      %v6311 = vunpack.c.l.b16 %v6157
      %v6312 = vunpack.c.l.b16 %v6158
      %v6313 = vunpack.c.h.b16 %v6158
      %v6314 = vunpack.c.l.b16 %v6159
      %v6315 = vunpack.c.h.b16 %v6159
      %v6316 = vunpack.c.l.b16 %v6160
      %v6317 = vunpack.c.l.b16 %v6161
      %v6318 = vunpack.c.h.b16 %v6161
      %v6319 = vunpack.c.l.b16 %v6162
      %v6320 = vunpack.c.h.b16 %v6162
      %v6321 = vunpack.c.l.b16 %v6163
      %v6322 = vunpack.c.l.b16 %v6164
      %v6323 = vunpack.c.h.b16 %v6164
      %v6324 = vunpack.c.l.b16 %v6165
      %v6325 = vunpack.c.h.b16 %v6165
      %v6326 = vunpack.c.l.b16 %v6166
      %v6327 = vunpack.c.l.b16 %v6167
      %v6328 = vunpack.c.h.b16 %v6167
      %v6329 = vunpack.c.l.b16 %v6168
      %v6330 = vunpack.c.h.b16 %v6168
      %v6331 = vunpack.c.l.b16 %v6169
      %v6332 = vunpack.c.l.b16 %v6170
      %v6333 = vunpack.c.h.b16 %v6170
      %v6334 = vunpack.c.l.b16 %v6171
      %v6335 = vunpack.c.h.b16 %v6171
      %v6336 = vunpack.c.l.b16 %v6172
      %v6337 = vunpack.c.l.b16 %v6173
      %v6338 = vunpack.c.h.b16 %v6173
      %v6339 = vunpack.c.l.b16 %v6174
      %v6340 = vunpack.c.h.b16 %v6174
      %v6341 = vunpack.c.l.b16 %v6175
      %v6342 = vunpack.c.l.b16 %v6176
      %v6343 = vunpack.c.h.b16 %v6176
      %v6344 = vunpack.c.l.b16 %v6177
      %v6345 = vunpack.c.h.b16 %v6177
      %v6346 = vunpack.c.l.b16 %v6178
      %v6347 = vunpack.c.l.b16 %v6179
      %v6348 = vunpack.c.h.b16 %v6179
      %v6349 = vunpack.c.l.b16 %v6180
      %v6350 = vunpack.c.h.b16 %v6180
      %v6351 = vunpack.c.l.b16 %v6181
      %v6352 = vunpack.c.l.b16 %v6182
      %v6353 = vunpack.c.h.b16 %v6182
      %v6354 = vunpack.c.l.b16 %v6183
      %v6355 = vunpack.c.h.b16 %v6183
      %v6356 = vunpack.c.l.b16 %v6184
      %v6357 = vunpack.c.l.b16 %v6185
      %v6358 = vunpack.c.h.b16 %v6185
      %v6359 = vunpack.c.l.b16 %v6186
      %v6360 = vunpack.c.h.b16 %v6186
      %v6361 = vunpack.c.l.b16 %v6187
      %v6362 = vunpack.c.l.b16 %v6188
      %v6363 = vunpack.c.h.b16 %v6188
      %v6364 = vunpack.c.l.b16 %v6189
      %v6365 = vunpack.c.h.b16 %v6189
      %v6366 = vunpack.c.l.b16 %v6190
      %v6367 = vunpack.c.l.b16 %v6191
      %v6368 = vunpack.c.h.b16 %v6191
      %v6369 = vunpack.c.l.b16 %v6192
      %v6370 = vunpack.c.h.b16 %v6192
      %v6371 = vunpack.c.l.b16 %v6193
      %v6372 = vunpack.c.l.b16 %v6194
      %v6373 = vunpack.c.h.b16 %v6194
      %v6374 = vunpack.c.l.b16 %v6195
      %v6375 = vunpack.c.h.b16 %v6195
      %v6376 = vunpack.c.l.b16 %v6196
      %v6377 = vpack.c.b16 %v6292, %v6287
      %v6378 = vpack.c.b16 %v6293, %v6288
      %v6379 = vpack.c.b16 %v6294, %v6289
      %v6380 = vpack.c.b16 %v6295, %v6290
      %v6381 = vpack.c.b16 %v6296, %v6291
      %v6382 = vpack.c.b16 %v6302, %v6297
      %v6383 = vpack.c.b16 %v6303, %v6298
      %v6384 = vpack.c.b16 %v6304, %v6299
      %v6385 = vpack.c.b16 %v6305, %v6300
      %v6386 = vpack.c.b16 %v6306, %v6301
      %v6387 = vpack.c.b16 %v6312, %v6307
      %v6388 = vpack.c.b16 %v6313, %v6308
      %v6389 = vpack.c.b16 %v6314, %v6309
      %v6390 = vpack.c.b16 %v6315, %v6310
      %v6391 = vpack.c.b16 %v6316, %v6311
      %v6392 = vpack.c.b16 %v6322, %v6317
      %v6393 = vpack.c.b16 %v6323, %v6318
      %v6394 = vpack.c.b16 %v6324, %v6319
      %v6395 = vpack.c.b16 %v6325, %v6320
      %v6396 = vpack.c.b16 %v6326, %v6321
      %v6397 = vpack.c.b16 %v6332, %v6327
      %v6398 = vpack.c.b16 %v6333, %v6328
      %v6399 = vpack.c.b16 %v6334, %v6329
      %v6400 = vpack.c.b16 %v6335, %v6330
      %v6401 = vpack.c.b16 %v6336, %v6331
      %v6402 = vpack.c.b16 %v6342, %v6337
      %v6403 = vpack.c.b16 %v6343, %v6338
      %v6404 = vpack.c.b16 %v6344, %v6339
      %v6405 = vpack.c.b16 %v6345, %v6340
      %v6406 = vpack.c.b16 %v6346, %v6341
      %v6407 = vpack.c.b16 %v6352, %v6347
      %v6408 = vpack.c.b16 %v6353, %v6348
      %v6409 = vpack.c.b16 %v6354, %v6349
      %v6410 = vpack.c.b16 %v6355, %v6350
      %v6411 = vpack.c.b16 %v6356, %v6351
      %v6412 = vpack.c.b16 %v6362, %v6357
      %v6413 = vpack.c.b16 %v6363, %v6358
      %v6414 = vpack.c.b16 %v6364, %v6359
      %v6415 = vpack.c.b16 %v6365, %v6360
      %v6416 = vpack.c.b16 %v6366, %v6361
      %v6417 = vpack.c.b16 %v6372, %v6367
      %v6418 = vpack.c.b16 %v6373, %v6368
      %v6419 = vpack.c.b16 %v6374, %v6369
      %v6420 = vpack.c.b16 %v6375, %v6370
      %v6421 = vpack.c.b16 %v6376, %v6371
      %vm6458 = vcmask 523264
      %v6460 = vsel %vm6458, %v6381, 0
      %v6463 = vsel %vm6458, %v6386, 0
      %v6466 = vsel %vm6458, %v6391, 0
      %v6469 = vsel %vm6458, %v6396, 0
      %v6472 = vsel %vm6458, %v6401, 0
      %v6475 = vsel %vm6458, %v6406, 0
      %v6478 = vsel %vm6458, %v6411, 0
      %v6481 = vsel %vm6458, %v6416, 0
      %v6484 = vsel %vm6458, %v6421, 0
      %6486 = vmatpush.bf16.msra.mxu0 %v6204
      %6487 = vmatpush.bf16.msra.mxu0 %v6203
      %6488 = vmatpush.bf16.msra.mxu0 %v6202
      %6489 = vmatpush.bf16.msra.mxu0 %v6201
      %6490 = vmatpush.bf16.msra.mxu0 %v6200
      %6491 = vmatpush.bf16.msra.mxu0 %v6199
      %6492 = vmatpush.bf16.msra.mxu0 %v6198
      %6493 = vmatpush.bf16.msra.mxu0 %v6197
      %6494 = vmatmul.bf16.gmra.mxu0 %v6377
      %v6495 = vpop.f32.mrf.mxu0
      %v6496 = vadd.f32 0.0, %v6495
      %v6497 = vpop.f32.mrf.mxu0
      %v6498 = vadd.f32 0.0, %v6497
      %6499 = vmatmul.bf16.gmra.mxu0 %v6382
      %v6500 = vpop.f32.mrf.mxu0
      %v6501 = vadd.f32 0.0, %v6500
      %v6502 = vpop.f32.mrf.mxu0
      %v6503 = vadd.f32 0.0, %v6502
      %6504 = vmatmul.bf16.gmra.mxu0 %v6387
      %v6505 = vpop.f32.mrf.mxu0
      %v6506 = vadd.f32 0.0, %v6505
      %v6507 = vpop.f32.mrf.mxu0
      %v6508 = vadd.f32 0.0, %v6507
      %6509 = vmatmul.bf16.gmra.mxu0 %v6392
      %v6510 = vpop.f32.mrf.mxu0
      %v6511 = vadd.f32 0.0, %v6510
      %v6512 = vpop.f32.mrf.mxu0
      %v6513 = vadd.f32 0.0, %v6512
      %6514 = vmatmul.bf16.gmra.mxu0 %v6397
      %v6515 = vpop.f32.mrf.mxu0
      %v6516 = vadd.f32 0.0, %v6515
      %v6517 = vpop.f32.mrf.mxu0
      %v6518 = vadd.f32 0.0, %v6517
      %6519 = vmatmul.bf16.gmra.mxu0 %v6402
      %v6520 = vpop.f32.mrf.mxu0
      %v6521 = vadd.f32 0.0, %v6520
      %v6522 = vpop.f32.mrf.mxu0
      %v6523 = vadd.f32 0.0, %v6522
      %6524 = vmatmul.bf16.gmra.mxu0 %v6407
      %v6525 = vpop.f32.mrf.mxu0
      %v6526 = vadd.f32 0.0, %v6525
      %v6527 = vpop.f32.mrf.mxu0
      %v6528 = vadd.f32 0.0, %v6527
      %6529 = vmatmul.bf16.gmra.mxu0 %v6412
      %v6530 = vpop.f32.mrf.mxu0
      %v6531 = vadd.f32 0.0, %v6530
      %v6532 = vpop.f32.mrf.mxu0
      %v6533 = vadd.f32 0.0, %v6532
      %6534 = vmatmul.bf16.gmra.mxu0 %v6417
      %v6535 = vpop.f32.mrf.mxu0
      %v6536 = vadd.f32 0.0, %v6535
      %v6537 = vpop.f32.mrf.mxu0
      %v6538 = vadd.f32 0.0, %v6537
      %6539 = vdwg.mxu0
      %6540 = vmatpush.bf16.msra.mxu0 %v6212
      %6541 = vmatpush.bf16.msra.mxu0 %v6211
      %6542 = vmatpush.bf16.msra.mxu0 %v6210
      %6543 = vmatpush.bf16.msra.mxu0 %v6209
      %6544 = vmatpush.bf16.msra.mxu0 %v6208
      %6545 = vmatpush.bf16.msra.mxu0 %v6207
      %6546 = vmatpush.bf16.msra.mxu0 %v6206
      %6547 = vmatpush.bf16.msra.mxu0 %v6205
      %6548 = vmatmul.bf16.gmra.mxu0 %v6378
      %v6549 = vpop.f32.mrf.mxu0
      %v6550 = vadd.f32 %v6496, %v6549
      %v6551 = vpop.f32.mrf.mxu0
      %v6552 = vadd.f32 %v6498, %v6551
      %6553 = vmatmul.bf16.gmra.mxu0 %v6383
      %v6554 = vpop.f32.mrf.mxu0
      %v6555 = vadd.f32 %v6501, %v6554
      %v6556 = vpop.f32.mrf.mxu0
      %v6557 = vadd.f32 %v6503, %v6556
      %6558 = vmatmul.bf16.gmra.mxu0 %v6388
      %v6559 = vpop.f32.mrf.mxu0
      %v6560 = vadd.f32 %v6506, %v6559
      %v6561 = vpop.f32.mrf.mxu0
      %v6562 = vadd.f32 %v6508, %v6561
      %6563 = vmatmul.bf16.gmra.mxu0 %v6393
      %v6564 = vpop.f32.mrf.mxu0
      %v6565 = vadd.f32 %v6511, %v6564
      %v6566 = vpop.f32.mrf.mxu0
      %v6567 = vadd.f32 %v6513, %v6566
      %6568 = vmatmul.bf16.gmra.mxu0 %v6398
      %v6569 = vpop.f32.mrf.mxu0
      %v6570 = vadd.f32 %v6516, %v6569
      %v6571 = vpop.f32.mrf.mxu0
      %v6572 = vadd.f32 %v6518, %v6571
      %6573 = vmatmul.bf16.gmra.mxu0 %v6403
      %v6574 = vpop.f32.mrf.mxu0
      %v6575 = vadd.f32 %v6521, %v6574
      %v6576 = vpop.f32.mrf.mxu0
      %v6577 = vadd.f32 %v6523, %v6576
      %6578 = vmatmul.bf16.gmra.mxu0 %v6408
      %v6579 = vpop.f32.mrf.mxu0
      %v6580 = vadd.f32 %v6526, %v6579
      %v6581 = vpop.f32.mrf.mxu0
      %v6582 = vadd.f32 %v6528, %v6581
      %6583 = vmatmul.bf16.gmra.mxu0 %v6413
      %v6584 = vpop.f32.mrf.mxu0
      %v6585 = vadd.f32 %v6531, %v6584
      %v6586 = vpop.f32.mrf.mxu0
      %v6587 = vadd.f32 %v6533, %v6586
      %6588 = vmatmul.bf16.gmra.mxu0 %v6418
      %v6589 = vpop.f32.mrf.mxu0
      %v6590 = vadd.f32 %v6536, %v6589
      %v6591 = vpop.f32.mrf.mxu0
      %v6592 = vadd.f32 %v6538, %v6591
      %6593 = vdwg.mxu0
      %6594 = vmatpush.bf16.msra.mxu0 %v6220
      %6595 = vmatpush.bf16.msra.mxu0 %v6219
      %6596 = vmatpush.bf16.msra.mxu0 %v6218
      %6597 = vmatpush.bf16.msra.mxu0 %v6217
      %6598 = vmatpush.bf16.msra.mxu0 %v6216
      %6599 = vmatpush.bf16.msra.mxu0 %v6215
      %6600 = vmatpush.bf16.msra.mxu0 %v6214
      %6601 = vmatpush.bf16.msra.mxu0 %v6213
      %6602 = vmatmul.bf16.gmra.mxu0 %v6379
      %v6603 = vpop.f32.mrf.mxu0
      %v6604 = vadd.f32 %v6550, %v6603
      %v6605 = vpop.f32.mrf.mxu0
      %v6606 = vadd.f32 %v6552, %v6605
      %6607 = vmatmul.bf16.gmra.mxu0 %v6384
      %v6608 = vpop.f32.mrf.mxu0
      %v6609 = vadd.f32 %v6555, %v6608
      %v6610 = vpop.f32.mrf.mxu0
      %v6611 = vadd.f32 %v6557, %v6610
      %6612 = vmatmul.bf16.gmra.mxu0 %v6389
      %v6613 = vpop.f32.mrf.mxu0
      %v6614 = vadd.f32 %v6560, %v6613
      %v6615 = vpop.f32.mrf.mxu0
      %v6616 = vadd.f32 %v6562, %v6615
      %6617 = vmatmul.bf16.gmra.mxu0 %v6394
      %v6618 = vpop.f32.mrf.mxu0
      %v6619 = vadd.f32 %v6565, %v6618
      %v6620 = vpop.f32.mrf.mxu0
      %v6621 = vadd.f32 %v6567, %v6620
      %6622 = vmatmul.bf16.gmra.mxu0 %v6399
      %v6623 = vpop.f32.mrf.mxu0
      %v6624 = vadd.f32 %v6570, %v6623
      %v6625 = vpop.f32.mrf.mxu0
      %v6626 = vadd.f32 %v6572, %v6625
      %6627 = vmatmul.bf16.gmra.mxu0 %v6404
      %v6628 = vpop.f32.mrf.mxu0
      %v6629 = vadd.f32 %v6575, %v6628
      %v6630 = vpop.f32.mrf.mxu0
      %v6631 = vadd.f32 %v6577, %v6630
      %6632 = vmatmul.bf16.gmra.mxu0 %v6409
      %v6633 = vpop.f32.mrf.mxu0
      %v6634 = vadd.f32 %v6580, %v6633
      %v6635 = vpop.f32.mrf.mxu0
      %v6636 = vadd.f32 %v6582, %v6635
      %6637 = vmatmul.bf16.gmra.mxu0 %v6414
      %v6638 = vpop.f32.mrf.mxu0
      %v6639 = vadd.f32 %v6585, %v6638
      %v6640 = vpop.f32.mrf.mxu0
      %v6641 = vadd.f32 %v6587, %v6640
      %6642 = vmatmul.bf16.gmra.mxu0 %v6419
      %v6643 = vpop.f32.mrf.mxu0
      %v6644 = vadd.f32 %v6590, %v6643
      %v6645 = vpop.f32.mrf.mxu0
      %v6646 = vadd.f32 %v6592, %v6645
      %6647 = vdwg.mxu0
      %6648 = vmatpush.bf16.msra.mxu0 %v6228
      %6649 = vmatpush.bf16.msra.mxu0 %v6227
      %6650 = vmatpush.bf16.msra.mxu0 %v6226
      %6651 = vmatpush.bf16.msra.mxu0 %v6225
      %6652 = vmatpush.bf16.msra.mxu0 %v6224
      %6653 = vmatpush.bf16.msra.mxu0 %v6223
      %6654 = vmatpush.bf16.msra.mxu0 %v6222
      %6655 = vmatpush.bf16.msra.mxu0 %v6221
      %6656 = vmatmul.bf16.gmra.mxu0 %v6380
      %v6657 = vpop.f32.mrf.mxu0
      %v6658 = vadd.f32 %v6604, %v6657
      %v6659 = vpop.f32.mrf.mxu0
      %v6660 = vadd.f32 %v6606, %v6659
      %6661 = vmatmul.bf16.gmra.mxu0 %v6385
      %v6662 = vpop.f32.mrf.mxu0
      %v6663 = vadd.f32 %v6609, %v6662
      %v6664 = vpop.f32.mrf.mxu0
      %v6665 = vadd.f32 %v6611, %v6664
      %6666 = vmatmul.bf16.gmra.mxu0 %v6390
      %v6667 = vpop.f32.mrf.mxu0
      %v6668 = vadd.f32 %v6614, %v6667
      %v6669 = vpop.f32.mrf.mxu0
      %v6670 = vadd.f32 %v6616, %v6669
      %6671 = vmatmul.bf16.gmra.mxu0 %v6395
      %v6672 = vpop.f32.mrf.mxu0
      %v6673 = vadd.f32 %v6619, %v6672
      %v6674 = vpop.f32.mrf.mxu0
      %v6675 = vadd.f32 %v6621, %v6674
      %6676 = vmatmul.bf16.gmra.mxu0 %v6400
      %v6677 = vpop.f32.mrf.mxu0
      %v6678 = vadd.f32 %v6624, %v6677
      %v6679 = vpop.f32.mrf.mxu0
      %v6680 = vadd.f32 %v6626, %v6679
      %6681 = vmatmul.bf16.gmra.mxu0 %v6405
      %v6682 = vpop.f32.mrf.mxu0
      %v6683 = vadd.f32 %v6629, %v6682
      %v6684 = vpop.f32.mrf.mxu0
      %v6685 = vadd.f32 %v6631, %v6684
      %6686 = vmatmul.bf16.gmra.mxu0 %v6410
      %v6687 = vpop.f32.mrf.mxu0
      %v6688 = vadd.f32 %v6634, %v6687
      %v6689 = vpop.f32.mrf.mxu0
      %v6690 = vadd.f32 %v6636, %v6689
      %6691 = vmatmul.bf16.gmra.mxu0 %v6415
      %v6692 = vpop.f32.mrf.mxu0
      %v6693 = vadd.f32 %v6639, %v6692
      %v6694 = vpop.f32.mrf.mxu0
      %v6695 = vadd.f32 %v6641, %v6694
      %6696 = vmatmul.bf16.gmra.mxu0 %v6420
      %v6697 = vpop.f32.mrf.mxu0
      %v6698 = vadd.f32 %v6644, %v6697
      %v6699 = vpop.f32.mrf.mxu0
      %v6700 = vadd.f32 %v6646, %v6699
      %6701 = vdwg.mxu0
      %6702 = vmatpush.bf16.msra.mxu0 0
      %6703 = vmatpush.bf16.msra.mxu0 0
      %6704 = vmatpush.bf16.msra.mxu0 0
      %6705 = vmatpush.bf16.msra.mxu0 0
      %6706 = vmatpush.bf16.msra.mxu0 %v6232
      %6707 = vmatpush.bf16.msra.mxu0 %v6231
      %6708 = vmatpush.bf16.msra.mxu0 %v6230
      %6709 = vmatpush.bf16.msra.mxu0 %v6229
      %6710 = vmatmul.bf16.gmra.mxu0 %v6460
      %v6711 = vpop.f32.mrf.mxu0
      %v6712 = vadd.f32 %v6658, %v6711
      %v6713 = vpop.f32.mrf.mxu0
      %v6714 = vadd.f32 %v6660, %v6713
      %6715 = vmatmul.bf16.gmra.mxu0 %v6463
      %v6716 = vpop.f32.mrf.mxu0
      %v6717 = vadd.f32 %v6663, %v6716
      %v6718 = vpop.f32.mrf.mxu0
      %v6719 = vadd.f32 %v6665, %v6718
      %6720 = vmatmul.bf16.gmra.mxu0 %v6466
      %v6721 = vpop.f32.mrf.mxu0
      %v6722 = vadd.f32 %v6668, %v6721
      %v6723 = vpop.f32.mrf.mxu0
      %v6724 = vadd.f32 %v6670, %v6723
      %6725 = vmatmul.bf16.gmra.mxu0 %v6469
      %v6726 = vpop.f32.mrf.mxu0
      %v6727 = vadd.f32 %v6673, %v6726
      %v6728 = vpop.f32.mrf.mxu0
      %v6729 = vadd.f32 %v6675, %v6728
      %6730 = vmatmul.bf16.gmra.mxu0 %v6472
      %v6731 = vpop.f32.mrf.mxu0
      %v6732 = vadd.f32 %v6678, %v6731
      %v6733 = vpop.f32.mrf.mxu0
      %v6734 = vadd.f32 %v6680, %v6733
      %6735 = vmatmul.bf16.gmra.mxu0 %v6475
      %v6736 = vpop.f32.mrf.mxu0
      %v6737 = vadd.f32 %v6683, %v6736
      %v6738 = vpop.f32.mrf.mxu0
      %v6739 = vadd.f32 %v6685, %v6738
      %6740 = vmatmul.bf16.gmra.mxu0 %v6478
      %v6741 = vpop.f32.mrf.mxu0
      %v6742 = vadd.f32 %v6688, %v6741
      %v6743 = vpop.f32.mrf.mxu0
      %v6744 = vadd.f32 %v6690, %v6743
      %6745 = vmatmul.bf16.gmra.mxu0 %v6481
      %v6746 = vpop.f32.mrf.mxu0
      %v6747 = vadd.f32 %v6693, %v6746
      %v6748 = vpop.f32.mrf.mxu0
      %v6749 = vadd.f32 %v6695, %v6748
      %6750 = vmatmul.bf16.gmra.mxu0 %v6484
      %v6751 = vpop.f32.mrf.mxu0
      %v6752 = vadd.f32 %v6698, %v6751
      %v6753 = vpop.f32.mrf.mxu0
      %v6754 = vadd.f32 %v6700, %v6753
      %6755 = vdwg.mxu0
      %v6756 = vpack.c.bf16 %v6712, %v6712
      %v6757 = vpack.c.bf16 %v6714, %v6714
      %v6758 = vpack.c.bf16 %v6717, %v6717
      %v6759 = vpack.c.bf16 %v6719, %v6719
      %v6760 = vpack.c.bf16 %v6722, %v6722
      %v6761 = vpack.c.bf16 %v6724, %v6724
      %v6762 = vpack.c.bf16 %v6727, %v6727
      %v6763 = vpack.c.bf16 %v6729, %v6729
      %v6764 = vpack.c.bf16 %v6732, %v6732
      %v6765 = vpack.c.bf16 %v6734, %v6734
      %v6766 = vpack.c.bf16 %v6737, %v6737
      %v6767 = vpack.c.bf16 %v6739, %v6739
      %v6768 = vpack.c.bf16 %v6742, %v6742
      %v6769 = vpack.c.bf16 %v6744, %v6744
      %v6770 = vpack.c.bf16 %v6747, %v6747
      %v6771 = vpack.c.bf16 %v6749, %v6749
      %v6772 = vpack.c.bf16 %v6752, %v6752
      %v6773 = vpack.c.bf16 %v6754, %v6754
      %vm6774 = vcmask 519168
      %6775 = vst.msk [vmem:[%s251] sm:$0xf] %vm6774, %v6756
      %6776 = vst.msk [vmem:[%s251 + $0x4] sm:$0xf] %vm6774, %v6757
      %6777 = vst.msk [vmem:[%s251 + $0x8] sm:$0xf] %vm6774, %v6758
      %6778 = vst.msk [vmem:[%s251 + $0xc] sm:$0xf] %vm6774, %v6759
      %6779 = vst.msk [vmem:[%s251 + $0x10] sm:$0xf] %vm6774, %v6760
      %6780 = vst.msk [vmem:[%s251 + $0x14] sm:$0xf] %vm6774, %v6761
      %6781 = vst.msk [vmem:[%s251 + $0x18] sm:$0xf] %vm6774, %v6762
      %6782 = vst.msk [vmem:[%s251 + $0x1c] sm:$0xf] %vm6774, %v6763
      %6783 = vst.msk [vmem:[%s251 + $0x20] sm:$0xf] %vm6774, %v6764
      %6784 = vst.msk [vmem:[%s251 + $0x24] sm:$0xf] %vm6774, %v6765
      %6785 = vst.msk [vmem:[%s251 + $0x28] sm:$0xf] %vm6774, %v6766
      %6786 = vst.msk [vmem:[%s251 + $0x2c] sm:$0xf] %vm6774, %v6767
      %6787 = vst.msk [vmem:[%s251 + $0x30] sm:$0xf] %vm6774, %v6768
      %6788 = vst.msk [vmem:[%s251 + $0x34] sm:$0xf] %vm6774, %v6769
      %6789 = vst.msk [vmem:[%s251 + $0x38] sm:$0xf] %vm6774, %v6770
      %6790 = vst.msk [vmem:[%s251 + $0x3c] sm:$0xf] %vm6774, %v6771
      %6791 = vst.msk [vmem:[%s251 + $0x40] sm:$0xf] %vm6774, %v6772
      %6792 = vst.msk [vmem:[%s251 + $0x44] sm:$0xf] %vm6774, %v6773
      %p6793 = scmp.lt.s32.totalorder %s17, 1
      %s6794 = scalar_select %p6793, %s17, 1
      %s6795 = smul.addr %s6794, 18
      %s6796 = smul.addr %s6795, 4
      %s6797 = scalar_lea.vmem %s6, %s6796
      // Predicated region
      $region45: #{net_forward.2} parent=43 // pred_check
        %p6798 = pneg %p166
      $region46: #{net_forward.2} parent=43 // pred_check_branch
        %6800 = sbr.rel (%p6798) target = $region48
      $region47: #{net_forward.2} parent=43 // pred_region
        _
      $region48: #{net_forward.2} parent=43 // pred_fallthru
        _
    $region44: #{net_forward.2} parent=5 // pred_fallthru
      _
    %p6801 = scmp.le.s32.totalorder 2, %s12
    // Predicated region
    $region49: #{net_forward.2} parent=5 // pred_check
      %p6802 = pneg %p6801
    $region50: #{net_forward.2} parent=5 // pred_check_branch
      %6804 = sbr.rel (%p6802) target = $region52
    $region51: #{net_forward.2} parent=5 // pred_region
      %s6805 = ssub.s32 %s12, 2
      // Predicated region
      $region53: #{net_forward.2} parent=51 // pred_check
        %p6806 = pneg %p172
      $region54: #{net_forward.2} parent=51 // pred_check_branch
        %6808 = sbr.rel (%p6806) target = $region56
      $region55: #{net_forward.2} parent=51 // pred_region
        %p6809 = scmp.lt.s32.totalorder %s18, 1
        %s6810 = scalar_select %p6809, %s18, 1
        %s6811 = smul.addr %s6810, 18
        %s6812 = smul.addr %s6811, 4
        %s6813 = scalar_lea.vmem %s6, %s6812
      $region56: #{net_forward.2} parent=51 // pred_fallthru
        _
    $region52: #{net_forward.2} parent=5 // pred_fallthru
      _
  $region6: #{net_forward.2} parent=0 // loop_footer
    %s16 = sadd.s32 1, %s12
  $region7: #{net_forward.2} parent=0 // loop_footer_branch
    %11 = sbr.rel target = $region3
  $region8: #{net_forward.2} parent=0 // loop_exit
    _

// kernel: net_forward.3
$region0: #{net_forward.3}
  #allocation0 [shape = 'u32[]', space=smem, size = 0x4, offset = 0x4, fixed_abs, tag = 'smem constant byte address 0x4 - core index']
  #allocation1 [shape = 'u32[72,128]{1,0:T(1,128)}', space=vmem, size = 0x9000, scoped, tag = 'internal scratch']
  %s0 = inlined_call_operand.vmem [shape: bf16[2,9216], index: 0, kind: input, shape index: {}]
  %s1 = inlined_call_operand.vmem [shape: bf16[9216,128], index: 1, kind: input, shape index: {}]
  %s2 = inlined_call_operand.vmem [shape: f32[1,128], index: 2, kind: input, shape index: {}]
  %s3 = inlined_call_operand.vmem [shape: f32[128,10], index: 3, kind: input, shape index: {}]
  %s4 = inlined_call_operand.vmem [shape: f32[1,10], index: 4, kind: input, shape index: {}]
  %s5 = inlined_call_operand.hbm [shape: f32[2,10], index: 5, kind: output, shape index: {}]
  %s6 = sld [smem:[#allocation0]]
  $region30: #{net_forward.3} parent=0
    _
  %s8 = ssub.s32 1, %s6
  %s9 = scalar_select 0, %s8, %s6
  $region1: #{net_forward.3} parent=0
    #allocation2 [shape = 'u8[1024]{0}', space=vmem, size = 0x400, scoped, tag = 'output window, operand 0, single buffered']
    #allocation3 [shape = 's32[1]{0}', space=sflag, size = 0x4, scoped, tag = 'scoped memory for net_forward.3']
    %10 = vsyncpa [#allocation3], 0
    // Predicated region
    $region2: #{net_forward.3} parent=1 // pred_check
      _
    $region3: #{net_forward.3} parent=1 // pred_check_branch
      %12 = sbr.rel (0) target = $region5
    $region4: #{net_forward.3} parent=1 // pred_region
      _
    $region5: #{net_forward.3} parent=1 // pred_fallthru
      _
    // Predicated region
    $region6: #{net_forward.3} parent=1 // pred_check
      _
    $region7: #{net_forward.3} parent=1 // pred_check_branch
      %14 = sbr.rel (0) target = $region9
    $region8: #{net_forward.3} parent=1 // pred_region
      _
    $region9: #{net_forward.3} parent=1 // pred_fallthru
      _
    // Predicated region
    $region10: #{net_forward.3} parent=1 // pred_check
      _
    $region11: #{net_forward.3} parent=1 // pred_check_branch
      %16 = sbr.rel (0) target = $region13
    $region12: #{net_forward.3} parent=1 // pred_region
      _
    $region13: #{net_forward.3} parent=1 // pred_fallthru
      _
    // Predicated region
    $region14: #{net_forward.3} parent=1 // pred_check
      _
    $region15: #{net_forward.3} parent=1 // pred_check_branch
      %18 = sbr.rel (0) target = $region17
    $region16: #{net_forward.3} parent=1 // pred_region
      _
    $region17: #{net_forward.3} parent=1 // pred_fallthru
      _
    // Predicated region
    $region18: #{net_forward.3} parent=1 // pred_check
      _
    $region19: #{net_forward.3} parent=1 // pred_check_branch
      %20 = sbr.rel (0) target = $region21
    $region20: #{net_forward.3} parent=1 // pred_region
      _
    $region21: #{net_forward.3} parent=1 // pred_fallthru
      _
    %v21 = vld [vmem:[%s0] sm:$0xff]
    %v22 = vld [vmem:[%s0 + $0x8] sm:$0xff]
    %v23 = vld [vmem:[%s0 + $0x10] sm:$0xff]
    %v24 = vld [vmem:[%s0 + $0x18] sm:$0xff]
    %v25 = vld [vmem:[%s0 + $0x20] sm:$0xff]
    %v26 = vld [vmem:[%s0 + $0x28] sm:$0xff]
    %v27 = vld [vmem:[%s0 + $0x30] sm:$0xff]
    %v28 = vld [vmem:[%s0 + $0x38] sm:$0xff]
    %v29 = vld [vmem:[%s0 + $0x40] sm:$0xff]
    %v30 = vld [vmem:[%s1] sm:$0xf]
    %v31 = vld [vmem:[%s1 + $0x4] sm:$0xf]
    %v32 = vld [vmem:[%s1 + $0x8] sm:$0xf]
    %v33 = vld [vmem:[%s1 + $0xc] sm:$0xf]
    %v34 = vld [vmem:[%s1 + $0x10] sm:$0xf]
    %v35 = vld [vmem:[%s1 + $0x14] sm:$0xf]
    %v36 = vld [vmem:[%s1 + $0x18] sm:$0xf]
    %v37 = vld [vmem:[%s1 + $0x1c] sm:$0xf]
    %v38 = vld [vmem:[%s1 + $0x20] sm:$0xf]
    %v39 = vld [vmem:[%s1 + $0x24] sm:$0xf]
    %v40 = vld [vmem:[%s1 + $0x28] sm:$0xf]
    %v41 = vld [vmem:[%s1 + $0x2c] sm:$0xf]
    %v42 = vld [vmem:[%s1 + $0x30] sm:$0xf]
    %v43 = vld [vmem:[%s1 + $0x34] sm:$0xf]
    %v44 = vld [vmem:[%s1 + $0x38] sm:$0xf]
    %v45 = vld [vmem:[%s1 + $0x3c] sm:$0xf]
    %v46 = vld [vmem:[%s1 + $0x40] sm:$0xf]
    %v47 = vld [vmem:[%s1 + $0x44] sm:$0xf]
    %v48 = vld [vmem:[%s1 + $0x48] sm:$0xf]
    %v49 = vld [vmem:[%s1 + $0x4c] sm:$0xf]
    %v50 = vld [vmem:[%s1 + $0x50] sm:$0xf]
    %v51 = vld [vmem:[%s1 + $0x54] sm:$0xf]
    %v52 = vld [vmem:[%s1 + $0x58] sm:$0xf]
    %v53 = vld [vmem:[%s1 + $0x5c] sm:$0xf]
    %v54 = vld [vmem:[%s1 + $0x60] sm:$0xf]
    %v55 = vld [vmem:[%s1 + $0x64] sm:$0xf]
    %v56 = vld [vmem:[%s1 + $0x68] sm:$0xf]
    %v57 = vld [vmem:[%s1 + $0x6c] sm:$0xf]
    %v58 = vld [vmem:[%s1 + $0x70] sm:$0xf]
    %v59 = vld [vmem:[%s1 + $0x74] sm:$0xf]
    %v60 = vld [vmem:[%s1 + $0x78] sm:$0xf]
    %v61 = vld [vmem:[%s1 + $0x7c] sm:$0xf]
    %v62 = vld [vmem:[%s1 + $0x80] sm:$0xf]
    %v63 = vld [vmem:[%s1 + $0x84] sm:$0xf]
    %v64 = vld [vmem:[%s1 + $0x88] sm:$0xf]
    %v65 = vld [vmem:[%s1 + $0x8c] sm:$0xf]
    %v66 = vld [vmem:[%s1 + $0x90] sm:$0xf]
    %v67 = vld [vmem:[%s1 + $0x94] sm:$0xf]
    %v68 = vld [vmem:[%s1 + $0x98] sm:$0xf]
    %v69 = vld [vmem:[%s1 + $0x9c] sm:$0xf]
    %v70 = vld [vmem:[%s1 + $0xa0] sm:$0xf]
    %v71 = vld [vmem:[%s1 + $0xa4] sm:$0xf]
    %v72 = vld [vmem:[%s1 + $0xa8] sm:$0xf]
    %v73 = vld [vmem:[%s1 + $0xac] sm:$0xf]
    %v74 = vld [vmem:[%s1 + $0xb0] sm:$0xf]
    %v75 = vld [vmem:[%s1 + $0xb4] sm:$0xf]
    %v76 = vld [vmem:[%s1 + $0xb8] sm:$0xf]
    %v77 = vld [vmem:[%s1 + $0xbc] sm:$0xf]
    %v78 = vld [vmem:[%s1 + $0xc0] sm:$0xf]
    %v79 = vld [vmem:[%s1 + $0xc4] sm:$0xf]
    %v80 = vld [vmem:[%s1 + $0xc8] sm:$0xf]
    %v81 = vld [vmem:[%s1 + $0xcc] sm:$0xf]
    %v82 = vld [vmem:[%s1 + $0xd0] sm:$0xf]
    %v83 = vld [vmem:[%s1 + $0xd4] sm:$0xf]
    %v84 = vld [vmem:[%s1 + $0xd8] sm:$0xf]
    %v85 = vld [vmem:[%s1 + $0xdc] sm:$0xf]
    %v86 = vld [vmem:[%s1 + $0xe0] sm:$0xf]
    %v87 = vld [vmem:[%s1 + $0xe4] sm:$0xf]
    %v88 = vld [vmem:[%s1 + $0xe8] sm:$0xf]
    %v89 = vld [vmem:[%s1 + $0xec] sm:$0xf]
    %v90 = vld [vmem:[%s1 + $0xf0] sm:$0xf]
    %v91 = vld [vmem:[%s1 + $0xf4] sm:$0xf]
    %v92 = vld [vmem:[%s1 + $0xf8] sm:$0xf]
    %v93 = vld [vmem:[%s1 + $0xfc] sm:$0xf]
    %v94 = vld [vmem:[%s1 + $0x100] sm:$0xf]
    %v95 = vld [vmem:[%s1 + $0x104] sm:$0xf]
    %v96 = vld [vmem:[%s1 + $0x108] sm:$0xf]
    %v97 = vld [vmem:[%s1 + $0x10c] sm:$0xf]
    %v98 = vld [vmem:[%s1 + $0x110] sm:$0xf]
    %v99 = vld [vmem:[%s1 + $0x114] sm:$0xf]
    %v100 = vld [vmem:[%s1 + $0x118] sm:$0xf]
    %v101 = vld [vmem:[%s1 + $0x11c] sm:$0xf]
    %v102 = vld [vmem:[%s1 + $0x120] sm:$0xf]
    %v103 = vld [vmem:[%s1 + $0x124] sm:$0xf]
    %v104 = vld [vmem:[%s1 + $0x128] sm:$0xf]
    %v105 = vld [vmem:[%s1 + $0x12c] sm:$0xf]
    %v106 = vld [vmem:[%s1 + $0x130] sm:$0xf]
    %v107 = vld [vmem:[%s1 + $0x134] sm:$0xf]
    %v108 = vld [vmem:[%s1 + $0x138] sm:$0xf]
    %v109 = vld [vmem:[%s1 + $0x13c] sm:$0xf]
    %v110 = vld [vmem:[%s1 + $0x140] sm:$0xf]
    %v111 = vld [vmem:[%s1 + $0x144] sm:$0xf]
    %v112 = vld [vmem:[%s1 + $0x148] sm:$0xf]
    %v113 = vld [vmem:[%s1 + $0x14c] sm:$0xf]
    %v114 = vld [vmem:[%s1 + $0x150] sm:$0xf]
    %v115 = vld [vmem:[%s1 + $0x154] sm:$0xf]
    %v116 = vld [vmem:[%s1 + $0x158] sm:$0xf]
    %v117 = vld [vmem:[%s1 + $0x15c] sm:$0xf]
    %v118 = vld [vmem:[%s1 + $0x160] sm:$0xf]
    %v119 = vld [vmem:[%s1 + $0x164] sm:$0xf]
    %v120 = vld [vmem:[%s1 + $0x168] sm:$0xf]
    %v121 = vld [vmem:[%s1 + $0x16c] sm:$0xf]
    %v122 = vld [vmem:[%s1 + $0x170] sm:$0xf]
    %v123 = vld [vmem:[%s1 + $0x174] sm:$0xf]
    %v124 = vld [vmem:[%s1 + $0x178] sm:$0xf]
    %v125 = vld [vmem:[%s1 + $0x17c] sm:$0xf]
    %v126 = vld [vmem:[%s1 + $0x180] sm:$0xf]
    %v127 = vld [vmem:[%s1 + $0x184] sm:$0xf]
    %v128 = vld [vmem:[%s1 + $0x188] sm:$0xf]
    %v129 = vld [vmem:[%s1 + $0x18c] sm:$0xf]
    %v130 = vld [vmem:[%s1 + $0x190] sm:$0xf]
    %v131 = vld [vmem:[%s1 + $0x194] sm:$0xf]
    %v132 = vld [vmem:[%s1 + $0x198] sm:$0xf]
    %v133 = vld [vmem:[%s1 + $0x19c] sm:$0xf]
    %v134 = vld [vmem:[%s1 + $0x1a0] sm:$0xf]
    %v135 = vld [vmem:[%s1 + $0x1a4] sm:$0xf]
    %v136 = vld [vmem:[%s1 + $0x1a8] sm:$0xf]
    %v137 = vld [vmem:[%s1 + $0x1ac] sm:$0xf]
    %v138 = vld [vmem:[%s1 + $0x1b0] sm:$0xf]
    %v139 = vld [vmem:[%s1 + $0x1b4] sm:$0xf]
    %v140 = vld [vmem:[%s1 + $0x1b8] sm:$0xf]
    %v141 = vld [vmem:[%s1 + $0x1bc] sm:$0xf]
    %v142 = vld [vmem:[%s1 + $0x1c0] sm:$0xf]
    %v143 = vld [vmem:[%s1 + $0x1c4] sm:$0xf]
    %v144 = vld [vmem:[%s1 + $0x1c8] sm:$0xf]
    %v145 = vld [vmem:[%s1 + $0x1cc] sm:$0xf]
    %v146 = vld [vmem:[%s1 + $0x1d0] sm:$0xf]
    %v147 = vld [vmem:[%s1 + $0x1d4] sm:$0xf]
    %v148 = vld [vmem:[%s1 + $0x1d8] sm:$0xf]
    %v149 = vld [vmem:[%s1 + $0x1dc] sm:$0xf]
    %v150 = vld [vmem:[%s1 + $0x1e0] sm:$0xf]
    %v151 = vld [vmem:[%s1 + $0x1e4] sm:$0xf]
    %v152 = vld [vmem:[%s1 + $0x1e8] sm:$0xf]
    %v153 = vld [vmem:[%s1 + $0x1ec] sm:$0xf]
    %v154 = vld [vmem:[%s1 + $0x1f0] sm:$0xf]
    %v155 = vld [vmem:[%s1 + $0x1f4] sm:$0xf]
    %v156 = vld [vmem:[%s1 + $0x1f8] sm:$0xf]
    %v157 = vld [vmem:[%s1 + $0x1fc] sm:$0xf]
    %v158 = vld [vmem:[%s1 + $0x200] sm:$0xf]
    %v159 = vld [vmem:[%s1 + $0x204] sm:$0xf]
    %v160 = vld [vmem:[%s1 + $0x208] sm:$0xf]
    %v161 = vld [vmem:[%s1 + $0x20c] sm:$0xf]
    %v162 = vld [vmem:[%s1 + $0x210] sm:$0xf]
    %v163 = vld [vmem:[%s1 + $0x214] sm:$0xf]
    %v164 = vld [vmem:[%s1 + $0x218] sm:$0xf]
    %v165 = vld [vmem:[%s1 + $0x21c] sm:$0xf]
    %v166 = vld [vmem:[%s1 + $0x220] sm:$0xf]
    %v167 = vld [vmem:[%s1 + $0x224] sm:$0xf]
    %v168 = vld [vmem:[%s1 + $0x228] sm:$0xf]
    %v169 = vld [vmem:[%s1 + $0x22c] sm:$0xf]
    %v170 = vld [vmem:[%s1 + $0x230] sm:$0xf]
    %v171 = vld [vmem:[%s1 + $0x234] sm:$0xf]
    %v172 = vld [vmem:[%s1 + $0x238] sm:$0xf]
    %v173 = vld [vmem:[%s1 + $0x23c] sm:$0xf]
    %v174 = vld [vmem:[%s1 + $0x240] sm:$0xf]
    %v175 = vld [vmem:[%s1 + $0x244] sm:$0xf]
    %v176 = vld [vmem:[%s1 + $0x248] sm:$0xf]
    %v177 = vld [vmem:[%s1 + $0x24c] sm:$0xf]
    %v178 = vld [vmem:[%s1 + $0x250] sm:$0xf]
    %v179 = vld [vmem:[%s1 + $0x254] sm:$0xf]
    %v180 = vld [vmem:[%s1 + $0x258] sm:$0xf]
    %v181 = vld [vmem:[%s1 + $0x25c] sm:$0xf]
    %v182 = vld [vmem:[%s1 + $0x260] sm:$0xf]
    %v183 = vld [vmem:[%s1 + $0x264] sm:$0xf]
    %v184 = vld [vmem:[%s1 + $0x268] sm:$0xf]
    %v185 = vld [vmem:[%s1 + $0x26c] sm:$0xf]
    %v186 = vld [vmem:[%s1 + $0x270] sm:$0xf]
    %v187 = vld [vmem:[%s1 + $0x274] sm:$0xf]
    %v188 = vld [vmem:[%s1 + $0x278] sm:$0xf]
    %v189 = vld [vmem:[%s1 + $0x27c] sm:$0xf]
    %v190 = vld [vmem:[%s1 + $0x280] sm:$0xf]
    %v191 = vld [vmem:[%s1 + $0x284] sm:$0xf]
    %v192 = vld [vmem:[%s1 + $0x288] sm:$0xf]
    %v193 = vld [vmem:[%s1 + $0x28c] sm:$0xf]
    %v194 = vld [vmem:[%s1 + $0x290] sm:$0xf]
    %v195 = vld [vmem:[%s1 + $0x294] sm:$0xf]
    %v196 = vld [vmem:[%s1 + $0x298] sm:$0xf]
    %v197 = vld [vmem:[%s1 + $0x29c] sm:$0xf]
    %v198 = vld [vmem:[%s1 + $0x2a0] sm:$0xf]
    %v199 = vld [vmem:[%s1 + $0x2a4] sm:$0xf]
    %v200 = vld [vmem:[%s1 + $0x2a8] sm:$0xf]
    %v201 = vld [vmem:[%s1 + $0x2ac] sm:$0xf]
    %v202 = vld [vmem:[%s1 + $0x2b0] sm:$0xf]
    %v203 = vld [vmem:[%s1 + $0x2b4] sm:$0xf]
    %v204 = vld [vmem:[%s1 + $0x2b8] sm:$0xf]
    %v205 = vld [vmem:[%s1 + $0x2bc] sm:$0xf]
    %v206 = vld [vmem:[%s1 + $0x2c0] sm:$0xf]
    %v207 = vld [vmem:[%s1 + $0x2c4] sm:$0xf]
    %v208 = vld [vmem:[%s1 + $0x2c8] sm:$0xf]
    %v209 = vld [vmem:[%s1 + $0x2cc] sm:$0xf]
    %v210 = vld [vmem:[%s1 + $0x2d0] sm:$0xf]
    %v211 = vld [vmem:[%s1 + $0x2d4] sm:$0xf]
    %v212 = vld [vmem:[%s1 + $0x2d8] sm:$0xf]
    %v213 = vld [vmem:[%s1 + $0x2dc] sm:$0xf]
    %v214 = vld [vmem:[%s1 + $0x2e0] sm:$0xf]
    %v215 = vld [vmem:[%s1 + $0x2e4] sm:$0xf]
    %v216 = vld [vmem:[%s1 + $0x2e8] sm:$0xf]
    %v217 = vld [vmem:[%s1 + $0x2ec] sm:$0xf]
    %v218 = vld [vmem:[%s1 + $0x2f0] sm:$0xf]
    %v219 = vld [vmem:[%s1 + $0x2f4] sm:$0xf]
    %v220 = vld [vmem:[%s1 + $0x2f8] sm:$0xf]
    %v221 = vld [vmem:[%s1 + $0x2fc] sm:$0xf]
    %v222 = vld [vmem:[%s1 + $0x300] sm:$0xf]
    %v223 = vld [vmem:[%s1 + $0x304] sm:$0xf]
    %v224 = vld [vmem:[%s1 + $0x308] sm:$0xf]
    %v225 = vld [vmem:[%s1 + $0x30c] sm:$0xf]
    %v226 = vld [vmem:[%s1 + $0x310] sm:$0xf]
    %v227 = vld [vmem:[%s1 + $0x314] sm:$0xf]
    %v228 = vld [vmem:[%s1 + $0x318] sm:$0xf]
    %v229 = vld [vmem:[%s1 + $0x31c] sm:$0xf]
    %v230 = vld [vmem:[%s1 + $0x320] sm:$0xf]
    %v231 = vld [vmem:[%s1 + $0x324] sm:$0xf]
    %v232 = vld [vmem:[%s1 + $0x328] sm:$0xf]
    %v233 = vld [vmem:[%s1 + $0x32c] sm:$0xf]
    %v234 = vld [vmem:[%s1 + $0x330] sm:$0xf]
    %v235 = vld [vmem:[%s1 + $0x334] sm:$0xf]
    %v236 = vld [vmem:[%s1 + $0x338] sm:$0xf]
    %v237 = vld [vmem:[%s1 + $0x33c] sm:$0xf]
    %v238 = vld [vmem:[%s1 + $0x340] sm:$0xf]
    %v239 = vld [vmem:[%s1 + $0x344] sm:$0xf]
    %v240 = vld [vmem:[%s1 + $0x348] sm:$0xf]
    %v241 = vld [vmem:[%s1 + $0x34c] sm:$0xf]
    %v242 = vld [vmem:[%s1 + $0x350] sm:$0xf]
    %v243 = vld [vmem:[%s1 + $0x354] sm:$0xf]
    %v244 = vld [vmem:[%s1 + $0x358] sm:$0xf]
    %v245 = vld [vmem:[%s1 + $0x35c] sm:$0xf]
    %v246 = vld [vmem:[%s1 + $0x360] sm:$0xf]
    %v247 = vld [vmem:[%s1 + $0x364] sm:$0xf]
    %v248 = vld [vmem:[%s1 + $0x368] sm:$0xf]
    %v249 = vld [vmem:[%s1 + $0x36c] sm:$0xf]
    %v250 = vld [vmem:[%s1 + $0x370] sm:$0xf]
    %v251 = vld [vmem:[%s1 + $0x374] sm:$0xf]
    %v252 = vld [vmem:[%s1 + $0x378] sm:$0xf]
    %v253 = vld [vmem:[%s1 + $0x37c] sm:$0xf]
    %v254 = vld [vmem:[%s1 + $0x380] sm:$0xf]
    %v255 = vld [vmem:[%s1 + $0x384] sm:$0xf]
    %v256 = vld [vmem:[%s1 + $0x388] sm:$0xf]
    %v257 = vld [vmem:[%s1 + $0x38c] sm:$0xf]
    %v258 = vld [vmem:[%s1 + $0x390] sm:$0xf]
    %v259 = vld [vmem:[%s1 + $0x394] sm:$0xf]
    %v260 = vld [vmem:[%s1 + $0x398] sm:$0xf]
    %v261 = vld [vmem:[%s1 + $0x39c] sm:$0xf]
    %v262 = vld [vmem:[%s1 + $0x3a0] sm:$0xf]
    %v263 = vld [vmem:[%s1 + $0x3a4] sm:$0xf]
    %v264 = vld [vmem:[%s1 + $0x3a8] sm:$0xf]
    %v265 = vld [vmem:[%s1 + $0x3ac] sm:$0xf]
    %v266 = vld [vmem:[%s1 + $0x3b0] sm:$0xf]
    %v267 = vld [vmem:[%s1 + $0x3b4] sm:$0xf]
    %v268 = vld [vmem:[%s1 + $0x3b8] sm:$0xf]
    %v269 = vld [vmem:[%s1 + $0x3bc] sm:$0xf]
    %v270 = vld [vmem:[%s1 + $0x3c0] sm:$0xf]
    %v271 = vld [vmem:[%s1 + $0x3c4] sm:$0xf]
    %v272 = vld [vmem:[%s1 + $0x3c8] sm:$0xf]
    %v273 = vld [vmem:[%s1 + $0x3cc] sm:$0xf]
    %v274 = vld [vmem:[%s1 + $0x3d0] sm:$0xf]
    %v275 = vld [vmem:[%s1 + $0x3d4] sm:$0xf]
    %v276 = vld [vmem:[%s1 + $0x3d8] sm:$0xf]
    %v277 = vld [vmem:[%s1 + $0x3dc] sm:$0xf]
    %v278 = vld [vmem:[%s1 + $0x3e0] sm:$0xf]
    %v279 = vld [vmem:[%s1 + $0x3e4] sm:$0xf]
    %v280 = vld [vmem:[%s1 + $0x3e8] sm:$0xf]
    %v281 = vld [vmem:[%s1 + $0x3ec] sm:$0xf]
    %v282 = vld [vmem:[%s1 + $0x3f0] sm:$0xf]
    %v283 = vld [vmem:[%s1 + $0x3f4] sm:$0xf]
    %v284 = vld [vmem:[%s1 + $0x3f8] sm:$0xf]
    %v285 = vld [vmem:[%s1 + $0x3fc] sm:$0xf]
    %v286 = vld [vmem:[%s1 + $0x400] sm:$0xf]
    %v287 = vld [vmem:[%s1 + $0x404] sm:$0xf]
    %v288 = vld [vmem:[%s1 + $0x408] sm:$0xf]
    %v289 = vld [vmem:[%s1 + $0x40c] sm:$0xf]
    %v290 = vld [vmem:[%s1 + $0x410] sm:$0xf]
    %v291 = vld [vmem:[%s1 + $0x414] sm:$0xf]
    %v292 = vld [vmem:[%s1 + $0x418] sm:$0xf]
    %v293 = vld [vmem:[%s1 + $0x41c] sm:$0xf]
    %v294 = vld [vmem:[%s1 + $0x420] sm:$0xf]
    %v295 = vld [vmem:[%s1 + $0x424] sm:$0xf]
    %v296 = vld [vmem:[%s1 + $0x428] sm:$0xf]
    %v297 = vld [vmem:[%s1 + $0x42c] sm:$0xf]
    %v298 = vld [vmem:[%s1 + $0x430] sm:$0xf]
    %v299 = vld [vmem:[%s1 + $0x434] sm:$0xf]
    %v300 = vld [vmem:[%s1 + $0x438] sm:$0xf]
    %v301 = vld [vmem:[%s1 + $0x43c] sm:$0xf]
    %v302 = vld [vmem:[%s1 + $0x440] sm:$0xf]
    %v303 = vld [vmem:[%s1 + $0x444] sm:$0xf]
    %v304 = vld [vmem:[%s1 + $0x448] sm:$0xf]
    %v305 = vld [vmem:[%s1 + $0x44c] sm:$0xf]
    %v306 = vld [vmem:[%s1 + $0x450] sm:$0xf]
    %v307 = vld [vmem:[%s1 + $0x454] sm:$0xf]
    %v308 = vld [vmem:[%s1 + $0x458] sm:$0xf]
    %v309 = vld [vmem:[%s1 + $0x45c] sm:$0xf]
    %v310 = vld [vmem:[%s1 + $0x460] sm:$0xf]
    %v311 = vld [vmem:[%s1 + $0x464] sm:$0xf]
    %v312 = vld [vmem:[%s1 + $0x468] sm:$0xf]
    %v313 = vld [vmem:[%s1 + $0x46c] sm:$0xf]
    %v314 = vld [vmem:[%s1 + $0x470] sm:$0xf]
    %v315 = vld [vmem:[%s1 + $0x474] sm:$0xf]
    %v316 = vld [vmem:[%s1 + $0x478] sm:$0xf]
    %v317 = vld [vmem:[%s1 + $0x47c] sm:$0xf]
    %v318 = vld [vmem:[%s1 + $0x480] sm:$0xf]
    %v319 = vld [vmem:[%s1 + $0x484] sm:$0xf]
    %v320 = vld [vmem:[%s1 + $0x488] sm:$0xf]
    %v321 = vld [vmem:[%s1 + $0x48c] sm:$0xf]
    %v322 = vld [vmem:[%s1 + $0x490] sm:$0xf]
    %v323 = vld [vmem:[%s1 + $0x494] sm:$0xf]
    %v324 = vld [vmem:[%s1 + $0x498] sm:$0xf]
    %v325 = vld [vmem:[%s1 + $0x49c] sm:$0xf]
    %v326 = vld [vmem:[%s1 + $0x4a0] sm:$0xf]
    %v327 = vld [vmem:[%s1 + $0x4a4] sm:$0xf]
    %v328 = vld [vmem:[%s1 + $0x4a8] sm:$0xf]
    %v329 = vld [vmem:[%s1 + $0x4ac] sm:$0xf]
    %v330 = vld [vmem:[%s1 + $0x4b0] sm:$0xf]
    %v331 = vld [vmem:[%s1 + $0x4b4] sm:$0xf]
    %v332 = vld [vmem:[%s1 + $0x4b8] sm:$0xf]
    %v333 = vld [vmem:[%s1 + $0x4bc] sm:$0xf]
    %v334 = vld [vmem:[%s1 + $0x4c0] sm:$0xf]
    %v335 = vld [vmem:[%s1 + $0x4c4] sm:$0xf]
    %v336 = vld [vmem:[%s1 + $0x4c8] sm:$0xf]
    %v337 = vld [vmem:[%s1 + $0x4cc] sm:$0xf]
    %v338 = vld [vmem:[%s1 + $0x4d0] sm:$0xf]
    %v339 = vld [vmem:[%s1 + $0x4d4] sm:$0xf]
    %v340 = vld [vmem:[%s1 + $0x4d8] sm:$0xf]
    %v341 = vld [vmem:[%s1 + $0x4dc] sm:$0xf]
    %v342 = vld [vmem:[%s1 + $0x4e0] sm:$0xf]
    %v343 = vld [vmem:[%s1 + $0x4e4] sm:$0xf]
    %v344 = vld [vmem:[%s1 + $0x4e8] sm:$0xf]
    %v345 = vld [vmem:[%s1 + $0x4ec] sm:$0xf]
    %v346 = vld [vmem:[%s1 + $0x4f0] sm:$0xf]
    %v347 = vld [vmem:[%s1 + $0x4f4] sm:$0xf]
    %v348 = vld [vmem:[%s1 + $0x4f8] sm:$0xf]
    %v349 = vld [vmem:[%s1 + $0x4fc] sm:$0xf]
    %v350 = vld [vmem:[%s1 + $0x500] sm:$0xf]
    %v351 = vld [vmem:[%s1 + $0x504] sm:$0xf]
    %v352 = vld [vmem:[%s1 + $0x508] sm:$0xf]
    %v353 = vld [vmem:[%s1 + $0x50c] sm:$0xf]
    %v354 = vld [vmem:[%s1 + $0x510] sm:$0xf]
    %v355 = vld [vmem:[%s1 + $0x514] sm:$0xf]
    %v356 = vld [vmem:[%s1 + $0x518] sm:$0xf]
    %v357 = vld [vmem:[%s1 + $0x51c] sm:$0xf]
    %v358 = vld [vmem:[%s1 + $0x520] sm:$0xf]
    %v359 = vld [vmem:[%s1 + $0x524] sm:$0xf]
    %v360 = vld [vmem:[%s1 + $0x528] sm:$0xf]
    %v361 = vld [vmem:[%s1 + $0x52c] sm:$0xf]
    %v362 = vld [vmem:[%s1 + $0x530] sm:$0xf]
    %v363 = vld [vmem:[%s1 + $0x534] sm:$0xf]
    %v364 = vld [vmem:[%s1 + $0x538] sm:$0xf]
    %v365 = vld [vmem:[%s1 + $0x53c] sm:$0xf]
    %v366 = vld [vmem:[%s1 + $0x540] sm:$0xf]
    %v367 = vld [vmem:[%s1 + $0x544] sm:$0xf]
    %v368 = vld [vmem:[%s1 + $0x548] sm:$0xf]
    %v369 = vld [vmem:[%s1 + $0x54c] sm:$0xf]
    %v370 = vld [vmem:[%s1 + $0x550] sm:$0xf]
    %v371 = vld [vmem:[%s1 + $0x554] sm:$0xf]
    %v372 = vld [vmem:[%s1 + $0x558] sm:$0xf]
    %v373 = vld [vmem:[%s1 + $0x55c] sm:$0xf]
    %v374 = vld [vmem:[%s1 + $0x560] sm:$0xf]
    %v375 = vld [vmem:[%s1 + $0x564] sm:$0xf]
    %v376 = vld [vmem:[%s1 + $0x568] sm:$0xf]
    %v377 = vld [vmem:[%s1 + $0x56c] sm:$0xf]
    %v378 = vld [vmem:[%s1 + $0x570] sm:$0xf]
    %v379 = vld [vmem:[%s1 + $0x574] sm:$0xf]
    %v380 = vld [vmem:[%s1 + $0x578] sm:$0xf]
    %v381 = vld [vmem:[%s1 + $0x57c] sm:$0xf]
    %v382 = vld [vmem:[%s1 + $0x580] sm:$0xf]
    %v383 = vld [vmem:[%s1 + $0x584] sm:$0xf]
    %v384 = vld [vmem:[%s1 + $0x588] sm:$0xf]
    %v385 = vld [vmem:[%s1 + $0x58c] sm:$0xf]
    %v386 = vld [vmem:[%s1 + $0x590] sm:$0xf]
    %v387 = vld [vmem:[%s1 + $0x594] sm:$0xf]
    %v388 = vld [vmem:[%s1 + $0x598] sm:$0xf]
    %v389 = vld [vmem:[%s1 + $0x59c] sm:$0xf]
    %v390 = vld [vmem:[%s1 + $0x5a0] sm:$0xf]
    %v391 = vld [vmem:[%s1 + $0x5a4] sm:$0xf]
    %v392 = vld [vmem:[%s1 + $0x5a8] sm:$0xf]
    %v393 = vld [vmem:[%s1 + $0x5ac] sm:$0xf]
    %v394 = vld [vmem:[%s1 + $0x5b0] sm:$0xf]
    %v395 = vld [vmem:[%s1 + $0x5b4] sm:$0xf]
    %v396 = vld [vmem:[%s1 + $0x5b8] sm:$0xf]
    %v397 = vld [vmem:[%s1 + $0x5bc] sm:$0xf]
    %v398 = vld [vmem:[%s1 + $0x5c0] sm:$0xf]
    %v399 = vld [vmem:[%s1 + $0x5c4] sm:$0xf]
    %v400 = vld [vmem:[%s1 + $0x5c8] sm:$0xf]
    %v401 = vld [vmem:[%s1 + $0x5cc] sm:$0xf]
    %v402 = vld [vmem:[%s1 + $0x5d0] sm:$0xf]
    %v403 = vld [vmem:[%s1 + $0x5d4] sm:$0xf]
    %v404 = vld [vmem:[%s1 + $0x5d8] sm:$0xf]
    %v405 = vld [vmem:[%s1 + $0x5dc] sm:$0xf]
    %v406 = vld [vmem:[%s1 + $0x5e0] sm:$0xf]
    %v407 = vld [vmem:[%s1 + $0x5e4] sm:$0xf]
    %v408 = vld [vmem:[%s1 + $0x5e8] sm:$0xf]
    %v409 = vld [vmem:[%s1 + $0x5ec] sm:$0xf]
    %v410 = vld [vmem:[%s1 + $0x5f0] sm:$0xf]
    %v411 = vld [vmem:[%s1 + $0x5f4] sm:$0xf]
    %v412 = vld [vmem:[%s1 + $0x5f8] sm:$0xf]
    %v413 = vld [vmem:[%s1 + $0x5fc] sm:$0xf]
    %v414 = vld [vmem:[%s1 + $0x600] sm:$0xf]
    %v415 = vld [vmem:[%s1 + $0x604] sm:$0xf]
    %v416 = vld [vmem:[%s1 + $0x608] sm:$0xf]
    %v417 = vld [vmem:[%s1 + $0x60c] sm:$0xf]
    %v418 = vld [vmem:[%s1 + $0x610] sm:$0xf]
    %v419 = vld [vmem:[%s1 + $0x614] sm:$0xf]
    %v420 = vld [vmem:[%s1 + $0x618] sm:$0xf]
    %v421 = vld [vmem:[%s1 + $0x61c] sm:$0xf]
    %v422 = vld [vmem:[%s1 + $0x620] sm:$0xf]
    %v423 = vld [vmem:[%s1 + $0x624] sm:$0xf]
    %v424 = vld [vmem:[%s1 + $0x628] sm:$0xf]
    %v425 = vld [vmem:[%s1 + $0x62c] sm:$0xf]
    %v426 = vld [vmem:[%s1 + $0x630] sm:$0xf]
    %v427 = vld [vmem:[%s1 + $0x634] sm:$0xf]
    %v428 = vld [vmem:[%s1 + $0x638] sm:$0xf]
    %v429 = vld [vmem:[%s1 + $0x63c] sm:$0xf]
    %v430 = vld [vmem:[%s1 + $0x640] sm:$0xf]
    %v431 = vld [vmem:[%s1 + $0x644] sm:$0xf]
    %v432 = vld [vmem:[%s1 + $0x648] sm:$0xf]
    %v433 = vld [vmem:[%s1 + $0x64c] sm:$0xf]
    %v434 = vld [vmem:[%s1 + $0x650] sm:$0xf]
    %v435 = vld [vmem:[%s1 + $0x654] sm:$0xf]
    %v436 = vld [vmem:[%s1 + $0x658] sm:$0xf]
    %v437 = vld [vmem:[%s1 + $0x65c] sm:$0xf]
    %v438 = vld [vmem:[%s1 + $0x660] sm:$0xf]
    %v439 = vld [vmem:[%s1 + $0x664] sm:$0xf]
    %v440 = vld [vmem:[%s1 + $0x668] sm:$0xf]
    %v441 = vld [vmem:[%s1 + $0x66c] sm:$0xf]
    %v442 = vld [vmem:[%s1 + $0x670] sm:$0xf]
    %v443 = vld [vmem:[%s1 + $0x674] sm:$0xf]
    %v444 = vld [vmem:[%s1 + $0x678] sm:$0xf]
    %v445 = vld [vmem:[%s1 + $0x67c] sm:$0xf]
    %v446 = vld [vmem:[%s1 + $0x680] sm:$0xf]
    %v447 = vld [vmem:[%s1 + $0x684] sm:$0xf]
    %v448 = vld [vmem:[%s1 + $0x688] sm:$0xf]
    %v449 = vld [vmem:[%s1 + $0x68c] sm:$0xf]
    %v450 = vld [vmem:[%s1 + $0x690] sm:$0xf]
    %v451 = vld [vmem:[%s1 + $0x694] sm:$0xf]
    %v452 = vld [vmem:[%s1 + $0x698] sm:$0xf]
    %v453 = vld [vmem:[%s1 + $0x69c] sm:$0xf]
    %v454 = vld [vmem:[%s1 + $0x6a0] sm:$0xf]
    %v455 = vld [vmem:[%s1 + $0x6a4] sm:$0xf]
    %v456 = vld [vmem:[%s1 + $0x6a8] sm:$0xf]
    %v457 = vld [vmem:[%s1 + $0x6ac] sm:$0xf]
    %v458 = vld [vmem:[%s1 + $0x6b0] sm:$0xf]
    %v459 = vld [vmem:[%s1 + $0x6b4] sm:$0xf]
    %v460 = vld [vmem:[%s1 + $0x6b8] sm:$0xf]
    %v461 = vld [vmem:[%s1 + $0x6bc] sm:$0xf]
    %v462 = vld [vmem:[%s1 + $0x6c0] sm:$0xf]
    %v463 = vld [vmem:[%s1 + $0x6c4] sm:$0xf]
    %v464 = vld [vmem:[%s1 + $0x6c8] sm:$0xf]
    %v465 = vld [vmem:[%s1 + $0x6cc] sm:$0xf]
    %v466 = vld [vmem:[%s1 + $0x6d0] sm:$0xf]
    %v467 = vld [vmem:[%s1 + $0x6d4] sm:$0xf]
    %v468 = vld [vmem:[%s1 + $0x6d8] sm:$0xf]
    %v469 = vld [vmem:[%s1 + $0x6dc] sm:$0xf]
    %v470 = vld [vmem:[%s1 + $0x6e0] sm:$0xf]
    %v471 = vld [vmem:[%s1 + $0x6e4] sm:$0xf]
    %v472 = vld [vmem:[%s1 + $0x6e8] sm:$0xf]
    %v473 = vld [vmem:[%s1 + $0x6ec] sm:$0xf]
    %v474 = vld [vmem:[%s1 + $0x6f0] sm:$0xf]
    %v475 = vld [vmem:[%s1 + $0x6f4] sm:$0xf]
    %v476 = vld [vmem:[%s1 + $0x6f8] sm:$0xf]
    %v477 = vld [vmem:[%s1 + $0x6fc] sm:$0xf]
    %v478 = vld [vmem:[%s1 + $0x700] sm:$0xf]
    %v479 = vld [vmem:[%s1 + $0x704] sm:$0xf]
    %v480 = vld [vmem:[%s1 + $0x708] sm:$0xf]
    %v481 = vld [vmem:[%s1 + $0x70c] sm:$0xf]
    %v482 = vld [vmem:[%s1 + $0x710] sm:$0xf]
    %v483 = vld [vmem:[%s1 + $0x714] sm:$0xf]
    %v484 = vld [vmem:[%s1 + $0x718] sm:$0xf]
    %v485 = vld [vmem:[%s1 + $0x71c] sm:$0xf]
    %v486 = vld [vmem:[%s1 + $0x720] sm:$0xf]
    %v487 = vld [vmem:[%s1 + $0x724] sm:$0xf]
    %v488 = vld [vmem:[%s1 + $0x728] sm:$0xf]
    %v489 = vld [vmem:[%s1 + $0x72c] sm:$0xf]
    %v490 = vld [vmem:[%s1 + $0x730] sm:$0xf]
    %v491 = vld [vmem:[%s1 + $0x734] sm:$0xf]
    %v492 = vld [vmem:[%s1 + $0x738] sm:$0xf]
    %v493 = vld [vmem:[%s1 + $0x73c] sm:$0xf]
    %v494 = vld [vmem:[%s1 + $0x740] sm:$0xf]
    %v495 = vld [vmem:[%s1 + $0x744] sm:$0xf]
    %v496 = vld [vmem:[%s1 + $0x748] sm:$0xf]
    %v497 = vld [vmem:[%s1 + $0x74c] sm:$0xf]
    %v498 = vld [vmem:[%s1 + $0x750] sm:$0xf]
    %v499 = vld [vmem:[%s1 + $0x754] sm:$0xf]
    %v500 = vld [vmem:[%s1 + $0x758] sm:$0xf]
    %v501 = vld [vmem:[%s1 + $0x75c] sm:$0xf]
    %v502 = vld [vmem:[%s1 + $0x760] sm:$0xf]
    %v503 = vld [vmem:[%s1 + $0x764] sm:$0xf]
    %v504 = vld [vmem:[%s1 + $0x768] sm:$0xf]
    %v505 = vld [vmem:[%s1 + $0x76c] sm:$0xf]
    %v506 = vld [vmem:[%s1 + $0x770] sm:$0xf]
    %v507 = vld [vmem:[%s1 + $0x774] sm:$0xf]
    %v508 = vld [vmem:[%s1 + $0x778] sm:$0xf]
    %v509 = vld [vmem:[%s1 + $0x77c] sm:$0xf]
    %v510 = vld [vmem:[%s1 + $0x780] sm:$0xf]
    %v511 = vld [vmem:[%s1 + $0x784] sm:$0xf]
    %v512 = vld [vmem:[%s1 + $0x788] sm:$0xf]
    %v513 = vld [vmem:[%s1 + $0x78c] sm:$0xf]
    %v514 = vld [vmem:[%s1 + $0x790] sm:$0xf]
    %v515 = vld [vmem:[%s1 + $0x794] sm:$0xf]
    %v516 = vld [vmem:[%s1 + $0x798] sm:$0xf]
    %v517 = vld [vmem:[%s1 + $0x79c] sm:$0xf]
    %v518 = vld [vmem:[%s1 + $0x7a0] sm:$0xf]
    %v519 = vld [vmem:[%s1 + $0x7a4] sm:$0xf]
    %v520 = vld [vmem:[%s1 + $0x7a8] sm:$0xf]
    %v521 = vld [vmem:[%s1 + $0x7ac] sm:$0xf]
    %v522 = vld [vmem:[%s1 + $0x7b0] sm:$0xf]
    %v523 = vld [vmem:[%s1 + $0x7b4] sm:$0xf]
    %v524 = vld [vmem:[%s1 + $0x7b8] sm:$0xf]
    %v525 = vld [vmem:[%s1 + $0x7bc] sm:$0xf]
    %v526 = vld [vmem:[%s1 + $0x7c0] sm:$0xf]
    %v527 = vld [vmem:[%s1 + $0x7c4] sm:$0xf]
    %v528 = vld [vmem:[%s1 + $0x7c8] sm:$0xf]
    %v529 = vld [vmem:[%s1 + $0x7cc] sm:$0xf]
    %v530 = vld [vmem:[%s1 + $0x7d0] sm:$0xf]
    %v531 = vld [vmem:[%s1 + $0x7d4] sm:$0xf]
    %v532 = vld [vmem:[%s1 + $0x7d8] sm:$0xf]
    %v533 = vld [vmem:[%s1 + $0x7dc] sm:$0xf]
    %v534 = vld [vmem:[%s1 + $0x7e0] sm:$0xf]
    %v535 = vld [vmem:[%s1 + $0x7e4] sm:$0xf]
    %v536 = vld [vmem:[%s1 + $0x7e8] sm:$0xf]
    %v537 = vld [vmem:[%s1 + $0x7ec] sm:$0xf]
    %v538 = vld [vmem:[%s1 + $0x7f0] sm:$0xf]
    %v539 = vld [vmem:[%s1 + $0x7f4] sm:$0xf]
    %v540 = vld [vmem:[%s1 + $0x7f8] sm:$0xf]
    %v541 = vld [vmem:[%s1 + $0x7fc] sm:$0xf]
    %v542 = vld [vmem:[%s1 + $0x800] sm:$0xf]
    %v543 = vld [vmem:[%s1 + $0x804] sm:$0xf]
    %v544 = vld [vmem:[%s1 + $0x808] sm:$0xf]
    %v545 = vld [vmem:[%s1 + $0x80c] sm:$0xf]
    %v546 = vld [vmem:[%s1 + $0x810] sm:$0xf]
    %v547 = vld [vmem:[%s1 + $0x814] sm:$0xf]
    %v548 = vld [vmem:[%s1 + $0x818] sm:$0xf]
    %v549 = vld [vmem:[%s1 + $0x81c] sm:$0xf]
    %v550 = vld [vmem:[%s1 + $0x820] sm:$0xf]
    %v551 = vld [vmem:[%s1 + $0x824] sm:$0xf]
    %v552 = vld [vmem:[%s1 + $0x828] sm:$0xf]
    %v553 = vld [vmem:[%s1 + $0x82c] sm:$0xf]
    %v554 = vld [vmem:[%s1 + $0x830] sm:$0xf]
    %v555 = vld [vmem:[%s1 + $0x834] sm:$0xf]
    %v556 = vld [vmem:[%s1 + $0x838] sm:$0xf]
    %v557 = vld [vmem:[%s1 + $0x83c] sm:$0xf]
    %v558 = vld [vmem:[%s1 + $0x840] sm:$0xf]
    %v559 = vld [vmem:[%s1 + $0x844] sm:$0xf]
    %v560 = vld [vmem:[%s1 + $0x848] sm:$0xf]
    %v561 = vld [vmem:[%s1 + $0x84c] sm:$0xf]
    %v562 = vld [vmem:[%s1 + $0x850] sm:$0xf]
    %v563 = vld [vmem:[%s1 + $0x854] sm:$0xf]
    %v564 = vld [vmem:[%s1 + $0x858] sm:$0xf]
    %v565 = vld [vmem:[%s1 + $0x85c] sm:$0xf]
    %v566 = vld [vmem:[%s1 + $0x860] sm:$0xf]
    %v567 = vld [vmem:[%s1 + $0x864] sm:$0xf]
    %v568 = vld [vmem:[%s1 + $0x868] sm:$0xf]
    %v569 = vld [vmem:[%s1 + $0x86c] sm:$0xf]
    %v570 = vld [vmem:[%s1 + $0x870] sm:$0xf]
    %v571 = vld [vmem:[%s1 + $0x874] sm:$0xf]
    %v572 = vld [vmem:[%s1 + $0x878] sm:$0xf]
    %v573 = vld [vmem:[%s1 + $0x87c] sm:$0xf]
    %v574 = vld [vmem:[%s1 + $0x880] sm:$0xf]
    %v575 = vld [vmem:[%s1 + $0x884] sm:$0xf]
    %v576 = vld [vmem:[%s1 + $0x888] sm:$0xf]
    %v577 = vld [vmem:[%s1 + $0x88c] sm:$0xf]
    %v578 = vld [vmem:[%s1 + $0x890] sm:$0xf]
    %v579 = vld [vmem:[%s1 + $0x894] sm:$0xf]
    %v580 = vld [vmem:[%s1 + $0x898] sm:$0xf]
    %v581 = vld [vmem:[%s1 + $0x89c] sm:$0xf]
    %v582 = vld [vmem:[%s1 + $0x8a0] sm:$0xf]
    %v583 = vld [vmem:[%s1 + $0x8a4] sm:$0xf]
    %v584 = vld [vmem:[%s1 + $0x8a8] sm:$0xf]
    %v585 = vld [vmem:[%s1 + $0x8ac] sm:$0xf]
    %v586 = vld [vmem:[%s1 + $0x8b0] sm:$0xf]
    %v587 = vld [vmem:[%s1 + $0x8b4] sm:$0xf]
    %v588 = vld [vmem:[%s1 + $0x8b8] sm:$0xf]
    %v589 = vld [vmem:[%s1 + $0x8bc] sm:$0xf]
    %v590 = vld [vmem:[%s1 + $0x8c0] sm:$0xf]
    %v591 = vld [vmem:[%s1 + $0x8c4] sm:$0xf]
    %v592 = vld [vmem:[%s1 + $0x8c8] sm:$0xf]
    %v593 = vld [vmem:[%s1 + $0x8cc] sm:$0xf]
    %v594 = vld [vmem:[%s1 + $0x8d0] sm:$0xf]
    %v595 = vld [vmem:[%s1 + $0x8d4] sm:$0xf]
    %v596 = vld [vmem:[%s1 + $0x8d8] sm:$0xf]
    %v597 = vld [vmem:[%s1 + $0x8dc] sm:$0xf]
    %v598 = vld [vmem:[%s1 + $0x8e0] sm:$0xf]
    %v599 = vld [vmem:[%s1 + $0x8e4] sm:$0xf]
    %v600 = vld [vmem:[%s1 + $0x8e8] sm:$0xf]
    %v601 = vld [vmem:[%s1 + $0x8ec] sm:$0xf]
    %v602 = vld [vmem:[%s1 + $0x8f0] sm:$0xf]
    %v603 = vld [vmem:[%s1 + $0x8f4] sm:$0xf]
    %v604 = vld [vmem:[%s1 + $0x8f8] sm:$0xf]
    %v605 = vld [vmem:[%s1 + $0x8fc] sm:$0xf]
    %v606 = vld [vmem:[%s1 + $0x900] sm:$0xf]
    %v607 = vld [vmem:[%s1 + $0x904] sm:$0xf]
    %v608 = vld [vmem:[%s1 + $0x908] sm:$0xf]
    %v609 = vld [vmem:[%s1 + $0x90c] sm:$0xf]
    %v610 = vld [vmem:[%s1 + $0x910] sm:$0xf]
    %v611 = vld [vmem:[%s1 + $0x914] sm:$0xf]
    %v612 = vld [vmem:[%s1 + $0x918] sm:$0xf]
    %v613 = vld [vmem:[%s1 + $0x91c] sm:$0xf]
    %v614 = vld [vmem:[%s1 + $0x920] sm:$0xf]
    %v615 = vld [vmem:[%s1 + $0x924] sm:$0xf]
    %v616 = vld [vmem:[%s1 + $0x928] sm:$0xf]
    %v617 = vld [vmem:[%s1 + $0x92c] sm:$0xf]
    %v618 = vld [vmem:[%s1 + $0x930] sm:$0xf]
    %v619 = vld [vmem:[%s1 + $0x934] sm:$0xf]
    %v620 = vld [vmem:[%s1 + $0x938] sm:$0xf]
    %v621 = vld [vmem:[%s1 + $0x93c] sm:$0xf]
    %v622 = vld [vmem:[%s1 + $0x940] sm:$0xf]
    %v623 = vld [vmem:[%s1 + $0x944] sm:$0xf]
    %v624 = vld [vmem:[%s1 + $0x948] sm:$0xf]
    %v625 = vld [vmem:[%s1 + $0x94c] sm:$0xf]
    %v626 = vld [vmem:[%s1 + $0x950] sm:$0xf]
    %v627 = vld [vmem:[%s1 + $0x954] sm:$0xf]
    %v628 = vld [vmem:[%s1 + $0x958] sm:$0xf]
    %v629 = vld [vmem:[%s1 + $0x95c] sm:$0xf]
    %v630 = vld [vmem:[%s1 + $0x960] sm:$0xf]
    %v631 = vld [vmem:[%s1 + $0x964] sm:$0xf]
    %v632 = vld [vmem:[%s1 + $0x968] sm:$0xf]
    %v633 = vld [vmem:[%s1 + $0x96c] sm:$0xf]
    %v634 = vld [vmem:[%s1 + $0x970] sm:$0xf]
    %v635 = vld [vmem:[%s1 + $0x974] sm:$0xf]
    %v636 = vld [vmem:[%s1 + $0x978] sm:$0xf]
    %v637 = vld [vmem:[%s1 + $0x97c] sm:$0xf]
    %v638 = vld [vmem:[%s1 + $0x980] sm:$0xf]
    %v639 = vld [vmem:[%s1 + $0x984] sm:$0xf]
    %v640 = vld [vmem:[%s1 + $0x988] sm:$0xf]
    %v641 = vld [vmem:[%s1 + $0x98c] sm:$0xf]
    %v642 = vld [vmem:[%s1 + $0x990] sm:$0xf]
    %v643 = vld [vmem:[%s1 + $0x994] sm:$0xf]
    %v644 = vld [vmem:[%s1 + $0x998] sm:$0xf]
    %v645 = vld [vmem:[%s1 + $0x99c] sm:$0xf]
    %v646 = vld [vmem:[%s1 + $0x9a0] sm:$0xf]
    %v647 = vld [vmem:[%s1 + $0x9a4] sm:$0xf]
    %v648 = vld [vmem:[%s1 + $0x9a8] sm:$0xf]
    %v649 = vld [vmem:[%s1 + $0x9ac] sm:$0xf]
    %v650 = vld [vmem:[%s1 + $0x9b0] sm:$0xf]
    %v651 = vld [vmem:[%s1 + $0x9b4] sm:$0xf]
    %v652 = vld [vmem:[%s1 + $0x9b8] sm:$0xf]
    %v653 = vld [vmem:[%s1 + $0x9bc] sm:$0xf]
    %v654 = vld [vmem:[%s1 + $0x9c0] sm:$0xf]
    %v655 = vld [vmem:[%s1 + $0x9c4] sm:$0xf]
    %v656 = vld [vmem:[%s1 + $0x9c8] sm:$0xf]
    %v657 = vld [vmem:[%s1 + $0x9cc] sm:$0xf]
    %v658 = vld [vmem:[%s1 + $0x9d0] sm:$0xf]
    %v659 = vld [vmem:[%s1 + $0x9d4] sm:$0xf]
    %v660 = vld [vmem:[%s1 + $0x9d8] sm:$0xf]
    %v661 = vld [vmem:[%s1 + $0x9dc] sm:$0xf]
    %v662 = vld [vmem:[%s1 + $0x9e0] sm:$0xf]
    %v663 = vld [vmem:[%s1 + $0x9e4] sm:$0xf]
    %v664 = vld [vmem:[%s1 + $0x9e8] sm:$0xf]
    %v665 = vld [vmem:[%s1 + $0x9ec] sm:$0xf]
    %v666 = vld [vmem:[%s1 + $0x9f0] sm:$0xf]
    %v667 = vld [vmem:[%s1 + $0x9f4] sm:$0xf]
    %v668 = vld [vmem:[%s1 + $0x9f8] sm:$0xf]
    %v669 = vld [vmem:[%s1 + $0x9fc] sm:$0xf]
    %v670 = vld [vmem:[%s1 + $0xa00] sm:$0xf]
    %v671 = vld [vmem:[%s1 + $0xa04] sm:$0xf]
    %v672 = vld [vmem:[%s1 + $0xa08] sm:$0xf]
    %v673 = vld [vmem:[%s1 + $0xa0c] sm:$0xf]
    %v674 = vld [vmem:[%s1 + $0xa10] sm:$0xf]
    %v675 = vld [vmem:[%s1 + $0xa14] sm:$0xf]
    %v676 = vld [vmem:[%s1 + $0xa18] sm:$0xf]
    %v677 = vld [vmem:[%s1 + $0xa1c] sm:$0xf]
    %v678 = vld [vmem:[%s1 + $0xa20] sm:$0xf]
    %v679 = vld [vmem:[%s1 + $0xa24] sm:$0xf]
    %v680 = vld [vmem:[%s1 + $0xa28] sm:$0xf]
    %v681 = vld [vmem:[%s1 + $0xa2c] sm:$0xf]
    %v682 = vld [vmem:[%s1 + $0xa30] sm:$0xf]
    %v683 = vld [vmem:[%s1 + $0xa34] sm:$0xf]
    %v684 = vld [vmem:[%s1 + $0xa38] sm:$0xf]
    %v685 = vld [vmem:[%s1 + $0xa3c] sm:$0xf]
    %v686 = vld [vmem:[%s1 + $0xa40] sm:$0xf]
    %v687 = vld [vmem:[%s1 + $0xa44] sm:$0xf]
    %v688 = vld [vmem:[%s1 + $0xa48] sm:$0xf]
    %v689 = vld [vmem:[%s1 + $0xa4c] sm:$0xf]
    %v690 = vld [vmem:[%s1 + $0xa50] sm:$0xf]
    %v691 = vld [vmem:[%s1 + $0xa54] sm:$0xf]
    %v692 = vld [vmem:[%s1 + $0xa58] sm:$0xf]
    %v693 = vld [vmem:[%s1 + $0xa5c] sm:$0xf]
    %v694 = vld [vmem:[%s1 + $0xa60] sm:$0xf]
    %v695 = vld [vmem:[%s1 + $0xa64] sm:$0xf]
    %v696 = vld [vmem:[%s1 + $0xa68] sm:$0xf]
    %v697 = vld [vmem:[%s1 + $0xa6c] sm:$0xf]
    %v698 = vld [vmem:[%s1 + $0xa70] sm:$0xf]
    %v699 = vld [vmem:[%s1 + $0xa74] sm:$0xf]
    %v700 = vld [vmem:[%s1 + $0xa78] sm:$0xf]
    %v701 = vld [vmem:[%s1 + $0xa7c] sm:$0xf]
    %v702 = vld [vmem:[%s1 + $0xa80] sm:$0xf]
    %v703 = vld [vmem:[%s1 + $0xa84] sm:$0xf]
    %v704 = vld [vmem:[%s1 + $0xa88] sm:$0xf]
    %v705 = vld [vmem:[%s1 + $0xa8c] sm:$0xf]
    %v706 = vld [vmem:[%s1 + $0xa90] sm:$0xf]
    %v707 = vld [vmem:[%s1 + $0xa94] sm:$0xf]
    %v708 = vld [vmem:[%s1 + $0xa98] sm:$0xf]
    %v709 = vld [vmem:[%s1 + $0xa9c] sm:$0xf]
    %v710 = vld [vmem:[%s1 + $0xaa0] sm:$0xf]
    %v711 = vld [vmem:[%s1 + $0xaa4] sm:$0xf]
    %v712 = vld [vmem:[%s1 + $0xaa8] sm:$0xf]
    %v713 = vld [vmem:[%s1 + $0xaac] sm:$0xf]
    %v714 = vld [vmem:[%s1 + $0xab0] sm:$0xf]
    %v715 = vld [vmem:[%s1 + $0xab4] sm:$0xf]
    %v716 = vld [vmem:[%s1 + $0xab8] sm:$0xf]
    %v717 = vld [vmem:[%s1 + $0xabc] sm:$0xf]
    %v718 = vld [vmem:[%s1 + $0xac0] sm:$0xf]
    %v719 = vld [vmem:[%s1 + $0xac4] sm:$0xf]
    %v720 = vld [vmem:[%s1 + $0xac8] sm:$0xf]
    %v721 = vld [vmem:[%s1 + $0xacc] sm:$0xf]
    %v722 = vld [vmem:[%s1 + $0xad0] sm:$0xf]
    %v723 = vld [vmem:[%s1 + $0xad4] sm:$0xf]
    %v724 = vld [vmem:[%s1 + $0xad8] sm:$0xf]
    %v725 = vld [vmem:[%s1 + $0xadc] sm:$0xf]
    %v726 = vld [vmem:[%s1 + $0xae0] sm:$0xf]
    %v727 = vld [vmem:[%s1 + $0xae4] sm:$0xf]
    %v728 = vld [vmem:[%s1 + $0xae8] sm:$0xf]
    %v729 = vld [vmem:[%s1 + $0xaec] sm:$0xf]
    %v730 = vld [vmem:[%s1 + $0xaf0] sm:$0xf]
    %v731 = vld [vmem:[%s1 + $0xaf4] sm:$0xf]
    %v732 = vld [vmem:[%s1 + $0xaf8] sm:$0xf]
    %v733 = vld [vmem:[%s1 + $0xafc] sm:$0xf]
    %v734 = vld [vmem:[%s1 + $0xb00] sm:$0xf]
    %v735 = vld [vmem:[%s1 + $0xb04] sm:$0xf]
    %v736 = vld [vmem:[%s1 + $0xb08] sm:$0xf]
    %v737 = vld [vmem:[%s1 + $0xb0c] sm:$0xf]
    %v738 = vld [vmem:[%s1 + $0xb10] sm:$0xf]
    %v739 = vld [vmem:[%s1 + $0xb14] sm:$0xf]
    %v740 = vld [vmem:[%s1 + $0xb18] sm:$0xf]
    %v741 = vld [vmem:[%s1 + $0xb1c] sm:$0xf]
    %v742 = vld [vmem:[%s1 + $0xb20] sm:$0xf]
    %v743 = vld [vmem:[%s1 + $0xb24] sm:$0xf]
    %v744 = vld [vmem:[%s1 + $0xb28] sm:$0xf]
    %v745 = vld [vmem:[%s1 + $0xb2c] sm:$0xf]
    %v746 = vld [vmem:[%s1 + $0xb30] sm:$0xf]
    %v747 = vld [vmem:[%s1 + $0xb34] sm:$0xf]
    %v748 = vld [vmem:[%s1 + $0xb38] sm:$0xf]
    %v749 = vld [vmem:[%s1 + $0xb3c] sm:$0xf]
    %v750 = vld [vmem:[%s1 + $0xb40] sm:$0xf]
    %v751 = vld [vmem:[%s1 + $0xb44] sm:$0xf]
    %v752 = vld [vmem:[%s1 + $0xb48] sm:$0xf]
    %v753 = vld [vmem:[%s1 + $0xb4c] sm:$0xf]
    %v754 = vld [vmem:[%s1 + $0xb50] sm:$0xf]
    %v755 = vld [vmem:[%s1 + $0xb54] sm:$0xf]
    %v756 = vld [vmem:[%s1 + $0xb58] sm:$0xf]
    %v757 = vld [vmem:[%s1 + $0xb5c] sm:$0xf]
    %v758 = vld [vmem:[%s1 + $0xb60] sm:$0xf]
    %v759 = vld [vmem:[%s1 + $0xb64] sm:$0xf]
    %v760 = vld [vmem:[%s1 + $0xb68] sm:$0xf]
    %v761 = vld [vmem:[%s1 + $0xb6c] sm:$0xf]
    %v762 = vld [vmem:[%s1 + $0xb70] sm:$0xf]
    %v763 = vld [vmem:[%s1 + $0xb74] sm:$0xf]
    %v764 = vld [vmem:[%s1 + $0xb78] sm:$0xf]
    %v765 = vld [vmem:[%s1 + $0xb7c] sm:$0xf]
    %v766 = vld [vmem:[%s1 + $0xb80] sm:$0xf]
    %v767 = vld [vmem:[%s1 + $0xb84] sm:$0xf]
    %v768 = vld [vmem:[%s1 + $0xb88] sm:$0xf]
    %v769 = vld [vmem:[%s1 + $0xb8c] sm:$0xf]
    %v770 = vld [vmem:[%s1 + $0xb90] sm:$0xf]
    %v771 = vld [vmem:[%s1 + $0xb94] sm:$0xf]
    %v772 = vld [vmem:[%s1 + $0xb98] sm:$0xf]
    %v773 = vld [vmem:[%s1 + $0xb9c] sm:$0xf]
    %v774 = vld [vmem:[%s1 + $0xba0] sm:$0xf]
    %v775 = vld [vmem:[%s1 + $0xba4] sm:$0xf]
    %v776 = vld [vmem:[%s1 + $0xba8] sm:$0xf]
    %v777 = vld [vmem:[%s1 + $0xbac] sm:$0xf]
    %v778 = vld [vmem:[%s1 + $0xbb0] sm:$0xf]
    %v779 = vld [vmem:[%s1 + $0xbb4] sm:$0xf]
    %v780 = vld [vmem:[%s1 + $0xbb8] sm:$0xf]
    %v781 = vld [vmem:[%s1 + $0xbbc] sm:$0xf]
    %v782 = vld [vmem:[%s1 + $0xbc0] sm:$0xf]
    %v783 = vld [vmem:[%s1 + $0xbc4] sm:$0xf]
    %v784 = vld [vmem:[%s1 + $0xbc8] sm:$0xf]
    %v785 = vld [vmem:[%s1 + $0xbcc] sm:$0xf]
    %v786 = vld [vmem:[%s1 + $0xbd0] sm:$0xf]
    %v787 = vld [vmem:[%s1 + $0xbd4] sm:$0xf]
    %v788 = vld [vmem:[%s1 + $0xbd8] sm:$0xf]
    %v789 = vld [vmem:[%s1 + $0xbdc] sm:$0xf]
    %v790 = vld [vmem:[%s1 + $0xbe0] sm:$0xf]
    %v791 = vld [vmem:[%s1 + $0xbe4] sm:$0xf]
    %v792 = vld [vmem:[%s1 + $0xbe8] sm:$0xf]
    %v793 = vld [vmem:[%s1 + $0xbec] sm:$0xf]
    %v794 = vld [vmem:[%s1 + $0xbf0] sm:$0xf]
    %v795 = vld [vmem:[%s1 + $0xbf4] sm:$0xf]
    %v796 = vld [vmem:[%s1 + $0xbf8] sm:$0xf]
    %v797 = vld [vmem:[%s1 + $0xbfc] sm:$0xf]
    %v798 = vld [vmem:[%s1 + $0xc00] sm:$0xf]
    %v799 = vld [vmem:[%s1 + $0xc04] sm:$0xf]
    %v800 = vld [vmem:[%s1 + $0xc08] sm:$0xf]
    %v801 = vld [vmem:[%s1 + $0xc0c] sm:$0xf]
    %v802 = vld [vmem:[%s1 + $0xc10] sm:$0xf]
    %v803 = vld [vmem:[%s1 + $0xc14] sm:$0xf]
    %v804 = vld [vmem:[%s1 + $0xc18] sm:$0xf]
    %v805 = vld [vmem:[%s1 + $0xc1c] sm:$0xf]
    %v806 = vld [vmem:[%s1 + $0xc20] sm:$0xf]
    %v807 = vld [vmem:[%s1 + $0xc24] sm:$0xf]
    %v808 = vld [vmem:[%s1 + $0xc28] sm:$0xf]
    %v809 = vld [vmem:[%s1 + $0xc2c] sm:$0xf]
    %v810 = vld [vmem:[%s1 + $0xc30] sm:$0xf]
    %v811 = vld [vmem:[%s1 + $0xc34] sm:$0xf]
    %v812 = vld [vmem:[%s1 + $0xc38] sm:$0xf]
    %v813 = vld [vmem:[%s1 + $0xc3c] sm:$0xf]
    %v814 = vld [vmem:[%s1 + $0xc40] sm:$0xf]
    %v815 = vld [vmem:[%s1 + $0xc44] sm:$0xf]
    %v816 = vld [vmem:[%s1 + $0xc48] sm:$0xf]
    %v817 = vld [vmem:[%s1 + $0xc4c] sm:$0xf]
    %v818 = vld [vmem:[%s1 + $0xc50] sm:$0xf]
    %v819 = vld [vmem:[%s1 + $0xc54] sm:$0xf]
    %v820 = vld [vmem:[%s1 + $0xc58] sm:$0xf]
    %v821 = vld [vmem:[%s1 + $0xc5c] sm:$0xf]
    %v822 = vld [vmem:[%s1 + $0xc60] sm:$0xf]
    %v823 = vld [vmem:[%s1 + $0xc64] sm:$0xf]
    %v824 = vld [vmem:[%s1 + $0xc68] sm:$0xf]
    %v825 = vld [vmem:[%s1 + $0xc6c] sm:$0xf]
    %v826 = vld [vmem:[%s1 + $0xc70] sm:$0xf]
    %v827 = vld [vmem:[%s1 + $0xc74] sm:$0xf]
    %v828 = vld [vmem:[%s1 + $0xc78] sm:$0xf]
    %v829 = vld [vmem:[%s1 + $0xc7c] sm:$0xf]
    %v830 = vld [vmem:[%s1 + $0xc80] sm:$0xf]
    %v831 = vld [vmem:[%s1 + $0xc84] sm:$0xf]
    %v832 = vld [vmem:[%s1 + $0xc88] sm:$0xf]
    %v833 = vld [vmem:[%s1 + $0xc8c] sm:$0xf]
    %v834 = vld [vmem:[%s1 + $0xc90] sm:$0xf]
    %v835 = vld [vmem:[%s1 + $0xc94] sm:$0xf]
    %v836 = vld [vmem:[%s1 + $0xc98] sm:$0xf]
    %v837 = vld [vmem:[%s1 + $0xc9c] sm:$0xf]
    %v838 = vld [vmem:[%s1 + $0xca0] sm:$0xf]
    %v839 = vld [vmem:[%s1 + $0xca4] sm:$0xf]
    %v840 = vld [vmem:[%s1 + $0xca8] sm:$0xf]
    %v841 = vld [vmem:[%s1 + $0xcac] sm:$0xf]
    %v842 = vld [vmem:[%s1 + $0xcb0] sm:$0xf]
    %v843 = vld [vmem:[%s1 + $0xcb4] sm:$0xf]
    %v844 = vld [vmem:[%s1 + $0xcb8] sm:$0xf]
    %v845 = vld [vmem:[%s1 + $0xcbc] sm:$0xf]
    %v846 = vld [vmem:[%s1 + $0xcc0] sm:$0xf]
    %v847 = vld [vmem:[%s1 + $0xcc4] sm:$0xf]
    %v848 = vld [vmem:[%s1 + $0xcc8] sm:$0xf]
    %v849 = vld [vmem:[%s1 + $0xccc] sm:$0xf]
    %v850 = vld [vmem:[%s1 + $0xcd0] sm:$0xf]
    %v851 = vld [vmem:[%s1 + $0xcd4] sm:$0xf]
    %v852 = vld [vmem:[%s1 + $0xcd8] sm:$0xf]
    %v853 = vld [vmem:[%s1 + $0xcdc] sm:$0xf]
    %v854 = vld [vmem:[%s1 + $0xce0] sm:$0xf]
    %v855 = vld [vmem:[%s1 + $0xce4] sm:$0xf]
    %v856 = vld [vmem:[%s1 + $0xce8] sm:$0xf]
    %v857 = vld [vmem:[%s1 + $0xcec] sm:$0xf]
    %v858 = vld [vmem:[%s1 + $0xcf0] sm:$0xf]
    %v859 = vld [vmem:[%s1 + $0xcf4] sm:$0xf]
    %v860 = vld [vmem:[%s1 + $0xcf8] sm:$0xf]
    %v861 = vld [vmem:[%s1 + $0xcfc] sm:$0xf]
    %v862 = vld [vmem:[%s1 + $0xd00] sm:$0xf]
    %v863 = vld [vmem:[%s1 + $0xd04] sm:$0xf]
    %v864 = vld [vmem:[%s1 + $0xd08] sm:$0xf]
    %v865 = vld [vmem:[%s1 + $0xd0c] sm:$0xf]
    %v866 = vld [vmem:[%s1 + $0xd10] sm:$0xf]
    %v867 = vld [vmem:[%s1 + $0xd14] sm:$0xf]
    %v868 = vld [vmem:[%s1 + $0xd18] sm:$0xf]
    %v869 = vld [vmem:[%s1 + $0xd1c] sm:$0xf]
    %v870 = vld [vmem:[%s1 + $0xd20] sm:$0xf]
    %v871 = vld [vmem:[%s1 + $0xd24] sm:$0xf]
    %v872 = vld [vmem:[%s1 + $0xd28] sm:$0xf]
    %v873 = vld [vmem:[%s1 + $0xd2c] sm:$0xf]
    %v874 = vld [vmem:[%s1 + $0xd30] sm:$0xf]
    %v875 = vld [vmem:[%s1 + $0xd34] sm:$0xf]
    %v876 = vld [vmem:[%s1 + $0xd38] sm:$0xf]
    %v877 = vld [vmem:[%s1 + $0xd3c] sm:$0xf]
    %v878 = vld [vmem:[%s1 + $0xd40] sm:$0xf]
    %v879 = vld [vmem:[%s1 + $0xd44] sm:$0xf]
    %v880 = vld [vmem:[%s1 + $0xd48] sm:$0xf]
    %v881 = vld [vmem:[%s1 + $0xd4c] sm:$0xf]
    %v882 = vld [vmem:[%s1 + $0xd50] sm:$0xf]
    %v883 = vld [vmem:[%s1 + $0xd54] sm:$0xf]
    %v884 = vld [vmem:[%s1 + $0xd58] sm:$0xf]
    %v885 = vld [vmem:[%s1 + $0xd5c] sm:$0xf]
    %v886 = vld [vmem:[%s1 + $0xd60] sm:$0xf]
    %v887 = vld [vmem:[%s1 + $0xd64] sm:$0xf]
    %v888 = vld [vmem:[%s1 + $0xd68] sm:$0xf]
    %v889 = vld [vmem:[%s1 + $0xd6c] sm:$0xf]
    %v890 = vld [vmem:[%s1 + $0xd70] sm:$0xf]
    %v891 = vld [vmem:[%s1 + $0xd74] sm:$0xf]
    %v892 = vld [vmem:[%s1 + $0xd78] sm:$0xf]
    %v893 = vld [vmem:[%s1 + $0xd7c] sm:$0xf]
    %v894 = vld [vmem:[%s1 + $0xd80] sm:$0xf]
    %v895 = vld [vmem:[%s1 + $0xd84] sm:$0xf]
    %v896 = vld [vmem:[%s1 + $0xd88] sm:$0xf]
    %v897 = vld [vmem:[%s1 + $0xd8c] sm:$0xf]
    %v898 = vld [vmem:[%s1 + $0xd90] sm:$0xf]
    %v899 = vld [vmem:[%s1 + $0xd94] sm:$0xf]
    %v900 = vld [vmem:[%s1 + $0xd98] sm:$0xf]
    %v901 = vld [vmem:[%s1 + $0xd9c] sm:$0xf]
    %v902 = vld [vmem:[%s1 + $0xda0] sm:$0xf]
    %v903 = vld [vmem:[%s1 + $0xda4] sm:$0xf]
    %v904 = vld [vmem:[%s1 + $0xda8] sm:$0xf]
    %v905 = vld [vmem:[%s1 + $0xdac] sm:$0xf]
    %v906 = vld [vmem:[%s1 + $0xdb0] sm:$0xf]
    %v907 = vld [vmem:[%s1 + $0xdb4] sm:$0xf]
    %v908 = vld [vmem:[%s1 + $0xdb8] sm:$0xf]
    %v909 = vld [vmem:[%s1 + $0xdbc] sm:$0xf]
    %v910 = vld [vmem:[%s1 + $0xdc0] sm:$0xf]
    %v911 = vld [vmem:[%s1 + $0xdc4] sm:$0xf]
    %v912 = vld [vmem:[%s1 + $0xdc8] sm:$0xf]
    %v913 = vld [vmem:[%s1 + $0xdcc] sm:$0xf]
    %v914 = vld [vmem:[%s1 + $0xdd0] sm:$0xf]
    %v915 = vld [vmem:[%s1 + $0xdd4] sm:$0xf]
    %v916 = vld [vmem:[%s1 + $0xdd8] sm:$0xf]
    %v917 = vld [vmem:[%s1 + $0xddc] sm:$0xf]
    %v918 = vld [vmem:[%s1 + $0xde0] sm:$0xf]
    %v919 = vld [vmem:[%s1 + $0xde4] sm:$0xf]
    %v920 = vld [vmem:[%s1 + $0xde8] sm:$0xf]
    %v921 = vld [vmem:[%s1 + $0xdec] sm:$0xf]
    %v922 = vld [vmem:[%s1 + $0xdf0] sm:$0xf]
    %v923 = vld [vmem:[%s1 + $0xdf4] sm:$0xf]
    %v924 = vld [vmem:[%s1 + $0xdf8] sm:$0xf]
    %v925 = vld [vmem:[%s1 + $0xdfc] sm:$0xf]
    %v926 = vld [vmem:[%s1 + $0xe00] sm:$0xf]
    %v927 = vld [vmem:[%s1 + $0xe04] sm:$0xf]
    %v928 = vld [vmem:[%s1 + $0xe08] sm:$0xf]
    %v929 = vld [vmem:[%s1 + $0xe0c] sm:$0xf]
    %v930 = vld [vmem:[%s1 + $0xe10] sm:$0xf]
    %v931 = vld [vmem:[%s1 + $0xe14] sm:$0xf]
    %v932 = vld [vmem:[%s1 + $0xe18] sm:$0xf]
    %v933 = vld [vmem:[%s1 + $0xe1c] sm:$0xf]
    %v934 = vld [vmem:[%s1 + $0xe20] sm:$0xf]
    %v935 = vld [vmem:[%s1 + $0xe24] sm:$0xf]
    %v936 = vld [vmem:[%s1 + $0xe28] sm:$0xf]
    %v937 = vld [vmem:[%s1 + $0xe2c] sm:$0xf]
    %v938 = vld [vmem:[%s1 + $0xe30] sm:$0xf]
    %v939 = vld [vmem:[%s1 + $0xe34] sm:$0xf]
    %v940 = vld [vmem:[%s1 + $0xe38] sm:$0xf]
    %v941 = vld [vmem:[%s1 + $0xe3c] sm:$0xf]
    %v942 = vld [vmem:[%s1 + $0xe40] sm:$0xf]
    %v943 = vld [vmem:[%s1 + $0xe44] sm:$0xf]
    %v944 = vld [vmem:[%s1 + $0xe48] sm:$0xf]
    %v945 = vld [vmem:[%s1 + $0xe4c] sm:$0xf]
    %v946 = vld [vmem:[%s1 + $0xe50] sm:$0xf]
    %v947 = vld [vmem:[%s1 + $0xe54] sm:$0xf]
    %v948 = vld [vmem:[%s1 + $0xe58] sm:$0xf]
    %v949 = vld [vmem:[%s1 + $0xe5c] sm:$0xf]
    %v950 = vld [vmem:[%s1 + $0xe60] sm:$0xf]
    %v951 = vld [vmem:[%s1 + $0xe64] sm:$0xf]
    %v952 = vld [vmem:[%s1 + $0xe68] sm:$0xf]
    %v953 = vld [vmem:[%s1 + $0xe6c] sm:$0xf]
    %v954 = vld [vmem:[%s1 + $0xe70] sm:$0xf]
    %v955 = vld [vmem:[%s1 + $0xe74] sm:$0xf]
    %v956 = vld [vmem:[%s1 + $0xe78] sm:$0xf]
    %v957 = vld [vmem:[%s1 + $0xe7c] sm:$0xf]
    %v958 = vld [vmem:[%s1 + $0xe80] sm:$0xf]
    %v959 = vld [vmem:[%s1 + $0xe84] sm:$0xf]
    %v960 = vld [vmem:[%s1 + $0xe88] sm:$0xf]
    %v961 = vld [vmem:[%s1 + $0xe8c] sm:$0xf]
    %v962 = vld [vmem:[%s1 + $0xe90] sm:$0xf]
    %v963 = vld [vmem:[%s1 + $0xe94] sm:$0xf]
    %v964 = vld [vmem:[%s1 + $0xe98] sm:$0xf]
    %v965 = vld [vmem:[%s1 + $0xe9c] sm:$0xf]
    %v966 = vld [vmem:[%s1 + $0xea0] sm:$0xf]
    %v967 = vld [vmem:[%s1 + $0xea4] sm:$0xf]
    %v968 = vld [vmem:[%s1 + $0xea8] sm:$0xf]
    %v969 = vld [vmem:[%s1 + $0xeac] sm:$0xf]
    %v970 = vld [vmem:[%s1 + $0xeb0] sm:$0xf]
    %v971 = vld [vmem:[%s1 + $0xeb4] sm:$0xf]
    %v972 = vld [vmem:[%s1 + $0xeb8] sm:$0xf]
    %v973 = vld [vmem:[%s1 + $0xebc] sm:$0xf]
    %v974 = vld [vmem:[%s1 + $0xec0] sm:$0xf]
    %v975 = vld [vmem:[%s1 + $0xec4] sm:$0xf]
    %v976 = vld [vmem:[%s1 + $0xec8] sm:$0xf]
    %v977 = vld [vmem:[%s1 + $0xecc] sm:$0xf]
    %v978 = vld [vmem:[%s1 + $0xed0] sm:$0xf]
    %v979 = vld [vmem:[%s1 + $0xed4] sm:$0xf]
    %v980 = vld [vmem:[%s1 + $0xed8] sm:$0xf]
    %v981 = vld [vmem:[%s1 + $0xedc] sm:$0xf]
    %v982 = vld [vmem:[%s1 + $0xee0] sm:$0xf]
    %v983 = vld [vmem:[%s1 + $0xee4] sm:$0xf]
    %v984 = vld [vmem:[%s1 + $0xee8] sm:$0xf]
    %v985 = vld [vmem:[%s1 + $0xeec] sm:$0xf]
    %v986 = vld [vmem:[%s1 + $0xef0] sm:$0xf]
    %v987 = vld [vmem:[%s1 + $0xef4] sm:$0xf]
    %v988 = vld [vmem:[%s1 + $0xef8] sm:$0xf]
    %v989 = vld [vmem:[%s1 + $0xefc] sm:$0xf]
    %v990 = vld [vmem:[%s1 + $0xf00] sm:$0xf]
    %v991 = vld [vmem:[%s1 + $0xf04] sm:$0xf]
    %v992 = vld [vmem:[%s1 + $0xf08] sm:$0xf]
    %v993 = vld [vmem:[%s1 + $0xf0c] sm:$0xf]
    %v994 = vld [vmem:[%s1 + $0xf10] sm:$0xf]
    %v995 = vld [vmem:[%s1 + $0xf14] sm:$0xf]
    %v996 = vld [vmem:[%s1 + $0xf18] sm:$0xf]
    %v997 = vld [vmem:[%s1 + $0xf1c] sm:$0xf]
    %v998 = vld [vmem:[%s1 + $0xf20] sm:$0xf]
    %v999 = vld [vmem:[%s1 + $0xf24] sm:$0xf]
    %v1000 = vld [vmem:[%s1 + $0xf28] sm:$0xf]
    %v1001 = vld [vmem:[%s1 + $0xf2c] sm:$0xf]
    %v1002 = vld [vmem:[%s1 + $0xf30] sm:$0xf]
    %v1003 = vld [vmem:[%s1 + $0xf34] sm:$0xf]
    %v1004 = vld [vmem:[%s1 + $0xf38] sm:$0xf]
    %v1005 = vld [vmem:[%s1 + $0xf3c] sm:$0xf]
    %v1006 = vld [vmem:[%s1 + $0xf40] sm:$0xf]
    %v1007 = vld [vmem:[%s1 + $0xf44] sm:$0xf]
    %v1008 = vld [vmem:[%s1 + $0xf48] sm:$0xf]
    %v1009 = vld [vmem:[%s1 + $0xf4c] sm:$0xf]
    %v1010 = vld [vmem:[%s1 + $0xf50] sm:$0xf]
    %v1011 = vld [vmem:[%s1 + $0xf54] sm:$0xf]
    %v1012 = vld [vmem:[%s1 + $0xf58] sm:$0xf]
    %v1013 = vld [vmem:[%s1 + $0xf5c] sm:$0xf]
    %v1014 = vld [vmem:[%s1 + $0xf60] sm:$0xf]
    %v1015 = vld [vmem:[%s1 + $0xf64] sm:$0xf]
    %v1016 = vld [vmem:[%s1 + $0xf68] sm:$0xf]
    %v1017 = vld [vmem:[%s1 + $0xf6c] sm:$0xf]
    %v1018 = vld [vmem:[%s1 + $0xf70] sm:$0xf]
    %v1019 = vld [vmem:[%s1 + $0xf74] sm:$0xf]
    %v1020 = vld [vmem:[%s1 + $0xf78] sm:$0xf]
    %v1021 = vld [vmem:[%s1 + $0xf7c] sm:$0xf]
    %v1022 = vld [vmem:[%s1 + $0xf80] sm:$0xf]
    %v1023 = vld [vmem:[%s1 + $0xf84] sm:$0xf]
    %v1024 = vld [vmem:[%s1 + $0xf88] sm:$0xf]
    %v1025 = vld [vmem:[%s1 + $0xf8c] sm:$0xf]
    %v1026 = vld [vmem:[%s1 + $0xf90] sm:$0xf]
    %v1027 = vld [vmem:[%s1 + $0xf94] sm:$0xf]
    %v1028 = vld [vmem:[%s1 + $0xf98] sm:$0xf]
    %v1029 = vld [vmem:[%s1 + $0xf9c] sm:$0xf]
    %v1030 = vld [vmem:[%s1 + $0xfa0] sm:$0xf]
    %v1031 = vld [vmem:[%s1 + $0xfa4] sm:$0xf]
    %v1032 = vld [vmem:[%s1 + $0xfa8] sm:$0xf]
    %v1033 = vld [vmem:[%s1 + $0xfac] sm:$0xf]
    %v1034 = vld [vmem:[%s1 + $0xfb0] sm:$0xf]
    %v1035 = vld [vmem:[%s1 + $0xfb4] sm:$0xf]
    %v1036 = vld [vmem:[%s1 + $0xfb8] sm:$0xf]
    %v1037 = vld [vmem:[%s1 + $0xfbc] sm:$0xf]
    %v1038 = vld [vmem:[%s1 + $0xfc0] sm:$0xf]
    %v1039 = vld [vmem:[%s1 + $0xfc4] sm:$0xf]
    %v1040 = vld [vmem:[%s1 + $0xfc8] sm:$0xf]
    %v1041 = vld [vmem:[%s1 + $0xfcc] sm:$0xf]
    %v1042 = vld [vmem:[%s1 + $0xfd0] sm:$0xf]
    %v1043 = vld [vmem:[%s1 + $0xfd4] sm:$0xf]
    %v1044 = vld [vmem:[%s1 + $0xfd8] sm:$0xf]
    %v1045 = vld [vmem:[%s1 + $0xfdc] sm:$0xf]
    %v1046 = vld [vmem:[%s1 + $0xfe0] sm:$0xf]
    %v1047 = vld [vmem:[%s1 + $0xfe4] sm:$0xf]
    %v1048 = vld [vmem:[%s1 + $0xfe8] sm:$0xf]
    %v1049 = vld [vmem:[%s1 + $0xfec] sm:$0xf]
    %v1050 = vld [vmem:[%s1 + $0xff0] sm:$0xf]
    %v1051 = vld [vmem:[%s1 + $0xff4] sm:$0xf]
    %v1052 = vld [vmem:[%s1 + $0xff8] sm:$0xf]
    %v1053 = vld [vmem:[%s1 + $0xffc] sm:$0xf]
    %v1054 = vld [vmem:[%s1 + $0x1000] sm:$0xf]
    %v1055 = vld [vmem:[%s1 + $0x1004] sm:$0xf]
    %v1056 = vld [vmem:[%s1 + $0x1008] sm:$0xf]
    %v1057 = vld [vmem:[%s1 + $0x100c] sm:$0xf]
    %v1058 = vld [vmem:[%s1 + $0x1010] sm:$0xf]
    %v1059 = vld [vmem:[%s1 + $0x1014] sm:$0xf]
    %v1060 = vld [vmem:[%s1 + $0x1018] sm:$0xf]
    %v1061 = vld [vmem:[%s1 + $0x101c] sm:$0xf]
    %v1062 = vld [vmem:[%s1 + $0x1020] sm:$0xf]
    %v1063 = vld [vmem:[%s1 + $0x1024] sm:$0xf]
    %v1064 = vld [vmem:[%s1 + $0x1028] sm:$0xf]
    %v1065 = vld [vmem:[%s1 + $0x102c] sm:$0xf]
    %v1066 = vld [vmem:[%s1 + $0x1030] sm:$0xf]
    %v1067 = vld [vmem:[%s1 + $0x1034] sm:$0xf]
    %v1068 = vld [vmem:[%s1 + $0x1038] sm:$0xf]
    %v1069 = vld [vmem:[%s1 + $0x103c] sm:$0xf]
    %v1070 = vld [vmem:[%s1 + $0x1040] sm:$0xf]
    %v1071 = vld [vmem:[%s1 + $0x1044] sm:$0xf]
    %v1072 = vld [vmem:[%s1 + $0x1048] sm:$0xf]
    %v1073 = vld [vmem:[%s1 + $0x104c] sm:$0xf]
    %v1074 = vld [vmem:[%s1 + $0x1050] sm:$0xf]
    %v1075 = vld [vmem:[%s1 + $0x1054] sm:$0xf]
    %v1076 = vld [vmem:[%s1 + $0x1058] sm:$0xf]
    %v1077 = vld [vmem:[%s1 + $0x105c] sm:$0xf]
    %v1078 = vld [vmem:[%s1 + $0x1060] sm:$0xf]
    %v1079 = vld [vmem:[%s1 + $0x1064] sm:$0xf]
    %v1080 = vld [vmem:[%s1 + $0x1068] sm:$0xf]
    %v1081 = vld [vmem:[%s1 + $0x106c] sm:$0xf]
    %v1082 = vld [vmem:[%s1 + $0x1070] sm:$0xf]
    %v1083 = vld [vmem:[%s1 + $0x1074] sm:$0xf]
    %v1084 = vld [vmem:[%s1 + $0x1078] sm:$0xf]
    %v1085 = vld [vmem:[%s1 + $0x107c] sm:$0xf]
    %v1086 = vld [vmem:[%s1 + $0x1080] sm:$0xf]
    %v1087 = vld [vmem:[%s1 + $0x1084] sm:$0xf]
    %v1088 = vld [vmem:[%s1 + $0x1088] sm:$0xf]
    %v1089 = vld [vmem:[%s1 + $0x108c] sm:$0xf]
    %v1090 = vld [vmem:[%s1 + $0x1090] sm:$0xf]
    %v1091 = vld [vmem:[%s1 + $0x1094] sm:$0xf]
    %v1092 = vld [vmem:[%s1 + $0x1098] sm:$0xf]
    %v1093 = vld [vmem:[%s1 + $0x109c] sm:$0xf]
    %v1094 = vld [vmem:[%s1 + $0x10a0] sm:$0xf]
    %v1095 = vld [vmem:[%s1 + $0x10a4] sm:$0xf]
    %v1096 = vld [vmem:[%s1 + $0x10a8] sm:$0xf]
    %v1097 = vld [vmem:[%s1 + $0x10ac] sm:$0xf]
    %v1098 = vld [vmem:[%s1 + $0x10b0] sm:$0xf]
    %v1099 = vld [vmem:[%s1 + $0x10b4] sm:$0xf]
    %v1100 = vld [vmem:[%s1 + $0x10b8] sm:$0xf]
    %v1101 = vld [vmem:[%s1 + $0x10bc] sm:$0xf]
    %v1102 = vld [vmem:[%s1 + $0x10c0] sm:$0xf]
    %v1103 = vld [vmem:[%s1 + $0x10c4] sm:$0xf]
    %v1104 = vld [vmem:[%s1 + $0x10c8] sm:$0xf]
    %v1105 = vld [vmem:[%s1 + $0x10cc] sm:$0xf]
    %v1106 = vld [vmem:[%s1 + $0x10d0] sm:$0xf]
    %v1107 = vld [vmem:[%s1 + $0x10d4] sm:$0xf]
    %v1108 = vld [vmem:[%s1 + $0x10d8] sm:$0xf]
    %v1109 = vld [vmem:[%s1 + $0x10dc] sm:$0xf]
    %v1110 = vld [vmem:[%s1 + $0x10e0] sm:$0xf]
    %v1111 = vld [vmem:[%s1 + $0x10e4] sm:$0xf]
    %v1112 = vld [vmem:[%s1 + $0x10e8] sm:$0xf]
    %v1113 = vld [vmem:[%s1 + $0x10ec] sm:$0xf]
    %v1114 = vld [vmem:[%s1 + $0x10f0] sm:$0xf]
    %v1115 = vld [vmem:[%s1 + $0x10f4] sm:$0xf]
    %v1116 = vld [vmem:[%s1 + $0x10f8] sm:$0xf]
    %v1117 = vld [vmem:[%s1 + $0x10fc] sm:$0xf]
    %v1118 = vld [vmem:[%s1 + $0x1100] sm:$0xf]
    %v1119 = vld [vmem:[%s1 + $0x1104] sm:$0xf]
    %v1120 = vld [vmem:[%s1 + $0x1108] sm:$0xf]
    %v1121 = vld [vmem:[%s1 + $0x110c] sm:$0xf]
    %v1122 = vld [vmem:[%s1 + $0x1110] sm:$0xf]
    %v1123 = vld [vmem:[%s1 + $0x1114] sm:$0xf]
    %v1124 = vld [vmem:[%s1 + $0x1118] sm:$0xf]
    %v1125 = vld [vmem:[%s1 + $0x111c] sm:$0xf]
    %v1126 = vld [vmem:[%s1 + $0x1120] sm:$0xf]
    %v1127 = vld [vmem:[%s1 + $0x1124] sm:$0xf]
    %v1128 = vld [vmem:[%s1 + $0x1128] sm:$0xf]
    %v1129 = vld [vmem:[%s1 + $0x112c] sm:$0xf]
    %v1130 = vld [vmem:[%s1 + $0x1130] sm:$0xf]
    %v1131 = vld [vmem:[%s1 + $0x1134] sm:$0xf]
    %v1132 = vld [vmem:[%s1 + $0x1138] sm:$0xf]
    %v1133 = vld [vmem:[%s1 + $0x113c] sm:$0xf]
    %v1134 = vld [vmem:[%s1 + $0x1140] sm:$0xf]
    %v1135 = vld [vmem:[%s1 + $0x1144] sm:$0xf]
    %v1136 = vld [vmem:[%s1 + $0x1148] sm:$0xf]
    %v1137 = vld [vmem:[%s1 + $0x114c] sm:$0xf]
    %v1138 = vld [vmem:[%s1 + $0x1150] sm:$0xf]
    %v1139 = vld [vmem:[%s1 + $0x1154] sm:$0xf]
    %v1140 = vld [vmem:[%s1 + $0x1158] sm:$0xf]
    %v1141 = vld [vmem:[%s1 + $0x115c] sm:$0xf]
    %v1142 = vld [vmem:[%s1 + $0x1160] sm:$0xf]
    %v1143 = vld [vmem:[%s1 + $0x1164] sm:$0xf]
    %v1144 = vld [vmem:[%s1 + $0x1168] sm:$0xf]
    %v1145 = vld [vmem:[%s1 + $0x116c] sm:$0xf]
    %v1146 = vld [vmem:[%s1 + $0x1170] sm:$0xf]
    %v1147 = vld [vmem:[%s1 + $0x1174] sm:$0xf]
    %v1148 = vld [vmem:[%s1 + $0x1178] sm:$0xf]
    %v1149 = vld [vmem:[%s1 + $0x117c] sm:$0xf]
    %v1150 = vld [vmem:[%s1 + $0x1180] sm:$0xf]
    %v1151 = vld [vmem:[%s1 + $0x1184] sm:$0xf]
    %v1152 = vld [vmem:[%s1 + $0x1188] sm:$0xf]
    %v1153 = vld [vmem:[%s1 + $0x118c] sm:$0xf]
    %v1154 = vld [vmem:[%s1 + $0x1190] sm:$0xf]
    %v1155 = vld [vmem:[%s1 + $0x1194] sm:$0xf]
    %v1156 = vld [vmem:[%s1 + $0x1198] sm:$0xf]
    %v1157 = vld [vmem:[%s1 + $0x119c] sm:$0xf]
    %v1158 = vld [vmem:[%s1 + $0x11a0] sm:$0xf]
    %v1159 = vld [vmem:[%s1 + $0x11a4] sm:$0xf]
    %v1160 = vld [vmem:[%s1 + $0x11a8] sm:$0xf]
    %v1161 = vld [vmem:[%s1 + $0x11ac] sm:$0xf]
    %v1162 = vld [vmem:[%s1 + $0x11b0] sm:$0xf]
    %v1163 = vld [vmem:[%s1 + $0x11b4] sm:$0xf]
    %v1164 = vld [vmem:[%s1 + $0x11b8] sm:$0xf]
    %v1165 = vld [vmem:[%s1 + $0x11bc] sm:$0xf]
    %v1166 = vld [vmem:[%s1 + $0x11c0] sm:$0xf]
    %v1167 = vld [vmem:[%s1 + $0x11c4] sm:$0xf]
    %v1168 = vld [vmem:[%s1 + $0x11c8] sm:$0xf]
    %v1169 = vld [vmem:[%s1 + $0x11cc] sm:$0xf]
    %v1170 = vld [vmem:[%s1 + $0x11d0] sm:$0xf]
    %v1171 = vld [vmem:[%s1 + $0x11d4] sm:$0xf]
    %v1172 = vld [vmem:[%s1 + $0x11d8] sm:$0xf]
    %v1173 = vld [vmem:[%s1 + $0x11dc] sm:$0xf]
    %v1174 = vld [vmem:[%s1 + $0x11e0] sm:$0xf]
    %v1175 = vld [vmem:[%s1 + $0x11e4] sm:$0xf]
    %v1176 = vld [vmem:[%s1 + $0x11e8] sm:$0xf]
    %v1177 = vld [vmem:[%s1 + $0x11ec] sm:$0xf]
    %v1178 = vld [vmem:[%s1 + $0x11f0] sm:$0xf]
    %v1179 = vld [vmem:[%s1 + $0x11f4] sm:$0xf]
    %v1180 = vld [vmem:[%s1 + $0x11f8] sm:$0xf]
    %v1181 = vld [vmem:[%s1 + $0x11fc] sm:$0xf]
    %v1182 = vld [vmem:[%s2] sm:$0x1]
    %v1184 = vperm.slane %v1182, 0
    %1187 = vst [vmem:[#allocation1] ss:$9 sm:$0xff] %v21
    %v1188 = vld [vmem:[#allocation1] sm:$0xff]
    %v1189 = vld [vmem:[#allocation1 + $0x9] sm:$0xff]
    %v1190 = vld [vmem:[#allocation1 + $0x12] sm:$0xff]
    %v1191 = vld [vmem:[#allocation1 + $0x1b] sm:$0xff]
    %v1192 = vld [vmem:[#allocation1 + $0x24] sm:$0xff]
    %v1193 = vld [vmem:[#allocation1 + $0x2d] sm:$0xff]
    %v1194 = vld [vmem:[#allocation1 + $0x36] sm:$0xff]
    %v1195 = vld [vmem:[#allocation1 + $0x3f] sm:$0xff]
    %1197 = vst [vmem:[#allocation1] ss:$9 sm:$0xff] %v22
    %v1198 = vld [vmem:[#allocation1] sm:$0xff]
    %v1199 = vld [vmem:[#allocation1 + $0x9] sm:$0xff]
    %v1200 = vld [vmem:[#allocation1 + $0x12] sm:$0xff]
    %v1201 = vld [vmem:[#allocation1 + $0x1b] sm:$0xff]
    %v1202 = vld [vmem:[#allocation1 + $0x24] sm:$0xff]
    %v1203 = vld [vmem:[#allocation1 + $0x2d] sm:$0xff]
    %v1204 = vld [vmem:[#allocation1 + $0x36] sm:$0xff]
    %v1205 = vld [vmem:[#allocation1 + $0x3f] sm:$0xff]
    %1207 = vst [vmem:[#allocation1] ss:$9 sm:$0xff] %v23
    %v1208 = vld [vmem:[#allocation1] sm:$0xff]
    %v1209 = vld [vmem:[#allocation1 + $0x9] sm:$0xff]
    %v1210 = vld [vmem:[#allocation1 + $0x12] sm:$0xff]
    %v1211 = vld [vmem:[#allocation1 + $0x1b] sm:$0xff]
    %v1212 = vld [vmem:[#allocation1 + $0x24] sm:$0xff]
    %v1213 = vld [vmem:[#allocation1 + $0x2d] sm:$0xff]
    %v1214 = vld [vmem:[#allocation1 + $0x36] sm:$0xff]
    %v1215 = vld [vmem:[#allocation1 + $0x3f] sm:$0xff]
    %1217 = vst [vmem:[#allocation1] ss:$9 sm:$0xff] %v24
    %v1218 = vld [vmem:[#allocation1] sm:$0xff]
    %v1219 = vld [vmem:[#allocation1 + $0x9] sm:$0xff]
    %v1220 = vld [vmem:[#allocation1 + $0x12] sm:$0xff]
    %v1221 = vld [vmem:[#allocation1 + $0x1b] sm:$0xff]
    %v1222 = vld [vmem:[#allocation1 + $0x24] sm:$0xff]
    %v1223 = vld [vmem:[#allocation1 + $0x2d] sm:$0xff]
    %v1224 = vld [vmem:[#allocation1 + $0x36] sm:$0xff]
    %v1225 = vld [vmem:[#allocation1 + $0x3f] sm:$0xff]
    %1227 = vst [vmem:[#allocation1] ss:$9 sm:$0xff] %v25
    %v1228 = vld [vmem:[#allocation1] sm:$0xff]
    %v1229 = vld [vmem:[#allocation1 + $0x9] sm:$0xff]
    %v1230 = vld [vmem:[#allocation1 + $0x12] sm:$0xff]
    %v1231 = vld [vmem:[#allocation1 + $0x1b] sm:$0xff]
    %v1232 = vld [vmem:[#allocation1 + $0x24] sm:$0xff]
    %v1233 = vld [vmem:[#allocation1 + $0x2d] sm:$0xff]
    %v1234 = vld [vmem:[#allocation1 + $0x36] sm:$0xff]
    %v1235 = vld [vmem:[#allocation1 + $0x3f] sm:$0xff]
    %1237 = vst [vmem:[#allocation1] ss:$9 sm:$0xff] %v26
    %v1238 = vld [vmem:[#allocation1] sm:$0xff]
    %v1239 = vld [vmem:[#allocation1 + $0x9] sm:$0xff]
    %v1240 = vld [vmem:[#allocation1 + $0x12] sm:$0xff]
    %v1241 = vld [vmem:[#allocation1 + $0x1b] sm:$0xff]
    %v1242 = vld [vmem:[#allocation1 + $0x24] sm:$0xff]
    %v1243 = vld [vmem:[#allocation1 + $0x2d] sm:$0xff]
    %v1244 = vld [vmem:[#allocation1 + $0x36] sm:$0xff]
    %v1245 = vld [vmem:[#allocation1 + $0x3f] sm:$0xff]
    %1247 = vst [vmem:[#allocation1] ss:$9 sm:$0xff] %v27
    %v1248 = vld [vmem:[#allocation1] sm:$0xff]
    %v1249 = vld [vmem:[#allocation1 + $0x9] sm:$0xff]
    %v1250 = vld [vmem:[#allocation1 + $0x12] sm:$0xff]
    %v1251 = vld [vmem:[#allocation1 + $0x1b] sm:$0xff]
    %v1252 = vld [vmem:[#allocation1 + $0x24] sm:$0xff]
    %v1253 = vld [vmem:[#allocation1 + $0x2d] sm:$0xff]
    %v1254 = vld [vmem:[#allocation1 + $0x36] sm:$0xff]
    %v1255 = vld [vmem:[#allocation1 + $0x3f] sm:$0xff]
    %1257 = vst [vmem:[#allocation1] ss:$9 sm:$0xff] %v28
    %v1258 = vld [vmem:[#allocation1] sm:$0xff]
    %v1259 = vld [vmem:[#allocation1 + $0x9] sm:$0xff]
    %v1260 = vld [vmem:[#allocation1 + $0x12] sm:$0xff]
    %v1261 = vld [vmem:[#allocation1 + $0x1b] sm:$0xff]
    %v1262 = vld [vmem:[#allocation1 + $0x24] sm:$0xff]
    %v1263 = vld [vmem:[#allocation1 + $0x2d] sm:$0xff]
    %v1264 = vld [vmem:[#allocation1 + $0x36] sm:$0xff]
    %v1265 = vld [vmem:[#allocation1 + $0x3f] sm:$0xff]
    %1267 = vst [vmem:[#allocation1] ss:$9 sm:$0xff] %v29
    %v1268 = vld [vmem:[#allocation1] sm:$0xff]
    %v1269 = vld [vmem:[#allocation1 + $0x9] sm:$0xff]
    %v1270 = vld [vmem:[#allocation1 + $0x12] sm:$0xff]
    %v1271 = vld [vmem:[#allocation1 + $0x1b] sm:$0xff]
    %v1272 = vld [vmem:[#allocation1 + $0x24] sm:$0xff]
    %v1273 = vld [vmem:[#allocation1 + $0x2d] sm:$0xff]
    %v1274 = vld [vmem:[#allocation1 + $0x36] sm:$0xff]
    %v1275 = vld [vmem:[#allocation1 + $0x3f] sm:$0xff]
    %v2500 = vunpack.c.l.b16 %v30
    %v2501 = vunpack.c.l.b16 %v31
    %v2502 = vunpack.c.l.b16 %v32
    %v2503 = vunpack.c.l.b16 %v33
    %v2504 = vunpack.c.l.b16 %v34
    %v2505 = vunpack.c.l.b16 %v35
    %v2506 = vunpack.c.l.b16 %v36
    %v2507 = vunpack.c.l.b16 %v37
    %v2508 = vunpack.c.l.b16 %v38
    %v2509 = vunpack.c.l.b16 %v39
    %v2510 = vunpack.c.l.b16 %v40
    %v2511 = vunpack.c.l.b16 %v41
    %v2512 = vunpack.c.l.b16 %v42
    %v2513 = vunpack.c.l.b16 %v43
    %v2514 = vunpack.c.l.b16 %v44
    %v2515 = vunpack.c.l.b16 %v45
    %v2516 = vunpack.c.l.b16 %v46
    %v2517 = vunpack.c.l.b16 %v47
    %v2518 = vunpack.c.l.b16 %v48
    %v2519 = vunpack.c.l.b16 %v49
    %v2520 = vunpack.c.l.b16 %v50
    %v2521 = vunpack.c.l.b16 %v51
    %v2522 = vunpack.c.l.b16 %v52
    %v2523 = vunpack.c.l.b16 %v53
    %v2524 = vunpack.c.l.b16 %v54
    %v2525 = vunpack.c.l.b16 %v55
    %v2526 = vunpack.c.l.b16 %v56
    %v2527 = vunpack.c.l.b16 %v57
    %v2528 = vunpack.c.l.b16 %v58
    %v2529 = vunpack.c.l.b16 %v59
    %v2530 = vunpack.c.l.b16 %v60
    %v2531 = vunpack.c.l.b16 %v61
    %v2532 = vunpack.c.l.b16 %v62
    %v2533 = vunpack.c.l.b16 %v63
    %v2534 = vunpack.c.l.b16 %v64
    %v2535 = vunpack.c.l.b16 %v65
    %v2536 = vunpack.c.l.b16 %v66
    %v2537 = vunpack.c.l.b16 %v67
    %v2538 = vunpack.c.l.b16 %v68
    %v2539 = vunpack.c.l.b16 %v69
    %v2540 = vunpack.c.l.b16 %v70
    %v2541 = vunpack.c.l.b16 %v71
    %v2542 = vunpack.c.l.b16 %v72
    %v2543 = vunpack.c.l.b16 %v73
    %v2544 = vunpack.c.l.b16 %v74
    %v2545 = vunpack.c.l.b16 %v75
    %v2546 = vunpack.c.l.b16 %v76
    %v2547 = vunpack.c.l.b16 %v77
    %v2548 = vunpack.c.l.b16 %v78
    %v2549 = vunpack.c.l.b16 %v79
    %v2550 = vunpack.c.l.b16 %v80
    %v2551 = vunpack.c.l.b16 %v81
    %v2552 = vunpack.c.l.b16 %v82
    %v2553 = vunpack.c.l.b16 %v83
    %v2554 = vunpack.c.l.b16 %v84
    %v2555 = vunpack.c.l.b16 %v85
    %v2556 = vunpack.c.l.b16 %v86
    %v2557 = vunpack.c.l.b16 %v87
    %v2558 = vunpack.c.l.b16 %v88
    %v2559 = vunpack.c.l.b16 %v89
    %v2560 = vunpack.c.l.b16 %v90
    %v2561 = vunpack.c.l.b16 %v91
    %v2562 = vunpack.c.l.b16 %v92
    %v2563 = vunpack.c.l.b16 %v93
    %v2564 = vunpack.c.l.b16 %v94
    %v2565 = vunpack.c.l.b16 %v95
    %v2566 = vunpack.c.l.b16 %v96
    %v2567 = vunpack.c.l.b16 %v97
    %v2568 = vunpack.c.l.b16 %v98
    %v2569 = vunpack.c.l.b16 %v99
    %v2570 = vunpack.c.l.b16 %v100
    %v2571 = vunpack.c.l.b16 %v101
    %v2572 = vunpack.c.l.b16 %v102
    %v2573 = vunpack.c.l.b16 %v103
    %v2574 = vunpack.c.l.b16 %v104
    %v2575 = vunpack.c.l.b16 %v105
    %v2576 = vunpack.c.l.b16 %v106
    %v2577 = vunpack.c.l.b16 %v107
    %v2578 = vunpack.c.l.b16 %v108
    %v2579 = vunpack.c.l.b16 %v109
    %v2580 = vunpack.c.l.b16 %v110
    %v2581 = vunpack.c.l.b16 %v111
    %v2582 = vunpack.c.l.b16 %v112
    %v2583 = vunpack.c.l.b16 %v113
    %v2584 = vunpack.c.l.b16 %v114
    %v2585 = vunpack.c.l.b16 %v115
    %v2586 = vunpack.c.l.b16 %v116
    %v2587 = vunpack.c.l.b16 %v117
    %v2588 = vunpack.c.l.b16 %v118
    %v2589 = vunpack.c.l.b16 %v119
    %v2590 = vunpack.c.l.b16 %v120
    %v2591 = vunpack.c.l.b16 %v121
    %v2592 = vunpack.c.l.b16 %v122
    %v2593 = vunpack.c.l.b16 %v123
    %v2594 = vunpack.c.l.b16 %v124
    %v2595 = vunpack.c.l.b16 %v125
    %v2596 = vunpack.c.l.b16 %v126
    %v2597 = vunpack.c.l.b16 %v127
    %v2598 = vunpack.c.l.b16 %v128
    %v2599 = vunpack.c.l.b16 %v129
    %v2600 = vunpack.c.l.b16 %v130
    %v2601 = vunpack.c.l.b16 %v131
    %v2602 = vunpack.c.l.b16 %v132
    %v2603 = vunpack.c.l.b16 %v133
    %v2604 = vunpack.c.l.b16 %v134
    %v2605 = vunpack.c.l.b16 %v135
    %v2606 = vunpack.c.l.b16 %v136
    %v2607 = vunpack.c.l.b16 %v137
    %v2608 = vunpack.c.l.b16 %v138
    %v2609 = vunpack.c.l.b16 %v139
    %v2610 = vunpack.c.l.b16 %v140
    %v2611 = vunpack.c.l.b16 %v141
    %v2612 = vunpack.c.l.b16 %v142
    %v2613 = vunpack.c.l.b16 %v143
    %v2614 = vunpack.c.l.b16 %v144
    %v2615 = vunpack.c.l.b16 %v145
    %v2616 = vunpack.c.l.b16 %v146
    %v2617 = vunpack.c.l.b16 %v147
    %v2618 = vunpack.c.l.b16 %v148
    %v2619 = vunpack.c.l.b16 %v149
    %v2620 = vunpack.c.l.b16 %v150
    %v2621 = vunpack.c.l.b16 %v151
    %v2622 = vunpack.c.l.b16 %v152
    %v2623 = vunpack.c.l.b16 %v153
    %v2624 = vunpack.c.l.b16 %v154
    %v2625 = vunpack.c.l.b16 %v155
    %v2626 = vunpack.c.l.b16 %v156
    %v2627 = vunpack.c.l.b16 %v157
    %v2628 = vunpack.c.l.b16 %v158
    %v2629 = vunpack.c.l.b16 %v159
    %v2630 = vunpack.c.l.b16 %v160
    %v2631 = vunpack.c.l.b16 %v161
    %v2632 = vunpack.c.l.b16 %v162
    %v2633 = vunpack.c.l.b16 %v163
    %v2634 = vunpack.c.l.b16 %v164
    %v2635 = vunpack.c.l.b16 %v165
    %v2636 = vunpack.c.l.b16 %v166
    %v2637 = vunpack.c.l.b16 %v167
    %v2638 = vunpack.c.l.b16 %v168
    %v2639 = vunpack.c.l.b16 %v169
    %v2640 = vunpack.c.l.b16 %v170
    %v2641 = vunpack.c.l.b16 %v171
    %v2642 = vunpack.c.l.b16 %v172
    %v2643 = vunpack.c.l.b16 %v173
    %v2644 = vunpack.c.l.b16 %v174
    %v2645 = vunpack.c.l.b16 %v175
    %v2646 = vunpack.c.l.b16 %v176
    %v2647 = vunpack.c.l.b16 %v177
    %v2648 = vunpack.c.l.b16 %v178
    %v2649 = vunpack.c.l.b16 %v179
    %v2650 = vunpack.c.l.b16 %v180
    %v2651 = vunpack.c.l.b16 %v181
    %v2652 = vunpack.c.l.b16 %v182
    %v2653 = vunpack.c.l.b16 %v183
    %v2654 = vunpack.c.l.b16 %v184
    %v2655 = vunpack.c.l.b16 %v185
    %v2656 = vunpack.c.l.b16 %v186
    %v2657 = vunpack.c.l.b16 %v187
    %v2658 = vunpack.c.l.b16 %v188
    %v2659 = vunpack.c.l.b16 %v189
    %v2660 = vunpack.c.l.b16 %v190
    %v2661 = vunpack.c.l.b16 %v191
    %v2662 = vunpack.c.l.b16 %v192
    %v2663 = vunpack.c.l.b16 %v193
    %v2664 = vunpack.c.l.b16 %v194
    %v2665 = vunpack.c.l.b16 %v195
    %v2666 = vunpack.c.l.b16 %v196
    %v2667 = vunpack.c.l.b16 %v197
    %v2668 = vunpack.c.l.b16 %v198
    %v2669 = vunpack.c.l.b16 %v199
    %v2670 = vunpack.c.l.b16 %v200
    %v2671 = vunpack.c.l.b16 %v201
    %v2672 = vunpack.c.l.b16 %v202
    %v2673 = vunpack.c.l.b16 %v203
    %v2674 = vunpack.c.l.b16 %v204
    %v2675 = vunpack.c.l.b16 %v205
    %v2676 = vunpack.c.l.b16 %v206
    %v2677 = vunpack.c.l.b16 %v207
    %v2678 = vunpack.c.l.b16 %v208
    %v2679 = vunpack.c.l.b16 %v209
    %v2680 = vunpack.c.l.b16 %v210
    %v2681 = vunpack.c.l.b16 %v211
    %v2682 = vunpack.c.l.b16 %v212
    %v2683 = vunpack.c.l.b16 %v213
    %v2684 = vunpack.c.l.b16 %v214
    %v2685 = vunpack.c.l.b16 %v215
    %v2686 = vunpack.c.l.b16 %v216
    %v2687 = vunpack.c.l.b16 %v217
    %v2688 = vunpack.c.l.b16 %v218
    %v2689 = vunpack.c.l.b16 %v219
    %v2690 = vunpack.c.l.b16 %v220
    %v2691 = vunpack.c.l.b16 %v221
    %v2692 = vunpack.c.l.b16 %v222
    %v2693 = vunpack.c.l.b16 %v223
    %v2694 = vunpack.c.l.b16 %v224
    %v2695 = vunpack.c.l.b16 %v225
    %v2696 = vunpack.c.l.b16 %v226
    %v2697 = vunpack.c.l.b16 %v227
    %v2698 = vunpack.c.l.b16 %v228
    %v2699 = vunpack.c.l.b16 %v229
    %v2700 = vunpack.c.l.b16 %v230
    %v2701 = vunpack.c.l.b16 %v231
    %v2702 = vunpack.c.l.b16 %v232
    %v2703 = vunpack.c.l.b16 %v233
    %v2704 = vunpack.c.l.b16 %v234
    %v2705 = vunpack.c.l.b16 %v235
    %v2706 = vunpack.c.l.b16 %v236
    %v2707 = vunpack.c.l.b16 %v237
    %v2708 = vunpack.c.l.b16 %v238
    %v2709 = vunpack.c.l.b16 %v239
    %v2710 = vunpack.c.l.b16 %v240
    %v2711 = vunpack.c.l.b16 %v241
    %v2712 = vunpack.c.l.b16 %v242
    %v2713 = vunpack.c.l.b16 %v243
    %v2714 = vunpack.c.l.b16 %v244
    %v2715 = vunpack.c.l.b16 %v245
    %v2716 = vunpack.c.l.b16 %v246
    %v2717 = vunpack.c.l.b16 %v247
    %v2718 = vunpack.c.l.b16 %v248
    %v2719 = vunpack.c.l.b16 %v249
    %v2720 = vunpack.c.l.b16 %v250
    %v2721 = vunpack.c.l.b16 %v251
    %v2722 = vunpack.c.l.b16 %v252
    %v2723 = vunpack.c.l.b16 %v253
    %v2724 = vunpack.c.l.b16 %v254
    %v2725 = vunpack.c.l.b16 %v255
    %v2726 = vunpack.c.l.b16 %v256
    %v2727 = vunpack.c.l.b16 %v257
    %v2728 = vunpack.c.l.b16 %v258
    %v2729 = vunpack.c.l.b16 %v259
    %v2730 = vunpack.c.l.b16 %v260
    %v2731 = vunpack.c.l.b16 %v261
    %v2732 = vunpack.c.l.b16 %v262
    %v2733 = vunpack.c.l.b16 %v263
    %v2734 = vunpack.c.l.b16 %v264
    %v2735 = vunpack.c.l.b16 %v265
    %v2736 = vunpack.c.l.b16 %v266
    %v2737 = vunpack.c.l.b16 %v267
    %v2738 = vunpack.c.l.b16 %v268
    %v2739 = vunpack.c.l.b16 %v269
    %v2740 = vunpack.c.l.b16 %v270
    %v2741 = vunpack.c.l.b16 %v271
    %v2742 = vunpack.c.l.b16 %v272
    %v2743 = vunpack.c.l.b16 %v273
    %v2744 = vunpack.c.l.b16 %v274
    %v2745 = vunpack.c.l.b16 %v275
    %v2746 = vunpack.c.l.b16 %v276
    %v2747 = vunpack.c.l.b16 %v277
    %v2748 = vunpack.c.l.b16 %v278
    %v2749 = vunpack.c.l.b16 %v279
    %v2750 = vunpack.c.l.b16 %v280
    %v2751 = vunpack.c.l.b16 %v281
    %v2752 = vunpack.c.l.b16 %v282
    %v2753 = vunpack.c.l.b16 %v283
    %v2754 = vunpack.c.l.b16 %v284
    %v2755 = vunpack.c.l.b16 %v285
    %v2756 = vunpack.c.l.b16 %v286
    %v2757 = vunpack.c.l.b16 %v287
    %v2758 = vunpack.c.l.b16 %v288
    %v2759 = vunpack.c.l.b16 %v289
    %v2760 = vunpack.c.l.b16 %v290
    %v2761 = vunpack.c.l.b16 %v291
    %v2762 = vunpack.c.l.b16 %v292
    %v2763 = vunpack.c.l.b16 %v293
    %v2764 = vunpack.c.l.b16 %v294
    %v2765 = vunpack.c.l.b16 %v295
    %v2766 = vunpack.c.l.b16 %v296
    %v2767 = vunpack.c.l.b16 %v297
    %v2768 = vunpack.c.l.b16 %v298
    %v2769 = vunpack.c.l.b16 %v299
    %v2770 = vunpack.c.l.b16 %v300
    %v2771 = vunpack.c.l.b16 %v301
    %v2772 = vunpack.c.l.b16 %v302
    %v2773 = vunpack.c.l.b16 %v303
    %v2774 = vunpack.c.l.b16 %v304
    %v2775 = vunpack.c.l.b16 %v305
    %v2776 = vunpack.c.l.b16 %v306
    %v2777 = vunpack.c.l.b16 %v307
    %v2778 = vunpack.c.l.b16 %v308
    %v2779 = vunpack.c.l.b16 %v309
    %v2780 = vunpack.c.l.b16 %v310
    %v2781 = vunpack.c.l.b16 %v311
    %v2782 = vunpack.c.l.b16 %v312
    %v2783 = vunpack.c.l.b16 %v313
    %v2784 = vunpack.c.l.b16 %v314
    %v2785 = vunpack.c.l.b16 %v315
    %v2786 = vunpack.c.l.b16 %v316
    %v2787 = vunpack.c.l.b16 %v317
    %v2788 = vunpack.c.l.b16 %v318
    %v2789 = vunpack.c.l.b16 %v319
    %v2790 = vunpack.c.l.b16 %v320
    %v2791 = vunpack.c.l.b16 %v321
    %v2792 = vunpack.c.l.b16 %v322
    %v2793 = vunpack.c.l.b16 %v323
    %v2794 = vunpack.c.l.b16 %v324
    %v2795 = vunpack.c.l.b16 %v325
    %v2796 = vunpack.c.l.b16 %v326
    %v2797 = vunpack.c.l.b16 %v327
    %v2798 = vunpack.c.l.b16 %v328
    %v2799 = vunpack.c.l.b16 %v329
    %v2800 = vunpack.c.l.b16 %v330
    %v2801 = vunpack.c.l.b16 %v331
    %v2802 = vunpack.c.l.b16 %v332
    %v2803 = vunpack.c.l.b16 %v333
    %v2804 = vunpack.c.l.b16 %v334
    %v2805 = vunpack.c.l.b16 %v335
    %v2806 = vunpack.c.l.b16 %v336
    %v2807 = vunpack.c.l.b16 %v337
    %v2808 = vunpack.c.l.b16 %v338
    %v2809 = vunpack.c.l.b16 %v339
    %v2810 = vunpack.c.l.b16 %v340
    %v2811 = vunpack.c.l.b16 %v341
    %v2812 = vunpack.c.l.b16 %v342
    %v2813 = vunpack.c.l.b16 %v343
    %v2814 = vunpack.c.l.b16 %v344
    %v2815 = vunpack.c.l.b16 %v345
    %v2816 = vunpack.c.l.b16 %v346
    %v2817 = vunpack.c.l.b16 %v347
    %v2818 = vunpack.c.l.b16 %v348
    %v2819 = vunpack.c.l.b16 %v349
    %v2820 = vunpack.c.l.b16 %v350
    %v2821 = vunpack.c.l.b16 %v351
    %v2822 = vunpack.c.l.b16 %v352
    %v2823 = vunpack.c.l.b16 %v353
    %v2824 = vunpack.c.l.b16 %v354
    %v2825 = vunpack.c.l.b16 %v355
    %v2826 = vunpack.c.l.b16 %v356
    %v2827 = vunpack.c.l.b16 %v357
    %v2828 = vunpack.c.l.b16 %v358
    %v2829 = vunpack.c.l.b16 %v359
    %v2830 = vunpack.c.l.b16 %v360
    %v2831 = vunpack.c.l.b16 %v361
    %v2832 = vunpack.c.l.b16 %v362
    %v2833 = vunpack.c.l.b16 %v363
    %v2834 = vunpack.c.l.b16 %v364
    %v2835 = vunpack.c.l.b16 %v365
    %v2836 = vunpack.c.l.b16 %v366
    %v2837 = vunpack.c.l.b16 %v367
    %v2838 = vunpack.c.l.b16 %v368
    %v2839 = vunpack.c.l.b16 %v369
    %v2840 = vunpack.c.l.b16 %v370
    %v2841 = vunpack.c.l.b16 %v371
    %v2842 = vunpack.c.l.b16 %v372
    %v2843 = vunpack.c.l.b16 %v373
    %v2844 = vunpack.c.l.b16 %v374
    %v2845 = vunpack.c.l.b16 %v375
    %v2846 = vunpack.c.l.b16 %v376
    %v2847 = vunpack.c.l.b16 %v377
    %v2848 = vunpack.c.l.b16 %v378
    %v2849 = vunpack.c.l.b16 %v379
    %v2850 = vunpack.c.l.b16 %v380
    %v2851 = vunpack.c.l.b16 %v381
    %v2852 = vunpack.c.l.b16 %v382
    %v2853 = vunpack.c.l.b16 %v383
    %v2854 = vunpack.c.l.b16 %v384
    %v2855 = vunpack.c.l.b16 %v385
    %v2856 = vunpack.c.l.b16 %v386
    %v2857 = vunpack.c.l.b16 %v387
    %v2858 = vunpack.c.l.b16 %v388
    %v2859 = vunpack.c.l.b16 %v389
    %v2860 = vunpack.c.l.b16 %v390
    %v2861 = vunpack.c.l.b16 %v391
    %v2862 = vunpack.c.l.b16 %v392
    %v2863 = vunpack.c.l.b16 %v393
    %v2864 = vunpack.c.l.b16 %v394
    %v2865 = vunpack.c.l.b16 %v395
    %v2866 = vunpack.c.l.b16 %v396
    %v2867 = vunpack.c.l.b16 %v397
    %v2868 = vunpack.c.l.b16 %v398
    %v2869 = vunpack.c.l.b16 %v399
    %v2870 = vunpack.c.l.b16 %v400
    %v2871 = vunpack.c.l.b16 %v401
    %v2872 = vunpack.c.l.b16 %v402
    %v2873 = vunpack.c.l.b16 %v403
    %v2874 = vunpack.c.l.b16 %v404
    %v2875 = vunpack.c.l.b16 %v405
    %v2876 = vunpack.c.l.b16 %v406
    %v2877 = vunpack.c.l.b16 %v407
    %v2878 = vunpack.c.l.b16 %v408
    %v2879 = vunpack.c.l.b16 %v409
    %v2880 = vunpack.c.l.b16 %v410
    %v2881 = vunpack.c.l.b16 %v411
    %v2882 = vunpack.c.l.b16 %v412
    %v2883 = vunpack.c.l.b16 %v413
    %v2884 = vunpack.c.l.b16 %v414
    %v2885 = vunpack.c.l.b16 %v415
    %v2886 = vunpack.c.l.b16 %v416
    %v2887 = vunpack.c.l.b16 %v417
    %v2888 = vunpack.c.l.b16 %v418
    %v2889 = vunpack.c.l.b16 %v419
    %v2890 = vunpack.c.l.b16 %v420
    %v2891 = vunpack.c.l.b16 %v421
    %v2892 = vunpack.c.l.b16 %v422
    %v2893 = vunpack.c.l.b16 %v423
    %v2894 = vunpack.c.l.b16 %v424
    %v2895 = vunpack.c.l.b16 %v425
    %v2896 = vunpack.c.l.b16 %v426
    %v2897 = vunpack.c.l.b16 %v427
    %v2898 = vunpack.c.l.b16 %v428
    %v2899 = vunpack.c.l.b16 %v429
    %v2900 = vunpack.c.l.b16 %v430
    %v2901 = vunpack.c.l.b16 %v431
    %v2902 = vunpack.c.l.b16 %v432
    %v2903 = vunpack.c.l.b16 %v433
    %v2904 = vunpack.c.l.b16 %v434
    %v2905 = vunpack.c.l.b16 %v435
    %v2906 = vunpack.c.l.b16 %v436
    %v2907 = vunpack.c.l.b16 %v437
    %v2908 = vunpack.c.l.b16 %v438
    %v2909 = vunpack.c.l.b16 %v439
    %v2910 = vunpack.c.l.b16 %v440
    %v2911 = vunpack.c.l.b16 %v441
    %v2912 = vunpack.c.l.b16 %v442
    %v2913 = vunpack.c.l.b16 %v443
    %v2914 = vunpack.c.l.b16 %v444
    %v2915 = vunpack.c.l.b16 %v445
    %v2916 = vunpack.c.l.b16 %v446
    %v2917 = vunpack.c.l.b16 %v447
    %v2918 = vunpack.c.l.b16 %v448
    %v2919 = vunpack.c.l.b16 %v449
    %v2920 = vunpack.c.l.b16 %v450
    %v2921 = vunpack.c.l.b16 %v451
    %v2922 = vunpack.c.l.b16 %v452
    %v2923 = vunpack.c.l.b16 %v453
    %v2924 = vunpack.c.l.b16 %v454
    %v2925 = vunpack.c.l.b16 %v455
    %v2926 = vunpack.c.l.b16 %v456
    %v2927 = vunpack.c.l.b16 %v457
    %v2928 = vunpack.c.l.b16 %v458
    %v2929 = vunpack.c.l.b16 %v459
    %v2930 = vunpack.c.l.b16 %v460
    %v2931 = vunpack.c.l.b16 %v461
    %v2932 = vunpack.c.l.b16 %v462
    %v2933 = vunpack.c.l.b16 %v463
    %v2934 = vunpack.c.l.b16 %v464
    %v2935 = vunpack.c.l.b16 %v465
    %v2936 = vunpack.c.l.b16 %v466
    %v2937 = vunpack.c.l.b16 %v467
    %v2938 = vunpack.c.l.b16 %v468
    %v2939 = vunpack.c.l.b16 %v469
    %v2940 = vunpack.c.l.b16 %v470
    %v2941 = vunpack.c.l.b16 %v471
    %v2942 = vunpack.c.l.b16 %v472
    %v2943 = vunpack.c.l.b16 %v473
    %v2944 = vunpack.c.l.b16 %v474
    %v2945 = vunpack.c.l.b16 %v475
    %v2946 = vunpack.c.l.b16 %v476
    %v2947 = vunpack.c.l.b16 %v477
    %v2948 = vunpack.c.l.b16 %v478
    %v2949 = vunpack.c.l.b16 %v479
    %v2950 = vunpack.c.l.b16 %v480
    %v2951 = vunpack.c.l.b16 %v481
    %v2952 = vunpack.c.l.b16 %v482
    %v2953 = vunpack.c.l.b16 %v483
    %v2954 = vunpack.c.l.b16 %v484
    %v2955 = vunpack.c.l.b16 %v485
    %v2956 = vunpack.c.l.b16 %v486
    %v2957 = vunpack.c.l.b16 %v487
    %v2958 = vunpack.c.l.b16 %v488
    %v2959 = vunpack.c.l.b16 %v489
    %v2960 = vunpack.c.l.b16 %v490
    %v2961 = vunpack.c.l.b16 %v491
    %v2962 = vunpack.c.l.b16 %v492
    %v2963 = vunpack.c.l.b16 %v493
    %v2964 = vunpack.c.l.b16 %v494
    %v2965 = vunpack.c.l.b16 %v495
    %v2966 = vunpack.c.l.b16 %v496
    %v2967 = vunpack.c.l.b16 %v497
    %v2968 = vunpack.c.l.b16 %v498
    %v2969 = vunpack.c.l.b16 %v499
    %v2970 = vunpack.c.l.b16 %v500
    %v2971 = vunpack.c.l.b16 %v501
    %v2972 = vunpack.c.l.b16 %v502
    %v2973 = vunpack.c.l.b16 %v503
    %v2974 = vunpack.c.l.b16 %v504
    %v2975 = vunpack.c.l.b16 %v505
    %v2976 = vunpack.c.l.b16 %v506
    %v2977 = vunpack.c.l.b16 %v507
    %v2978 = vunpack.c.l.b16 %v508
    %v2979 = vunpack.c.l.b16 %v509
    %v2980 = vunpack.c.l.b16 %v510
    %v2981 = vunpack.c.l.b16 %v511
    %v2982 = vunpack.c.l.b16 %v512
    %v2983 = vunpack.c.l.b16 %v513
    %v2984 = vunpack.c.l.b16 %v514
    %v2985 = vunpack.c.l.b16 %v515
    %v2986 = vunpack.c.l.b16 %v516
    %v2987 = vunpack.c.l.b16 %v517
    %v2988 = vunpack.c.l.b16 %v518
    %v2989 = vunpack.c.l.b16 %v519
    %v2990 = vunpack.c.l.b16 %v520
    %v2991 = vunpack.c.l.b16 %v521
    %v2992 = vunpack.c.l.b16 %v522
    %v2993 = vunpack.c.l.b16 %v523
    %v2994 = vunpack.c.l.b16 %v524
    %v2995 = vunpack.c.l.b16 %v525
    %v2996 = vunpack.c.l.b16 %v526
    %v2997 = vunpack.c.l.b16 %v527
    %v2998 = vunpack.c.l.b16 %v528
    %v2999 = vunpack.c.l.b16 %v529
    %v3000 = vunpack.c.l.b16 %v530
    %v3001 = vunpack.c.l.b16 %v531
    %v3002 = vunpack.c.l.b16 %v532
    %v3003 = vunpack.c.l.b16 %v533
    %v3004 = vunpack.c.l.b16 %v534
    %v3005 = vunpack.c.l.b16 %v535
    %v3006 = vunpack.c.l.b16 %v536
    %v3007 = vunpack.c.l.b16 %v537
    %v3008 = vunpack.c.l.b16 %v538
    %v3009 = vunpack.c.l.b16 %v539
    %v3010 = vunpack.c.l.b16 %v540
    %v3011 = vunpack.c.l.b16 %v541
    %v3012 = vunpack.c.l.b16 %v542
    %v3013 = vunpack.c.l.b16 %v543
    %v3014 = vunpack.c.l.b16 %v544
    %v3015 = vunpack.c.l.b16 %v545
    %v3016 = vunpack.c.l.b16 %v546
    %v3017 = vunpack.c.l.b16 %v547
    %v3018 = vunpack.c.l.b16 %v548
    %v3019 = vunpack.c.l.b16 %v549
    %v3020 = vunpack.c.l.b16 %v550
    %v3021 = vunpack.c.l.b16 %v551
    %v3022 = vunpack.c.l.b16 %v552
    %v3023 = vunpack.c.l.b16 %v553
    %v3024 = vunpack.c.l.b16 %v554
    %v3025 = vunpack.c.l.b16 %v555
    %v3026 = vunpack.c.l.b16 %v556
    %v3027 = vunpack.c.l.b16 %v557
    %v3028 = vunpack.c.l.b16 %v558
    %v3029 = vunpack.c.l.b16 %v559
    %v3030 = vunpack.c.l.b16 %v560
    %v3031 = vunpack.c.l.b16 %v561
    %v3032 = vunpack.c.l.b16 %v562
    %v3033 = vunpack.c.l.b16 %v563
    %v3034 = vunpack.c.l.b16 %v564
    %v3035 = vunpack.c.l.b16 %v565
    %v3036 = vunpack.c.l.b16 %v566
    %v3037 = vunpack.c.l.b16 %v567
    %v3038 = vunpack.c.l.b16 %v568
    %v3039 = vunpack.c.l.b16 %v569
    %v3040 = vunpack.c.l.b16 %v570
    %v3041 = vunpack.c.l.b16 %v571
    %v3042 = vunpack.c.l.b16 %v572
    %v3043 = vunpack.c.l.b16 %v573
    %v3044 = vunpack.c.l.b16 %v574
    %v3045 = vunpack.c.l.b16 %v575
    %v3046 = vunpack.c.l.b16 %v576
    %v3047 = vunpack.c.l.b16 %v577
    %v3048 = vunpack.c.l.b16 %v578
    %v3049 = vunpack.c.l.b16 %v579
    %v3050 = vunpack.c.l.b16 %v580
    %v3051 = vunpack.c.l.b16 %v581
    %v3052 = vunpack.c.l.b16 %v582
    %v3053 = vunpack.c.l.b16 %v583
    %v3054 = vunpack.c.l.b16 %v584
    %v3055 = vunpack.c.l.b16 %v585
    %v3056 = vunpack.c.l.b16 %v586
    %v3057 = vunpack.c.l.b16 %v587
    %v3058 = vunpack.c.l.b16 %v588
    %v3059 = vunpack.c.l.b16 %v589
    %v3060 = vunpack.c.l.b16 %v590
    %v3061 = vunpack.c.l.b16 %v591
    %v3062 = vunpack.c.l.b16 %v592
    %v3063 = vunpack.c.l.b16 %v593
    %v3064 = vunpack.c.l.b16 %v594
    %v3065 = vunpack.c.l.b16 %v595
    %v3066 = vunpack.c.l.b16 %v596
    %v3067 = vunpack.c.l.b16 %v597
    %v3068 = vunpack.c.l.b16 %v598
    %v3069 = vunpack.c.l.b16 %v599
    %v3070 = vunpack.c.l.b16 %v600
    %v3071 = vunpack.c.l.b16 %v601
    %v3072 = vunpack.c.l.b16 %v602
    %v3073 = vunpack.c.l.b16 %v603
    %v3074 = vunpack.c.l.b16 %v604
    %v3075 = vunpack.c.l.b16 %v605
    %v3076 = vunpack.c.l.b16 %v606
    %v3077 = vunpack.c.l.b16 %v607
    %v3078 = vunpack.c.l.b16 %v608
    %v3079 = vunpack.c.l.b16 %v609
    %v3080 = vunpack.c.l.b16 %v610
    %v3081 = vunpack.c.l.b16 %v611
    %v3082 = vunpack.c.l.b16 %v612
    %v3083 = vunpack.c.l.b16 %v613
    %v3084 = vunpack.c.l.b16 %v614
    %v3085 = vunpack.c.l.b16 %v615
    %v3086 = vunpack.c.l.b16 %v616
    %v3087 = vunpack.c.l.b16 %v617
    %v3088 = vunpack.c.l.b16 %v618
    %v3089 = vunpack.c.l.b16 %v619
    %v3090 = vunpack.c.l.b16 %v620
    %v3091 = vunpack.c.l.b16 %v621
    %v3092 = vunpack.c.l.b16 %v622
    %v3093 = vunpack.c.l.b16 %v623
    %v3094 = vunpack.c.l.b16 %v624
    %v3095 = vunpack.c.l.b16 %v625
    %v3096 = vunpack.c.l.b16 %v626
    %v3097 = vunpack.c.l.b16 %v627
    %v3098 = vunpack.c.l.b16 %v628
    %v3099 = vunpack.c.l.b16 %v629
    %v3100 = vunpack.c.l.b16 %v630
    %v3101 = vunpack.c.l.b16 %v631
    %v3102 = vunpack.c.l.b16 %v632
    %v3103 = vunpack.c.l.b16 %v633
    %v3104 = vunpack.c.l.b16 %v634
    %v3105 = vunpack.c.l.b16 %v635
    %v3106 = vunpack.c.l.b16 %v636
    %v3107 = vunpack.c.l.b16 %v637
    %v3108 = vunpack.c.l.b16 %v638
    %v3109 = vunpack.c.l.b16 %v639
    %v3110 = vunpack.c.l.b16 %v640
    %v3111 = vunpack.c.l.b16 %v641
    %v3112 = vunpack.c.l.b16 %v642
    %v3113 = vunpack.c.l.b16 %v643
    %v3114 = vunpack.c.l.b16 %v644
    %v3115 = vunpack.c.l.b16 %v645
    %v3116 = vunpack.c.l.b16 %v646
    %v3117 = vunpack.c.l.b16 %v647
    %v3118 = vunpack.c.l.b16 %v648
    %v3119 = vunpack.c.l.b16 %v649
    %v3120 = vunpack.c.l.b16 %v650
    %v3121 = vunpack.c.l.b16 %v651
    %v3122 = vunpack.c.l.b16 %v652
    %v3123 = vunpack.c.l.b16 %v653
    %v3124 = vunpack.c.l.b16 %v654
    %v3125 = vunpack.c.l.b16 %v655
    %v3126 = vunpack.c.l.b16 %v656
    %v3127 = vunpack.c.l.b16 %v657
    %v3128 = vunpack.c.l.b16 %v658
    %v3129 = vunpack.c.l.b16 %v659
    %v3130 = vunpack.c.l.b16 %v660
    %v3131 = vunpack.c.l.b16 %v661
    %v3132 = vunpack.c.l.b16 %v662
    %v3133 = vunpack.c.l.b16 %v663
    %v3134 = vunpack.c.l.b16 %v664
    %v3135 = vunpack.c.l.b16 %v665
    %v3136 = vunpack.c.l.b16 %v666
    %v3137 = vunpack.c.l.b16 %v667
    %v3138 = vunpack.c.l.b16 %v668
    %v3139 = vunpack.c.l.b16 %v669
    %v3140 = vunpack.c.l.b16 %v670
    %v3141 = vunpack.c.l.b16 %v671
    %v3142 = vunpack.c.l.b16 %v672
    %v3143 = vunpack.c.l.b16 %v673
    %v3144 = vunpack.c.l.b16 %v674
    %v3145 = vunpack.c.l.b16 %v675
    %v3146 = vunpack.c.l.b16 %v676
    %v3147 = vunpack.c.l.b16 %v677
    %v3148 = vunpack.c.l.b16 %v678
    %v3149 = vunpack.c.l.b16 %v679
    %v3150 = vunpack.c.l.b16 %v680
    %v3151 = vunpack.c.l.b16 %v681
    %v3152 = vunpack.c.l.b16 %v682
    %v3153 = vunpack.c.l.b16 %v683
    %v3154 = vunpack.c.l.b16 %v684
    %v3155 = vunpack.c.l.b16 %v685
    %v3156 = vunpack.c.l.b16 %v686
    %v3157 = vunpack.c.l.b16 %v687
    %v3158 = vunpack.c.l.b16 %v688
    %v3159 = vunpack.c.l.b16 %v689
    %v3160 = vunpack.c.l.b16 %v690
    %v3161 = vunpack.c.l.b16 %v691
    %v3162 = vunpack.c.l.b16 %v692
    %v3163 = vunpack.c.l.b16 %v693
    %v3164 = vunpack.c.l.b16 %v694
    %v3165 = vunpack.c.l.b16 %v695
    %v3166 = vunpack.c.l.b16 %v696
    %v3167 = vunpack.c.l.b16 %v697
    %v3168 = vunpack.c.l.b16 %v698
    %v3169 = vunpack.c.l.b16 %v699
    %v3170 = vunpack.c.l.b16 %v700
    %v3171 = vunpack.c.l.b16 %v701
    %v3172 = vunpack.c.l.b16 %v702
    %v3173 = vunpack.c.l.b16 %v703
    %v3174 = vunpack.c.l.b16 %v704
    %v3175 = vunpack.c.l.b16 %v705
    %v3176 = vunpack.c.l.b16 %v706
    %v3177 = vunpack.c.l.b16 %v707
    %v3178 = vunpack.c.l.b16 %v708
    %v3179 = vunpack.c.l.b16 %v709
    %v3180 = vunpack.c.l.b16 %v710
    %v3181 = vunpack.c.l.b16 %v711
    %v3182 = vunpack.c.l.b16 %v712
    %v3183 = vunpack.c.l.b16 %v713
    %v3184 = vunpack.c.l.b16 %v714
    %v3185 = vunpack.c.l.b16 %v715
    %v3186 = vunpack.c.l.b16 %v716
    %v3187 = vunpack.c.l.b16 %v717
    %v3188 = vunpack.c.l.b16 %v718
    %v3189 = vunpack.c.l.b16 %v719
    %v3190 = vunpack.c.l.b16 %v720
    %v3191 = vunpack.c.l.b16 %v721
    %v3192 = vunpack.c.l.b16 %v722
    %v3193 = vunpack.c.l.b16 %v723
    %v3194 = vunpack.c.l.b16 %v724
    %v3195 = vunpack.c.l.b16 %v725
    %v3196 = vunpack.c.l.b16 %v726
    %v3197 = vunpack.c.l.b16 %v727
    %v3198 = vunpack.c.l.b16 %v728
    %v3199 = vunpack.c.l.b16 %v729
    %v3200 = vunpack.c.l.b16 %v730
    %v3201 = vunpack.c.l.b16 %v731
    %v3202 = vunpack.c.l.b16 %v732
    %v3203 = vunpack.c.l.b16 %v733
    %v3204 = vunpack.c.l.b16 %v734
    %v3205 = vunpack.c.l.b16 %v735
    %v3206 = vunpack.c.l.b16 %v736
    %v3207 = vunpack.c.l.b16 %v737
    %v3208 = vunpack.c.l.b16 %v738
    %v3209 = vunpack.c.l.b16 %v739
    %v3210 = vunpack.c.l.b16 %v740
    %v3211 = vunpack.c.l.b16 %v741
    %v3212 = vunpack.c.l.b16 %v742
    %v3213 = vunpack.c.l.b16 %v743
    %v3214 = vunpack.c.l.b16 %v744
    %v3215 = vunpack.c.l.b16 %v745
    %v3216 = vunpack.c.l.b16 %v746
    %v3217 = vunpack.c.l.b16 %v747
    %v3218 = vunpack.c.l.b16 %v748
    %v3219 = vunpack.c.l.b16 %v749
    %v3220 = vunpack.c.l.b16 %v750
    %v3221 = vunpack.c.l.b16 %v751
    %v3222 = vunpack.c.l.b16 %v752
    %v3223 = vunpack.c.l.b16 %v753
    %v3224 = vunpack.c.l.b16 %v754
    %v3225 = vunpack.c.l.b16 %v755
    %v3226 = vunpack.c.l.b16 %v756
    %v3227 = vunpack.c.l.b16 %v757
    %v3228 = vunpack.c.l.b16 %v758
    %v3229 = vunpack.c.l.b16 %v759
    %v3230 = vunpack.c.l.b16 %v760
    %v3231 = vunpack.c.l.b16 %v761
    %v3232 = vunpack.c.l.b16 %v762
    %v3233 = vunpack.c.l.b16 %v763
    %v3234 = vunpack.c.l.b16 %v764
    %v3235 = vunpack.c.l.b16 %v765
    %v3236 = vunpack.c.l.b16 %v766
    %v3237 = vunpack.c.l.b16 %v767
    %v3238 = vunpack.c.l.b16 %v768
    %v3239 = vunpack.c.l.b16 %v769
    %v3240 = vunpack.c.l.b16 %v770
    %v3241 = vunpack.c.l.b16 %v771
    %v3242 = vunpack.c.l.b16 %v772
    %v3243 = vunpack.c.l.b16 %v773
    %v3244 = vunpack.c.l.b16 %v774
    %v3245 = vunpack.c.l.b16 %v775
    %v3246 = vunpack.c.l.b16 %v776
    %v3247 = vunpack.c.l.b16 %v777
    %v3248 = vunpack.c.l.b16 %v778
    %v3249 = vunpack.c.l.b16 %v779
    %v3250 = vunpack.c.l.b16 %v780
    %v3251 = vunpack.c.l.b16 %v781
    %v3252 = vunpack.c.l.b16 %v782
    %v3253 = vunpack.c.l.b16 %v783
    %v3254 = vunpack.c.l.b16 %v784
    %v3255 = vunpack.c.l.b16 %v785
    %v3256 = vunpack.c.l.b16 %v786
    %v3257 = vunpack.c.l.b16 %v787
    %v3258 = vunpack.c.l.b16 %v788
    %v3259 = vunpack.c.l.b16 %v789
    %v3260 = vunpack.c.l.b16 %v790
    %v3261 = vunpack.c.l.b16 %v791
    %v3262 = vunpack.c.l.b16 %v792
    %v3263 = vunpack.c.l.b16 %v793
    %v3264 = vunpack.c.l.b16 %v794
    %v3265 = vunpack.c.l.b16 %v795
    %v3266 = vunpack.c.l.b16 %v796
    %v3267 = vunpack.c.l.b16 %v797
    %v3268 = vunpack.c.l.b16 %v798
    %v3269 = vunpack.c.l.b16 %v799
    %v3270 = vunpack.c.l.b16 %v800
    %v3271 = vunpack.c.l.b16 %v801
    %v3272 = vunpack.c.l.b16 %v802
    %v3273 = vunpack.c.l.b16 %v803
    %v3274 = vunpack.c.l.b16 %v804
    %v3275 = vunpack.c.l.b16 %v805
    %v3276 = vunpack.c.l.b16 %v806
    %v3277 = vunpack.c.l.b16 %v807
    %v3278 = vunpack.c.l.b16 %v808
    %v3279 = vunpack.c.l.b16 %v809
    %v3280 = vunpack.c.l.b16 %v810
    %v3281 = vunpack.c.l.b16 %v811
    %v3282 = vunpack.c.l.b16 %v812
    %v3283 = vunpack.c.l.b16 %v813
    %v3284 = vunpack.c.l.b16 %v814
    %v3285 = vunpack.c.l.b16 %v815
    %v3286 = vunpack.c.l.b16 %v816
    %v3287 = vunpack.c.l.b16 %v817
    %v3288 = vunpack.c.l.b16 %v818
    %v3289 = vunpack.c.l.b16 %v819
    %v3290 = vunpack.c.l.b16 %v820
    %v3291 = vunpack.c.l.b16 %v821
    %v3292 = vunpack.c.l.b16 %v822
    %v3293 = vunpack.c.l.b16 %v823
    %v3294 = vunpack.c.l.b16 %v824
    %v3295 = vunpack.c.l.b16 %v825
    %v3296 = vunpack.c.l.b16 %v826
    %v3297 = vunpack.c.l.b16 %v827
    %v3298 = vunpack.c.l.b16 %v828
    %v3299 = vunpack.c.l.b16 %v829
    %v3300 = vunpack.c.l.b16 %v830
    %v3301 = vunpack.c.l.b16 %v831
    %v3302 = vunpack.c.l.b16 %v832
    %v3303 = vunpack.c.l.b16 %v833
    %v3304 = vunpack.c.l.b16 %v834
    %v3305 = vunpack.c.l.b16 %v835
    %v3306 = vunpack.c.l.b16 %v836
    %v3307 = vunpack.c.l.b16 %v837
    %v3308 = vunpack.c.l.b16 %v838
    %v3309 = vunpack.c.l.b16 %v839
    %v3310 = vunpack.c.l.b16 %v840
    %v3311 = vunpack.c.l.b16 %v841
    %v3312 = vunpack.c.l.b16 %v842
    %v3313 = vunpack.c.l.b16 %v843
    %v3314 = vunpack.c.l.b16 %v844
    %v3315 = vunpack.c.l.b16 %v845
    %v3316 = vunpack.c.l.b16 %v846
    %v3317 = vunpack.c.l.b16 %v847
    %v3318 = vunpack.c.l.b16 %v848
    %v3319 = vunpack.c.l.b16 %v849
    %v3320 = vunpack.c.l.b16 %v850
    %v3321 = vunpack.c.l.b16 %v851
    %v3322 = vunpack.c.l.b16 %v852
    %v3323 = vunpack.c.l.b16 %v853
    %v3324 = vunpack.c.l.b16 %v854
    %v3325 = vunpack.c.l.b16 %v855
    %v3326 = vunpack.c.l.b16 %v856
    %v3327 = vunpack.c.l.b16 %v857
    %v3328 = vunpack.c.l.b16 %v858
    %v3329 = vunpack.c.l.b16 %v859
    %v3330 = vunpack.c.l.b16 %v860
    %v3331 = vunpack.c.l.b16 %v861
    %v3332 = vunpack.c.l.b16 %v862
    %v3333 = vunpack.c.l.b16 %v863
    %v3334 = vunpack.c.l.b16 %v864
    %v3335 = vunpack.c.l.b16 %v865
    %v3336 = vunpack.c.l.b16 %v866
    %v3337 = vunpack.c.l.b16 %v867
    %v3338 = vunpack.c.l.b16 %v868
    %v3339 = vunpack.c.l.b16 %v869
    %v3340 = vunpack.c.l.b16 %v870
    %v3341 = vunpack.c.l.b16 %v871
    %v3342 = vunpack.c.l.b16 %v872
    %v3343 = vunpack.c.l.b16 %v873
    %v3344 = vunpack.c.l.b16 %v874
    %v3345 = vunpack.c.l.b16 %v875
    %v3346 = vunpack.c.l.b16 %v876
    %v3347 = vunpack.c.l.b16 %v877
    %v3348 = vunpack.c.l.b16 %v878
    %v3349 = vunpack.c.l.b16 %v879
    %v3350 = vunpack.c.l.b16 %v880
    %v3351 = vunpack.c.l.b16 %v881
    %v3352 = vunpack.c.l.b16 %v882
    %v3353 = vunpack.c.l.b16 %v883
    %v3354 = vunpack.c.l.b16 %v884
    %v3355 = vunpack.c.l.b16 %v885
    %v3356 = vunpack.c.l.b16 %v886
    %v3357 = vunpack.c.l.b16 %v887
    %v3358 = vunpack.c.l.b16 %v888
    %v3359 = vunpack.c.l.b16 %v889
    %v3360 = vunpack.c.l.b16 %v890
    %v3361 = vunpack.c.l.b16 %v891
    %v3362 = vunpack.c.l.b16 %v892
    %v3363 = vunpack.c.l.b16 %v893
    %v3364 = vunpack.c.l.b16 %v894
    %v3365 = vunpack.c.l.b16 %v895
    %v3366 = vunpack.c.l.b16 %v896
    %v3367 = vunpack.c.l.b16 %v897
    %v3368 = vunpack.c.l.b16 %v898
    %v3369 = vunpack.c.l.b16 %v899
    %v3370 = vunpack.c.l.b16 %v900
    %v3371 = vunpack.c.l.b16 %v901
    %v3372 = vunpack.c.l.b16 %v902
    %v3373 = vunpack.c.l.b16 %v903
    %v3374 = vunpack.c.l.b16 %v904
    %v3375 = vunpack.c.l.b16 %v905
    %v3376 = vunpack.c.l.b16 %v906
    %v3377 = vunpack.c.l.b16 %v907
    %v3378 = vunpack.c.l.b16 %v908
    %v3379 = vunpack.c.l.b16 %v909
    %v3380 = vunpack.c.l.b16 %v910
    %v3381 = vunpack.c.l.b16 %v911
    %v3382 = vunpack.c.l.b16 %v912
    %v3383 = vunpack.c.l.b16 %v913
    %v3384 = vunpack.c.l.b16 %v914
    %v3385 = vunpack.c.l.b16 %v915
    %v3386 = vunpack.c.l.b16 %v916
    %v3387 = vunpack.c.l.b16 %v917
    %v3388 = vunpack.c.l.b16 %v918
    %v3389 = vunpack.c.l.b16 %v919
    %v3390 = vunpack.c.l.b16 %v920
    %v3391 = vunpack.c.l.b16 %v921
    %v3392 = vunpack.c.l.b16 %v922
    %v3393 = vunpack.c.l.b16 %v923
    %v3394 = vunpack.c.l.b16 %v924
    %v3395 = vunpack.c.l.b16 %v925
    %v3396 = vunpack.c.l.b16 %v926
    %v3397 = vunpack.c.l.b16 %v927
    %v3398 = vunpack.c.l.b16 %v928
    %v3399 = vunpack.c.l.b16 %v929
    %v3400 = vunpack.c.l.b16 %v930
    %v3401 = vunpack.c.l.b16 %v931
    %v3402 = vunpack.c.l.b16 %v932
    %v3403 = vunpack.c.l.b16 %v933
    %v3404 = vunpack.c.l.b16 %v934
    %v3405 = vunpack.c.l.b16 %v935
    %v3406 = vunpack.c.l.b16 %v936
    %v3407 = vunpack.c.l.b16 %v937
    %v3408 = vunpack.c.l.b16 %v938
    %v3409 = vunpack.c.l.b16 %v939
    %v3410 = vunpack.c.l.b16 %v940
    %v3411 = vunpack.c.l.b16 %v941
    %v3412 = vunpack.c.l.b16 %v942
    %v3413 = vunpack.c.l.b16 %v943
    %v3414 = vunpack.c.l.b16 %v944
    %v3415 = vunpack.c.l.b16 %v945
    %v3416 = vunpack.c.l.b16 %v946
    %v3417 = vunpack.c.l.b16 %v947
    %v3418 = vunpack.c.l.b16 %v948
    %v3419 = vunpack.c.l.b16 %v949
    %v3420 = vunpack.c.l.b16 %v950
    %v3421 = vunpack.c.l.b16 %v951
    %v3422 = vunpack.c.l.b16 %v952
    %v3423 = vunpack.c.l.b16 %v953
    %v3424 = vunpack.c.l.b16 %v954
    %v3425 = vunpack.c.l.b16 %v955
    %v3426 = vunpack.c.l.b16 %v956
    %v3427 = vunpack.c.l.b16 %v957
    %v3428 = vunpack.c.l.b16 %v958
    %v3429 = vunpack.c.l.b16 %v959
    %v3430 = vunpack.c.l.b16 %v960
    %v3431 = vunpack.c.l.b16 %v961
    %v3432 = vunpack.c.l.b16 %v962
    %v3433 = vunpack.c.l.b16 %v963
    %v3434 = vunpack.c.l.b16 %v964
    %v3435 = vunpack.c.l.b16 %v965
    %v3436 = vunpack.c.l.b16 %v966
    %v3437 = vunpack.c.l.b16 %v967
    %v3438 = vunpack.c.l.b16 %v968
    %v3439 = vunpack.c.l.b16 %v969
    %v3440 = vunpack.c.l.b16 %v970
    %v3441 = vunpack.c.l.b16 %v971
    %v3442 = vunpack.c.l.b16 %v972
    %v3443 = vunpack.c.l.b16 %v973
    %v3444 = vunpack.c.l.b16 %v974
    %v3445 = vunpack.c.l.b16 %v975
    %v3446 = vunpack.c.l.b16 %v976
    %v3447 = vunpack.c.l.b16 %v977
    %v3448 = vunpack.c.l.b16 %v978
    %v3449 = vunpack.c.l.b16 %v979
    %v3450 = vunpack.c.l.b16 %v980
    %v3451 = vunpack.c.l.b16 %v981
    %v3452 = vunpack.c.l.b16 %v982
    %v3453 = vunpack.c.l.b16 %v983
    %v3454 = vunpack.c.l.b16 %v984
    %v3455 = vunpack.c.l.b16 %v985
    %v3456 = vunpack.c.l.b16 %v986
    %v3457 = vunpack.c.l.b16 %v987
    %v3458 = vunpack.c.l.b16 %v988
    %v3459 = vunpack.c.l.b16 %v989
    %v3460 = vunpack.c.l.b16 %v990
    %v3461 = vunpack.c.l.b16 %v991
    %v3462 = vunpack.c.l.b16 %v992
    %v3463 = vunpack.c.l.b16 %v993
    %v3464 = vunpack.c.l.b16 %v994
    %v3465 = vunpack.c.l.b16 %v995
    %v3466 = vunpack.c.l.b16 %v996
    %v3467 = vunpack.c.l.b16 %v997
    %v3468 = vunpack.c.l.b16 %v998
    %v3469 = vunpack.c.l.b16 %v999
    %v3470 = vunpack.c.l.b16 %v1000
    %v3471 = vunpack.c.l.b16 %v1001
    %v3472 = vunpack.c.l.b16 %v1002
    %v3473 = vunpack.c.l.b16 %v1003
    %v3474 = vunpack.c.l.b16 %v1004
    %v3475 = vunpack.c.l.b16 %v1005
    %v3476 = vunpack.c.l.b16 %v1006
    %v3477 = vunpack.c.l.b16 %v1007
    %v3478 = vunpack.c.l.b16 %v1008
    %v3479 = vunpack.c.l.b16 %v1009
    %v3480 = vunpack.c.l.b16 %v1010
    %v3481 = vunpack.c.l.b16 %v1011
    %v3482 = vunpack.c.l.b16 %v1012
    %v3483 = vunpack.c.l.b16 %v1013
    %v3484 = vunpack.c.l.b16 %v1014
    %v3485 = vunpack.c.l.b16 %v1015
    %v3486 = vunpack.c.l.b16 %v1016
    %v3487 = vunpack.c.l.b16 %v1017
    %v3488 = vunpack.c.l.b16 %v1018
    %v3489 = vunpack.c.l.b16 %v1019
    %v3490 = vunpack.c.l.b16 %v1020
    %v3491 = vunpack.c.l.b16 %v1021
    %v3492 = vunpack.c.l.b16 %v1022
    %v3493 = vunpack.c.l.b16 %v1023
    %v3494 = vunpack.c.l.b16 %v1024
    %v3495 = vunpack.c.l.b16 %v1025
    %v3496 = vunpack.c.l.b16 %v1026
    %v3497 = vunpack.c.l.b16 %v1027
    %v3498 = vunpack.c.l.b16 %v1028
    %v3499 = vunpack.c.l.b16 %v1029
    %v3500 = vunpack.c.l.b16 %v1030
    %v3501 = vunpack.c.l.b16 %v1031
    %v3502 = vunpack.c.l.b16 %v1032
    %v3503 = vunpack.c.l.b16 %v1033
    %v3504 = vunpack.c.l.b16 %v1034
    %v3505 = vunpack.c.l.b16 %v1035
    %v3506 = vunpack.c.l.b16 %v1036
    %v3507 = vunpack.c.l.b16 %v1037
    %v3508 = vunpack.c.l.b16 %v1038
    %v3509 = vunpack.c.l.b16 %v1039
    %v3510 = vunpack.c.l.b16 %v1040
    %v3511 = vunpack.c.l.b16 %v1041
    %v3512 = vunpack.c.l.b16 %v1042
    %v3513 = vunpack.c.l.b16 %v1043
    %v3514 = vunpack.c.l.b16 %v1044
    %v3515 = vunpack.c.l.b16 %v1045
    %v3516 = vunpack.c.l.b16 %v1046
    %v3517 = vunpack.c.l.b16 %v1047
    %v3518 = vunpack.c.l.b16 %v1048
    %v3519 = vunpack.c.l.b16 %v1049
    %v3520 = vunpack.c.l.b16 %v1050
    %v3521 = vunpack.c.l.b16 %v1051
    %v3522 = vunpack.c.l.b16 %v1052
    %v3523 = vunpack.c.l.b16 %v1053
    %v3524 = vunpack.c.l.b16 %v1054
    %v3525 = vunpack.c.l.b16 %v1055
    %v3526 = vunpack.c.l.b16 %v1056
    %v3527 = vunpack.c.l.b16 %v1057
    %v3528 = vunpack.c.l.b16 %v1058
    %v3529 = vunpack.c.l.b16 %v1059
    %v3530 = vunpack.c.l.b16 %v1060
    %v3531 = vunpack.c.l.b16 %v1061
    %v3532 = vunpack.c.l.b16 %v1062
    %v3533 = vunpack.c.l.b16 %v1063
    %v3534 = vunpack.c.l.b16 %v1064
    %v3535 = vunpack.c.l.b16 %v1065
    %v3536 = vunpack.c.l.b16 %v1066
    %v3537 = vunpack.c.l.b16 %v1067
    %v3538 = vunpack.c.l.b16 %v1068
    %v3539 = vunpack.c.l.b16 %v1069
    %v3540 = vunpack.c.l.b16 %v1070
    %v3541 = vunpack.c.l.b16 %v1071
    %v3542 = vunpack.c.l.b16 %v1072
    %v3543 = vunpack.c.l.b16 %v1073
    %v3544 = vunpack.c.l.b16 %v1074
    %v3545 = vunpack.c.l.b16 %v1075
    %v3546 = vunpack.c.l.b16 %v1076
    %v3547 = vunpack.c.l.b16 %v1077
    %v3548 = vunpack.c.l.b16 %v1078
    %v3549 = vunpack.c.l.b16 %v1079
    %v3550 = vunpack.c.l.b16 %v1080
    %v3551 = vunpack.c.l.b16 %v1081
    %v3552 = vunpack.c.l.b16 %v1082
    %v3553 = vunpack.c.l.b16 %v1083
    %v3554 = vunpack.c.l.b16 %v1084
    %v3555 = vunpack.c.l.b16 %v1085
    %v3556 = vunpack.c.l.b16 %v1086
    %v3557 = vunpack.c.l.b16 %v1087
    %v3558 = vunpack.c.l.b16 %v1088
    %v3559 = vunpack.c.l.b16 %v1089
    %v3560 = vunpack.c.l.b16 %v1090
    %v3561 = vunpack.c.l.b16 %v1091
    %v3562 = vunpack.c.l.b16 %v1092
    %v3563 = vunpack.c.l.b16 %v1093
    %v3564 = vunpack.c.l.b16 %v1094
    %v3565 = vunpack.c.l.b16 %v1095
    %v3566 = vunpack.c.l.b16 %v1096
    %v3567 = vunpack.c.l.b16 %v1097
    %v3568 = vunpack.c.l.b16 %v1098
    %v3569 = vunpack.c.l.b16 %v1099
    %v3570 = vunpack.c.l.b16 %v1100
    %v3571 = vunpack.c.l.b16 %v1101
    %v3572 = vunpack.c.l.b16 %v1102
    %v3573 = vunpack.c.l.b16 %v1103
    %v3574 = vunpack.c.l.b16 %v1104
    %v3575 = vunpack.c.l.b16 %v1105
    %v3576 = vunpack.c.l.b16 %v1106
    %v3577 = vunpack.c.l.b16 %v1107
    %v3578 = vunpack.c.l.b16 %v1108
    %v3579 = vunpack.c.l.b16 %v1109
    %v3580 = vunpack.c.l.b16 %v1110
    %v3581 = vunpack.c.l.b16 %v1111
    %v3582 = vunpack.c.l.b16 %v1112
    %v3583 = vunpack.c.l.b16 %v1113
    %v3584 = vunpack.c.l.b16 %v1114
    %v3585 = vunpack.c.l.b16 %v1115
    %v3586 = vunpack.c.l.b16 %v1116
    %v3587 = vunpack.c.l.b16 %v1117
    %v3588 = vunpack.c.l.b16 %v1118
    %v3589 = vunpack.c.l.b16 %v1119
    %v3590 = vunpack.c.l.b16 %v1120
    %v3591 = vunpack.c.l.b16 %v1121
    %v3592 = vunpack.c.l.b16 %v1122
    %v3593 = vunpack.c.l.b16 %v1123
    %v3594 = vunpack.c.l.b16 %v1124
    %v3595 = vunpack.c.l.b16 %v1125
    %v3596 = vunpack.c.l.b16 %v1126
    %v3597 = vunpack.c.l.b16 %v1127
    %v3598 = vunpack.c.l.b16 %v1128
    %v3599 = vunpack.c.l.b16 %v1129
    %v3600 = vunpack.c.l.b16 %v1130
    %v3601 = vunpack.c.l.b16 %v1131
    %v3602 = vunpack.c.l.b16 %v1132
    %v3603 = vunpack.c.l.b16 %v1133
    %v3604 = vunpack.c.l.b16 %v1134
    %v3605 = vunpack.c.l.b16 %v1135
    %v3606 = vunpack.c.l.b16 %v1136
    %v3607 = vunpack.c.l.b16 %v1137
    %v3608 = vunpack.c.l.b16 %v1138
    %v3609 = vunpack.c.l.b16 %v1139
    %v3610 = vunpack.c.l.b16 %v1140
    %v3611 = vunpack.c.l.b16 %v1141
    %v3612 = vunpack.c.l.b16 %v1142
    %v3613 = vunpack.c.l.b16 %v1143
    %v3614 = vunpack.c.l.b16 %v1144
    %v3615 = vunpack.c.l.b16 %v1145
    %v3616 = vunpack.c.l.b16 %v1146
    %v3617 = vunpack.c.l.b16 %v1147
    %v3618 = vunpack.c.l.b16 %v1148
    %v3619 = vunpack.c.l.b16 %v1149
    %v3620 = vunpack.c.l.b16 %v1150
    %v3621 = vunpack.c.l.b16 %v1151
    %v3622 = vunpack.c.l.b16 %v1152
    %v3623 = vunpack.c.l.b16 %v1153
    %v3624 = vunpack.c.l.b16 %v1154
    %v3625 = vunpack.c.l.b16 %v1155
    %v3626 = vunpack.c.l.b16 %v1156
    %v3627 = vunpack.c.l.b16 %v1157
    %v3628 = vunpack.c.l.b16 %v1158
    %v3629 = vunpack.c.l.b16 %v1159
    %v3630 = vunpack.c.l.b16 %v1160
    %v3631 = vunpack.c.l.b16 %v1161
    %v3632 = vunpack.c.l.b16 %v1162
    %v3633 = vunpack.c.l.b16 %v1163
    %v3634 = vunpack.c.l.b16 %v1164
    %v3635 = vunpack.c.l.b16 %v1165
    %v3636 = vunpack.c.l.b16 %v1166
    %v3637 = vunpack.c.l.b16 %v1167
    %v3638 = vunpack.c.l.b16 %v1168
    %v3639 = vunpack.c.l.b16 %v1169
    %v3640 = vunpack.c.l.b16 %v1170
    %v3641 = vunpack.c.l.b16 %v1171
    %v3642 = vunpack.c.l.b16 %v1172
    %v3643 = vunpack.c.l.b16 %v1173
    %v3644 = vunpack.c.l.b16 %v1174
    %v3645 = vunpack.c.l.b16 %v1175
    %v3646 = vunpack.c.l.b16 %v1176
    %v3647 = vunpack.c.l.b16 %v1177
    %v3648 = vunpack.c.l.b16 %v1178
    %v3649 = vunpack.c.l.b16 %v1179
    %v3650 = vunpack.c.l.b16 %v1180
    %v3651 = vunpack.c.l.b16 %v1181
    %v3652 = vpack.c.b16 %v2501, %v2500
    %v3653 = vpack.c.b16 %v2503, %v2502
    %v3654 = vpack.c.b16 %v2505, %v2504
    %v3655 = vpack.c.b16 %v2507, %v2506
    %v3656 = vpack.c.b16 %v2509, %v2508
    %v3657 = vpack.c.b16 %v2511, %v2510
    %v3658 = vpack.c.b16 %v2513, %v2512
    %v3659 = vpack.c.b16 %v2515, %v2514
    %v3660 = vpack.c.b16 %v2517, %v2516
    %v3661 = vpack.c.b16 %v2519, %v2518
    %v3662 = vpack.c.b16 %v2521, %v2520
    %v3663 = vpack.c.b16 %v2523, %v2522
    %v3664 = vpack.c.b16 %v2525, %v2524
    %v3665 = vpack.c.b16 %v2527, %v2526
    %v3666 = vpack.c.b16 %v2529, %v2528
    %v3667 = vpack.c.b16 %v2531, %v2530
    %v3668 = vpack.c.b16 %v2533, %v2532
    %v3669 = vpack.c.b16 %v2535, %v2534
    %v3670 = vpack.c.b16 %v2537, %v2536
    %v3671 = vpack.c.b16 %v2539, %v2538
    %v3672 = vpack.c.b16 %v2541, %v2540
    %v3673 = vpack.c.b16 %v2543, %v2542
    %v3674 = vpack.c.b16 %v2545, %v2544
    %v3675 = vpack.c.b16 %v2547, %v2546
    %v3676 = vpack.c.b16 %v2549, %v2548
    %v3677 = vpack.c.b16 %v2551, %v2550
    %v3678 = vpack.c.b16 %v2553, %v2552
    %v3679 = vpack.c.b16 %v2555, %v2554
    %v3680 = vpack.c.b16 %v2557, %v2556
    %v3681 = vpack.c.b16 %v2559, %v2558
    %v3682 = vpack.c.b16 %v2561, %v2560
    %v3683 = vpack.c.b16 %v2563, %v2562
    %v3684 = vpack.c.b16 %v2565, %v2564
    %v3685 = vpack.c.b16 %v2567, %v2566
    %v3686 = vpack.c.b16 %v2569, %v2568
    %v3687 = vpack.c.b16 %v2571, %v2570
    %v3688 = vpack.c.b16 %v2573, %v2572
    %v3689 = vpack.c.b16 %v2575, %v2574
    %v3690 = vpack.c.b16 %v2577, %v2576
    %v3691 = vpack.c.b16 %v2579, %v2578
    %v3692 = vpack.c.b16 %v2581, %v2580
    %v3693 = vpack.c.b16 %v2583, %v2582
    %v3694 = vpack.c.b16 %v2585, %v2584
    %v3695 = vpack.c.b16 %v2587, %v2586
    %v3696 = vpack.c.b16 %v2589, %v2588
    %v3697 = vpack.c.b16 %v2591, %v2590
    %v3698 = vpack.c.b16 %v2593, %v2592
    %v3699 = vpack.c.b16 %v2595, %v2594
    %v3700 = vpack.c.b16 %v2597, %v2596
    %v3701 = vpack.c.b16 %v2599, %v2598
    %v3702 = vpack.c.b16 %v2601, %v2600
    %v3703 = vpack.c.b16 %v2603, %v2602
    %v3704 = vpack.c.b16 %v2605, %v2604
    %v3705 = vpack.c.b16 %v2607, %v2606
    %v3706 = vpack.c.b16 %v2609, %v2608
    %v3707 = vpack.c.b16 %v2611, %v2610
    %v3708 = vpack.c.b16 %v2613, %v2612
    %v3709 = vpack.c.b16 %v2615, %v2614
    %v3710 = vpack.c.b16 %v2617, %v2616
    %v3711 = vpack.c.b16 %v2619, %v2618
    %v3712 = vpack.c.b16 %v2621, %v2620
    %v3713 = vpack.c.b16 %v2623, %v2622
    %v3714 = vpack.c.b16 %v2625, %v2624
    %v3715 = vpack.c.b16 %v2627, %v2626
    %v3716 = vpack.c.b16 %v2629, %v2628
    %v3717 = vpack.c.b16 %v2631, %v2630
    %v3718 = vpack.c.b16 %v2633, %v2632
    %v3719 = vpack.c.b16 %v2635, %v2634
    %v3720 = vpack.c.b16 %v2637, %v2636
    %v3721 = vpack.c.b16 %v2639, %v2638
    %v3722 = vpack.c.b16 %v2641, %v2640
    %v3723 = vpack.c.b16 %v2643, %v2642
    %v3724 = vpack.c.b16 %v2645, %v2644
    %v3725 = vpack.c.b16 %v2647, %v2646
    %v3726 = vpack.c.b16 %v2649, %v2648
    %v3727 = vpack.c.b16 %v2651, %v2650
    %v3728 = vpack.c.b16 %v2653, %v2652
    %v3729 = vpack.c.b16 %v2655, %v2654
    %v3730 = vpack.c.b16 %v2657, %v2656
    %v3731 = vpack.c.b16 %v2659, %v2658
    %v3732 = vpack.c.b16 %v2661, %v2660
    %v3733 = vpack.c.b16 %v2663, %v2662
    %v3734 = vpack.c.b16 %v2665, %v2664
    %v3735 = vpack.c.b16 %v2667, %v2666
    %v3736 = vpack.c.b16 %v2669, %v2668
    %v3737 = vpack.c.b16 %v2671, %v2670
    %v3738 = vpack.c.b16 %v2673, %v2672
    %v3739 = vpack.c.b16 %v2675, %v2674
    %v3740 = vpack.c.b16 %v2677, %v2676
    %v3741 = vpack.c.b16 %v2679, %v2678
    %v3742 = vpack.c.b16 %v2681, %v2680
    %v3743 = vpack.c.b16 %v2683, %v2682
    %v3744 = vpack.c.b16 %v2685, %v2684
    %v3745 = vpack.c.b16 %v2687, %v2686
    %v3746 = vpack.c.b16 %v2689, %v2688
    %v3747 = vpack.c.b16 %v2691, %v2690
    %v3748 = vpack.c.b16 %v2693, %v2692
    %v3749 = vpack.c.b16 %v2695, %v2694
    %v3750 = vpack.c.b16 %v2697, %v2696
    %v3751 = vpack.c.b16 %v2699, %v2698
    %v3752 = vpack.c.b16 %v2701, %v2700
    %v3753 = vpack.c.b16 %v2703, %v2702
    %v3754 = vpack.c.b16 %v2705, %v2704
    %v3755 = vpack.c.b16 %v2707, %v2706
    %v3756 = vpack.c.b16 %v2709, %v2708
    %v3757 = vpack.c.b16 %v2711, %v2710
    %v3758 = vpack.c.b16 %v2713, %v2712
    %v3759 = vpack.c.b16 %v2715, %v2714
    %v3760 = vpack.c.b16 %v2717, %v2716
    %v3761 = vpack.c.b16 %v2719, %v2718
    %v3762 = vpack.c.b16 %v2721, %v2720
    %v3763 = vpack.c.b16 %v2723, %v2722
    %v3764 = vpack.c.b16 %v2725, %v2724
    %v3765 = vpack.c.b16 %v2727, %v2726
    %v3766 = vpack.c.b16 %v2729, %v2728
    %v3767 = vpack.c.b16 %v2731, %v2730
    %v3768 = vpack.c.b16 %v2733, %v2732
    %v3769 = vpack.c.b16 %v2735, %v2734
    %v3770 = vpack.c.b16 %v2737, %v2736
    %v3771 = vpack.c.b16 %v2739, %v2738
    %v3772 = vpack.c.b16 %v2741, %v2740
    %v3773 = vpack.c.b16 %v2743, %v2742
    %v3774 = vpack.c.b16 %v2745, %v2744
    %v3775 = vpack.c.b16 %v2747, %v2746
    %v3776 = vpack.c.b16 %v2749, %v2748
    %v3777 = vpack.c.b16 %v2751, %v2750
    %v3778 = vpack.c.b16 %v2753, %v2752
    %v3779 = vpack.c.b16 %v2755, %v2754
    %v3780 = vpack.c.b16 %v2757, %v2756
    %v3781 = vpack.c.b16 %v2759, %v2758
    %v3782 = vpack.c.b16 %v2761, %v2760
    %v3783 = vpack.c.b16 %v2763, %v2762
    %v3784 = vpack.c.b16 %v2765, %v2764
    %v3785 = vpack.c.b16 %v2767, %v2766
    %v3786 = vpack.c.b16 %v2769, %v2768
    %v3787 = vpack.c.b16 %v2771, %v2770
    %v3788 = vpack.c.b16 %v2773, %v2772
    %v3789 = vpack.c.b16 %v2775, %v2774
    %v3790 = vpack.c.b16 %v2777, %v2776
    %v3791 = vpack.c.b16 %v2779, %v2778
    %v3792 = vpack.c.b16 %v2781, %v2780
    %v3793 = vpack.c.b16 %v2783, %v2782
    %v3794 = vpack.c.b16 %v2785, %v2784
    %v3795 = vpack.c.b16 %v2787, %v2786
    %v3796 = vpack.c.b16 %v2789, %v2788
    %v3797 = vpack.c.b16 %v2791, %v2790
    %v3798 = vpack.c.b16 %v2793, %v2792
    %v3799 = vpack.c.b16 %v2795, %v2794
    %v3800 = vpack.c.b16 %v2797, %v2796
    %v3801 = vpack.c.b16 %v2799, %v2798
    %v3802 = vpack.c.b16 %v2801, %v2800
    %v3803 = vpack.c.b16 %v2803, %v2802
    %v3804 = vpack.c.b16 %v2805, %v2804
    %v3805 = vpack.c.b16 %v2807, %v2806
    %v3806 = vpack.c.b16 %v2809, %v2808
    %v3807 = vpack.c.b16 %v2811, %v2810
    %v3808 = vpack.c.b16 %v2813, %v2812
    %v3809 = vpack.c.b16 %v2815, %v2814
    %v3810 = vpack.c.b16 %v2817, %v2816
    %v3811 = vpack.c.b16 %v2819, %v2818
    %v3812 = vpack.c.b16 %v2821, %v2820
    %v3813 = vpack.c.b16 %v2823, %v2822
    %v3814 = vpack.c.b16 %v2825, %v2824
    %v3815 = vpack.c.b16 %v2827, %v2826
    %v3816 = vpack.c.b16 %v2829, %v2828
    %v3817 = vpack.c.b16 %v2831, %v2830
    %v3818 = vpack.c.b16 %v2833, %v2832
    %v3819 = vpack.c.b16 %v2835, %v2834
    %v3820 = vpack.c.b16 %v2837, %v2836
    %v3821 = vpack.c.b16 %v2839, %v2838
    %v3822 = vpack.c.b16 %v2841, %v2840
    %v3823 = vpack.c.b16 %v2843, %v2842
    %v3824 = vpack.c.b16 %v2845, %v2844
    %v3825 = vpack.c.b16 %v2847, %v2846
    %v3826 = vpack.c.b16 %v2849, %v2848
    %v3827 = vpack.c.b16 %v2851, %v2850
    %v3828 = vpack.c.b16 %v2853, %v2852
    %v3829 = vpack.c.b16 %v2855, %v2854
    %v3830 = vpack.c.b16 %v2857, %v2856
    %v3831 = vpack.c.b16 %v2859, %v2858
    %v3832 = vpack.c.b16 %v2861, %v2860
    %v3833 = vpack.c.b16 %v2863, %v2862
    %v3834 = vpack.c.b16 %v2865, %v2864
    %v3835 = vpack.c.b16 %v2867, %v2866
    %v3836 = vpack.c.b16 %v2869, %v2868
    %v3837 = vpack.c.b16 %v2871, %v2870
    %v3838 = vpack.c.b16 %v2873, %v2872
    %v3839 = vpack.c.b16 %v2875, %v2874
    %v3840 = vpack.c.b16 %v2877, %v2876
    %v3841 = vpack.c.b16 %v2879, %v2878
    %v3842 = vpack.c.b16 %v2881, %v2880
    %v3843 = vpack.c.b16 %v2883, %v2882
    %v3844 = vpack.c.b16 %v2885, %v2884
    %v3845 = vpack.c.b16 %v2887, %v2886
    %v3846 = vpack.c.b16 %v2889, %v2888
    %v3847 = vpack.c.b16 %v2891, %v2890
    %v3848 = vpack.c.b16 %v2893, %v2892
    %v3849 = vpack.c.b16 %v2895, %v2894
    %v3850 = vpack.c.b16 %v2897, %v2896
    %v3851 = vpack.c.b16 %v2899, %v2898
    %v3852 = vpack.c.b16 %v2901, %v2900
    %v3853 = vpack.c.b16 %v2903, %v2902
    %v3854 = vpack.c.b16 %v2905, %v2904
    %v3855 = vpack.c.b16 %v2907, %v2906
    %v3856 = vpack.c.b16 %v2909, %v2908
    %v3857 = vpack.c.b16 %v2911, %v2910
    %v3858 = vpack.c.b16 %v2913, %v2912
    %v3859 = vpack.c.b16 %v2915, %v2914
    %v3860 = vpack.c.b16 %v2917, %v2916
    %v3861 = vpack.c.b16 %v2919, %v2918
    %v3862 = vpack.c.b16 %v2921, %v2920
    %v3863 = vpack.c.b16 %v2923, %v2922
    %v3864 = vpack.c.b16 %v2925, %v2924
    %v3865 = vpack.c.b16 %v2927, %v2926
    %v3866 = vpack.c.b16 %v2929, %v2928
    %v3867 = vpack.c.b16 %v2931, %v2930
    %v3868 = vpack.c.b16 %v2933, %v2932
    %v3869 = vpack.c.b16 %v2935, %v2934
    %v3870 = vpack.c.b16 %v2937, %v2936
    %v3871 = vpack.c.b16 %v2939, %v2938
    %v3872 = vpack.c.b16 %v2941, %v2940
    %v3873 = vpack.c.b16 %v2943, %v2942
    %v3874 = vpack.c.b16 %v2945, %v2944
    %v3875 = vpack.c.b16 %v2947, %v2946
    %v3876 = vpack.c.b16 %v2949, %v2948
    %v3877 = vpack.c.b16 %v2951, %v2950
    %v3878 = vpack.c.b16 %v2953, %v2952
    %v3879 = vpack.c.b16 %v2955, %v2954
    %v3880 = vpack.c.b16 %v2957, %v2956
    %v3881 = vpack.c.b16 %v2959, %v2958
    %v3882 = vpack.c.b16 %v2961, %v2960
    %v3883 = vpack.c.b16 %v2963, %v2962
    %v3884 = vpack.c.b16 %v2965, %v2964
    %v3885 = vpack.c.b16 %v2967, %v2966
    %v3886 = vpack.c.b16 %v2969, %v2968
    %v3887 = vpack.c.b16 %v2971, %v2970
    %v3888 = vpack.c.b16 %v2973, %v2972
    %v3889 = vpack.c.b16 %v2975, %v2974
    %v3890 = vpack.c.b16 %v2977, %v2976
    %v3891 = vpack.c.b16 %v2979, %v2978
    %v3892 = vpack.c.b16 %v2981, %v2980
    %v3893 = vpack.c.b16 %v2983, %v2982
    %v3894 = vpack.c.b16 %v2985, %v2984
    %v3895 = vpack.c.b16 %v2987, %v2986
    %v3896 = vpack.c.b16 %v2989, %v2988
    %v3897 = vpack.c.b16 %v2991, %v2990
    %v3898 = vpack.c.b16 %v2993, %v2992
    %v3899 = vpack.c.b16 %v2995, %v2994
    %v3900 = vpack.c.b16 %v2997, %v2996
    %v3901 = vpack.c.b16 %v2999, %v2998
    %v3902 = vpack.c.b16 %v3001, %v3000
    %v3903 = vpack.c.b16 %v3003, %v3002
    %v3904 = vpack.c.b16 %v3005, %v3004
    %v3905 = vpack.c.b16 %v3007, %v3006
    %v3906 = vpack.c.b16 %v3009, %v3008
    %v3907 = vpack.c.b16 %v3011, %v3010
    %v3908 = vpack.c.b16 %v3013, %v3012
    %v3909 = vpack.c.b16 %v3015, %v3014
    %v3910 = vpack.c.b16 %v3017, %v3016
    %v3911 = vpack.c.b16 %v3019, %v3018
    %v3912 = vpack.c.b16 %v3021, %v3020
    %v3913 = vpack.c.b16 %v3023, %v3022
    %v3914 = vpack.c.b16 %v3025, %v3024
    %v3915 = vpack.c.b16 %v3027, %v3026
    %v3916 = vpack.c.b16 %v3029, %v3028
    %v3917 = vpack.c.b16 %v3031, %v3030
    %v3918 = vpack.c.b16 %v3033, %v3032
    %v3919 = vpack.c.b16 %v3035, %v3034
    %v3920 = vpack.c.b16 %v3037, %v3036
    %v3921 = vpack.c.b16 %v3039, %v3038
    %v3922 = vpack.c.b16 %v3041, %v3040
    %v3923 = vpack.c.b16 %v3043, %v3042
    %v3924 = vpack.c.b16 %v3045, %v3044
    %v3925 = vpack.c.b16 %v3047, %v3046
    %v3926 = vpack.c.b16 %v3049, %v3048
    %v3927 = vpack.c.b16 %v3051, %v3050
    %v3928 = vpack.c.b16 %v3053, %v3052
    %v3929 = vpack.c.b16 %v3055, %v3054
    %v3930 = vpack.c.b16 %v3057, %v3056
    %v3931 = vpack.c.b16 %v3059, %v3058
    %v3932 = vpack.c.b16 %v3061, %v3060
    %v3933 = vpack.c.b16 %v3063, %v3062
    %v3934 = vpack.c.b16 %v3065, %v3064
    %v3935 = vpack.c.b16 %v3067, %v3066
    %v3936 = vpack.c.b16 %v3069, %v3068
    %v3937 = vpack.c.b16 %v3071, %v3070
    %v3938 = vpack.c.b16 %v3073, %v3072
    %v3939 = vpack.c.b16 %v3075, %v3074
    %v3940 = vpack.c.b16 %v3077, %v3076
    %v3941 = vpack.c.b16 %v3079, %v3078
    %v3942 = vpack.c.b16 %v3081, %v3080
    %v3943 = vpack.c.b16 %v3083, %v3082
    %v3944 = vpack.c.b16 %v3085, %v3084
    %v3945 = vpack.c.b16 %v3087, %v3086
    %v3946 = vpack.c.b16 %v3089, %v3088
    %v3947 = vpack.c.b16 %v3091, %v3090
    %v3948 = vpack.c.b16 %v3093, %v3092
    %v3949 = vpack.c.b16 %v3095, %v3094
    %v3950 = vpack.c.b16 %v3097, %v3096
    %v3951 = vpack.c.b16 %v3099, %v3098
    %v3952 = vpack.c.b16 %v3101, %v3100
    %v3953 = vpack.c.b16 %v3103, %v3102
    %v3954 = vpack.c.b16 %v3105, %v3104
    %v3955 = vpack.c.b16 %v3107, %v3106
    %v3956 = vpack.c.b16 %v3109, %v3108
    %v3957 = vpack.c.b16 %v3111, %v3110
    %v3958 = vpack.c.b16 %v3113, %v3112
    %v3959 = vpack.c.b16 %v3115, %v3114
    %v3960 = vpack.c.b16 %v3117, %v3116
    %v3961 = vpack.c.b16 %v3119, %v3118
    %v3962 = vpack.c.b16 %v3121, %v3120
    %v3963 = vpack.c.b16 %v3123, %v3122
    %v3964 = vpack.c.b16 %v3125, %v3124
    %v3965 = vpack.c.b16 %v3127, %v3126
    %v3966 = vpack.c.b16 %v3129, %v3128
    %v3967 = vpack.c.b16 %v3131, %v3130
    %v3968 = vpack.c.b16 %v3133, %v3132
    %v3969 = vpack.c.b16 %v3135, %v3134
    %v3970 = vpack.c.b16 %v3137, %v3136
    %v3971 = vpack.c.b16 %v3139, %v3138
    %v3972 = vpack.c.b16 %v3141, %v3140
    %v3973 = vpack.c.b16 %v3143, %v3142
    %v3974 = vpack.c.b16 %v3145, %v3144
    %v3975 = vpack.c.b16 %v3147, %v3146
    %v3976 = vpack.c.b16 %v3149, %v3148
    %v3977 = vpack.c.b16 %v3151, %v3150
    %v3978 = vpack.c.b16 %v3153, %v3152
    %v3979 = vpack.c.b16 %v3155, %v3154
    %v3980 = vpack.c.b16 %v3157, %v3156
    %v3981 = vpack.c.b16 %v3159, %v3158
    %v3982 = vpack.c.b16 %v3161, %v3160
    %v3983 = vpack.c.b16 %v3163, %v3162
    %v3984 = vpack.c.b16 %v3165, %v3164
    %v3985 = vpack.c.b16 %v3167, %v3166
    %v3986 = vpack.c.b16 %v3169, %v3168
    %v3987 = vpack.c.b16 %v3171, %v3170
    %v3988 = vpack.c.b16 %v3173, %v3172
    %v3989 = vpack.c.b16 %v3175, %v3174
    %v3990 = vpack.c.b16 %v3177, %v3176
    %v3991 = vpack.c.b16 %v3179, %v3178
    %v3992 = vpack.c.b16 %v3181, %v3180
    %v3993 = vpack.c.b16 %v3183, %v3182
    %v3994 = vpack.c.b16 %v3185, %v3184
    %v3995 = vpack.c.b16 %v3187, %v3186
    %v3996 = vpack.c.b16 %v3189, %v3188
    %v3997 = vpack.c.b16 %v3191, %v3190
    %v3998 = vpack.c.b16 %v3193, %v3192
    %v3999 = vpack.c.b16 %v3195, %v3194
    %v4000 = vpack.c.b16 %v3197, %v3196
    %v4001 = vpack.c.b16 %v3199, %v3198
    %v4002 = vpack.c.b16 %v3201, %v3200
    %v4003 = vpack.c.b16 %v3203, %v3202
    %v4004 = vpack.c.b16 %v3205, %v3204
    %v4005 = vpack.c.b16 %v3207, %v3206
    %v4006 = vpack.c.b16 %v3209, %v3208
    %v4007 = vpack.c.b16 %v3211, %v3210
    %v4008 = vpack.c.b16 %v3213, %v3212
    %v4009 = vpack.c.b16 %v3215, %v3214
    %v4010 = vpack.c.b16 %v3217, %v3216
    %v4011 = vpack.c.b16 %v3219, %v3218
    %v4012 = vpack.c.b16 %v3221, %v3220
    %v4013 = vpack.c.b16 %v3223, %v3222
    %v4014 = vpack.c.b16 %v3225, %v3224
    %v4015 = vpack.c.b16 %v3227, %v3226
    %v4016 = vpack.c.b16 %v3229, %v3228
    %v4017 = vpack.c.b16 %v3231, %v3230
    %v4018 = vpack.c.b16 %v3233, %v3232
    %v4019 = vpack.c.b16 %v3235, %v3234
    %v4020 = vpack.c.b16 %v3237, %v3236
    %v4021 = vpack.c.b16 %v3239, %v3238
    %v4022 = vpack.c.b16 %v3241, %v3240
    %v4023 = vpack.c.b16 %v3243, %v3242
    %v4024 = vpack.c.b16 %v3245, %v3244
    %v4025 = vpack.c.b16 %v3247, %v3246
    %v4026 = vpack.c.b16 %v3249, %v3248
    %v4027 = vpack.c.b16 %v3251, %v3250
    %v4028 = vpack.c.b16 %v3253, %v3252
    %v4029 = vpack.c.b16 %v3255, %v3254
    %v4030 = vpack.c.b16 %v3257, %v3256
    %v4031 = vpack.c.b16 %v3259, %v3258
    %v4032 = vpack.c.b16 %v3261, %v3260
    %v4033 = vpack.c.b16 %v3263, %v3262
    %v4034 = vpack.c.b16 %v3265, %v3264
    %v4035 = vpack.c.b16 %v3267, %v3266
    %v4036 = vpack.c.b16 %v3269, %v3268
    %v4037 = vpack.c.b16 %v3271, %v3270
    %v4038 = vpack.c.b16 %v3273, %v3272
    %v4039 = vpack.c.b16 %v3275, %v3274
    %v4040 = vpack.c.b16 %v3277, %v3276
    %v4041 = vpack.c.b16 %v3279, %v3278
    %v4042 = vpack.c.b16 %v3281, %v3280
    %v4043 = vpack.c.b16 %v3283, %v3282
    %v4044 = vpack.c.b16 %v3285, %v3284
    %v4045 = vpack.c.b16 %v3287, %v3286
    %v4046 = vpack.c.b16 %v3289, %v3288
    %v4047 = vpack.c.b16 %v3291, %v3290
    %v4048 = vpack.c.b16 %v3293, %v3292
    %v4049 = vpack.c.b16 %v3295, %v3294
    %v4050 = vpack.c.b16 %v3297, %v3296
    %v4051 = vpack.c.b16 %v3299, %v3298
    %v4052 = vpack.c.b16 %v3301, %v3300
    %v4053 = vpack.c.b16 %v3303, %v3302
    %v4054 = vpack.c.b16 %v3305, %v3304
    %v4055 = vpack.c.b16 %v3307, %v3306
    %v4056 = vpack.c.b16 %v3309, %v3308
    %v4057 = vpack.c.b16 %v3311, %v3310
    %v4058 = vpack.c.b16 %v3313, %v3312
    %v4059 = vpack.c.b16 %v3315, %v3314
    %v4060 = vpack.c.b16 %v3317, %v3316
    %v4061 = vpack.c.b16 %v3319, %v3318
    %v4062 = vpack.c.b16 %v3321, %v3320
    %v4063 = vpack.c.b16 %v3323, %v3322
    %v4064 = vpack.c.b16 %v3325, %v3324
    %v4065 = vpack.c.b16 %v3327, %v3326
    %v4066 = vpack.c.b16 %v3329, %v3328
    %v4067 = vpack.c.b16 %v3331, %v3330
    %v4068 = vpack.c.b16 %v3333, %v3332
    %v4069 = vpack.c.b16 %v3335, %v3334
    %v4070 = vpack.c.b16 %v3337, %v3336
    %v4071 = vpack.c.b16 %v3339, %v3338
    %v4072 = vpack.c.b16 %v3341, %v3340
    %v4073 = vpack.c.b16 %v3343, %v3342
    %v4074 = vpack.c.b16 %v3345, %v3344
    %v4075 = vpack.c.b16 %v3347, %v3346
    %v4076 = vpack.c.b16 %v3349, %v3348
    %v4077 = vpack.c.b16 %v3351, %v3350
    %v4078 = vpack.c.b16 %v3353, %v3352
    %v4079 = vpack.c.b16 %v3355, %v3354
    %v4080 = vpack.c.b16 %v3357, %v3356
    %v4081 = vpack.c.b16 %v3359, %v3358
    %v4082 = vpack.c.b16 %v3361, %v3360
    %v4083 = vpack.c.b16 %v3363, %v3362
    %v4084 = vpack.c.b16 %v3365, %v3364
    %v4085 = vpack.c.b16 %v3367, %v3366
    %v4086 = vpack.c.b16 %v3369, %v3368
    %v4087 = vpack.c.b16 %v3371, %v3370
    %v4088 = vpack.c.b16 %v3373, %v3372
    %v4089 = vpack.c.b16 %v3375, %v3374
    %v4090 = vpack.c.b16 %v3377, %v3376
    %v4091 = vpack.c.b16 %v3379, %v3378
    %v4092 = vpack.c.b16 %v3381, %v3380
    %v4093 = vpack.c.b16 %v3383, %v3382
    %v4094 = vpack.c.b16 %v3385, %v3384
    %v4095 = vpack.c.b16 %v3387, %v3386
    %v4096 = vpack.c.b16 %v3389, %v3388
    %v4097 = vpack.c.b16 %v3391, %v3390
    %v4098 = vpack.c.b16 %v3393, %v3392
    %v4099 = vpack.c.b16 %v3395, %v3394
    %v4100 = vpack.c.b16 %v3397, %v3396
    %v4101 = vpack.c.b16 %v3399, %v3398
    %v4102 = vpack.c.b16 %v3401, %v3400
    %v4103 = vpack.c.b16 %v3403, %v3402
    %v4104 = vpack.c.b16 %v3405, %v3404
    %v4105 = vpack.c.b16 %v3407, %v3406
    %v4106 = vpack.c.b16 %v3409, %v3408
    %v4107 = vpack.c.b16 %v3411, %v3410
    %v4108 = vpack.c.b16 %v3413, %v3412
    %v4109 = vpack.c.b16 %v3415, %v3414
    %v4110 = vpack.c.b16 %v3417, %v3416
    %v4111 = vpack.c.b16 %v3419, %v3418
    %v4112 = vpack.c.b16 %v3421, %v3420
    %v4113 = vpack.c.b16 %v3423, %v3422
    %v4114 = vpack.c.b16 %v3425, %v3424
    %v4115 = vpack.c.b16 %v3427, %v3426
    %v4116 = vpack.c.b16 %v3429, %v3428
    %v4117 = vpack.c.b16 %v3431, %v3430
    %v4118 = vpack.c.b16 %v3433, %v3432
    %v4119 = vpack.c.b16 %v3435, %v3434
    %v4120 = vpack.c.b16 %v3437, %v3436
    %v4121 = vpack.c.b16 %v3439, %v3438
    %v4122 = vpack.c.b16 %v3441, %v3440
    %v4123 = vpack.c.b16 %v3443, %v3442
    %v4124 = vpack.c.b16 %v3445, %v3444
    %v4125 = vpack.c.b16 %v3447, %v3446
    %v4126 = vpack.c.b16 %v3449, %v3448
    %v4127 = vpack.c.b16 %v3451, %v3450
    %v4128 = vpack.c.b16 %v3453, %v3452
    %v4129 = vpack.c.b16 %v3455, %v3454
    %v4130 = vpack.c.b16 %v3457, %v3456
    %v4131 = vpack.c.b16 %v3459, %v3458
    %v4132 = vpack.c.b16 %v3461, %v3460
    %v4133 = vpack.c.b16 %v3463, %v3462
    %v4134 = vpack.c.b16 %v3465, %v3464
    %v4135 = vpack.c.b16 %v3467, %v3466
    %v4136 = vpack.c.b16 %v3469, %v3468
    %v4137 = vpack.c.b16 %v3471, %v3470
    %v4138 = vpack.c.b16 %v3473, %v3472
    %v4139 = vpack.c.b16 %v3475, %v3474
    %v4140 = vpack.c.b16 %v3477, %v3476
    %v4141 = vpack.c.b16 %v3479, %v3478
    %v4142 = vpack.c.b16 %v3481, %v3480
    %v4143 = vpack.c.b16 %v3483, %v3482
    %v4144 = vpack.c.b16 %v3485, %v3484
    %v4145 = vpack.c.b16 %v3487, %v3486
    %v4146 = vpack.c.b16 %v3489, %v3488
    %v4147 = vpack.c.b16 %v3491, %v3490
    %v4148 = vpack.c.b16 %v3493, %v3492
    %v4149 = vpack.c.b16 %v3495, %v3494
    %v4150 = vpack.c.b16 %v3497, %v3496
    %v4151 = vpack.c.b16 %v3499, %v3498
    %v4152 = vpack.c.b16 %v3501, %v3500
    %v4153 = vpack.c.b16 %v3503, %v3502
    %v4154 = vpack.c.b16 %v3505, %v3504
    %v4155 = vpack.c.b16 %v3507, %v3506
    %v4156 = vpack.c.b16 %v3509, %v3508
    %v4157 = vpack.c.b16 %v3511, %v3510
    %v4158 = vpack.c.b16 %v3513, %v3512
    %v4159 = vpack.c.b16 %v3515, %v3514
    %v4160 = vpack.c.b16 %v3517, %v3516
    %v4161 = vpack.c.b16 %v3519, %v3518
    %v4162 = vpack.c.b16 %v3521, %v3520
    %v4163 = vpack.c.b16 %v3523, %v3522
    %v4164 = vpack.c.b16 %v3525, %v3524
    %v4165 = vpack.c.b16 %v3527, %v3526
    %v4166 = vpack.c.b16 %v3529, %v3528
    %v4167 = vpack.c.b16 %v3531, %v3530
    %v4168 = vpack.c.b16 %v3533, %v3532
    %v4169 = vpack.c.b16 %v3535, %v3534
    %v4170 = vpack.c.b16 %v3537, %v3536
    %v4171 = vpack.c.b16 %v3539, %v3538
    %v4172 = vpack.c.b16 %v3541, %v3540
    %v4173 = vpack.c.b16 %v3543, %v3542
    %v4174 = vpack.c.b16 %v3545, %v3544
    %v4175 = vpack.c.b16 %v3547, %v3546
    %v4176 = vpack.c.b16 %v3549, %v3548
    %v4177 = vpack.c.b16 %v3551, %v3550
    %v4178 = vpack.c.b16 %v3553, %v3552
    %v4179 = vpack.c.b16 %v3555, %v3554
    %v4180 = vpack.c.b16 %v3557, %v3556
    %v4181 = vpack.c.b16 %v3559, %v3558
    %v4182 = vpack.c.b16 %v3561, %v3560
    %v4183 = vpack.c.b16 %v3563, %v3562
    %v4184 = vpack.c.b16 %v3565, %v3564
    %v4185 = vpack.c.b16 %v3567, %v3566
    %v4186 = vpack.c.b16 %v3569, %v3568
    %v4187 = vpack.c.b16 %v3571, %v3570
    %v4188 = vpack.c.b16 %v3573, %v3572
    %v4189 = vpack.c.b16 %v3575, %v3574
    %v4190 = vpack.c.b16 %v3577, %v3576
    %v4191 = vpack.c.b16 %v3579, %v3578
    %v4192 = vpack.c.b16 %v3581, %v3580
    %v4193 = vpack.c.b16 %v3583, %v3582
    %v4194 = vpack.c.b16 %v3585, %v3584
    %v4195 = vpack.c.b16 %v3587, %v3586
    %v4196 = vpack.c.b16 %v3589, %v3588
    %v4197 = vpack.c.b16 %v3591, %v3590
    %v4198 = vpack.c.b16 %v3593, %v3592
    %v4199 = vpack.c.b16 %v3595, %v3594
    %v4200 = vpack.c.b16 %v3597, %v3596
    %v4201 = vpack.c.b16 %v3599, %v3598
    %v4202 = vpack.c.b16 %v3601, %v3600
    %v4203 = vpack.c.b16 %v3603, %v3602
    %v4204 = vpack.c.b16 %v3605, %v3604
    %v4205 = vpack.c.b16 %v3607, %v3606
    %v4206 = vpack.c.b16 %v3609, %v3608
    %v4207 = vpack.c.b16 %v3611, %v3610
    %v4208 = vpack.c.b16 %v3613, %v3612
    %v4209 = vpack.c.b16 %v3615, %v3614
    %v4210 = vpack.c.b16 %v3617, %v3616
    %v4211 = vpack.c.b16 %v3619, %v3618
    %v4212 = vpack.c.b16 %v3621, %v3620
    %v4213 = vpack.c.b16 %v3623, %v3622
    %v4214 = vpack.c.b16 %v3625, %v3624
    %v4215 = vpack.c.b16 %v3627, %v3626
    %v4216 = vpack.c.b16 %v3629, %v3628
    %v4217 = vpack.c.b16 %v3631, %v3630
    %v4218 = vpack.c.b16 %v3633, %v3632
    %v4219 = vpack.c.b16 %v3635, %v3634
    %v4220 = vpack.c.b16 %v3637, %v3636
    %v4221 = vpack.c.b16 %v3639, %v3638
    %v4222 = vpack.c.b16 %v3641, %v3640
    %v4223 = vpack.c.b16 %v3643, %v3642
    %v4224 = vpack.c.b16 %v3645, %v3644
    %v4225 = vpack.c.b16 %v3647, %v3646
    %v4226 = vpack.c.b16 %v3649, %v3648
    %v4227 = vpack.c.b16 %v3651, %v3650
    %4804 = vmatpush.bf16.msra.mxu0 %v3659
    %4805 = vmatpush.bf16.msra.mxu0 %v3658
    %4806 = vmatpush.bf16.msra.mxu0 %v3657
    %4807 = vmatpush.bf16.msra.mxu0 %v3656
    %4808 = vmatpush.bf16.msra.mxu0 %v3655
    %4809 = vmatpush.bf16.msra.mxu0 %v3654
    %4810 = vmatpush.bf16.msra.mxu0 %v3653
    %4811 = vmatpush.bf16.msra.mxu0 %v3652
    %4812 = vmatmul.bf16.gmra.mxu0 %v1188
    %v4813 = vpop.f32.mrf.mxu0
    %v4814 = vadd.f32 %v1184, %v4813
    %v4815 = vpop.f32.mrf.mxu0
    %4816 = vdwg.mxu0
    %4817 = vmatpush.bf16.msra.mxu0 %v3667
    %4818 = vmatpush.bf16.msra.mxu0 %v3666
    %4819 = vmatpush.bf16.msra.mxu0 %v3665
    %4820 = vmatpush.bf16.msra.mxu0 %v3664
    %4821 = vmatpush.bf16.msra.mxu0 %v3663
    %4822 = vmatpush.bf16.msra.mxu0 %v3662
    %4823 = vmatpush.bf16.msra.mxu0 %v3661
    %4824 = vmatpush.bf16.msra.mxu0 %v3660
    %4825 = vmatmul.bf16.gmra.mxu0 %v1189
    %v4826 = vpop.f32.mrf.mxu0
    %v4827 = vadd.f32 %v4814, %v4826
    %v4828 = vpop.f32.mrf.mxu0
    %4829 = vdwg.mxu0
    %4830 = vmatpush.bf16.msra.mxu0 %v3675
    %4831 = vmatpush.bf16.msra.mxu0 %v3674
    %4832 = vmatpush.bf16.msra.mxu0 %v3673
    %4833 = vmatpush.bf16.msra.mxu0 %v3672
    %4834 = vmatpush.bf16.msra.mxu0 %v3671
    %4835 = vmatpush.bf16.msra.mxu0 %v3670
    %4836 = vmatpush.bf16.msra.mxu0 %v3669
    %4837 = vmatpush.bf16.msra.mxu0 %v3668
    %4838 = vmatmul.bf16.gmra.mxu0 %v1190
    %v4839 = vpop.f32.mrf.mxu0
    %v4840 = vadd.f32 %v4827, %v4839
    %v4841 = vpop.f32.mrf.mxu0
    %4842 = vdwg.mxu0
    %4843 = vmatpush.bf16.msra.mxu0 %v3683
    %4844 = vmatpush.bf16.msra.mxu0 %v3682
    %4845 = vmatpush.bf16.msra.mxu0 %v3681
    %4846 = vmatpush.bf16.msra.mxu0 %v3680
    %4847 = vmatpush.bf16.msra.mxu0 %v3679
    %4848 = vmatpush.bf16.msra.mxu0 %v3678
    %4849 = vmatpush.bf16.msra.mxu0 %v3677
    %4850 = vmatpush.bf16.msra.mxu0 %v3676
    %4851 = vmatmul.bf16.gmra.mxu0 %v1191
    %v4852 = vpop.f32.mrf.mxu0
    %v4853 = vadd.f32 %v4840, %v4852
    %v4854 = vpop.f32.mrf.mxu0
    %4855 = vdwg.mxu0
    %4856 = vmatpush.bf16.msra.mxu0 %v3691
    %4857 = vmatpush.bf16.msra.mxu0 %v3690
    %4858 = vmatpush.bf16.msra.mxu0 %v3689
    %4859 = vmatpush.bf16.msra.mxu0 %v3688
    %4860 = vmatpush.bf16.msra.mxu0 %v3687
    %4861 = vmatpush.bf16.msra.mxu0 %v3686
    %4862 = vmatpush.bf16.msra.mxu0 %v3685
    %4863 = vmatpush.bf16.msra.mxu0 %v3684
    %4864 = vmatmul.bf16.gmra.mxu0 %v1192
    %v4865 = vpop.f32.mrf.mxu0
    %v4866 = vadd.f32 %v4853, %v4865
    %v4867 = vpop.f32.mrf.mxu0
    %4868 = vdwg.mxu0
    %4869 = vmatpush.bf16.msra.mxu0 %v3699
    %4870 = vmatpush.bf16.msra.mxu0 %v3698
    %4871 = vmatpush.bf16.msra.mxu0 %v3697
    %4872 = vmatpush.bf16.msra.mxu0 %v3696
    %4873 = vmatpush.bf16.msra.mxu0 %v3695
    %4874 = vmatpush.bf16.msra.mxu0 %v3694
    %4875 = vmatpush.bf16.msra.mxu0 %v3693
    %4876 = vmatpush.bf16.msra.mxu0 %v3692
    %4877 = vmatmul.bf16.gmra.mxu0 %v1193
    %v4878 = vpop.f32.mrf.mxu0
    %v4879 = vadd.f32 %v4866, %v4878
    %v4880 = vpop.f32.mrf.mxu0
    %4881 = vdwg.mxu0
    %4882 = vmatpush.bf16.msra.mxu0 %v3707
    %4883 = vmatpush.bf16.msra.mxu0 %v3706
    %4884 = vmatpush.bf16.msra.mxu0 %v3705
    %4885 = vmatpush.bf16.msra.mxu0 %v3704
    %4886 = vmatpush.bf16.msra.mxu0 %v3703
    %4887 = vmatpush.bf16.msra.mxu0 %v3702
    %4888 = vmatpush.bf16.msra.mxu0 %v3701
    %4889 = vmatpush.bf16.msra.mxu0 %v3700
    %4890 = vmatmul.bf16.gmra.mxu0 %v1194
    %v4891 = vpop.f32.mrf.mxu0
    %v4892 = vadd.f32 %v4879, %v4891
    %v4893 = vpop.f32.mrf.mxu0
    %4894 = vdwg.mxu0
    %4895 = vmatpush.bf16.msra.mxu0 %v3715
    %4896 = vmatpush.bf16.msra.mxu0 %v3714
    %4897 = vmatpush.bf16.msra.mxu0 %v3713
    %4898 = vmatpush.bf16.msra.mxu0 %v3712
    %4899 = vmatpush.bf16.msra.mxu0 %v3711
    %4900 = vmatpush.bf16.msra.mxu0 %v3710
    %4901 = vmatpush.bf16.msra.mxu0 %v3709
    %4902 = vmatpush.bf16.msra.mxu0 %v3708
    %4903 = vmatmul.bf16.gmra.mxu0 %v1195
    %v4904 = vpop.f32.mrf.mxu0
    %v4905 = vadd.f32 %v4892, %v4904
    %v4906 = vpop.f32.mrf.mxu0
    %4907 = vdwg.mxu0
    %4908 = vmatpush.bf16.msra.mxu0 %v3723
    %4909 = vmatpush.bf16.msra.mxu0 %v3722
    %4910 = vmatpush.bf16.msra.mxu0 %v3721
    %4911 = vmatpush.bf16.msra.mxu0 %v3720
    %4912 = vmatpush.bf16.msra.mxu0 %v3719
    %4913 = vmatpush.bf16.msra.mxu0 %v3718
    %4914 = vmatpush.bf16.msra.mxu0 %v3717
    %4915 = vmatpush.bf16.msra.mxu0 %v3716
    %4916 = vmatmul.bf16.gmra.mxu0 %v1198
    %v4917 = vpop.f32.mrf.mxu0
    %v4918 = vadd.f32 %v4905, %v4917
    %v4919 = vpop.f32.mrf.mxu0
    %4920 = vdwg.mxu0
    %4921 = vmatpush.bf16.msra.mxu0 %v3731
    %4922 = vmatpush.bf16.msra.mxu0 %v3730
    %4923 = vmatpush.bf16.msra.mxu0 %v3729
    %4924 = vmatpush.bf16.msra.mxu0 %v3728
    %4925 = vmatpush.bf16.msra.mxu0 %v3727
    %4926 = vmatpush.bf16.msra.mxu0 %v3726
    %4927 = vmatpush.bf16.msra.mxu0 %v3725
    %4928 = vmatpush.bf16.msra.mxu0 %v3724
    %4929 = vmatmul.bf16.gmra.mxu0 %v1199
    %v4930 = vpop.f32.mrf.mxu0
    %v4931 = vadd.f32 %v4918, %v4930
    %v4932 = vpop.f32.mrf.mxu0
    %4933 = vdwg.mxu0
    %4934 = vmatpush.bf16.msra.mxu0 %v3739
    %4935 = vmatpush.bf16.msra.mxu0 %v3738
    %4936 = vmatpush.bf16.msra.mxu0 %v3737
    %4937 = vmatpush.bf16.msra.mxu0 %v3736
    %4938 = vmatpush.bf16.msra.mxu0 %v3735
    %4939 = vmatpush.bf16.msra.mxu0 %v3734
    %4940 = vmatpush.bf16.msra.mxu0 %v3733
    %4941 = vmatpush.bf16.msra.mxu0 %v3732
    %4942 = vmatmul.bf16.gmra.mxu0 %v1200
    %v4943 = vpop.f32.mrf.mxu0
    %v4944 = vadd.f32 %v4931, %v4943
    %v4945 = vpop.f32.mrf.mxu0
    %4946 = vdwg.mxu0
    %4947 = vmatpush.bf16.msra.mxu0 %v3747
    %4948 = vmatpush.bf16.msra.mxu0 %v3746
    %4949 = vmatpush.bf16.msra.mxu0 %v3745
    %4950 = vmatpush.bf16.msra.mxu0 %v3744
    %4951 = vmatpush.bf16.msra.mxu0 %v3743
    %4952 = vmatpush.bf16.msra.mxu0 %v3742
    %4953 = vmatpush.bf16.msra.mxu0 %v3741
    %4954 = vmatpush.bf16.msra.mxu0 %v3740
    %4955 = vmatmul.bf16.gmra.mxu0 %v1201
    %v4956 = vpop.f32.mrf.mxu0
    %v4957 = vadd.f32 %v4944, %v4956
    %v4958 = vpop.f32.mrf.mxu0
    %4959 = vdwg.mxu0
    %4960 = vmatpush.bf16.msra.mxu0 %v3755
    %4961 = vmatpush.bf16.msra.mxu0 %v3754
    %4962 = vmatpush.bf16.msra.mxu0 %v3753
    %4963 = vmatpush.bf16.msra.mxu0 %v3752
    %4964 = vmatpush.bf16.msra.mxu0 %v3751
    %4965 = vmatpush.bf16.msra.mxu0 %v3750
    %4966 = vmatpush.bf16.msra.mxu0 %v3749
    %4967 = vmatpush.bf16.msra.mxu0 %v3748
    %4968 = vmatmul.bf16.gmra.mxu0 %v1202
    %v4969 = vpop.f32.mrf.mxu0
    %v4970 = vadd.f32 %v4957, %v4969
    %v4971 = vpop.f32.mrf.mxu0
    %4972 = vdwg.mxu0
    %4973 = vmatpush.bf16.msra.mxu0 %v3763
    %4974 = vmatpush.bf16.msra.mxu0 %v3762
    %4975 = vmatpush.bf16.msra.mxu0 %v3761
    %4976 = vmatpush.bf16.msra.mxu0 %v3760
    %4977 = vmatpush.bf16.msra.mxu0 %v3759
    %4978 = vmatpush.bf16.msra.mxu0 %v3758
    %4979 = vmatpush.bf16.msra.mxu0 %v3757
    %4980 = vmatpush.bf16.msra.mxu0 %v3756
    %4981 = vmatmul.bf16.gmra.mxu0 %v1203
    %v4982 = vpop.f32.mrf.mxu0
    %v4983 = vadd.f32 %v4970, %v4982
    %v4984 = vpop.f32.mrf.mxu0
    %4985 = vdwg.mxu0
    %4986 = vmatpush.bf16.msra.mxu0 %v3771
    %4987 = vmatpush.bf16.msra.mxu0 %v3770
    %4988 = vmatpush.bf16.msra.mxu0 %v3769
    %4989 = vmatpush.bf16.msra.mxu0 %v3768
    %4990 = vmatpush.bf16.msra.mxu0 %v3767
    %4991 = vmatpush.bf16.msra.mxu0 %v3766
    %4992 = vmatpush.bf16.msra.mxu0 %v3765
    %4993 = vmatpush.bf16.msra.mxu0 %v3764
    %4994 = vmatmul.bf16.gmra.mxu0 %v1204
    %v4995 = vpop.f32.mrf.mxu0
    %v4996 = vadd.f32 %v4983, %v4995
    %v4997 = vpop.f32.mrf.mxu0
    %4998 = vdwg.mxu0
    %4999 = vmatpush.bf16.msra.mxu0 %v3779
    %5000 = vmatpush.bf16.msra.mxu0 %v3778
    %5001 = vmatpush.bf16.msra.mxu0 %v3777
    %5002 = vmatpush.bf16.msra.mxu0 %v3776
    %5003 = vmatpush.bf16.msra.mxu0 %v3775
    %5004 = vmatpush.bf16.msra.mxu0 %v3774
    %5005 = vmatpush.bf16.msra.mxu0 %v3773
    %5006 = vmatpush.bf16.msra.mxu0 %v3772
    %5007 = vmatmul.bf16.gmra.mxu0 %v1205
    %v5008 = vpop.f32.mrf.mxu0
    %v5009 = vadd.f32 %v4996, %v5008
    %v5010 = vpop.f32.mrf.mxu0
    %5011 = vdwg.mxu0
    %5012 = vmatpush.bf16.msra.mxu0 %v3787
    %5013 = vmatpush.bf16.msra.mxu0 %v3786
    %5014 = vmatpush.bf16.msra.mxu0 %v3785
    %5015 = vmatpush.bf16.msra.mxu0 %v3784
    %5016 = vmatpush.bf16.msra.mxu0 %v3783
    %5017 = vmatpush.bf16.msra.mxu0 %v3782
    %5018 = vmatpush.bf16.msra.mxu0 %v3781
    %5019 = vmatpush.bf16.msra.mxu0 %v3780
    %5020 = vmatmul.bf16.gmra.mxu0 %v1208
    %v5021 = vpop.f32.mrf.mxu0
    %v5022 = vadd.f32 %v5009, %v5021
    %v5023 = vpop.f32.mrf.mxu0
    %5024 = vdwg.mxu0
    %5025 = vmatpush.bf16.msra.mxu0 %v3795
    %5026 = vmatpush.bf16.msra.mxu0 %v3794
    %5027 = vmatpush.bf16.msra.mxu0 %v3793
    %5028 = vmatpush.bf16.msra.mxu0 %v3792
    %5029 = vmatpush.bf16.msra.mxu0 %v3791
    %5030 = vmatpush.bf16.msra.mxu0 %v3790
    %5031 = vmatpush.bf16.msra.mxu0 %v3789
    %5032 = vmatpush.bf16.msra.mxu0 %v3788
    %5033 = vmatmul.bf16.gmra.mxu0 %v1209
    %v5034 = vpop.f32.mrf.mxu0
    %v5035 = vadd.f32 %v5022, %v5034
    %v5036 = vpop.f32.mrf.mxu0
    %5037 = vdwg.mxu0
    %5038 = vmatpush.bf16.msra.mxu0 %v3803
    %5039 = vmatpush.bf16.msra.mxu0 %v3802
    %5040 = vmatpush.bf16.msra.mxu0 %v3801
    %5041 = vmatpush.bf16.msra.mxu0 %v3800
    %5042 = vmatpush.bf16.msra.mxu0 %v3799
    %5043 = vmatpush.bf16.msra.mxu0 %v3798
    %5044 = vmatpush.bf16.msra.mxu0 %v3797
    %5045 = vmatpush.bf16.msra.mxu0 %v3796
    %5046 = vmatmul.bf16.gmra.mxu0 %v1210
    %v5047 = vpop.f32.mrf.mxu0
    %v5048 = vadd.f32 %v5035, %v5047
    %v5049 = vpop.f32.mrf.mxu0
    %5050 = vdwg.mxu0
    %5051 = vmatpush.bf16.msra.mxu0 %v3811
    %5052 = vmatpush.bf16.msra.mxu0 %v3810
    %5053 = vmatpush.bf16.msra.mxu0 %v3809
    %5054 = vmatpush.bf16.msra.mxu0 %v3808
    %5055 = vmatpush.bf16.msra.mxu0 %v3807
    %5056 = vmatpush.bf16.msra.mxu0 %v3806
    %5057 = vmatpush.bf16.msra.mxu0 %v3805
    %5058 = vmatpush.bf16.msra.mxu0 %v3804
    %5059 = vmatmul.bf16.gmra.mxu0 %v1211
    %v5060 = vpop.f32.mrf.mxu0
    %v5061 = vadd.f32 %v5048, %v5060
    %v5062 = vpop.f32.mrf.mxu0
    %5063 = vdwg.mxu0
    %5064 = vmatpush.bf16.msra.mxu0 %v3819
    %5065 = vmatpush.bf16.msra.mxu0 %v3818
    %5066 = vmatpush.bf16.msra.mxu0 %v3817
    %5067 = vmatpush.bf16.msra.mxu0 %v3816
    %5068 = vmatpush.bf16.msra.mxu0 %v3815
    %5069 = vmatpush.bf16.msra.mxu0 %v3814
    %5070 = vmatpush.bf16.msra.mxu0 %v3813
    %5071 = vmatpush.bf16.msra.mxu0 %v3812
    %5072 = vmatmul.bf16.gmra.mxu0 %v1212
    %v5073 = vpop.f32.mrf.mxu0
    %v5074 = vadd.f32 %v5061, %v5073
    %v5075 = vpop.f32.mrf.mxu0
    %5076 = vdwg.mxu0
    %5077 = vmatpush.bf16.msra.mxu0 %v3827
    %5078 = vmatpush.bf16.msra.mxu0 %v3826
    %5079 = vmatpush.bf16.msra.mxu0 %v3825
    %5080 = vmatpush.bf16.msra.mxu0 %v3824
    %5081 = vmatpush.bf16.msra.mxu0 %v3823
    %5082 = vmatpush.bf16.msra.mxu0 %v3822
    %5083 = vmatpush.bf16.msra.mxu0 %v3821
    %5084 = vmatpush.bf16.msra.mxu0 %v3820
    %5085 = vmatmul.bf16.gmra.mxu0 %v1213
    %v5086 = vpop.f32.mrf.mxu0
    %v5087 = vadd.f32 %v5074, %v5086
    %v5088 = vpop.f32.mrf.mxu0
    %5089 = vdwg.mxu0
    %5090 = vmatpush.bf16.msra.mxu0 %v3835
    %5091 = vmatpush.bf16.msra.mxu0 %v3834
    %5092 = vmatpush.bf16.msra.mxu0 %v3833
    %5093 = vmatpush.bf16.msra.mxu0 %v3832
    %5094 = vmatpush.bf16.msra.mxu0 %v3831
    %5095 = vmatpush.bf16.msra.mxu0 %v3830
    %5096 = vmatpush.bf16.msra.mxu0 %v3829
    %5097 = vmatpush.bf16.msra.mxu0 %v3828
    %5098 = vmatmul.bf16.gmra.mxu0 %v1214
    %v5099 = vpop.f32.mrf.mxu0
    %v5100 = vadd.f32 %v5087, %v5099
    %v5101 = vpop.f32.mrf.mxu0
    %5102 = vdwg.mxu0
    %5103 = vmatpush.bf16.msra.mxu0 %v3843
    %5104 = vmatpush.bf16.msra.mxu0 %v3842
    %5105 = vmatpush.bf16.msra.mxu0 %v3841
    %5106 = vmatpush.bf16.msra.mxu0 %v3840
    %5107 = vmatpush.bf16.msra.mxu0 %v3839
    %5108 = vmatpush.bf16.msra.mxu0 %v3838
    %5109 = vmatpush.bf16.msra.mxu0 %v3837
    %5110 = vmatpush.bf16.msra.mxu0 %v3836
    %5111 = vmatmul.bf16.gmra.mxu0 %v1215
    %v5112 = vpop.f32.mrf.mxu0
    %v5113 = vadd.f32 %v5100, %v5112
    %v5114 = vpop.f32.mrf.mxu0
    %5115 = vdwg.mxu0
    %5116 = vmatpush.bf16.msra.mxu0 %v3851
    %5117 = vmatpush.bf16.msra.mxu0 %v3850
    %5118 = vmatpush.bf16.msra.mxu0 %v3849
    %5119 = vmatpush.bf16.msra.mxu0 %v3848
    %5120 = vmatpush.bf16.msra.mxu0 %v3847
    %5121 = vmatpush.bf16.msra.mxu0 %v3846
    %5122 = vmatpush.bf16.msra.mxu0 %v3845
    %5123 = vmatpush.bf16.msra.mxu0 %v3844
    %5124 = vmatmul.bf16.gmra.mxu0 %v1218
    %v5125 = vpop.f32.mrf.mxu0
    %v5126 = vadd.f32 %v5113, %v5125
    %v5127 = vpop.f32.mrf.mxu0
    %5128 = vdwg.mxu0
    %5129 = vmatpush.bf16.msra.mxu0 %v3859
    %5130 = vmatpush.bf16.msra.mxu0 %v3858
    %5131 = vmatpush.bf16.msra.mxu0 %v3857
    %5132 = vmatpush.bf16.msra.mxu0 %v3856
    %5133 = vmatpush.bf16.msra.mxu0 %v3855
    %5134 = vmatpush.bf16.msra.mxu0 %v3854
    %5135 = vmatpush.bf16.msra.mxu0 %v3853
    %5136 = vmatpush.bf16.msra.mxu0 %v3852
    %5137 = vmatmul.bf16.gmra.mxu0 %v1219
    %v5138 = vpop.f32.mrf.mxu0
    %v5139 = vadd.f32 %v5126, %v5138
    %v5140 = vpop.f32.mrf.mxu0
    %5141 = vdwg.mxu0
    %5142 = vmatpush.bf16.msra.mxu0 %v3867
    %5143 = vmatpush.bf16.msra.mxu0 %v3866
    %5144 = vmatpush.bf16.msra.mxu0 %v3865
    %5145 = vmatpush.bf16.msra.mxu0 %v3864
    %5146 = vmatpush.bf16.msra.mxu0 %v3863
    %5147 = vmatpush.bf16.msra.mxu0 %v3862
    %5148 = vmatpush.bf16.msra.mxu0 %v3861
    %5149 = vmatpush.bf16.msra.mxu0 %v3860
    %5150 = vmatmul.bf16.gmra.mxu0 %v1220
    %v5151 = vpop.f32.mrf.mxu0
    %v5152 = vadd.f32 %v5139, %v5151
    %v5153 = vpop.f32.mrf.mxu0
    %5154 = vdwg.mxu0
    %5155 = vmatpush.bf16.msra.mxu0 %v3875
    %5156 = vmatpush.bf16.msra.mxu0 %v3874
    %5157 = vmatpush.bf16.msra.mxu0 %v3873
    %5158 = vmatpush.bf16.msra.mxu0 %v3872
    %5159 = vmatpush.bf16.msra.mxu0 %v3871
    %5160 = vmatpush.bf16.msra.mxu0 %v3870
    %5161 = vmatpush.bf16.msra.mxu0 %v3869
    %5162 = vmatpush.bf16.msra.mxu0 %v3868
    %5163 = vmatmul.bf16.gmra.mxu0 %v1221
    %v5164 = vpop.f32.mrf.mxu0
    %v5165 = vadd.f32 %v5152, %v5164
    %v5166 = vpop.f32.mrf.mxu0
    %5167 = vdwg.mxu0
    %5168 = vmatpush.bf16.msra.mxu0 %v3883
    %5169 = vmatpush.bf16.msra.mxu0 %v3882
    %5170 = vmatpush.bf16.msra.mxu0 %v3881
    %5171 = vmatpush.bf16.msra.mxu0 %v3880
    %5172 = vmatpush.bf16.msra.mxu0 %v3879
    %5173 = vmatpush.bf16.msra.mxu0 %v3878
    %5174 = vmatpush.bf16.msra.mxu0 %v3877
    %5175 = vmatpush.bf16.msra.mxu0 %v3876
    %5176 = vmatmul.bf16.gmra.mxu0 %v1222
    %v5177 = vpop.f32.mrf.mxu0
    %v5178 = vadd.f32 %v5165, %v5177
    %v5179 = vpop.f32.mrf.mxu0
    %5180 = vdwg.mxu0
    %5181 = vmatpush.bf16.msra.mxu0 %v3891
    %5182 = vmatpush.bf16.msra.mxu0 %v3890
    %5183 = vmatpush.bf16.msra.mxu0 %v3889
    %5184 = vmatpush.bf16.msra.mxu0 %v3888
    %5185 = vmatpush.bf16.msra.mxu0 %v3887
    %5186 = vmatpush.bf16.msra.mxu0 %v3886
    %5187 = vmatpush.bf16.msra.mxu0 %v3885
    %5188 = vmatpush.bf16.msra.mxu0 %v3884
    %5189 = vmatmul.bf16.gmra.mxu0 %v1223
    %v5190 = vpop.f32.mrf.mxu0
    %v5191 = vadd.f32 %v5178, %v5190
    %v5192 = vpop.f32.mrf.mxu0
    %5193 = vdwg.mxu0
    %5194 = vmatpush.bf16.msra.mxu0 %v3899
    %5195 = vmatpush.bf16.msra.mxu0 %v3898
    %5196 = vmatpush.bf16.msra.mxu0 %v3897
    %5197 = vmatpush.bf16.msra.mxu0 %v3896
    %5198 = vmatpush.bf16.msra.mxu0 %v3895
    %5199 = vmatpush.bf16.msra.mxu0 %v3894
    %5200 = vmatpush.bf16.msra.mxu0 %v3893
    %5201 = vmatpush.bf16.msra.mxu0 %v3892
    %5202 = vmatmul.bf16.gmra.mxu0 %v1224
    %v5203 = vpop.f32.mrf.mxu0
    %v5204 = vadd.f32 %v5191, %v5203
    %v5205 = vpop.f32.mrf.mxu0
    %5206 = vdwg.mxu0
    %5207 = vmatpush.bf16.msra.mxu0 %v3907
    %5208 = vmatpush.bf16.msra.mxu0 %v3906
    %5209 = vmatpush.bf16.msra.mxu0 %v3905
    %5210 = vmatpush.bf16.msra.mxu0 %v3904
    %5211 = vmatpush.bf16.msra.mxu0 %v3903
    %5212 = vmatpush.bf16.msra.mxu0 %v3902
    %5213 = vmatpush.bf16.msra.mxu0 %v3901
    %5214 = vmatpush.bf16.msra.mxu0 %v3900
    %5215 = vmatmul.bf16.gmra.mxu0 %v1225
    %v5216 = vpop.f32.mrf.mxu0
    %v5217 = vadd.f32 %v5204, %v5216
    %v5218 = vpop.f32.mrf.mxu0
    %5219 = vdwg.mxu0
    %5220 = vmatpush.bf16.msra.mxu0 %v3915
    %5221 = vmatpush.bf16.msra.mxu0 %v3914
    %5222 = vmatpush.bf16.msra.mxu0 %v3913
    %5223 = vmatpush.bf16.msra.mxu0 %v3912
    %5224 = vmatpush.bf16.msra.mxu0 %v3911
    %5225 = vmatpush.bf16.msra.mxu0 %v3910
    %5226 = vmatpush.bf16.msra.mxu0 %v3909
    %5227 = vmatpush.bf16.msra.mxu0 %v3908
    %5228 = vmatmul.bf16.gmra.mxu0 %v1228
    %v5229 = vpop.f32.mrf.mxu0
    %v5230 = vadd.f32 %v5217, %v5229
    %v5231 = vpop.f32.mrf.mxu0
    %5232 = vdwg.mxu0
    %5233 = vmatpush.bf16.msra.mxu0 %v3923
    %5234 = vmatpush.bf16.msra.mxu0 %v3922
    %5235 = vmatpush.bf16.msra.mxu0 %v3921
    %5236 = vmatpush.bf16.msra.mxu0 %v3920
    %5237 = vmatpush.bf16.msra.mxu0 %v3919
    %5238 = vmatpush.bf16.msra.mxu0 %v3918
    %5239 = vmatpush.bf16.msra.mxu0 %v3917
    %5240 = vmatpush.bf16.msra.mxu0 %v3916
    %5241 = vmatmul.bf16.gmra.mxu0 %v1229
    %v5242 = vpop.f32.mrf.mxu0
    %v5243 = vadd.f32 %v5230, %v5242
    %v5244 = vpop.f32.mrf.mxu0
    %5245 = vdwg.mxu0
    %5246 = vmatpush.bf16.msra.mxu0 %v3931
    %5247 = vmatpush.bf16.msra.mxu0 %v3930
    %5248 = vmatpush.bf16.msra.mxu0 %v3929
    %5249 = vmatpush.bf16.msra.mxu0 %v3928
    %5250 = vmatpush.bf16.msra.mxu0 %v3927
    %5251 = vmatpush.bf16.msra.mxu0 %v3926
    %5252 = vmatpush.bf16.msra.mxu0 %v3925
    %5253 = vmatpush.bf16.msra.mxu0 %v3924
    %5254 = vmatmul.bf16.gmra.mxu0 %v1230
    %v5255 = vpop.f32.mrf.mxu0
    %v5256 = vadd.f32 %v5243, %v5255
    %v5257 = vpop.f32.mrf.mxu0
    %5258 = vdwg.mxu0
    %5259 = vmatpush.bf16.msra.mxu0 %v3939
    %5260 = vmatpush.bf16.msra.mxu0 %v3938
    %5261 = vmatpush.bf16.msra.mxu0 %v3937
    %5262 = vmatpush.bf16.msra.mxu0 %v3936
    %5263 = vmatpush.bf16.msra.mxu0 %v3935
    %5264 = vmatpush.bf16.msra.mxu0 %v3934
    %5265 = vmatpush.bf16.msra.mxu0 %v3933
    %5266 = vmatpush.bf16.msra.mxu0 %v3932
    %5267 = vmatmul.bf16.gmra.mxu0 %v1231
    %v5268 = vpop.f32.mrf.mxu0
    %v5269 = vadd.f32 %v5256, %v5268
    %v5270 = vpop.f32.mrf.mxu0
    %5271 = vdwg.mxu0
    %5272 = vmatpush.bf16.msra.mxu0 %v3947
    %5273 = vmatpush.bf16.msra.mxu0 %v3946
    %5274 = vmatpush.bf16.msra.mxu0 %v3945
    %5275 = vmatpush.bf16.msra.mxu0 %v3944
    %5276 = vmatpush.bf16.msra.mxu0 %v3943
    %5277 = vmatpush.bf16.msra.mxu0 %v3942
    %5278 = vmatpush.bf16.msra.mxu0 %v3941
    %5279 = vmatpush.bf16.msra.mxu0 %v3940
    %5280 = vmatmul.bf16.gmra.mxu0 %v1232
    %v5281 = vpop.f32.mrf.mxu0
    %v5282 = vadd.f32 %v5269, %v5281
    %v5283 = vpop.f32.mrf.mxu0
    %5284 = vdwg.mxu0
    %5285 = vmatpush.bf16.msra.mxu0 %v3955
    %5286 = vmatpush.bf16.msra.mxu0 %v3954
    %5287 = vmatpush.bf16.msra.mxu0 %v3953
    %5288 = vmatpush.bf16.msra.mxu0 %v3952
    %5289 = vmatpush.bf16.msra.mxu0 %v3951
    %5290 = vmatpush.bf16.msra.mxu0 %v3950
    %5291 = vmatpush.bf16.msra.mxu0 %v3949
    %5292 = vmatpush.bf16.msra.mxu0 %v3948
    %5293 = vmatmul.bf16.gmra.mxu0 %v1233
    %v5294 = vpop.f32.mrf.mxu0
    %v5295 = vadd.f32 %v5282, %v5294
    %v5296 = vpop.f32.mrf.mxu0
    %5297 = vdwg.mxu0
    %5298 = vmatpush.bf16.msra.mxu0 %v3963
    %5299 = vmatpush.bf16.msra.mxu0 %v3962
    %5300 = vmatpush.bf16.msra.mxu0 %v3961
    %5301 = vmatpush.bf16.msra.mxu0 %v3960
    %5302 = vmatpush.bf16.msra.mxu0 %v3959
    %5303 = vmatpush.bf16.msra.mxu0 %v3958
    %5304 = vmatpush.bf16.msra.mxu0 %v3957
    %5305 = vmatpush.bf16.msra.mxu0 %v3956
    %5306 = vmatmul.bf16.gmra.mxu0 %v1234
    %v5307 = vpop.f32.mrf.mxu0
    %v5308 = vadd.f32 %v5295, %v5307
    %v5309 = vpop.f32.mrf.mxu0
    %5310 = vdwg.mxu0
    %5311 = vmatpush.bf16.msra.mxu0 %v3971
    %5312 = vmatpush.bf16.msra.mxu0 %v3970
    %5313 = vmatpush.bf16.msra.mxu0 %v3969
    %5314 = vmatpush.bf16.msra.mxu0 %v3968
    %5315 = vmatpush.bf16.msra.mxu0 %v3967
    %5316 = vmatpush.bf16.msra.mxu0 %v3966
    %5317 = vmatpush.bf16.msra.mxu0 %v3965
    %5318 = vmatpush.bf16.msra.mxu0 %v3964
    %5319 = vmatmul.bf16.gmra.mxu0 %v1235
    %v5320 = vpop.f32.mrf.mxu0
    %v5321 = vadd.f32 %v5308, %v5320
    %v5322 = vpop.f32.mrf.mxu0
    %5323 = vdwg.mxu0
    %5324 = vmatpush.bf16.msra.mxu0 %v3979
    %5325 = vmatpush.bf16.msra.mxu0 %v3978
    %5326 = vmatpush.bf16.msra.mxu0 %v3977
    %5327 = vmatpush.bf16.msra.mxu0 %v3976
    %5328 = vmatpush.bf16.msra.mxu0 %v3975
    %5329 = vmatpush.bf16.msra.mxu0 %v3974
    %5330 = vmatpush.bf16.msra.mxu0 %v3973
    %5331 = vmatpush.bf16.msra.mxu0 %v3972
    %5332 = vmatmul.bf16.gmra.mxu0 %v1238
    %v5333 = vpop.f32.mrf.mxu0
    %v5334 = vadd.f32 %v5321, %v5333
    %v5335 = vpop.f32.mrf.mxu0
    %5336 = vdwg.mxu0
    %5337 = vmatpush.bf16.msra.mxu0 %v3987
    %5338 = vmatpush.bf16.msra.mxu0 %v3986
    %5339 = vmatpush.bf16.msra.mxu0 %v3985
    %5340 = vmatpush.bf16.msra.mxu0 %v3984
    %5341 = vmatpush.bf16.msra.mxu0 %v3983
    %5342 = vmatpush.bf16.msra.mxu0 %v3982
    %5343 = vmatpush.bf16.msra.mxu0 %v3981
    %5344 = vmatpush.bf16.msra.mxu0 %v3980
    %5345 = vmatmul.bf16.gmra.mxu0 %v1239
    %v5346 = vpop.f32.mrf.mxu0
    %v5347 = vadd.f32 %v5334, %v5346
    %v5348 = vpop.f32.mrf.mxu0
    %5349 = vdwg.mxu0
    %5350 = vmatpush.bf16.msra.mxu0 %v3995
    %5351 = vmatpush.bf16.msra.mxu0 %v3994
    %5352 = vmatpush.bf16.msra.mxu0 %v3993
    %5353 = vmatpush.bf16.msra.mxu0 %v3992
    %5354 = vmatpush.bf16.msra.mxu0 %v3991
    %5355 = vmatpush.bf16.msra.mxu0 %v3990
    %5356 = vmatpush.bf16.msra.mxu0 %v3989
    %5357 = vmatpush.bf16.msra.mxu0 %v3988
    %5358 = vmatmul.bf16.gmra.mxu0 %v1240
    %v5359 = vpop.f32.mrf.mxu0
    %v5360 = vadd.f32 %v5347, %v5359
    %v5361 = vpop.f32.mrf.mxu0
    %5362 = vdwg.mxu0
    %5363 = vmatpush.bf16.msra.mxu0 %v4003
    %5364 = vmatpush.bf16.msra.mxu0 %v4002
    %5365 = vmatpush.bf16.msra.mxu0 %v4001
    %5366 = vmatpush.bf16.msra.mxu0 %v4000
    %5367 = vmatpush.bf16.msra.mxu0 %v3999
    %5368 = vmatpush.bf16.msra.mxu0 %v3998
    %5369 = vmatpush.bf16.msra.mxu0 %v3997
    %5370 = vmatpush.bf16.msra.mxu0 %v3996
    %5371 = vmatmul.bf16.gmra.mxu0 %v1241
    %v5372 = vpop.f32.mrf.mxu0
    %v5373 = vadd.f32 %v5360, %v5372
    %v5374 = vpop.f32.mrf.mxu0
    %5375 = vdwg.mxu0
    %5376 = vmatpush.bf16.msra.mxu0 %v4011
    %5377 = vmatpush.bf16.msra.mxu0 %v4010
    %5378 = vmatpush.bf16.msra.mxu0 %v4009
    %5379 = vmatpush.bf16.msra.mxu0 %v4008
    %5380 = vmatpush.bf16.msra.mxu0 %v4007
    %5381 = vmatpush.bf16.msra.mxu0 %v4006
    %5382 = vmatpush.bf16.msra.mxu0 %v4005
    %5383 = vmatpush.bf16.msra.mxu0 %v4004
    %5384 = vmatmul.bf16.gmra.mxu0 %v1242
    %v5385 = vpop.f32.mrf.mxu0
    %v5386 = vadd.f32 %v5373, %v5385
    %v5387 = vpop.f32.mrf.mxu0
    %5388 = vdwg.mxu0
    %5389 = vmatpush.bf16.msra.mxu0 %v4019
    %5390 = vmatpush.bf16.msra.mxu0 %v4018
    %5391 = vmatpush.bf16.msra.mxu0 %v4017
    %5392 = vmatpush.bf16.msra.mxu0 %v4016
    %5393 = vmatpush.bf16.msra.mxu0 %v4015
    %5394 = vmatpush.bf16.msra.mxu0 %v4014
    %5395 = vmatpush.bf16.msra.mxu0 %v4013
    %5396 = vmatpush.bf16.msra.mxu0 %v4012
    %5397 = vmatmul.bf16.gmra.mxu0 %v1243
    %v5398 = vpop.f32.mrf.mxu0
    %v5399 = vadd.f32 %v5386, %v5398
    %v5400 = vpop.f32.mrf.mxu0
    %5401 = vdwg.mxu0
    %5402 = vmatpush.bf16.msra.mxu0 %v4027
    %5403 = vmatpush.bf16.msra.mxu0 %v4026
    %5404 = vmatpush.bf16.msra.mxu0 %v4025
    %5405 = vmatpush.bf16.msra.mxu0 %v4024
    %5406 = vmatpush.bf16.msra.mxu0 %v4023
    %5407 = vmatpush.bf16.msra.mxu0 %v4022
    %5408 = vmatpush.bf16.msra.mxu0 %v4021
    %5409 = vmatpush.bf16.msra.mxu0 %v4020
    %5410 = vmatmul.bf16.gmra.mxu0 %v1244
    %v5411 = vpop.f32.mrf.mxu0
    %v5412 = vadd.f32 %v5399, %v5411
    %v5413 = vpop.f32.mrf.mxu0
    %5414 = vdwg.mxu0
    %5415 = vmatpush.bf16.msra.mxu0 %v4035
    %5416 = vmatpush.bf16.msra.mxu0 %v4034
    %5417 = vmatpush.bf16.msra.mxu0 %v4033
    %5418 = vmatpush.bf16.msra.mxu0 %v4032
    %5419 = vmatpush.bf16.msra.mxu0 %v4031
    %5420 = vmatpush.bf16.msra.mxu0 %v4030
    %5421 = vmatpush.bf16.msra.mxu0 %v4029
    %5422 = vmatpush.bf16.msra.mxu0 %v4028
    %5423 = vmatmul.bf16.gmra.mxu0 %v1245
    %v5424 = vpop.f32.mrf.mxu0
    %v5425 = vadd.f32 %v5412, %v5424
    %v5426 = vpop.f32.mrf.mxu0
    %5427 = vdwg.mxu0
    %5428 = vmatpush.bf16.msra.mxu0 %v4043
    %5429 = vmatpush.bf16.msra.mxu0 %v4042
    %5430 = vmatpush.bf16.msra.mxu0 %v4041
    %5431 = vmatpush.bf16.msra.mxu0 %v4040
    %5432 = vmatpush.bf16.msra.mxu0 %v4039
    %5433 = vmatpush.bf16.msra.mxu0 %v4038
    %5434 = vmatpush.bf16.msra.mxu0 %v4037
    %5435 = vmatpush.bf16.msra.mxu0 %v4036
    %5436 = vmatmul.bf16.gmra.mxu0 %v1248
    %v5437 = vpop.f32.mrf.mxu0
    %v5438 = vadd.f32 %v5425, %v5437
    %v5439 = vpop.f32.mrf.mxu0
    %5440 = vdwg.mxu0
    %5441 = vmatpush.bf16.msra.mxu0 %v4051
    %5442 = vmatpush.bf16.msra.mxu0 %v4050
    %5443 = vmatpush.bf16.msra.mxu0 %v4049
    %5444 = vmatpush.bf16.msra.mxu0 %v4048
    %5445 = vmatpush.bf16.msra.mxu0 %v4047
    %5446 = vmatpush.bf16.msra.mxu0 %v4046
    %5447 = vmatpush.bf16.msra.mxu0 %v4045
    %5448 = vmatpush.bf16.msra.mxu0 %v4044
    %5449 = vmatmul.bf16.gmra.mxu0 %v1249
    %v5450 = vpop.f32.mrf.mxu0
    %v5451 = vadd.f32 %v5438, %v5450
    %v5452 = vpop.f32.mrf.mxu0
    %5453 = vdwg.mxu0
    %5454 = vmatpush.bf16.msra.mxu0 %v4059
    %5455 = vmatpush.bf16.msra.mxu0 %v4058
    %5456 = vmatpush.bf16.msra.mxu0 %v4057
    %5457 = vmatpush.bf16.msra.mxu0 %v4056
    %5458 = vmatpush.bf16.msra.mxu0 %v4055
    %5459 = vmatpush.bf16.msra.mxu0 %v4054
    %5460 = vmatpush.bf16.msra.mxu0 %v4053
    %5461 = vmatpush.bf16.msra.mxu0 %v4052
    %5462 = vmatmul.bf16.gmra.mxu0 %v1250
    %v5463 = vpop.f32.mrf.mxu0
    %v5464 = vadd.f32 %v5451, %v5463
    %v5465 = vpop.f32.mrf.mxu0
    %5466 = vdwg.mxu0
    %5467 = vmatpush.bf16.msra.mxu0 %v4067
    %5468 = vmatpush.bf16.msra.mxu0 %v4066
    %5469 = vmatpush.bf16.msra.mxu0 %v4065
    %5470 = vmatpush.bf16.msra.mxu0 %v4064
    %5471 = vmatpush.bf16.msra.mxu0 %v4063
    %5472 = vmatpush.bf16.msra.mxu0 %v4062
    %5473 = vmatpush.bf16.msra.mxu0 %v4061
    %5474 = vmatpush.bf16.msra.mxu0 %v4060
    %5475 = vmatmul.bf16.gmra.mxu0 %v1251
    %v5476 = vpop.f32.mrf.mxu0
    %v5477 = vadd.f32 %v5464, %v5476
    %v5478 = vpop.f32.mrf.mxu0
    %5479 = vdwg.mxu0
    %5480 = vmatpush.bf16.msra.mxu0 %v4075
    %5481 = vmatpush.bf16.msra.mxu0 %v4074
    %5482 = vmatpush.bf16.msra.mxu0 %v4073
    %5483 = vmatpush.bf16.msra.mxu0 %v4072
    %5484 = vmatpush.bf16.msra.mxu0 %v4071
    %5485 = vmatpush.bf16.msra.mxu0 %v4070
    %5486 = vmatpush.bf16.msra.mxu0 %v4069
    %5487 = vmatpush.bf16.msra.mxu0 %v4068
    %5488 = vmatmul.bf16.gmra.mxu0 %v1252
    %v5489 = vpop.f32.mrf.mxu0
    %v5490 = vadd.f32 %v5477, %v5489
    %v5491 = vpop.f32.mrf.mxu0
    %5492 = vdwg.mxu0
    %5493 = vmatpush.bf16.msra.mxu0 %v4083
    %5494 = vmatpush.bf16.msra.mxu0 %v4082
    %5495 = vmatpush.bf16.msra.mxu0 %v4081
    %5496 = vmatpush.bf16.msra.mxu0 %v4080
    %5497 = vmatpush.bf16.msra.mxu0 %v4079
    %5498 = vmatpush.bf16.msra.mxu0 %v4078
    %5499 = vmatpush.bf16.msra.mxu0 %v4077
    %5500 = vmatpush.bf16.msra.mxu0 %v4076
    %5501 = vmatmul.bf16.gmra.mxu0 %v1253
    %v5502 = vpop.f32.mrf.mxu0
    %v5503 = vadd.f32 %v5490, %v5502
    %v5504 = vpop.f32.mrf.mxu0
    %5505 = vdwg.mxu0
    %5506 = vmatpush.bf16.msra.mxu0 %v4091
    %5507 = vmatpush.bf16.msra.mxu0 %v4090
    %5508 = vmatpush.bf16.msra.mxu0 %v4089
    %5509 = vmatpush.bf16.msra.mxu0 %v4088
    %5510 = vmatpush.bf16.msra.mxu0 %v4087
    %5511 = vmatpush.bf16.msra.mxu0 %v4086
    %5512 = vmatpush.bf16.msra.mxu0 %v4085
    %5513 = vmatpush.bf16.msra.mxu0 %v4084
    %5514 = vmatmul.bf16.gmra.mxu0 %v1254
    %v5515 = vpop.f32.mrf.mxu0
    %v5516 = vadd.f32 %v5503, %v5515
    %v5517 = vpop.f32.mrf.mxu0
    %5518 = vdwg.mxu0
    %5519 = vmatpush.bf16.msra.mxu0 %v4099
    %5520 = vmatpush.bf16.msra.mxu0 %v4098
    %5521 = vmatpush.bf16.msra.mxu0 %v4097
    %5522 = vmatpush.bf16.msra.mxu0 %v4096
    %5523 = vmatpush.bf16.msra.mxu0 %v4095
    %5524 = vmatpush.bf16.msra.mxu0 %v4094
    %5525 = vmatpush.bf16.msra.mxu0 %v4093
    %5526 = vmatpush.bf16.msra.mxu0 %v4092
    %5527 = vmatmul.bf16.gmra.mxu0 %v1255
    %v5528 = vpop.f32.mrf.mxu0
    %v5529 = vadd.f32 %v5516, %v5528
    %v5530 = vpop.f32.mrf.mxu0
    %5531 = vdwg.mxu0
    %5532 = vmatpush.bf16.msra.mxu0 %v4107
    %5533 = vmatpush.bf16.msra.mxu0 %v4106
    %5534 = vmatpush.bf16.msra.mxu0 %v4105
    %5535 = vmatpush.bf16.msra.mxu0 %v4104
    %5536 = vmatpush.bf16.msra.mxu0 %v4103
    %5537 = vmatpush.bf16.msra.mxu0 %v4102
    %5538 = vmatpush.bf16.msra.mxu0 %v4101
    %5539 = vmatpush.bf16.msra.mxu0 %v4100
    %5540 = vmatmul.bf16.gmra.mxu0 %v1258
    %v5541 = vpop.f32.mrf.mxu0
    %v5542 = vadd.f32 %v5529, %v5541
    %v5543 = vpop.f32.mrf.mxu0
    %5544 = vdwg.mxu0
    %5545 = vmatpush.bf16.msra.mxu0 %v4115
    %5546 = vmatpush.bf16.msra.mxu0 %v4114
    %5547 = vmatpush.bf16.msra.mxu0 %v4113
    %5548 = vmatpush.bf16.msra.mxu0 %v4112
    %5549 = vmatpush.bf16.msra.mxu0 %v4111
    %5550 = vmatpush.bf16.msra.mxu0 %v4110
    %5551 = vmatpush.bf16.msra.mxu0 %v4109
    %5552 = vmatpush.bf16.msra.mxu0 %v4108
    %5553 = vmatmul.bf16.gmra.mxu0 %v1259
    %v5554 = vpop.f32.mrf.mxu0
    %v5555 = vadd.f32 %v5542, %v5554
    %v5556 = vpop.f32.mrf.mxu0
    %5557 = vdwg.mxu0
    %5558 = vmatpush.bf16.msra.mxu0 %v4123
    %5559 = vmatpush.bf16.msra.mxu0 %v4122
    %5560 = vmatpush.bf16.msra.mxu0 %v4121
    %5561 = vmatpush.bf16.msra.mxu0 %v4120
    %5562 = vmatpush.bf16.msra.mxu0 %v4119
    %5563 = vmatpush.bf16.msra.mxu0 %v4118
    %5564 = vmatpush.bf16.msra.mxu0 %v4117
    %5565 = vmatpush.bf16.msra.mxu0 %v4116
    %5566 = vmatmul.bf16.gmra.mxu0 %v1260
    %v5567 = vpop.f32.mrf.mxu0
    %v5568 = vadd.f32 %v5555, %v5567
    %v5569 = vpop.f32.mrf.mxu0
    %5570 = vdwg.mxu0
    %5571 = vmatpush.bf16.msra.mxu0 %v4131
    %5572 = vmatpush.bf16.msra.mxu0 %v4130
    %5573 = vmatpush.bf16.msra.mxu0 %v4129
    %5574 = vmatpush.bf16.msra.mxu0 %v4128
    %5575 = vmatpush.bf16.msra.mxu0 %v4127
    %5576 = vmatpush.bf16.msra.mxu0 %v4126
    %5577 = vmatpush.bf16.msra.mxu0 %v4125
    %5578 = vmatpush.bf16.msra.mxu0 %v4124
    %5579 = vmatmul.bf16.gmra.mxu0 %v1261
    %v5580 = vpop.f32.mrf.mxu0
    %v5581 = vadd.f32 %v5568, %v5580
    %v5582 = vpop.f32.mrf.mxu0
    %5583 = vdwg.mxu0
    %5584 = vmatpush.bf16.msra.mxu0 %v4139
    %5585 = vmatpush.bf16.msra.mxu0 %v4138
    %5586 = vmatpush.bf16.msra.mxu0 %v4137
    %5587 = vmatpush.bf16.msra.mxu0 %v4136
    %5588 = vmatpush.bf16.msra.mxu0 %v4135
    %5589 = vmatpush.bf16.msra.mxu0 %v4134
    %5590 = vmatpush.bf16.msra.mxu0 %v4133
    %5591 = vmatpush.bf16.msra.mxu0 %v4132
    %5592 = vmatmul.bf16.gmra.mxu0 %v1262
    %v5593 = vpop.f32.mrf.mxu0
    %v5594 = vadd.f32 %v5581, %v5593
    %v5595 = vpop.f32.mrf.mxu0
    %5596 = vdwg.mxu0
    %5597 = vmatpush.bf16.msra.mxu0 %v4147
    %5598 = vmatpush.bf16.msra.mxu0 %v4146
    %5599 = vmatpush.bf16.msra.mxu0 %v4145
    %5600 = vmatpush.bf16.msra.mxu0 %v4144
    %5601 = vmatpush.bf16.msra.mxu0 %v4143
    %5602 = vmatpush.bf16.msra.mxu0 %v4142
    %5603 = vmatpush.bf16.msra.mxu0 %v4141
    %5604 = vmatpush.bf16.msra.mxu0 %v4140
    %5605 = vmatmul.bf16.gmra.mxu0 %v1263
    %v5606 = vpop.f32.mrf.mxu0
    %v5607 = vadd.f32 %v5594, %v5606
    %v5608 = vpop.f32.mrf.mxu0
    %5609 = vdwg.mxu0
    %5610 = vmatpush.bf16.msra.mxu0 %v4155
    %5611 = vmatpush.bf16.msra.mxu0 %v4154
    %5612 = vmatpush.bf16.msra.mxu0 %v4153
    %5613 = vmatpush.bf16.msra.mxu0 %v4152
    %5614 = vmatpush.bf16.msra.mxu0 %v4151
    %5615 = vmatpush.bf16.msra.mxu0 %v4150
    %5616 = vmatpush.bf16.msra.mxu0 %v4149
    %5617 = vmatpush.bf16.msra.mxu0 %v4148
    %5618 = vmatmul.bf16.gmra.mxu0 %v1264
    %v5619 = vpop.f32.mrf.mxu0
    %v5620 = vadd.f32 %v5607, %v5619
    %v5621 = vpop.f32.mrf.mxu0
    %5622 = vdwg.mxu0
    %5623 = vmatpush.bf16.msra.mxu0 %v4163
    %5624 = vmatpush.bf16.msra.mxu0 %v4162
    %5625 = vmatpush.bf16.msra.mxu0 %v4161
    %5626 = vmatpush.bf16.msra.mxu0 %v4160
    %5627 = vmatpush.bf16.msra.mxu0 %v4159
    %5628 = vmatpush.bf16.msra.mxu0 %v4158
    %5629 = vmatpush.bf16.msra.mxu0 %v4157
    %5630 = vmatpush.bf16.msra.mxu0 %v4156
    %5631 = vmatmul.bf16.gmra.mxu0 %v1265
    %v5632 = vpop.f32.mrf.mxu0
    %v5633 = vadd.f32 %v5620, %v5632
    %v5634 = vpop.f32.mrf.mxu0
    %5635 = vdwg.mxu0
    %5636 = vmatpush.bf16.msra.mxu0 %v4171
    %5637 = vmatpush.bf16.msra.mxu0 %v4170
    %5638 = vmatpush.bf16.msra.mxu0 %v4169
    %5639 = vmatpush.bf16.msra.mxu0 %v4168
    %5640 = vmatpush.bf16.msra.mxu0 %v4167
    %5641 = vmatpush.bf16.msra.mxu0 %v4166
    %5642 = vmatpush.bf16.msra.mxu0 %v4165
    %5643 = vmatpush.bf16.msra.mxu0 %v4164
    %5644 = vmatmul.bf16.gmra.mxu0 %v1268
    %v5645 = vpop.f32.mrf.mxu0
    %v5646 = vadd.f32 %v5633, %v5645
    %v5647 = vpop.f32.mrf.mxu0
    %5648 = vdwg.mxu0
    %5649 = vmatpush.bf16.msra.mxu0 %v4179
    %5650 = vmatpush.bf16.msra.mxu0 %v4178
    %5651 = vmatpush.bf16.msra.mxu0 %v4177
    %5652 = vmatpush.bf16.msra.mxu0 %v4176
    %5653 = vmatpush.bf16.msra.mxu0 %v4175
    %5654 = vmatpush.bf16.msra.mxu0 %v4174
    %5655 = vmatpush.bf16.msra.mxu0 %v4173
    %5656 = vmatpush.bf16.msra.mxu0 %v4172
    %5657 = vmatmul.bf16.gmra.mxu0 %v1269
    %v5658 = vpop.f32.mrf.mxu0
    %v5659 = vadd.f32 %v5646, %v5658
    %v5660 = vpop.f32.mrf.mxu0
    %5661 = vdwg.mxu0
    %5662 = vmatpush.bf16.msra.mxu0 %v4187
    %5663 = vmatpush.bf16.msra.mxu0 %v4186
    %5664 = vmatpush.bf16.msra.mxu0 %v4185
    %5665 = vmatpush.bf16.msra.mxu0 %v4184
    %5666 = vmatpush.bf16.msra.mxu0 %v4183
    %5667 = vmatpush.bf16.msra.mxu0 %v4182
    %5668 = vmatpush.bf16.msra.mxu0 %v4181
    %5669 = vmatpush.bf16.msra.mxu0 %v4180
    %5670 = vmatmul.bf16.gmra.mxu0 %v1270
    %v5671 = vpop.f32.mrf.mxu0
    %v5672 = vadd.f32 %v5659, %v5671
    %v5673 = vpop.f32.mrf.mxu0
    %5674 = vdwg.mxu0
    %5675 = vmatpush.bf16.msra.mxu0 %v4195
    %5676 = vmatpush.bf16.msra.mxu0 %v4194
    %5677 = vmatpush.bf16.msra.mxu0 %v4193
    %5678 = vmatpush.bf16.msra.mxu0 %v4192
    %5679 = vmatpush.bf16.msra.mxu0 %v4191
    %5680 = vmatpush.bf16.msra.mxu0 %v4190
    %5681 = vmatpush.bf16.msra.mxu0 %v4189
    %5682 = vmatpush.bf16.msra.mxu0 %v4188
    %5683 = vmatmul.bf16.gmra.mxu0 %v1271
    %v5684 = vpop.f32.mrf.mxu0
    %v5685 = vadd.f32 %v5672, %v5684
    %v5686 = vpop.f32.mrf.mxu0
    %5687 = vdwg.mxu0
    %5688 = vmatpush.bf16.msra.mxu0 %v4203
    %5689 = vmatpush.bf16.msra.mxu0 %v4202
    %5690 = vmatpush.bf16.msra.mxu0 %v4201
    %5691 = vmatpush.bf16.msra.mxu0 %v4200
    %5692 = vmatpush.bf16.msra.mxu0 %v4199
    %5693 = vmatpush.bf16.msra.mxu0 %v4198
    %5694 = vmatpush.bf16.msra.mxu0 %v4197
    %5695 = vmatpush.bf16.msra.mxu0 %v4196
    %5696 = vmatmul.bf16.gmra.mxu0 %v1272
    %v5697 = vpop.f32.mrf.mxu0
    %v5698 = vadd.f32 %v5685, %v5697
    %v5699 = vpop.f32.mrf.mxu0
    %5700 = vdwg.mxu0
    %5701 = vmatpush.bf16.msra.mxu0 %v4211
    %5702 = vmatpush.bf16.msra.mxu0 %v4210
    %5703 = vmatpush.bf16.msra.mxu0 %v4209
    %5704 = vmatpush.bf16.msra.mxu0 %v4208
    %5705 = vmatpush.bf16.msra.mxu0 %v4207
    %5706 = vmatpush.bf16.msra.mxu0 %v4206
    %5707 = vmatpush.bf16.msra.mxu0 %v4205
    %5708 = vmatpush.bf16.msra.mxu0 %v4204
    %5709 = vmatmul.bf16.gmra.mxu0 %v1273
    %v5710 = vpop.f32.mrf.mxu0
    %v5711 = vadd.f32 %v5698, %v5710
    %v5712 = vpop.f32.mrf.mxu0
    %5713 = vdwg.mxu0
    %5714 = vmatpush.bf16.msra.mxu0 %v4219
    %5715 = vmatpush.bf16.msra.mxu0 %v4218
    %5716 = vmatpush.bf16.msra.mxu0 %v4217
    %5717 = vmatpush.bf16.msra.mxu0 %v4216
    %5718 = vmatpush.bf16.msra.mxu0 %v4215
    %5719 = vmatpush.bf16.msra.mxu0 %v4214
    %5720 = vmatpush.bf16.msra.mxu0 %v4213
    %5721 = vmatpush.bf16.msra.mxu0 %v4212
    %5722 = vmatmul.bf16.gmra.mxu0 %v1274
    %v5723 = vpop.f32.mrf.mxu0
    %v5724 = vadd.f32 %v5711, %v5723
    %v5725 = vpop.f32.mrf.mxu0
    %5726 = vdwg.mxu0
    %5727 = vmatpush.bf16.msra.mxu0 %v4227
    %5728 = vmatpush.bf16.msra.mxu0 %v4226
    %5729 = vmatpush.bf16.msra.mxu0 %v4225
    %5730 = vmatpush.bf16.msra.mxu0 %v4224
    %5731 = vmatpush.bf16.msra.mxu0 %v4223
    %5732 = vmatpush.bf16.msra.mxu0 %v4222
    %5733 = vmatpush.bf16.msra.mxu0 %v4221
    %5734 = vmatpush.bf16.msra.mxu0 %v4220
    %5735 = vmatmul.bf16.gmra.mxu0 %v1275
    %v5736 = vpop.f32.mrf.mxu0
    %v5737 = vadd.f32 %v5724, %v5736
    %v5738 = vpop.f32.mrf.mxu0
    %5739 = vdwg.mxu0
    %v5740 = vtanh.pop %v5737
    %v5741 = vld [vmem:[%s3] sm:$0xff]
    %v5742 = vld [vmem:[%s3 + $0x8] sm:$0xff]
    %v5743 = vld [vmem:[%s3 + $0x10] sm:$0xff]
    %v5744 = vld [vmem:[%s3 + $0x18] sm:$0xff]
    %v5745 = vld [vmem:[%s3 + $0x20] sm:$0xff]
    %v5746 = vld [vmem:[%s3 + $0x28] sm:$0xff]
    %v5747 = vld [vmem:[%s3 + $0x30] sm:$0xff]
    %v5748 = vld [vmem:[%s3 + $0x38] sm:$0xff]
    %v5749 = vld [vmem:[%s3 + $0x40] sm:$0xff]
    %v5750 = vld [vmem:[%s3 + $0x48] sm:$0xff]
    %v5751 = vld [vmem:[%s3 + $0x50] sm:$0xff]
    %v5752 = vld [vmem:[%s3 + $0x58] sm:$0xff]
    %v5753 = vld [vmem:[%s3 + $0x60] sm:$0xff]
    %v5754 = vld [vmem:[%s3 + $0x68] sm:$0xff]
    %v5755 = vld [vmem:[%s3 + $0x70] sm:$0xff]
    %v5756 = vld [vmem:[%s3 + $0x78] sm:$0xff]
    %v5757 = vld [vmem:[%s4] sm:$0x1]
    %v5759 = vperm.slane %v5757, 0
    %5761 = vmatpush.msra.mxu0 %v5756
    %5762 = vmatpush.msra.mxu0 %v5755
    %5763 = vmatpush.msra.mxu0 %v5754
    %5764 = vmatpush.msra.mxu0 %v5753
    %5765 = vmatpush.msra.mxu0 %v5752
    %5766 = vmatpush.msra.mxu0 %v5751
    %5767 = vmatpush.msra.mxu0 %v5750
    %5768 = vmatpush.msra.mxu0 %v5749
    %5769 = vmatpush.msra.mxu0 %v5748
    %5770 = vmatpush.msra.mxu0 %v5747
    %5771 = vmatpush.msra.mxu0 %v5746
    %5772 = vmatpush.msra.mxu0 %v5745
    %5773 = vmatpush.msra.mxu0 %v5744
    %5774 = vmatpush.msra.mxu0 %v5743
    %5775 = vmatpush.msra.mxu0 %v5742
    %5776 = vmatpush.msra.mxu0 %v5741
    %5777 = vmatmul.f32.gmra.mxu0 %v5740
    %v5778 = vpop.f32.mrf.mxu0
    %v5779 = vadd.f32 %v5759, %v5778
    %5780 = vdwg.mxu0
    %vm5781 = vcmask 74752
    %v5782 = vsel %vm5781, %v5779, -inf
    %5783 = vmax.xlane.f32.xlu0 %v5782
    %v5784 = vpop.xlane.xlu0 %5783
    %v5785 = vsub.f32 %v5779, %v5784
    %v5786 = vmul.f32 %v5785, 1.442695
    %v5787 = vpow.pop %v5786
    %v5788 = vsel %vm5781, %v5787, 0.0
    %5789 = vadd.xlane.f32.xlu0 %v5788
    %v5790 = vpop.xlane.xlu0 %5789
    %v5791 = vlog2.pop %v5790
    %v5792 = vmul.f32 %v5791, 0.6931472
    %v5793 = vsub.f32 %v5785, %v5792
    %5794 = vst.msk [vmem:[#allocation2] sm:$0x3] %vm5781, %v5793
    // Predicated region
    $region22: #{net_forward.3} parent=1 // pred_check
      _
    $region23: #{net_forward.3} parent=1 // pred_check_branch
      %5796 = sbr.rel (0) target = $region25
    $region24: #{net_forward.3} parent=1 // pred_region
      %5798 = vsyncadd [#allocation3], 0
      %s5800 = sshll.u32 [#allocation2], 4
      %s5801 = int_to_ptr.vmem [resolvable:$true] %s5800
      %s5802 = sshll.u32 %s5, 4
      %s5803 = int_to_ptr.hbm [resolvable:$true] %s5802
      %5805 = dma.vmem_to_hbm [thread:$0]  %s5801, 32, %s5803, [#allocation3]
    $region25: #{net_forward.3} parent=1 // pred_fallthru
      _
    // Predicated region
    $region26: #{net_forward.3} parent=1 // pred_check
      _
    $region27: #{net_forward.3} parent=1 // pred_check_branch
      %5807 = sbr.rel (0) target = $region29
    $region28: #{net_forward.3} parent=1 // pred_region
      %5809 = dma.done [#allocation3], 32
    $region29: #{net_forward.3} parent=1 // pred_fallthru
      _
    %5810 = vsyncpa [#allocation3], 1

</llo_original>
